<compile_context>
chip_gen: v7x
topology: tpu7x:2x2x1
jax: 0.10.0
libtpu: 0.0.40
codegen_flags: <defaults>
</compile_context>

<pallas_src>
import functools

import jax
import jax.numpy as jnp
from jax import lax
from jax.experimental import pallas as pl
from jax.experimental.pallas import tpu as pltpu

EPS = 1e-5  # nn.BatchNorm3d default eps


# ----------------------------------------------------------------------------
# Fused kernel: per (batch, D-block) grid step computes TD output planes.
# Layout inside the kernel: planes are (C, H*W) with H*W in lanes.
# ----------------------------------------------------------------------------
def _fused_residual_kernel(xb_ref, xlo_ref, xhi_ref, m9_ref,
                           w1_ref, w2kd_ref, w3_ref,
                           b1_ref, b2_ref, b3_ref,
                           o_ref, acc_scr, *, TD, R, W, HW):
    db = pl.program_id(1)
    n_db = pl.num_programs(1)

    # Hoisted (tiny) parameter loads.
    w1 = w1_ref[...]                         # (R, Cin)  f32, BN1 scale folded
    w3 = w3_ref[...]                         # (Cin, R)  f32, BN3 scale folded
    b1 = b1_ref[...]                         # (R, 1)
    b2 = b2_ref[...]                         # (R, 1)
    b3 = b3_ref[...]                         # (Cin, 1)
    w2s = [w2kd_ref[kd] for kd in range(3)]  # 3 x (R, 9R) bf16, BN2 scale folded

    # Per-grid-step accumulators of the 3x3x3 conv for the TD output planes.
    acc_scr[...] = jnp.zeros_like(acc_scr)

    def process_plane(x_plane, p):
        """pw1 (1x1 conv + BN1 + ReLU) on one input plane, build its 9 shifted
        + masked copies once, then scatter its <=3 depth-tap contributions into
        the output-plane accumulators with K=9*R bf16 MXU dots."""
        h1 = jnp.maximum(
            jnp.dot(w1, x_plane, preferred_element_type=jnp.float32) + b1, 0.0)
        pieces = []
        for kh in range(3):
            for kw in range(3):
                s = (kh - 1) * W + (kw - 1)          # flat in-plane offset
                if s == 0:
                    pieces.append(h1)
                else:
                    sh = pltpu.roll(h1, shift=(-s) % HW, axis=1)
                    pieces.append(sh * m9_ref[kh * 3 + kw])
        slab = jnp.concatenate(pieces, axis=0).astype(jnp.bfloat16)  # (9R, HW)
        for kd in range(3):
            t = p - kd                               # output plane fed by (p, kd)
            if 0 <= t < TD:
                acc_scr[t] = acc_scr[t] + jnp.dot(
                    w2s[kd], slab, preferred_element_type=jnp.float32)

    # Lower depth halo: skipped at the volume edge (zero padding of the
    # post-BN-ReLU activation makes its contribution exactly zero).
    @pl.when(db > 0)
    def _():
        process_plane(xlo_ref[0, 0], 0)

    for tp in range(TD):
        process_plane(xb_ref[0, tp], tp + 1)

    # Upper depth halo.
    @pl.when(db < n_db - 1)
    def _():
        process_plane(xhi_ref[0, 0], TD + 1)

    # Epilogue per output plane: BN2 bias + ReLU, final 1x1 conv (BN3 scale
    # folded), BN3 bias, residual add, ReLU, lane-dense store.
    for t in range(TD):
        h2 = jnp.maximum(acc_scr[t] + b2, 0.0)
        y = jnp.dot(w3, h2, preferred_element_type=jnp.float32) + b3 + xb_ref[0, t]
        o_ref[0, t] = jnp.maximum(y, 0.0)


# ----------------------------------------------------------------------------
# Wrapper glue
# ----------------------------------------------------------------------------
def _fold_bn(gamma, beta, mean, var):
    scale = gamma / jnp.sqrt(var + EPS)
    bias = beta - mean * scale
    return scale, bias                              # (C,), (C,)


def _make_tap_masks(H, W):
    """(9, 1, H*W) f32 validity masks for the in-plane (dh, dw) shifts."""
    HW = H * W
    h_idx = jnp.arange(HW, dtype=jnp.int32) // W
    w_idx = jnp.arange(HW, dtype=jnp.int32) % W
    rows = []
    for dh in (-1, 0, 1):
        if dh == -1:
            mh = h_idx >= 1
        elif dh == 1:
            mh = h_idx <= H - 2
        else:
            mh = jnp.ones((HW,), bool)
        for dw in (-1, 0, 1):
            if dw == -1:
                mw = w_idx >= 1
            elif dw == 1:
                mw = w_idx <= W - 2
            else:
                mw = jnp.ones((HW,), bool)
            rows.append((mh & mw).astype(jnp.float32))
    return jnp.stack(rows).reshape(9, 1, HW)


def _pick_div(n, target):
    t = max(1, min(target, n))
    while n % t:
        t -= 1
    return t


def residual_layer3d(x_ncdhw, params, d_block=8):
    """Forward pass of ResidualLayer3D. x_ncdhw: (N, Cin, D, H, W) float32."""
    N, Cin, D, H, W = x_ncdhw.shape
    HW = H * W
    R = params["w1"].shape[0]

    TD = _pick_div(D, d_block)
    # v7x has 2 TensorCores: keep at least 2 balanced parallel grid steps.
    if N * (D // TD) < 2 and D > 1:
        TD = _pick_div(D, max(1, D // 2))
    n_db = D // TD

    # glue: NCDHW -> (N, D, C, H*W); spatial in lanes, channels in sublanes
    xr = jnp.transpose(x_ncdhw, (0, 2, 1, 3, 4)).reshape(N, D, Cin, HW)

    s1, b1 = _fold_bn(*params["bn1"])
    s2, b2 = _fold_bn(*params["bn2"])
    s3, b3 = _fold_bn(*params["bn3"])

    # Fold BN scales into the conv weights; biases stay in the kernel.
    w1f = params["w1"] * s1[:, None]                          # (R, Cin)
    w3f = params["w3"] * s3[:, None]                          # (Cin, R)
    w2 = params["w2_dhwio"] * s2[None, None, None, None, :]   # scale O axis
    # (kd,kh,kw,I,O) -> (kd, O, kh, kw, I) -> (3, R, 9R) bf16: one weight slab
    # per depth tap, rows ordered to match the in-kernel slab stacking.
    w2kd = jnp.transpose(w2, (0, 4, 1, 2, 3)).reshape(3, R, 9 * R)
    w2kd = w2kd.astype(jnp.bfloat16)

    b1c, b2c, b3c = b1[:, None], b2[:, None], b3[:, None]
    mask9 = _make_tap_masks(H, W)

    kern = functools.partial(_fused_residual_kernel, TD=TD, R=R, W=W, HW=HW)

    # Explicit VMEM budget: double-buffered x / halos / out + accumulators.
    vmem_need = (2 * 2 * TD * Cin * HW * 4       # xb + out (double-buffered)
                 + 2 * 2 * 2 * Cin * HW * 4      # xlo + xhi halo planes
                 + TD * R * HW * 4               # acc scratch
                 + 9 * HW * 4                    # masks
                 + 3 * R * 9 * R * 2 + 2 * R * Cin * 4 + (2 * R + Cin) * 4)
    vmem_bytes = int(min(max(4 * vmem_need, 16 << 20), 48 << 20))

    out = pl.pallas_call(
        kern,
        out_shape=jax.ShapeDtypeStruct((N, D, Cin, HW), jnp.float32),
        grid=(N, n_db),
        in_specs=[
            # current D-block of x (also the residual)
            pl.BlockSpec((1, TD, Cin, HW), lambda n, db: (n, db, 0, 0)),
            # lower / upper depth-halo planes (clamped; skipped in-kernel at edges)
            pl.BlockSpec((1, 1, Cin, HW),
                         lambda n, db: (n, jnp.maximum(db * TD - 1, 0), 0, 0)),
            pl.BlockSpec((1, 1, Cin, HW),
                         lambda n, db: (n, jnp.minimum(db * TD + TD, D - 1), 0, 0)),
            # in-plane boundary masks + folded weights / biases (resident)
            pl.BlockSpec((9, 1, HW), lambda n, db: (0, 0, 0)),
            pl.BlockSpec((R, Cin), lambda n, db: (0, 0)),
            pl.BlockSpec((3, R, 9 * R), lambda n, db: (0, 0, 0)),
            pl.BlockSpec((Cin, R), lambda n, db: (0, 0)),
            pl.BlockSpec((R, 1), lambda n, db: (0, 0)),
            pl.BlockSpec((R, 1), lambda n, db: (0, 0)),
            pl.BlockSpec((Cin, 1), lambda n, db: (0, 0)),
        ],
        out_specs=pl.BlockSpec((1, TD, Cin, HW), lambda n, db: (n, db, 0, 0)),
        scratch_shapes=[pltpu.VMEM((TD, R, HW), jnp.float32)],
        compiler_params=pltpu.CompilerParams(
            dimension_semantics=("parallel", "parallel"),
            vmem_limit_bytes=vmem_bytes),
    )(xr, xr, xr, mask9, w1f, w2kd, w3f, b1c, b2c, b3c)

    return jnp.transpose(out.reshape(N, D, Cin, H, W), (0, 2, 1, 3, 4))


# ----------------------------------------------------------------------------
# Parameter setup
# ----------------------------------------------------------------------------
def init_params(key, in_dim, res_dim):
    ks = jax.random.split(key, 6)

    def bn_params(k, c):
        k1, k2, k3, k4 = jax.random.split(k, 4)
        gamma = 1.0 + 0.1 * jax.random.normal(k1, (c,), jnp.float32)
        beta = 0.1 * jax.random.normal(k2, (c,), jnp.float32)
        mean = 0.1 * jax.random.normal(k3, (c,), jnp.float32)
        var = jnp.abs(jax.random.normal(k4, (c,), jnp.float32)) + 0.5
        return (gamma, beta, mean, var)

    # channels-last equivalents of PyTorch Conv3d weights (no bias)
    w1 = 0.1 * jax.random.normal(ks[0], (res_dim, in_dim), jnp.float32)            # (O, I) 1x1x1
    w2 = 0.1 * jax.random.normal(ks[1], (3, 3, 3, res_dim, res_dim), jnp.float32)  # DHWIO
    w3 = 0.1 * jax.random.normal(ks[2], (in_dim, res_dim), jnp.float32)            # (O, I) 1x1x1
    return {
        "w1": w1, "w2_dhwio": w2, "w3": w3,
        "bn1": bn_params(ks[3], res_dim),
        "bn2": bn_params(ks[4], res_dim),
        "bn3": bn_params(ks[5], in_dim),
    }


# ----------------------------------------------------------------------------
# Pure-JAX reference for correctness check
# ----------------------------------------------------------------------------
def reference(x_ncdhw, params):
    xc = jnp.transpose(x_ncdhw, (0, 2, 3, 4, 1))  # NDHWC

    def bn(y, p):
        gamma, beta, mean, var = p
        return (y - mean) / jnp.sqrt(var + EPS) * gamma + beta

    h = jnp.einsum("ndhwc,rc->ndhwr", xc, params["w1"])
    h = jax.nn.relu(bn(h, params["bn1"]))
    h = lax.conv_general_dilated(
        h, params["w2_dhwio"], window_strides=(1, 1, 1), padding="SAME",
        dimension_numbers=("NDHWC", "DHWIO", "NDHWC"))
    h = jax.nn.relu(bn(h, params["bn2"]))
    h = jnp.einsum("ndhwr,cr->ndhwc", h, params["w3"])
    h = bn(h, params["bn3"])
    out = jax.nn.relu(xc + h)
    return jnp.transpose(out, (0, 4, 1, 2, 3))


if __name__ == "__main__":
    key = jax.random.PRNGKey(0)
    k_x, k_p = jax.random.split(key)

    in_dim, res_dim = 4, 8
    N, D, H, W = 2, 8, 16, 16          # H*W = 256 -> lane-dense blocks

    x = jax.random.normal(k_x, (N, in_dim, D, H, W), jnp.float32)
    params = init_params(k_p, in_dim, res_dim)

    out = jax.block_until_ready(jax.jit(residual_layer3d)(x, params))
    ref = jax.block_until_ready(reference(x, params))

    assert out.shape == x.shape
    err = float(jnp.max(jnp.abs(out - ref)))
    # bf16 MXU operands on the 3x3x3 stage -> loosened tolerance (f32 accum kept)
    assert jnp.allclose(out, ref, atol=2e-2, rtol=2e-2), err

    print("KERNEL_OK")
</pallas_src>

<mosaic_0001>
module attributes {stable_mosaic.version = 11 : i64} {
  func.func @_fused_residual_kernel(%arg0: i32, %arg1: i32, %arg2: memref<1x8x4x256xf32, #tpu.memory_space<vmem>>, %arg3: memref<1x1x4x256xf32, #tpu.memory_space<vmem>>, %arg4: memref<1x1x4x256xf32, #tpu.memory_space<vmem>>, %arg5: memref<9x1x256xf32, #tpu.memory_space<vmem>>, %arg6: memref<8x4xf32, #tpu.memory_space<vmem>>, %arg7: memref<3x8x72xbf16, #tpu.memory_space<vmem>>, %arg8: memref<4x8xf32, #tpu.memory_space<vmem>>, %arg9: memref<8x1xf32, #tpu.memory_space<vmem>>, %arg10: memref<8x1xf32, #tpu.memory_space<vmem>>, %arg11: memref<4x1xf32, #tpu.memory_space<vmem>>, %arg12: memref<1x8x4x256xf32, #tpu.memory_space<vmem>>, %arg13: memref<8x8x256xf32, #tpu.memory_space<vmem>>) attributes {dimension_semantics = [#tpu.dimension_semantics<parallel>, #tpu.dimension_semantics<parallel>], iteration_bounds = array<i64: 2, 1>, scalar_prefetch = 0 : i64, scratch_operands = 1 : i64, tpu.core_type = #tpu.core_type<tc>, window_params = [{transform_indices = @transform_0, window_bounds = array<i64: 1, 8, 4, 256>}, {transform_indices = @transform_1, window_bounds = array<i64: 1, 1, 4, 256>}, {transform_indices = @transform_2, window_bounds = array<i64: 1, 1, 4, 256>}, {pipeline_mode = #tpu.pipeline_mode<synchronous>, transform_indices = @transform_3, window_bounds = array<i64: 9, 1, 256>}, {pipeline_mode = #tpu.pipeline_mode<synchronous>, transform_indices = @transform_4, window_bounds = array<i64: 8, 4>}, {pipeline_mode = #tpu.pipeline_mode<synchronous>, transform_indices = @transform_5, window_bounds = array<i64: 3, 8, 72>}, {pipeline_mode = #tpu.pipeline_mode<synchronous>, transform_indices = @transform_6, window_bounds = array<i64: 4, 8>}, {pipeline_mode = #tpu.pipeline_mode<synchronous>, transform_indices = @transform_7, window_bounds = array<i64: 8, 1>}, {pipeline_mode = #tpu.pipeline_mode<synchronous>, transform_indices = @transform_8, window_bounds = array<i64: 8, 1>}, {pipeline_mode = #tpu.pipeline_mode<synchronous>, transform_indices = @transform_9, window_bounds = array<i64: 4, 1>}, {transform_indices = @transform_10, window_bounds = array<i64: 1, 8, 4, 256>}]} {
    %c0 = arith.constant 0 : index
    %c0_0 = arith.constant 0 : index
    %0 = vector.load %arg6[%c0, %c0_0] : memref<8x4xf32, #tpu.memory_space<vmem>>, vector<8x4xf32>
    %c0_1 = arith.constant 0 : index
    %c0_2 = arith.constant 0 : index
    %1 = vector.load %arg8[%c0_1, %c0_2] : memref<4x8xf32, #tpu.memory_space<vmem>>, vector<4x8xf32>
    %c0_3 = arith.constant 0 : index
    %c0_4 = arith.constant 0 : index
    %2 = vector.load %arg9[%c0_3, %c0_4] : memref<8x1xf32, #tpu.memory_space<vmem>>, vector<8x1xf32>
    %c0_5 = arith.constant 0 : index
    %c0_6 = arith.constant 0 : index
    %3 = vector.load %arg10[%c0_5, %c0_6] : memref<8x1xf32, #tpu.memory_space<vmem>>, vector<8x1xf32>
    %c0_7 = arith.constant 0 : index
    %c0_8 = arith.constant 0 : index
    %4 = vector.load %arg11[%c0_7, %c0_8] : memref<4x1xf32, #tpu.memory_space<vmem>>, vector<4x1xf32>
    %c0_9 = arith.constant 0 : index
    %c0_10 = arith.constant 0 : index
    %c0_11 = arith.constant 0 : index
    %5 = vector.load %arg7[%c0_9, %c0_10, %c0_11] : memref<3x8x72xbf16, #tpu.memory_space<vmem>>, vector<1x8x72xbf16>
    %6 = vector.shape_cast %5 : vector<1x8x72xbf16> to vector<8x72xbf16>
    %c1 = arith.constant 1 : index
    %c0_12 = arith.constant 0 : index
    %c0_13 = arith.constant 0 : index
    %7 = vector.load %arg7[%c1, %c0_12, %c0_13] : memref<3x8x72xbf16, #tpu.memory_space<vmem>>, vector<1x8x72xbf16>
    %8 = vector.shape_cast %7 : vector<1x8x72xbf16> to vector<8x72xbf16>
    %c2 = arith.constant 2 : index
    %c0_14 = arith.constant 0 : index
    %c0_15 = arith.constant 0 : index
    %9 = vector.load %arg7[%c2, %c0_14, %c0_15] : memref<3x8x72xbf16, #tpu.memory_space<vmem>>, vector<1x8x72xbf16>
    %10 = vector.shape_cast %9 : vector<1x8x72xbf16> to vector<8x72xbf16>
    %cst = arith.constant 0.000000e+00 : f32
    %11 = vector.broadcast %cst : f32 to vector<8x8x256xf32>
    %c0_16 = arith.constant 0 : index
    %c0_17 = arith.constant 0 : index
    %c0_18 = arith.constant 0 : index
    %12 = vector.load %arg13[%c0_16, %c0_17, %c0_18] : memref<8x8x256xf32, #tpu.memory_space<vmem>>, vector<8x8x256xf32>
    tpu.vector_store %arg13[%c0_16, %c0_17, %c0_18], %11 {strides = array<i32>} : memref<8x8x256xf32, #tpu.memory_space<vmem>>, vector<8x8x256xf32>,
    %c0_i32 = arith.constant 0 : i32
    %13 = arith.cmpi sgt, %arg1, %c0_i32 : i32
    %14 = arith.extui %13 : i1 to i32
    %c0_i32_19 = arith.constant 0 : i32
    %15 = arith.cmpi ne, %14, %c0_i32_19 : i32
    scf.if %15 {
      %c0_578 = arith.constant 0 : index
      %c0_579 = arith.constant 0 : index
      %c0_580 = arith.constant 0 : index
      %c0_581 = arith.constant 0 : index
      %701 = vector.load %arg3[%c0_578, %c0_579, %c0_580, %c0_581] : memref<1x1x4x256xf32, #tpu.memory_space<vmem>>, vector<1x1x4x256xf32>
      %702 = vector.shape_cast %701 : vector<1x1x4x256xf32> to vector<4x256xf32>
      %cst_582 = arith.constant dense<0.000000e+00> : vector<8x256xf32>
      %703 = tpu.matmul %0, %702, %cst_582 {dimension_numbers = #tpu.dot_dimension_numbers<[1], [0], [0], [1], [0, 0, 1, 1], [], []>} : vector<8x4xf32>, vector<4x256xf32>, vector<8x256xf32> -> vector<8x256xf32>
      %704 = vector.broadcast %2 : vector<8x1xf32> to vector<8x256xf32>
      %705 = arith.addf %703, %704 : vector<8x256xf32>
      %cst_583 = arith.constant 0.000000e+00 : f32
      %706 = vector.broadcast %cst_583 : f32 to vector<8x256xf32>
      %707 = arith.maximumf %705, %706 : vector<8x256xf32>
      %c17_i32_584 = arith.constant 17 : i32
      %708 = tpu.dynamic_rotate %707 by %c17_i32_584 dim 1 : vector<8x256xf32>, i32 -> vector<8x256xf32>
      %c0_585 = arith.constant 0 : index
      %c0_586 = arith.constant 0 : index
      %c0_587 = arith.constant 0 : index
      %709 = vector.load %arg5[%c0_585, %c0_586, %c0_587] : memref<9x1x256xf32, #tpu.memory_space<vmem>>, vector<1x1x256xf32>
      %710 = vector.shape_cast %709 : vector<1x1x256xf32> to vector<1x256xf32>
      %711 = vector.broadcast %710 : vector<1x256xf32> to vector<8x256xf32>
      %712 = arith.mulf %708, %711 : vector<8x256xf32>
      %c16_i32_588 = arith.constant 16 : i32
      %713 = tpu.dynamic_rotate %707 by %c16_i32_588 dim 1 : vector<8x256xf32>, i32 -> vector<8x256xf32>
      %c1_589 = arith.constant 1 : index
      %c0_590 = arith.constant 0 : index
      %c0_591 = arith.constant 0 : index
      %714 = vector.load %arg5[%c1_589, %c0_590, %c0_591] : memref<9x1x256xf32, #tpu.memory_space<vmem>>, vector<1x1x256xf32>
      %715 = vector.shape_cast %714 : vector<1x1x256xf32> to vector<1x256xf32>
      %716 = vector.broadcast %715 : vector<1x256xf32> to vector<8x256xf32>
      %717 = arith.mulf %713, %716 : vector<8x256xf32>
      %c15_i32_592 = arith.constant 15 : i32
      %718 = tpu.dynamic_rotate %707 by %c15_i32_592 dim 1 : vector<8x256xf32>, i32 -> vector<8x256xf32>
      %c2_593 = arith.constant 2 : index
      %c0_594 = arith.constant 0 : index
      %c0_595 = arith.constant 0 : index
      %719 = vector.load %arg5[%c2_593, %c0_594, %c0_595] : memref<9x1x256xf32, #tpu.memory_space<vmem>>, vector<1x1x256xf32>
      %720 = vector.shape_cast %719 : vector<1x1x256xf32> to vector<1x256xf32>
      %721 = vector.broadcast %720 : vector<1x256xf32> to vector<8x256xf32>
      %722 = arith.mulf %718, %721 : vector<8x256xf32>
      %c1_i32_596 = arith.constant 1 : i32
      %723 = tpu.dynamic_rotate %707 by %c1_i32_596 dim 1 : vector<8x256xf32>, i32 -> vector<8x256xf32>
      %c3_597 = arith.constant 3 : index
      %c0_598 = arith.constant 0 : index
      %c0_599 = arith.constant 0 : index
      %724 = vector.load %arg5[%c3_597, %c0_598, %c0_599] : memref<9x1x256xf32, #tpu.memory_space<vmem>>, vector<1x1x256xf32>
      %725 = vector.shape_cast %724 : vector<1x1x256xf32> to vector<1x256xf32>
      %726 = vector.broadcast %725 : vector<1x256xf32> to vector<8x256xf32>
      %727 = arith.mulf %723, %726 : vector<8x256xf32>
      %c255_i32_600 = arith.constant 255 : i32
      %728 = tpu.dynamic_rotate %707 by %c255_i32_600 dim 1 : vector<8x256xf32>, i32 -> vector<8x256xf32>
      %c5_601 = arith.constant 5 : index
      %c0_602 = arith.constant 0 : index
      %c0_603 = arith.constant 0 : index
      %729 = vector.load %arg5[%c5_601, %c0_602, %c0_603] : memref<9x1x256xf32, #tpu.memory_space<vmem>>, vector<1x1x256xf32>
      %730 = vector.shape_cast %729 : vector<1x1x256xf32> to vector<1x256xf32>
      %731 = vector.broadcast %730 : vector<1x256xf32> to vector<8x256xf32>
      %732 = arith.mulf %728, %731 : vector<8x256xf32>
      %c241_i32_604 = arith.constant 241 : i32
      %733 = tpu.dynamic_rotate %707 by %c241_i32_604 dim 1 : vector<8x256xf32>, i32 -> vector<8x256xf32>
      %c6_605 = arith.constant 6 : index
      %c0_606 = arith.constant 0 : index
      %c0_607 = arith.constant 0 : index
      %734 = vector.load %arg5[%c6_605, %c0_606, %c0_607] : memref<9x1x256xf32, #tpu.memory_space<vmem>>, vector<1x1x256xf32>
      %735 = vector.shape_cast %734 : vector<1x1x256xf32> to vector<1x256xf32>
      %736 = vector.broadcast %735 : vector<1x256xf32> to vector<8x256xf32>
      %737 = arith.mulf %733, %736 : vector<8x256xf32>
      %c240_i32_608 = arith.constant 240 : i32
      %738 = tpu.dynamic_rotate %707 by %c240_i32_608 dim 1 : vector<8x256xf32>, i32 -> vector<8x256xf32>
      %c7_609 = arith.constant 7 : index
      %c0_610 = arith.constant 0 : index
      %c0_611 = arith.constant 0 : index
      %739 = vector.load %arg5[%c7_609, %c0_610, %c0_611] : memref<9x1x256xf32, #tpu.memory_space<vmem>>, vector<1x1x256xf32>
      %740 = vector.shape_cast %739 : vector<1x1x256xf32> to vector<1x256xf32>
      %741 = vector.broadcast %740 : vector<1x256xf32> to vector<8x256xf32>
      %742 = arith.mulf %738, %741 : vector<8x256xf32>
      %c239_i32_612 = arith.constant 239 : i32
      %743 = tpu.dynamic_rotate %707 by %c239_i32_612 dim 1 : vector<8x256xf32>, i32 -> vector<8x256xf32>
      %c8_613 = arith.constant 8 : index
      %c0_614 = arith.constant 0 : index
      %c0_615 = arith.constant 0 : index
      %744 = vector.load %arg5[%c8_613, %c0_614, %c0_615] : memref<9x1x256xf32, #tpu.memory_space<vmem>>, vector<1x1x256xf32>
      %745 = vector.shape_cast %744 : vector<1x1x256xf32> to vector<1x256xf32>
      %746 = vector.broadcast %745 : vector<1x256xf32> to vector<8x256xf32>
      %747 = arith.mulf %743, %746 : vector<8x256xf32>
      %748 = tpu.concatenate %712, %717, %722, %727, %707, %732, %737, %742, %747 in 0 : vector<8x256xf32>, vector<8x256xf32>, vector<8x256xf32>, vector<8x256xf32>, vector<8x256xf32>, vector<8x256xf32>, vector<8x256xf32>, vector<8x256xf32>, vector<8x256xf32> -> vector<72x256xf32>
      %749 = arith.truncf %748 : vector<72x256xf32> to vector<72x256xbf16>
      %c0_616 = arith.constant 0 : index
      %c0_617 = arith.constant 0 : index
      %c0_618 = arith.constant 0 : index
      %750 = vector.load %arg13[%c0_616, %c0_617, %c0_618] : memref<8x8x256xf32, #tpu.memory_space<vmem>>, vector<1x8x256xf32>
      %751 = vector.shape_cast %750 : vector<1x8x256xf32> to vector<8x256xf32>
      %cst_619 = arith.constant dense<0.000000e+00> : vector<8x256xf32>
      %752 = tpu.matmul %6, %749, %cst_619 {dimension_numbers = #tpu.dot_dimension_numbers<[1], [0], [0], [1], [0, 0, 1, 1], [], []>} : vector<8x72xbf16>, vector<72x256xbf16>, vector<8x256xf32> -> vector<8x256xf32>
      %753 = arith.addf %751, %752 : vector<8x256xf32>
      %c0_620 = arith.constant 0 : index
      %c0_621 = arith.constant 0 : index
      %c0_622 = arith.constant 0 : index
      %754 = vector.load %arg13[%c0_620, %c0_621, %c0_622] : memref<8x8x256xf32, #tpu.memory_space<vmem>>, vector<1x8x256xf32>
      %755 = vector.shape_cast %754 : vector<1x8x256xf32> to vector<8x256xf32>
      %756 = vector.shape_cast %753 : vector<8x256xf32> to vector<1x8x256xf32>
      tpu.vector_store %arg13[%c0_620, %c0_621, %c0_622], %756 {strides = array<i32>} : memref<8x8x256xf32, #tpu.memory_space<vmem>>, vector<1x8x256xf32>,
    } else {
    }
    %c0_20 = arith.constant 0 : index
    %c0_21 = arith.constant 0 : index
    %c0_22 = arith.constant 0 : index
    %c0_23 = arith.constant 0 : index
    %16 = vector.load %arg2[%c0_20, %c0_21, %c0_22, %c0_23] : memref<1x8x4x256xf32, #tpu.memory_space<vmem>>, vector<1x1x4x256xf32>
    %17 = vector.shape_cast %16 : vector<1x1x4x256xf32> to vector<4x256xf32>
    %cst_24 = arith.constant dense<0.000000e+00> : vector<8x256xf32>
    %18 = tpu.matmul %0, %17, %cst_24 {dimension_numbers = #tpu.dot_dimension_numbers<[1], [0], [0], [1], [0, 0, 1, 1], [], []>} : vector<8x4xf32>, vector<4x256xf32>, vector<8x256xf32> -> vector<8x256xf32>
    %19 = vector.broadcast %2 : vector<8x1xf32> to vector<8x256xf32>
    %20 = arith.addf %18, %19 : vector<8x256xf32>
    %cst_25 = arith.constant 0.000000e+00 : f32
    %21 = vector.broadcast %cst_25 : f32 to vector<8x256xf32>
    %22 = arith.maximumf %20, %21 : vector<8x256xf32>
    %c17_i32 = arith.constant 17 : i32
    %23 = tpu.dynamic_rotate %22 by %c17_i32 dim 1 : vector<8x256xf32>, i32 -> vector<8x256xf32>
    %c0_26 = arith.constant 0 : index
    %c0_27 = arith.constant 0 : index
    %c0_28 = arith.constant 0 : index
    %24 = vector.load %arg5[%c0_26, %c0_27, %c0_28] : memref<9x1x256xf32, #tpu.memory_space<vmem>>, vector<1x1x256xf32>
    %25 = vector.shape_cast %24 : vector<1x1x256xf32> to vector<1x256xf32>
    %26 = vector.broadcast %25 : vector<1x256xf32> to vector<8x256xf32>
    %27 = arith.mulf %23, %26 : vector<8x256xf32>
    %c16_i32 = arith.constant 16 : i32
    %28 = tpu.dynamic_rotate %22 by %c16_i32 dim 1 : vector<8x256xf32>, i32 -> vector<8x256xf32>
    %c1_29 = arith.constant 1 : index
    %c0_30 = arith.constant 0 : index
    %c0_31 = arith.constant 0 : index
    %29 = vector.load %arg5[%c1_29, %c0_30, %c0_31] : memref<9x1x256xf32, #tpu.memory_space<vmem>>, vector<1x1x256xf32>
    %30 = vector.shape_cast %29 : vector<1x1x256xf32> to vector<1x256xf32>
    %31 = vector.broadcast %30 : vector<1x256xf32> to vector<8x256xf32>
    %32 = arith.mulf %28, %31 : vector<8x256xf32>
    %c15_i32 = arith.constant 15 : i32
    %33 = tpu.dynamic_rotate %22 by %c15_i32 dim 1 : vector<8x256xf32>, i32 -> vector<8x256xf32>
    %c2_32 = arith.constant 2 : index
    %c0_33 = arith.constant 0 : index
    %c0_34 = arith.constant 0 : index
    %34 = vector.load %arg5[%c2_32, %c0_33, %c0_34] : memref<9x1x256xf32, #tpu.memory_space<vmem>>, vector<1x1x256xf32>
    %35 = vector.shape_cast %34 : vector<1x1x256xf32> to vector<1x256xf32>
    %36 = vector.broadcast %35 : vector<1x256xf32> to vector<8x256xf32>
    %37 = arith.mulf %33, %36 : vector<8x256xf32>
    %c1_i32 = arith.constant 1 : i32
    %38 = tpu.dynamic_rotate %22 by %c1_i32 dim 1 : vector<8x256xf32>, i32 -> vector<8x256xf32>
    %c3 = arith.constant 3 : index
    %c0_35 = arith.constant 0 : index
    %c0_36 = arith.constant 0 : index
    %39 = vector.load %arg5[%c3, %c0_35, %c0_36] : memref<9x1x256xf32, #tpu.memory_space<vmem>>, vector<1x1x256xf32>
    %40 = vector.shape_cast %39 : vector<1x1x256xf32> to vector<1x256xf32>
    %41 = vector.broadcast %40 : vector<1x256xf32> to vector<8x256xf32>
    %42 = arith.mulf %38, %41 : vector<8x256xf32>
    %c255_i32 = arith.constant 255 : i32
    %43 = tpu.dynamic_rotate %22 by %c255_i32 dim 1 : vector<8x256xf32>, i32 -> vector<8x256xf32>
    %c5 = arith.constant 5 : index
    %c0_37 = arith.constant 0 : index
    %c0_38 = arith.constant 0 : index
    %44 = vector.load %arg5[%c5, %c0_37, %c0_38] : memref<9x1x256xf32, #tpu.memory_space<vmem>>, vector<1x1x256xf32>
    %45 = vector.shape_cast %44 : vector<1x1x256xf32> to vector<1x256xf32>
    %46 = vector.broadcast %45 : vector<1x256xf32> to vector<8x256xf32>
    %47 = arith.mulf %43, %46 : vector<8x256xf32>
    %c241_i32 = arith.constant 241 : i32
    %48 = tpu.dynamic_rotate %22 by %c241_i32 dim 1 : vector<8x256xf32>, i32 -> vector<8x256xf32>
    %c6 = arith.constant 6 : index
    %c0_39 = arith.constant 0 : index
    %c0_40 = arith.constant 0 : index
    %49 = vector.load %arg5[%c6, %c0_39, %c0_40] : memref<9x1x256xf32, #tpu.memory_space<vmem>>, vector<1x1x256xf32>
    %50 = vector.shape_cast %49 : vector<1x1x256xf32> to vector<1x256xf32>
    %51 = vector.broadcast %50 : vector<1x256xf32> to vector<8x256xf32>
    %52 = arith.mulf %48, %51 : vector<8x256xf32>
    %c240_i32 = arith.constant 240 : i32
    %53 = tpu.dynamic_rotate %22 by %c240_i32 dim 1 : vector<8x256xf32>, i32 -> vector<8x256xf32>
    %c7 = arith.constant 7 : index
    %c0_41 = arith.constant 0 : index
    %c0_42 = arith.constant 0 : index
    %54 = vector.load %arg5[%c7, %c0_41, %c0_42] : memref<9x1x256xf32, #tpu.memory_space<vmem>>, vector<1x1x256xf32>
    %55 = vector.shape_cast %54 : vector<1x1x256xf32> to vector<1x256xf32>
    %56 = vector.broadcast %55 : vector<1x256xf32> to vector<8x256xf32>
    %57 = arith.mulf %53, %56 : vector<8x256xf32>
    %c239_i32 = arith.constant 239 : i32
    %58 = tpu.dynamic_rotate %22 by %c239_i32 dim 1 : vector<8x256xf32>, i32 -> vector<8x256xf32>
    %c8 = arith.constant 8 : index
    %c0_43 = arith.constant 0 : index
    %c0_44 = arith.constant 0 : index
    %59 = vector.load %arg5[%c8, %c0_43, %c0_44] : memref<9x1x256xf32, #tpu.memory_space<vmem>>, vector<1x1x256xf32>
    %60 = vector.shape_cast %59 : vector<1x1x256xf32> to vector<1x256xf32>
    %61 = vector.broadcast %60 : vector<1x256xf32> to vector<8x256xf32>
    %62 = arith.mulf %58, %61 : vector<8x256xf32>
    %63 = tpu.concatenate %27, %32, %37, %42, %22, %47, %52, %57, %62 in 0 : vector<8x256xf32>, vector<8x256xf32>, vector<8x256xf32>, vector<8x256xf32>, vector<8x256xf32>, vector<8x256xf32>, vector<8x256xf32>, vector<8x256xf32>, vector<8x256xf32> -> vector<72x256xf32>
    %64 = arith.truncf %63 : vector<72x256xf32> to vector<72x256xbf16>
    %c1_45 = arith.constant 1 : index
    %c0_46 = arith.constant 0 : index
    %c0_47 = arith.constant 0 : index
    %65 = vector.load %arg13[%c1_45, %c0_46, %c0_47] : memref<8x8x256xf32, #tpu.memory_space<vmem>>, vector<1x8x256xf32>
    %66 = vector.shape_cast %65 : vector<1x8x256xf32> to vector<8x256xf32>
    %cst_48 = arith.constant dense<0.000000e+00> : vector<8x256xf32>
    %67 = tpu.matmul %6, %64, %cst_48 {dimension_numbers = #tpu.dot_dimension_numbers<[1], [0], [0], [1], [0, 0, 1, 1], [], []>} : vector<8x72xbf16>, vector<72x256xbf16>, vector<8x256xf32> -> vector<8x256xf32>
    %68 = arith.addf %66, %67 : vector<8x256xf32>
    %c1_49 = arith.constant 1 : index
    %c0_50 = arith.constant 0 : index
    %c0_51 = arith.constant 0 : index
    %69 = vector.load %arg13[%c1_49, %c0_50, %c0_51] : memref<8x8x256xf32, #tpu.memory_space<vmem>>, vector<1x8x256xf32>
    %70 = vector.shape_cast %69 : vector<1x8x256xf32> to vector<8x256xf32>
    %71 = vector.shape_cast %68 : vector<8x256xf32> to vector<1x8x256xf32>
    tpu.vector_store %arg13[%c1_49, %c0_50, %c0_51], %71 {strides = array<i32>} : memref<8x8x256xf32, #tpu.memory_space<vmem>>, vector<1x8x256xf32>,
    %c0_52 = arith.constant 0 : index
    %c0_53 = arith.constant 0 : index
    %c0_54 = arith.constant 0 : index
    %72 = vector.load %arg13[%c0_52, %c0_53, %c0_54] : memref<8x8x256xf32, #tpu.memory_space<vmem>>, vector<1x8x256xf32>
    %73 = vector.shape_cast %72 : vector<1x8x256xf32> to vector<8x256xf32>
    %cst_55 = arith.constant dense<0.000000e+00> : vector<8x256xf32>
    %74 = tpu.matmul %8, %64, %cst_55 {dimension_numbers = #tpu.dot_dimension_numbers<[1], [0], [0], [1], [0, 0, 1, 1], [], []>} : vector<8x72xbf16>, vector<72x256xbf16>, vector<8x256xf32> -> vector<8x256xf32>
    %75 = arith.addf %73, %74 : vector<8x256xf32>
    %c0_56 = arith.constant 0 : index
    %c0_57 = arith.constant 0 : index
    %c0_58 = arith.constant 0 : index
    %76 = vector.load %arg13[%c0_56, %c0_57, %c0_58] : memref<8x8x256xf32, #tpu.memory_space<vmem>>, vector<1x8x256xf32>
    %77 = vector.shape_cast %76 : vector<1x8x256xf32> to vector<8x256xf32>
    %78 = vector.shape_cast %75 : vector<8x256xf32> to vector<1x8x256xf32>
    tpu.vector_store %arg13[%c0_56, %c0_57, %c0_58], %78 {strides = array<i32>} : memref<8x8x256xf32, #tpu.memory_space<vmem>>, vector<1x8x256xf32>,
    %c0_59 = arith.constant 0 : index
    %c1_60 = arith.constant 1 : index
    %c0_61 = arith.constant 0 : index
    %c0_62 = arith.constant 0 : index
    %79 = vector.load %arg2[%c0_59, %c1_60, %c0_61, %c0_62] : memref<1x8x4x256xf32, #tpu.memory_space<vmem>>, vector<1x1x4x256xf32>
    %80 = vector.shape_cast %79 : vector<1x1x4x256xf32> to vector<4x256xf32>
    %cst_63 = arith.constant dense<0.000000e+00> : vector<8x256xf32>
    %81 = tpu.matmul %0, %80, %cst_63 {dimension_numbers = #tpu.dot_dimension_numbers<[1], [0], [0], [1], [0, 0, 1, 1], [], []>} : vector<8x4xf32>, vector<4x256xf32>, vector<8x256xf32> -> vector<8x256xf32>
    %82 = vector.broadcast %2 : vector<8x1xf32> to vector<8x256xf32>
    %83 = arith.addf %81, %82 : vector<8x256xf32>
    %cst_64 = arith.constant 0.000000e+00 : f32
    %84 = vector.broadcast %cst_64 : f32 to vector<8x256xf32>
    %85 = arith.maximumf %83, %84 : vector<8x256xf32>
    %c17_i32_65 = arith.constant 17 : i32
    %86 = tpu.dynamic_rotate %85 by %c17_i32_65 dim 1 : vector<8x256xf32>, i32 -> vector<8x256xf32>
    %c0_66 = arith.constant 0 : index
    %c0_67 = arith.constant 0 : index
    %c0_68 = arith.constant 0 : index
    %87 = vector.load %arg5[%c0_66, %c0_67, %c0_68] : memref<9x1x256xf32, #tpu.memory_space<vmem>>, vector<1x1x256xf32>
    %88 = vector.shape_cast %87 : vector<1x1x256xf32> to vector<1x256xf32>
    %89 = vector.broadcast %88 : vector<1x256xf32> to vector<8x256xf32>
    %90 = arith.mulf %86, %89 : vector<8x256xf32>
    %c16_i32_69 = arith.constant 16 : i32
    %91 = tpu.dynamic_rotate %85 by %c16_i32_69 dim 1 : vector<8x256xf32>, i32 -> vector<8x256xf32>
    %c1_70 = arith.constant 1 : index
    %c0_71 = arith.constant 0 : index
    %c0_72 = arith.constant 0 : index
    %92 = vector.load %arg5[%c1_70, %c0_71, %c0_72] : memref<9x1x256xf32, #tpu.memory_space<vmem>>, vector<1x1x256xf32>
    %93 = vector.shape_cast %92 : vector<1x1x256xf32> to vector<1x256xf32>
    %94 = vector.broadcast %93 : vector<1x256xf32> to vector<8x256xf32>
    %95 = arith.mulf %91, %94 : vector<8x256xf32>
    %c15_i32_73 = arith.constant 15 : i32
    %96 = tpu.dynamic_rotate %85 by %c15_i32_73 dim 1 : vector<8x256xf32>, i32 -> vector<8x256xf32>
    %c2_74 = arith.constant 2 : index
    %c0_75 = arith.constant 0 : index
    %c0_76 = arith.constant 0 : index
    %97 = vector.load %arg5[%c2_74, %c0_75, %c0_76] : memref<9x1x256xf32, #tpu.memory_space<vmem>>, vector<1x1x256xf32>
    %98 = vector.shape_cast %97 : vector<1x1x256xf32> to vector<1x256xf32>
    %99 = vector.broadcast %98 : vector<1x256xf32> to vector<8x256xf32>
    %100 = arith.mulf %96, %99 : vector<8x256xf32>
    %c1_i32_77 = arith.constant 1 : i32
    %101 = tpu.dynamic_rotate %85 by %c1_i32_77 dim 1 : vector<8x256xf32>, i32 -> vector<8x256xf32>
    %c3_78 = arith.constant 3 : index
    %c0_79 = arith.constant 0 : index
    %c0_80 = arith.constant 0 : index
    %102 = vector.load %arg5[%c3_78, %c0_79, %c0_80] : memref<9x1x256xf32, #tpu.memory_space<vmem>>, vector<1x1x256xf32>
    %103 = vector.shape_cast %102 : vector<1x1x256xf32> to vector<1x256xf32>
    %104 = vector.broadcast %103 : vector<1x256xf32> to vector<8x256xf32>
    %105 = arith.mulf %101, %104 : vector<8x256xf32>
    %c255_i32_81 = arith.constant 255 : i32
    %106 = tpu.dynamic_rotate %85 by %c255_i32_81 dim 1 : vector<8x256xf32>, i32 -> vector<8x256xf32>
    %c5_82 = arith.constant 5 : index
    %c0_83 = arith.constant 0 : index
    %c0_84 = arith.constant 0 : index
    %107 = vector.load %arg5[%c5_82, %c0_83, %c0_84] : memref<9x1x256xf32, #tpu.memory_space<vmem>>, vector<1x1x256xf32>
    %108 = vector.shape_cast %107 : vector<1x1x256xf32> to vector<1x256xf32>
    %109 = vector.broadcast %108 : vector<1x256xf32> to vector<8x256xf32>
    %110 = arith.mulf %106, %109 : vector<8x256xf32>
    %c241_i32_85 = arith.constant 241 : i32
    %111 = tpu.dynamic_rotate %85 by %c241_i32_85 dim 1 : vector<8x256xf32>, i32 -> vector<8x256xf32>
    %c6_86 = arith.constant 6 : index
    %c0_87 = arith.constant 0 : index
    %c0_88 = arith.constant 0 : index
    %112 = vector.load %arg5[%c6_86, %c0_87, %c0_88] : memref<9x1x256xf32, #tpu.memory_space<vmem>>, vector<1x1x256xf32>
    %113 = vector.shape_cast %112 : vector<1x1x256xf32> to vector<1x256xf32>
    %114 = vector.broadcast %113 : vector<1x256xf32> to vector<8x256xf32>
    %115 = arith.mulf %111, %114 : vector<8x256xf32>
    %c240_i32_89 = arith.constant 240 : i32
    %116 = tpu.dynamic_rotate %85 by %c240_i32_89 dim 1 : vector<8x256xf32>, i32 -> vector<8x256xf32>
    %c7_90 = arith.constant 7 : index
    %c0_91 = arith.constant 0 : index
    %c0_92 = arith.constant 0 : index
    %117 = vector.load %arg5[%c7_90, %c0_91, %c0_92] : memref<9x1x256xf32, #tpu.memory_space<vmem>>, vector<1x1x256xf32>
    %118 = vector.shape_cast %117 : vector<1x1x256xf32> to vector<1x256xf32>
    %119 = vector.broadcast %118 : vector<1x256xf32> to vector<8x256xf32>
    %120 = arith.mulf %116, %119 : vector<8x256xf32>
    %c239_i32_93 = arith.constant 239 : i32
    %121 = tpu.dynamic_rotate %85 by %c239_i32_93 dim 1 : vector<8x256xf32>, i32 -> vector<8x256xf32>
    %c8_94 = arith.constant 8 : index
    %c0_95 = arith.constant 0 : index
    %c0_96 = arith.constant 0 : index
    %122 = vector.load %arg5[%c8_94, %c0_95, %c0_96] : memref<9x1x256xf32, #tpu.memory_space<vmem>>, vector<1x1x256xf32>
    %123 = vector.shape_cast %122 : vector<1x1x256xf32> to vector<1x256xf32>
    %124 = vector.broadcast %123 : vector<1x256xf32> to vector<8x256xf32>
    %125 = arith.mulf %121, %124 : vector<8x256xf32>
    %126 = tpu.concatenate %90, %95, %100, %105, %85, %110, %115, %120, %125 in 0 : vector<8x256xf32>, vector<8x256xf32>, vector<8x256xf32>, vector<8x256xf32>, vector<8x256xf32>, vector<8x256xf32>, vector<8x256xf32>, vector<8x256xf32>, vector<8x256xf32> -> vector<72x256xf32>
    %127 = arith.truncf %126 : vector<72x256xf32> to vector<72x256xbf16>
    %c2_97 = arith.constant 2 : index
    %c0_98 = arith.constant 0 : index
    %c0_99 = arith.constant 0 : index
    %128 = vector.load %arg13[%c2_97, %c0_98, %c0_99] : memref<8x8x256xf32, #tpu.memory_space<vmem>>, vector<1x8x256xf32>
    %129 = vector.shape_cast %128 : vector<1x8x256xf32> to vector<8x256xf32>
    %cst_100 = arith.constant dense<0.000000e+00> : vector<8x256xf32>
    %130 = tpu.matmul %6, %127, %cst_100 {dimension_numbers = #tpu.dot_dimension_numbers<[1], [0], [0], [1], [0, 0, 1, 1], [], []>} : vector<8x72xbf16>, vector<72x256xbf16>, vector<8x256xf32> -> vector<8x256xf32>
    %131 = arith.addf %129, %130 : vector<8x256xf32>
    %c2_101 = arith.constant 2 : index
    %c0_102 = arith.constant 0 : index
    %c0_103 = arith.constant 0 : index
    %132 = vector.load %arg13[%c2_101, %c0_102, %c0_103] : memref<8x8x256xf32, #tpu.memory_space<vmem>>, vector<1x8x256xf32>
    %133 = vector.shape_cast %132 : vector<1x8x256xf32> to vector<8x256xf32>
    %134 = vector.shape_cast %131 : vector<8x256xf32> to vector<1x8x256xf32>
    tpu.vector_store %arg13[%c2_101, %c0_102, %c0_103], %134 {strides = array<i32>} : memref<8x8x256xf32, #tpu.memory_space<vmem>>, vector<1x8x256xf32>,
    %c1_104 = arith.constant 1 : index
    %c0_105 = arith.constant 0 : index
    %c0_106 = arith.constant 0 : index
    %135 = vector.load %arg13[%c1_104, %c0_105, %c0_106] : memref<8x8x256xf32, #tpu.memory_space<vmem>>, vector<1x8x256xf32>
    %136 = vector.shape_cast %135 : vector<1x8x256xf32> to vector<8x256xf32>
    %cst_107 = arith.constant dense<0.000000e+00> : vector<8x256xf32>
    %137 = tpu.matmul %8, %127, %cst_107 {dimension_numbers = #tpu.dot_dimension_numbers<[1], [0], [0], [1], [0, 0, 1, 1], [], []>} : vector<8x72xbf16>, vector<72x256xbf16>, vector<8x256xf32> -> vector<8x256xf32>
    %138 = arith.addf %136, %137 : vector<8x256xf32>
    %c1_108 = arith.constant 1 : index
    %c0_109 = arith.constant 0 : index
    %c0_110 = arith.constant 0 : index
    %139 = vector.load %arg13[%c1_108, %c0_109, %c0_110] : memref<8x8x256xf32, #tpu.memory_space<vmem>>, vector<1x8x256xf32>
    %140 = vector.shape_cast %139 : vector<1x8x256xf32> to vector<8x256xf32>
    %141 = vector.shape_cast %138 : vector<8x256xf32> to vector<1x8x256xf32>
    tpu.vector_store %arg13[%c1_108, %c0_109, %c0_110], %141 {strides = array<i32>} : memref<8x8x256xf32, #tpu.memory_space<vmem>>, vector<1x8x256xf32>,
    %c0_111 = arith.constant 0 : index
    %c0_112 = arith.constant 0 : index
    %c0_113 = arith.constant 0 : index
    %142 = vector.load %arg13[%c0_111, %c0_112, %c0_113] : memref<8x8x256xf32, #tpu.memory_space<vmem>>, vector<1x8x256xf32>
    %143 = vector.shape_cast %142 : vector<1x8x256xf32> to vector<8x256xf32>
    %cst_114 = arith.constant dense<0.000000e+00> : vector<8x256xf32>
    %144 = tpu.matmul %10, %127, %cst_114 {dimension_numbers = #tpu.dot_dimension_numbers<[1], [0], [0], [1], [0, 0, 1, 1], [], []>} : vector<8x72xbf16>, vector<72x256xbf16>, vector<8x256xf32> -> vector<8x256xf32>
    %145 = arith.addf %143, %144 : vector<8x256xf32>
    %c0_115 = arith.constant 0 : index
    %c0_116 = arith.constant 0 : index
    %c0_117 = arith.constant 0 : index
    %146 = vector.load %arg13[%c0_115, %c0_116, %c0_117] : memref<8x8x256xf32, #tpu.memory_space<vmem>>, vector<1x8x256xf32>
    %147 = vector.shape_cast %146 : vector<1x8x256xf32> to vector<8x256xf32>
    %148 = vector.shape_cast %145 : vector<8x256xf32> to vector<1x8x256xf32>
    tpu.vector_store %arg13[%c0_115, %c0_116, %c0_117], %148 {strides = array<i32>} : memref<8x8x256xf32, #tpu.memory_space<vmem>>, vector<1x8x256xf32>,
    %c0_118 = arith.constant 0 : index
    %c2_119 = arith.constant 2 : index
    %c0_120 = arith.constant 0 : index
    %c0_121 = arith.constant 0 : index
    %149 = vector.load %arg2[%c0_118, %c2_119, %c0_120, %c0_121] : memref<1x8x4x256xf32, #tpu.memory_space<vmem>>, vector<1x1x4x256xf32>
    %150 = vector.shape_cast %149 : vector<1x1x4x256xf32> to vector<4x256xf32>
    %cst_122 = arith.constant dense<0.000000e+00> : vector<8x256xf32>
    %151 = tpu.matmul %0, %150, %cst_122 {dimension_numbers = #tpu.dot_dimension_numbers<[1], [0], [0], [1], [0, 0, 1, 1], [], []>} : vector<8x4xf32>, vector<4x256xf32>, vector<8x256xf32> -> vector<8x256xf32>
    %152 = vector.broadcast %2 : vector<8x1xf32> to vector<8x256xf32>
    %153 = arith.addf %151, %152 : vector<8x256xf32>
    %cst_123 = arith.constant 0.000000e+00 : f32
    %154 = vector.broadcast %cst_123 : f32 to vector<8x256xf32>
    %155 = arith.maximumf %153, %154 : vector<8x256xf32>
    %c17_i32_124 = arith.constant 17 : i32
    %156 = tpu.dynamic_rotate %155 by %c17_i32_124 dim 1 : vector<8x256xf32>, i32 -> vector<8x256xf32>
    %c0_125 = arith.constant 0 : index
    %c0_126 = arith.constant 0 : index
    %c0_127 = arith.constant 0 : index
    %157 = vector.load %arg5[%c0_125, %c0_126, %c0_127] : memref<9x1x256xf32, #tpu.memory_space<vmem>>, vector<1x1x256xf32>
    %158 = vector.shape_cast %157 : vector<1x1x256xf32> to vector<1x256xf32>
    %159 = vector.broadcast %158 : vector<1x256xf32> to vector<8x256xf32>
    %160 = arith.mulf %156, %159 : vector<8x256xf32>
    %c16_i32_128 = arith.constant 16 : i32
    %161 = tpu.dynamic_rotate %155 by %c16_i32_128 dim 1 : vector<8x256xf32>, i32 -> vector<8x256xf32>
    %c1_129 = arith.constant 1 : index
    %c0_130 = arith.constant 0 : index
    %c0_131 = arith.constant 0 : index
    %162 = vector.load %arg5[%c1_129, %c0_130, %c0_131] : memref<9x1x256xf32, #tpu.memory_space<vmem>>, vector<1x1x256xf32>
    %163 = vector.shape_cast %162 : vector<1x1x256xf32> to vector<1x256xf32>
    %164 = vector.broadcast %163 : vector<1x256xf32> to vector<8x256xf32>
    %165 = arith.mulf %161, %164 : vector<8x256xf32>
    %c15_i32_132 = arith.constant 15 : i32
    %166 = tpu.dynamic_rotate %155 by %c15_i32_132 dim 1 : vector<8x256xf32>, i32 -> vector<8x256xf32>
    %c2_133 = arith.constant 2 : index
    %c0_134 = arith.constant 0 : index
    %c0_135 = arith.constant 0 : index
    %167 = vector.load %arg5[%c2_133, %c0_134, %c0_135] : memref<9x1x256xf32, #tpu.memory_space<vmem>>, vector<1x1x256xf32>
    %168 = vector.shape_cast %167 : vector<1x1x256xf32> to vector<1x256xf32>
    %169 = vector.broadcast %168 : vector<1x256xf32> to vector<8x256xf32>
    %170 = arith.mulf %166, %169 : vector<8x256xf32>
    %c1_i32_136 = arith.constant 1 : i32
    %171 = tpu.dynamic_rotate %155 by %c1_i32_136 dim 1 : vector<8x256xf32>, i32 -> vector<8x256xf32>
    %c3_137 = arith.constant 3 : index
    %c0_138 = arith.constant 0 : index
    %c0_139 = arith.constant 0 : index
    %172 = vector.load %arg5[%c3_137, %c0_138, %c0_139] : memref<9x1x256xf32, #tpu.memory_space<vmem>>, vector<1x1x256xf32>
    %173 = vector.shape_cast %172 : vector<1x1x256xf32> to vector<1x256xf32>
    %174 = vector.broadcast %173 : vector<1x256xf32> to vector<8x256xf32>
    %175 = arith.mulf %171, %174 : vector<8x256xf32>
    %c255_i32_140 = arith.constant 255 : i32
    %176 = tpu.dynamic_rotate %155 by %c255_i32_140 dim 1 : vector<8x256xf32>, i32 -> vector<8x256xf32>
    %c5_141 = arith.constant 5 : index
    %c0_142 = arith.constant 0 : index
    %c0_143 = arith.constant 0 : index
    %177 = vector.load %arg5[%c5_141, %c0_142, %c0_143] : memref<9x1x256xf32, #tpu.memory_space<vmem>>, vector<1x1x256xf32>
    %178 = vector.shape_cast %177 : vector<1x1x256xf32> to vector<1x256xf32>
    %179 = vector.broadcast %178 : vector<1x256xf32> to vector<8x256xf32>
    %180 = arith.mulf %176, %179 : vector<8x256xf32>
    %c241_i32_144 = arith.constant 241 : i32
    %181 = tpu.dynamic_rotate %155 by %c241_i32_144 dim 1 : vector<8x256xf32>, i32 -> vector<8x256xf32>
    %c6_145 = arith.constant 6 : index
    %c0_146 = arith.constant 0 : index
    %c0_147 = arith.constant 0 : index
    %182 = vector.load %arg5[%c6_145, %c0_146, %c0_147] : memref<9x1x256xf32, #tpu.memory_space<vmem>>, vector<1x1x256xf32>
    %183 = vector.shape_cast %182 : vector<1x1x256xf32> to vector<1x256xf32>
    %184 = vector.broadcast %183 : vector<1x256xf32> to vector<8x256xf32>
    %185 = arith.mulf %181, %184 : vector<8x256xf32>
    %c240_i32_148 = arith.constant 240 : i32
    %186 = tpu.dynamic_rotate %155 by %c240_i32_148 dim 1 : vector<8x256xf32>, i32 -> vector<8x256xf32>
    %c7_149 = arith.constant 7 : index
    %c0_150 = arith.constant 0 : index
    %c0_151 = arith.constant 0 : index
    %187 = vector.load %arg5[%c7_149, %c0_150, %c0_151] : memref<9x1x256xf32, #tpu.memory_space<vmem>>, vector<1x1x256xf32>
    %188 = vector.shape_cast %187 : vector<1x1x256xf32> to vector<1x256xf32>
    %189 = vector.broadcast %188 : vector<1x256xf32> to vector<8x256xf32>
    %190 = arith.mulf %186, %189 : vector<8x256xf32>
    %c239_i32_152 = arith.constant 239 : i32
    %191 = tpu.dynamic_rotate %155 by %c239_i32_152 dim 1 : vector<8x256xf32>, i32 -> vector<8x256xf32>
    %c8_153 = arith.constant 8 : index
    %c0_154 = arith.constant 0 : index
    %c0_155 = arith.constant 0 : index
    %192 = vector.load %arg5[%c8_153, %c0_154, %c0_155] : memref<9x1x256xf32, #tpu.memory_space<vmem>>, vector<1x1x256xf32>
    %193 = vector.shape_cast %192 : vector<1x1x256xf32> to vector<1x256xf32>
    %194 = vector.broadcast %193 : vector<1x256xf32> to vector<8x256xf32>
    %195 = arith.mulf %191, %194 : vector<8x256xf32>
    %196 = tpu.concatenate %160, %165, %170, %175, %155, %180, %185, %190, %195 in 0 : vector<8x256xf32>, vector<8x256xf32>, vector<8x256xf32>, vector<8x256xf32>, vector<8x256xf32>, vector<8x256xf32>, vector<8x256xf32>, vector<8x256xf32>, vector<8x256xf32> -> vector<72x256xf32>
    %197 = arith.truncf %196 : vector<72x256xf32> to vector<72x256xbf16>
    %c3_156 = arith.constant 3 : index
    %c0_157 = arith.constant 0 : index
    %c0_158 = arith.constant 0 : index
    %198 = vector.load %arg13[%c3_156, %c0_157, %c0_158] : memref<8x8x256xf32, #tpu.memory_space<vmem>>, vector<1x8x256xf32>
    %199 = vector.shape_cast %198 : vector<1x8x256xf32> to vector<8x256xf32>
    %cst_159 = arith.constant dense<0.000000e+00> : vector<8x256xf32>
    %200 = tpu.matmul %6, %197, %cst_159 {dimension_numbers = #tpu.dot_dimension_numbers<[1], [0], [0], [1], [0, 0, 1, 1], [], []>} : vector<8x72xbf16>, vector<72x256xbf16>, vector<8x256xf32> -> vector<8x256xf32>
    %201 = arith.addf %199, %200 : vector<8x256xf32>
    %c3_160 = arith.constant 3 : index
    %c0_161 = arith.constant 0 : index
    %c0_162 = arith.constant 0 : index
    %202 = vector.load %arg13[%c3_160, %c0_161, %c0_162] : memref<8x8x256xf32, #tpu.memory_space<vmem>>, vector<1x8x256xf32>
    %203 = vector.shape_cast %202 : vector<1x8x256xf32> to vector<8x256xf32>
    %204 = vector.shape_cast %201 : vector<8x256xf32> to vector<1x8x256xf32>
    tpu.vector_store %arg13[%c3_160, %c0_161, %c0_162], %204 {strides = array<i32>} : memref<8x8x256xf32, #tpu.memory_space<vmem>>, vector<1x8x256xf32>,
    %c2_163 = arith.constant 2 : index
    %c0_164 = arith.constant 0 : index
    %c0_165 = arith.constant 0 : index
    %205 = vector.load %arg13[%c2_163, %c0_164, %c0_165] : memref<8x8x256xf32, #tpu.memory_space<vmem>>, vector<1x8x256xf32>
    %206 = vector.shape_cast %205 : vector<1x8x256xf32> to vector<8x256xf32>
    %cst_166 = arith.constant dense<0.000000e+00> : vector<8x256xf32>
    %207 = tpu.matmul %8, %197, %cst_166 {dimension_numbers = #tpu.dot_dimension_numbers<[1], [0], [0], [1], [0, 0, 1, 1], [], []>} : vector<8x72xbf16>, vector<72x256xbf16>, vector<8x256xf32> -> vector<8x256xf32>
    %208 = arith.addf %206, %207 : vector<8x256xf32>
    %c2_167 = arith.constant 2 : index
    %c0_168 = arith.constant 0 : index
    %c0_169 = arith.constant 0 : index
    %209 = vector.load %arg13[%c2_167, %c0_168, %c0_169] : memref<8x8x256xf32, #tpu.memory_space<vmem>>, vector<1x8x256xf32>
    %210 = vector.shape_cast %209 : vector<1x8x256xf32> to vector<8x256xf32>
    %211 = vector.shape_cast %208 : vector<8x256xf32> to vector<1x8x256xf32>
    tpu.vector_store %arg13[%c2_167, %c0_168, %c0_169], %211 {strides = array<i32>} : memref<8x8x256xf32, #tpu.memory_space<vmem>>, vector<1x8x256xf32>,
    %c1_170 = arith.constant 1 : index
    %c0_171 = arith.constant 0 : index
    %c0_172 = arith.constant 0 : index
    %212 = vector.load %arg13[%c1_170, %c0_171, %c0_172] : memref<8x8x256xf32, #tpu.memory_space<vmem>>, vector<1x8x256xf32>
    %213 = vector.shape_cast %212 : vector<1x8x256xf32> to vector<8x256xf32>
    %cst_173 = arith.constant dense<0.000000e+00> : vector<8x256xf32>
    %214 = tpu.matmul %10, %197, %cst_173 {dimension_numbers = #tpu.dot_dimension_numbers<[1], [0], [0], [1], [0, 0, 1, 1], [], []>} : vector<8x72xbf16>, vector<72x256xbf16>, vector<8x256xf32> -> vector<8x256xf32>
    %215 = arith.addf %213, %214 : vector<8x256xf32>
    %c1_174 = arith.constant 1 : index
    %c0_175 = arith.constant 0 : index
    %c0_176 = arith.constant 0 : index
    %216 = vector.load %arg13[%c1_174, %c0_175, %c0_176] : memref<8x8x256xf32, #tpu.memory_space<vmem>>, vector<1x8x256xf32>
    %217 = vector.shape_cast %216 : vector<1x8x256xf32> to vector<8x256xf32>
    %218 = vector.shape_cast %215 : vector<8x256xf32> to vector<1x8x256xf32>
    tpu.vector_store %arg13[%c1_174, %c0_175, %c0_176], %218 {strides = array<i32>} : memref<8x8x256xf32, #tpu.memory_space<vmem>>, vector<1x8x256xf32>,
    %c0_177 = arith.constant 0 : index
    %c3_178 = arith.constant 3 : index
    %c0_179 = arith.constant 0 : index
    %c0_180 = arith.constant 0 : index
    %219 = vector.load %arg2[%c0_177, %c3_178, %c0_179, %c0_180] : memref<1x8x4x256xf32, #tpu.memory_space<vmem>>, vector<1x1x4x256xf32>
    %220 = vector.shape_cast %219 : vector<1x1x4x256xf32> to vector<4x256xf32>
    %cst_181 = arith.constant dense<0.000000e+00> : vector<8x256xf32>
    %221 = tpu.matmul %0, %220, %cst_181 {dimension_numbers = #tpu.dot_dimension_numbers<[1], [0], [0], [1], [0, 0, 1, 1], [], []>} : vector<8x4xf32>, vector<4x256xf32>, vector<8x256xf32> -> vector<8x256xf32>
    %222 = vector.broadcast %2 : vector<8x1xf32> to vector<8x256xf32>
    %223 = arith.addf %221, %222 : vector<8x256xf32>
    %cst_182 = arith.constant 0.000000e+00 : f32
    %224 = vector.broadcast %cst_182 : f32 to vector<8x256xf32>
    %225 = arith.maximumf %223, %224 : vector<8x256xf32>
    %c17_i32_183 = arith.constant 17 : i32
    %226 = tpu.dynamic_rotate %225 by %c17_i32_183 dim 1 : vector<8x256xf32>, i32 -> vector<8x256xf32>
    %c0_184 = arith.constant 0 : index
    %c0_185 = arith.constant 0 : index
    %c0_186 = arith.constant 0 : index
    %227 = vector.load %arg5[%c0_184, %c0_185, %c0_186] : memref<9x1x256xf32, #tpu.memory_space<vmem>>, vector<1x1x256xf32>
    %228 = vector.shape_cast %227 : vector<1x1x256xf32> to vector<1x256xf32>
    %229 = vector.broadcast %228 : vector<1x256xf32> to vector<8x256xf32>
    %230 = arith.mulf %226, %229 : vector<8x256xf32>
    %c16_i32_187 = arith.constant 16 : i32
    %231 = tpu.dynamic_rotate %225 by %c16_i32_187 dim 1 : vector<8x256xf32>, i32 -> vector<8x256xf32>
    %c1_188 = arith.constant 1 : index
    %c0_189 = arith.constant 0 : index
    %c0_190 = arith.constant 0 : index
    %232 = vector.load %arg5[%c1_188, %c0_189, %c0_190] : memref<9x1x256xf32, #tpu.memory_space<vmem>>, vector<1x1x256xf32>
    %233 = vector.shape_cast %232 : vector<1x1x256xf32> to vector<1x256xf32>
    %234 = vector.broadcast %233 : vector<1x256xf32> to vector<8x256xf32>
    %235 = arith.mulf %231, %234 : vector<8x256xf32>
    %c15_i32_191 = arith.constant 15 : i32
    %236 = tpu.dynamic_rotate %225 by %c15_i32_191 dim 1 : vector<8x256xf32>, i32 -> vector<8x256xf32>
    %c2_192 = arith.constant 2 : index
    %c0_193 = arith.constant 0 : index
    %c0_194 = arith.constant 0 : index
    %237 = vector.load %arg5[%c2_192, %c0_193, %c0_194] : memref<9x1x256xf32, #tpu.memory_space<vmem>>, vector<1x1x256xf32>
    %238 = vector.shape_cast %237 : vector<1x1x256xf32> to vector<1x256xf32>
    %239 = vector.broadcast %238 : vector<1x256xf32> to vector<8x256xf32>
    %240 = arith.mulf %236, %239 : vector<8x256xf32>
    %c1_i32_195 = arith.constant 1 : i32
    %241 = tpu.dynamic_rotate %225 by %c1_i32_195 dim 1 : vector<8x256xf32>, i32 -> vector<8x256xf32>
    %c3_196 = arith.constant 3 : index
    %c0_197 = arith.constant 0 : index
    %c0_198 = arith.constant 0 : index
    %242 = vector.load %arg5[%c3_196, %c0_197, %c0_198] : memref<9x1x256xf32, #tpu.memory_space<vmem>>, vector<1x1x256xf32>
    %243 = vector.shape_cast %242 : vector<1x1x256xf32> to vector<1x256xf32>
    %244 = vector.broadcast %243 : vector<1x256xf32> to vector<8x256xf32>
    %245 = arith.mulf %241, %244 : vector<8x256xf32>
    %c255_i32_199 = arith.constant 255 : i32
    %246 = tpu.dynamic_rotate %225 by %c255_i32_199 dim 1 : vector<8x256xf32>, i32 -> vector<8x256xf32>
    %c5_200 = arith.constant 5 : index
    %c0_201 = arith.constant 0 : index
    %c0_202 = arith.constant 0 : index
    %247 = vector.load %arg5[%c5_200, %c0_201, %c0_202] : memref<9x1x256xf32, #tpu.memory_space<vmem>>, vector<1x1x256xf32>
    %248 = vector.shape_cast %247 : vector<1x1x256xf32> to vector<1x256xf32>
    %249 = vector.broadcast %248 : vector<1x256xf32> to vector<8x256xf32>
    %250 = arith.mulf %246, %249 : vector<8x256xf32>
    %c241_i32_203 = arith.constant 241 : i32
    %251 = tpu.dynamic_rotate %225 by %c241_i32_203 dim 1 : vector<8x256xf32>, i32 -> vector<8x256xf32>
    %c6_204 = arith.constant 6 : index
    %c0_205 = arith.constant 0 : index
    %c0_206 = arith.constant 0 : index
    %252 = vector.load %arg5[%c6_204, %c0_205, %c0_206] : memref<9x1x256xf32, #tpu.memory_space<vmem>>, vector<1x1x256xf32>
    %253 = vector.shape_cast %252 : vector<1x1x256xf32> to vector<1x256xf32>
    %254 = vector.broadcast %253 : vector<1x256xf32> to vector<8x256xf32>
    %255 = arith.mulf %251, %254 : vector<8x256xf32>
    %c240_i32_207 = arith.constant 240 : i32
    %256 = tpu.dynamic_rotate %225 by %c240_i32_207 dim 1 : vector<8x256xf32>, i32 -> vector<8x256xf32>
    %c7_208 = arith.constant 7 : index
    %c0_209 = arith.constant 0 : index
    %c0_210 = arith.constant 0 : index
    %257 = vector.load %arg5[%c7_208, %c0_209, %c0_210] : memref<9x1x256xf32, #tpu.memory_space<vmem>>, vector<1x1x256xf32>
    %258 = vector.shape_cast %257 : vector<1x1x256xf32> to vector<1x256xf32>
    %259 = vector.broadcast %258 : vector<1x256xf32> to vector<8x256xf32>
    %260 = arith.mulf %256, %259 : vector<8x256xf32>
    %c239_i32_211 = arith.constant 239 : i32
    %261 = tpu.dynamic_rotate %225 by %c239_i32_211 dim 1 : vector<8x256xf32>, i32 -> vector<8x256xf32>
    %c8_212 = arith.constant 8 : index
    %c0_213 = arith.constant 0 : index
    %c0_214 = arith.constant 0 : index
    %262 = vector.load %arg5[%c8_212, %c0_213, %c0_214] : memref<9x1x256xf32, #tpu.memory_space<vmem>>, vector<1x1x256xf32>
    %263 = vector.shape_cast %262 : vector<1x1x256xf32> to vector<1x256xf32>
    %264 = vector.broadcast %263 : vector<1x256xf32> to vector<8x256xf32>
    %265 = arith.mulf %261, %264 : vector<8x256xf32>
    %266 = tpu.concatenate %230, %235, %240, %245, %225, %250, %255, %260, %265 in 0 : vector<8x256xf32>, vector<8x256xf32>, vector<8x256xf32>, vector<8x256xf32>, vector<8x256xf32>, vector<8x256xf32>, vector<8x256xf32>, vector<8x256xf32>, vector<8x256xf32> -> vector<72x256xf32>
    %267 = arith.truncf %266 : vector<72x256xf32> to vector<72x256xbf16>
    %c4 = arith.constant 4 : index
    %c0_215 = arith.constant 0 : index
    %c0_216 = arith.constant 0 : index
    %268 = vector.load %arg13[%c4, %c0_215, %c0_216] : memref<8x8x256xf32, #tpu.memory_space<vmem>>, vector<1x8x256xf32>
    %269 = vector.shape_cast %268 : vector<1x8x256xf32> to vector<8x256xf32>
    %cst_217 = arith.constant dense<0.000000e+00> : vector<8x256xf32>
    %270 = tpu.matmul %6, %267, %cst_217 {dimension_numbers = #tpu.dot_dimension_numbers<[1], [0], [0], [1], [0, 0, 1, 1], [], []>} : vector<8x72xbf16>, vector<72x256xbf16>, vector<8x256xf32> -> vector<8x256xf32>
    %271 = arith.addf %269, %270 : vector<8x256xf32>
    %c4_218 = arith.constant 4 : index
    %c0_219 = arith.constant 0 : index
    %c0_220 = arith.constant 0 : index
    %272 = vector.load %arg13[%c4_218, %c0_219, %c0_220] : memref<8x8x256xf32, #tpu.memory_space<vmem>>, vector<1x8x256xf32>
    %273 = vector.shape_cast %272 : vector<1x8x256xf32> to vector<8x256xf32>
    %274 = vector.shape_cast %271 : vector<8x256xf32> to vector<1x8x256xf32>
    tpu.vector_store %arg13[%c4_218, %c0_219, %c0_220], %274 {strides = array<i32>} : memref<8x8x256xf32, #tpu.memory_space<vmem>>, vector<1x8x256xf32>,
    %c3_221 = arith.constant 3 : index
    %c0_222 = arith.constant 0 : index
    %c0_223 = arith.constant 0 : index
    %275 = vector.load %arg13[%c3_221, %c0_222, %c0_223] : memref<8x8x256xf32, #tpu.memory_space<vmem>>, vector<1x8x256xf32>
    %276 = vector.shape_cast %275 : vector<1x8x256xf32> to vector<8x256xf32>
    %cst_224 = arith.constant dense<0.000000e+00> : vector<8x256xf32>
    %277 = tpu.matmul %8, %267, %cst_224 {dimension_numbers = #tpu.dot_dimension_numbers<[1], [0], [0], [1], [0, 0, 1, 1], [], []>} : vector<8x72xbf16>, vector<72x256xbf16>, vector<8x256xf32> -> vector<8x256xf32>
    %278 = arith.addf %276, %277 : vector<8x256xf32>
    %c3_225 = arith.constant 3 : index
    %c0_226 = arith.constant 0 : index
    %c0_227 = arith.constant 0 : index
    %279 = vector.load %arg13[%c3_225, %c0_226, %c0_227] : memref<8x8x256xf32, #tpu.memory_space<vmem>>, vector<1x8x256xf32>
    %280 = vector.shape_cast %279 : vector<1x8x256xf32> to vector<8x256xf32>
    %281 = vector.shape_cast %278 : vector<8x256xf32> to vector<1x8x256xf32>
    tpu.vector_store %arg13[%c3_225, %c0_226, %c0_227], %281 {strides = array<i32>} : memref<8x8x256xf32, #tpu.memory_space<vmem>>, vector<1x8x256xf32>,
    %c2_228 = arith.constant 2 : index
    %c0_229 = arith.constant 0 : index
    %c0_230 = arith.constant 0 : index
    %282 = vector.load %arg13[%c2_228, %c0_229, %c0_230] : memref<8x8x256xf32, #tpu.memory_space<vmem>>, vector<1x8x256xf32>
    %283 = vector.shape_cast %282 : vector<1x8x256xf32> to vector<8x256xf32>
    %cst_231 = arith.constant dense<0.000000e+00> : vector<8x256xf32>
    %284 = tpu.matmul %10, %267, %cst_231 {dimension_numbers = #tpu.dot_dimension_numbers<[1], [0], [0], [1], [0, 0, 1, 1], [], []>} : vector<8x72xbf16>, vector<72x256xbf16>, vector<8x256xf32> -> vector<8x256xf32>
    %285 = arith.addf %283, %284 : vector<8x256xf32>
    %c2_232 = arith.constant 2 : index
    %c0_233 = arith.constant 0 : index
    %c0_234 = arith.constant 0 : index
    %286 = vector.load %arg13[%c2_232, %c0_233, %c0_234] : memref<8x8x256xf32, #tpu.memory_space<vmem>>, vector<1x8x256xf32>
    %287 = vector.shape_cast %286 : vector<1x8x256xf32> to vector<8x256xf32>
    %288 = vector.shape_cast %285 : vector<8x256xf32> to vector<1x8x256xf32>
    tpu.vector_store %arg13[%c2_232, %c0_233, %c0_234], %288 {strides = array<i32>} : memref<8x8x256xf32, #tpu.memory_space<vmem>>, vector<1x8x256xf32>,
    %c0_235 = arith.constant 0 : index
    %c4_236 = arith.constant 4 : index
    %c0_237 = arith.constant 0 : index
    %c0_238 = arith.constant 0 : index
    %289 = vector.load %arg2[%c0_235, %c4_236, %c0_237, %c0_238] : memref<1x8x4x256xf32, #tpu.memory_space<vmem>>, vector<1x1x4x256xf32>
    %290 = vector.shape_cast %289 : vector<1x1x4x256xf32> to vector<4x256xf32>
    %cst_239 = arith.constant dense<0.000000e+00> : vector<8x256xf32>
    %291 = tpu.matmul %0, %290, %cst_239 {dimension_numbers = #tpu.dot_dimension_numbers<[1], [0], [0], [1], [0, 0, 1, 1], [], []>} : vector<8x4xf32>, vector<4x256xf32>, vector<8x256xf32> -> vector<8x256xf32>
    %292 = vector.broadcast %2 : vector<8x1xf32> to vector<8x256xf32>
    %293 = arith.addf %291, %292 : vector<8x256xf32>
    %cst_240 = arith.constant 0.000000e+00 : f32
    %294 = vector.broadcast %cst_240 : f32 to vector<8x256xf32>
    %295 = arith.maximumf %293, %294 : vector<8x256xf32>
    %c17_i32_241 = arith.constant 17 : i32
    %296 = tpu.dynamic_rotate %295 by %c17_i32_241 dim 1 : vector<8x256xf32>, i32 -> vector<8x256xf32>
    %c0_242 = arith.constant 0 : index
    %c0_243 = arith.constant 0 : index
    %c0_244 = arith.constant 0 : index
    %297 = vector.load %arg5[%c0_242, %c0_243, %c0_244] : memref<9x1x256xf32, #tpu.memory_space<vmem>>, vector<1x1x256xf32>
    %298 = vector.shape_cast %297 : vector<1x1x256xf32> to vector<1x256xf32>
    %299 = vector.broadcast %298 : vector<1x256xf32> to vector<8x256xf32>
    %300 = arith.mulf %296, %299 : vector<8x256xf32>
    %c16_i32_245 = arith.constant 16 : i32
    %301 = tpu.dynamic_rotate %295 by %c16_i32_245 dim 1 : vector<8x256xf32>, i32 -> vector<8x256xf32>
    %c1_246 = arith.constant 1 : index
    %c0_247 = arith.constant 0 : index
    %c0_248 = arith.constant 0 : index
    %302 = vector.load %arg5[%c1_246, %c0_247, %c0_248] : memref<9x1x256xf32, #tpu.memory_space<vmem>>, vector<1x1x256xf32>
    %303 = vector.shape_cast %302 : vector<1x1x256xf32> to vector<1x256xf32>
    %304 = vector.broadcast %303 : vector<1x256xf32> to vector<8x256xf32>
    %305 = arith.mulf %301, %304 : vector<8x256xf32>
    %c15_i32_249 = arith.constant 15 : i32
    %306 = tpu.dynamic_rotate %295 by %c15_i32_249 dim 1 : vector<8x256xf32>, i32 -> vector<8x256xf32>
    %c2_250 = arith.constant 2 : index
    %c0_251 = arith.constant 0 : index
    %c0_252 = arith.constant 0 : index
    %307 = vector.load %arg5[%c2_250, %c0_251, %c0_252] : memref<9x1x256xf32, #tpu.memory_space<vmem>>, vector<1x1x256xf32>
    %308 = vector.shape_cast %307 : vector<1x1x256xf32> to vector<1x256xf32>
    %309 = vector.broadcast %308 : vector<1x256xf32> to vector<8x256xf32>
    %310 = arith.mulf %306, %309 : vector<8x256xf32>
    %c1_i32_253 = arith.constant 1 : i32
    %311 = tpu.dynamic_rotate %295 by %c1_i32_253 dim 1 : vector<8x256xf32>, i32 -> vector<8x256xf32>
    %c3_254 = arith.constant 3 : index
    %c0_255 = arith.constant 0 : index
    %c0_256 = arith.constant 0 : index
    %312 = vector.load %arg5[%c3_254, %c0_255, %c0_256] : memref<9x1x256xf32, #tpu.memory_space<vmem>>, vector<1x1x256xf32>
    %313 = vector.shape_cast %312 : vector<1x1x256xf32> to vector<1x256xf32>
    %314 = vector.broadcast %313 : vector<1x256xf32> to vector<8x256xf32>
    %315 = arith.mulf %311, %314 : vector<8x256xf32>
    %c255_i32_257 = arith.constant 255 : i32
    %316 = tpu.dynamic_rotate %295 by %c255_i32_257 dim 1 : vector<8x256xf32>, i32 -> vector<8x256xf32>
    %c5_258 = arith.constant 5 : index
    %c0_259 = arith.constant 0 : index
    %c0_260 = arith.constant 0 : index
    %317 = vector.load %arg5[%c5_258, %c0_259, %c0_260] : memref<9x1x256xf32, #tpu.memory_space<vmem>>, vector<1x1x256xf32>
    %318 = vector.shape_cast %317 : vector<1x1x256xf32> to vector<1x256xf32>
    %319 = vector.broadcast %318 : vector<1x256xf32> to vector<8x256xf32>
    %320 = arith.mulf %316, %319 : vector<8x256xf32>
    %c241_i32_261 = arith.constant 241 : i32
    %321 = tpu.dynamic_rotate %295 by %c241_i32_261 dim 1 : vector<8x256xf32>, i32 -> vector<8x256xf32>
    %c6_262 = arith.constant 6 : index
    %c0_263 = arith.constant 0 : index
    %c0_264 = arith.constant 0 : index
    %322 = vector.load %arg5[%c6_262, %c0_263, %c0_264] : memref<9x1x256xf32, #tpu.memory_space<vmem>>, vector<1x1x256xf32>
    %323 = vector.shape_cast %322 : vector<1x1x256xf32> to vector<1x256xf32>
    %324 = vector.broadcast %323 : vector<1x256xf32> to vector<8x256xf32>
    %325 = arith.mulf %321, %324 : vector<8x256xf32>
    %c240_i32_265 = arith.constant 240 : i32
    %326 = tpu.dynamic_rotate %295 by %c240_i32_265 dim 1 : vector<8x256xf32>, i32 -> vector<8x256xf32>
    %c7_266 = arith.constant 7 : index
    %c0_267 = arith.constant 0 : index
    %c0_268 = arith.constant 0 : index
    %327 = vector.load %arg5[%c7_266, %c0_267, %c0_268] : memref<9x1x256xf32, #tpu.memory_space<vmem>>, vector<1x1x256xf32>
    %328 = vector.shape_cast %327 : vector<1x1x256xf32> to vector<1x256xf32>
    %329 = vector.broadcast %328 : vector<1x256xf32> to vector<8x256xf32>
    %330 = arith.mulf %326, %329 : vector<8x256xf32>
    %c239_i32_269 = arith.constant 239 : i32
    %331 = tpu.dynamic_rotate %295 by %c239_i32_269 dim 1 : vector<8x256xf32>, i32 -> vector<8x256xf32>
    %c8_270 = arith.constant 8 : index
    %c0_271 = arith.constant 0 : index
    %c0_272 = arith.constant 0 : index
    %332 = vector.load %arg5[%c8_270, %c0_271, %c0_272] : memref<9x1x256xf32, #tpu.memory_space<vmem>>, vector<1x1x256xf32>
    %333 = vector.shape_cast %332 : vector<1x1x256xf32> to vector<1x256xf32>
    %334 = vector.broadcast %333 : vector<1x256xf32> to vector<8x256xf32>
    %335 = arith.mulf %331, %334 : vector<8x256xf32>
    %336 = tpu.concatenate %300, %305, %310, %315, %295, %320, %325, %330, %335 in 0 : vector<8x256xf32>, vector<8x256xf32>, vector<8x256xf32>, vector<8x256xf32>, vector<8x256xf32>, vector<8x256xf32>, vector<8x256xf32>, vector<8x256xf32>, vector<8x256xf32> -> vector<72x256xf32>
    %337 = arith.truncf %336 : vector<72x256xf32> to vector<72x256xbf16>
    %c5_273 = arith.constant 5 : index
    %c0_274 = arith.constant 0 : index
    %c0_275 = arith.constant 0 : index
    %338 = vector.load %arg13[%c5_273, %c0_274, %c0_275] : memref<8x8x256xf32, #tpu.memory_space<vmem>>, vector<1x8x256xf32>
    %339 = vector.shape_cast %338 : vector<1x8x256xf32> to vector<8x256xf32>
    %cst_276 = arith.constant dense<0.000000e+00> : vector<8x256xf32>
    %340 = tpu.matmul %6, %337, %cst_276 {dimension_numbers = #tpu.dot_dimension_numbers<[1], [0], [0], [1], [0, 0, 1, 1], [], []>} : vector<8x72xbf16>, vector<72x256xbf16>, vector<8x256xf32> -> vector<8x256xf32>
    %341 = arith.addf %339, %340 : vector<8x256xf32>
    %c5_277 = arith.constant 5 : index
    %c0_278 = arith.constant 0 : index
    %c0_279 = arith.constant 0 : index
    %342 = vector.load %arg13[%c5_277, %c0_278, %c0_279] : memref<8x8x256xf32, #tpu.memory_space<vmem>>, vector<1x8x256xf32>
    %343 = vector.shape_cast %342 : vector<1x8x256xf32> to vector<8x256xf32>
    %344 = vector.shape_cast %341 : vector<8x256xf32> to vector<1x8x256xf32>
    tpu.vector_store %arg13[%c5_277, %c0_278, %c0_279], %344 {strides = array<i32>} : memref<8x8x256xf32, #tpu.memory_space<vmem>>, vector<1x8x256xf32>,
    %c4_280 = arith.constant 4 : index
    %c0_281 = arith.constant 0 : index
    %c0_282 = arith.constant 0 : index
    %345 = vector.load %arg13[%c4_280, %c0_281, %c0_282] : memref<8x8x256xf32, #tpu.memory_space<vmem>>, vector<1x8x256xf32>
    %346 = vector.shape_cast %345 : vector<1x8x256xf32> to vector<8x256xf32>
    %cst_283 = arith.constant dense<0.000000e+00> : vector<8x256xf32>
    %347 = tpu.matmul %8, %337, %cst_283 {dimension_numbers = #tpu.dot_dimension_numbers<[1], [0], [0], [1], [0, 0, 1, 1], [], []>} : vector<8x72xbf16>, vector<72x256xbf16>, vector<8x256xf32> -> vector<8x256xf32>
    %348 = arith.addf %346, %347 : vector<8x256xf32>
    %c4_284 = arith.constant 4 : index
    %c0_285 = arith.constant 0 : index
    %c0_286 = arith.constant 0 : index
    %349 = vector.load %arg13[%c4_284, %c0_285, %c0_286] : memref<8x8x256xf32, #tpu.memory_space<vmem>>, vector<1x8x256xf32>
    %350 = vector.shape_cast %349 : vector<1x8x256xf32> to vector<8x256xf32>
    %351 = vector.shape_cast %348 : vector<8x256xf32> to vector<1x8x256xf32>
    tpu.vector_store %arg13[%c4_284, %c0_285, %c0_286], %351 {strides = array<i32>} : memref<8x8x256xf32, #tpu.memory_space<vmem>>, vector<1x8x256xf32>,
    %c3_287 = arith.constant 3 : index
    %c0_288 = arith.constant 0 : index
    %c0_289 = arith.constant 0 : index
    %352 = vector.load %arg13[%c3_287, %c0_288, %c0_289] : memref<8x8x256xf32, #tpu.memory_space<vmem>>, vector<1x8x256xf32>
    %353 = vector.shape_cast %352 : vector<1x8x256xf32> to vector<8x256xf32>
    %cst_290 = arith.constant dense<0.000000e+00> : vector<8x256xf32>
    %354 = tpu.matmul %10, %337, %cst_290 {dimension_numbers = #tpu.dot_dimension_numbers<[1], [0], [0], [1], [0, 0, 1, 1], [], []>} : vector<8x72xbf16>, vector<72x256xbf16>, vector<8x256xf32> -> vector<8x256xf32>
    %355 = arith.addf %353, %354 : vector<8x256xf32>
    %c3_291 = arith.constant 3 : index
    %c0_292 = arith.constant 0 : index
    %c0_293 = arith.constant 0 : index
    %356 = vector.load %arg13[%c3_291, %c0_292, %c0_293] : memref<8x8x256xf32, #tpu.memory_space<vmem>>, vector<1x8x256xf32>
    %357 = vector.shape_cast %356 : vector<1x8x256xf32> to vector<8x256xf32>
    %358 = vector.shape_cast %355 : vector<8x256xf32> to vector<1x8x256xf32>
    tpu.vector_store %arg13[%c3_291, %c0_292, %c0_293], %358 {strides = array<i32>} : memref<8x8x256xf32, #tpu.memory_space<vmem>>, vector<1x8x256xf32>,
    %c0_294 = arith.constant 0 : index
    %c5_295 = arith.constant 5 : index
    %c0_296 = arith.constant 0 : index
    %c0_297 = arith.constant 0 : index
    %359 = vector.load %arg2[%c0_294, %c5_295, %c0_296, %c0_297] : memref<1x8x4x256xf32, #tpu.memory_space<vmem>>, vector<1x1x4x256xf32>
    %360 = vector.shape_cast %359 : vector<1x1x4x256xf32> to vector<4x256xf32>
    %cst_298 = arith.constant dense<0.000000e+00> : vector<8x256xf32>
    %361 = tpu.matmul %0, %360, %cst_298 {dimension_numbers = #tpu.dot_dimension_numbers<[1], [0], [0], [1], [0, 0, 1, 1], [], []>} : vector<8x4xf32>, vector<4x256xf32>, vector<8x256xf32> -> vector<8x256xf32>
    %362 = vector.broadcast %2 : vector<8x1xf32> to vector<8x256xf32>
    %363 = arith.addf %361, %362 : vector<8x256xf32>
    %cst_299 = arith.constant 0.000000e+00 : f32
    %364 = vector.broadcast %cst_299 : f32 to vector<8x256xf32>
    %365 = arith.maximumf %363, %364 : vector<8x256xf32>
    %c17_i32_300 = arith.constant 17 : i32
    %366 = tpu.dynamic_rotate %365 by %c17_i32_300 dim 1 : vector<8x256xf32>, i32 -> vector<8x256xf32>
    %c0_301 = arith.constant 0 : index
    %c0_302 = arith.constant 0 : index
    %c0_303 = arith.constant 0 : index
    %367 = vector.load %arg5[%c0_301, %c0_302, %c0_303] : memref<9x1x256xf32, #tpu.memory_space<vmem>>, vector<1x1x256xf32>
    %368 = vector.shape_cast %367 : vector<1x1x256xf32> to vector<1x256xf32>
    %369 = vector.broadcast %368 : vector<1x256xf32> to vector<8x256xf32>
    %370 = arith.mulf %366, %369 : vector<8x256xf32>
    %c16_i32_304 = arith.constant 16 : i32
    %371 = tpu.dynamic_rotate %365 by %c16_i32_304 dim 1 : vector<8x256xf32>, i32 -> vector<8x256xf32>
    %c1_305 = arith.constant 1 : index
    %c0_306 = arith.constant 0 : index
    %c0_307 = arith.constant 0 : index
    %372 = vector.load %arg5[%c1_305, %c0_306, %c0_307] : memref<9x1x256xf32, #tpu.memory_space<vmem>>, vector<1x1x256xf32>
    %373 = vector.shape_cast %372 : vector<1x1x256xf32> to vector<1x256xf32>
    %374 = vector.broadcast %373 : vector<1x256xf32> to vector<8x256xf32>
    %375 = arith.mulf %371, %374 : vector<8x256xf32>
    %c15_i32_308 = arith.constant 15 : i32
    %376 = tpu.dynamic_rotate %365 by %c15_i32_308 dim 1 : vector<8x256xf32>, i32 -> vector<8x256xf32>
    %c2_309 = arith.constant 2 : index
    %c0_310 = arith.constant 0 : index
    %c0_311 = arith.constant 0 : index
    %377 = vector.load %arg5[%c2_309, %c0_310, %c0_311] : memref<9x1x256xf32, #tpu.memory_space<vmem>>, vector<1x1x256xf32>
    %378 = vector.shape_cast %377 : vector<1x1x256xf32> to vector<1x256xf32>
    %379 = vector.broadcast %378 : vector<1x256xf32> to vector<8x256xf32>
    %380 = arith.mulf %376, %379 : vector<8x256xf32>
    %c1_i32_312 = arith.constant 1 : i32
    %381 = tpu.dynamic_rotate %365 by %c1_i32_312 dim 1 : vector<8x256xf32>, i32 -> vector<8x256xf32>
    %c3_313 = arith.constant 3 : index
    %c0_314 = arith.constant 0 : index
    %c0_315 = arith.constant 0 : index
    %382 = vector.load %arg5[%c3_313, %c0_314, %c0_315] : memref<9x1x256xf32, #tpu.memory_space<vmem>>, vector<1x1x256xf32>
    %383 = vector.shape_cast %382 : vector<1x1x256xf32> to vector<1x256xf32>
    %384 = vector.broadcast %383 : vector<1x256xf32> to vector<8x256xf32>
    %385 = arith.mulf %381, %384 : vector<8x256xf32>
    %c255_i32_316 = arith.constant 255 : i32
    %386 = tpu.dynamic_rotate %365 by %c255_i32_316 dim 1 : vector<8x256xf32>, i32 -> vector<8x256xf32>
    %c5_317 = arith.constant 5 : index
    %c0_318 = arith.constant 0 : index
    %c0_319 = arith.constant 0 : index
    %387 = vector.load %arg5[%c5_317, %c0_318, %c0_319] : memref<9x1x256xf32, #tpu.memory_space<vmem>>, vector<1x1x256xf32>
    %388 = vector.shape_cast %387 : vector<1x1x256xf32> to vector<1x256xf32>
    %389 = vector.broadcast %388 : vector<1x256xf32> to vector<8x256xf32>
    %390 = arith.mulf %386, %389 : vector<8x256xf32>
    %c241_i32_320 = arith.constant 241 : i32
    %391 = tpu.dynamic_rotate %365 by %c241_i32_320 dim 1 : vector<8x256xf32>, i32 -> vector<8x256xf32>
    %c6_321 = arith.constant 6 : index
    %c0_322 = arith.constant 0 : index
    %c0_323 = arith.constant 0 : index
    %392 = vector.load %arg5[%c6_321, %c0_322, %c0_323] : memref<9x1x256xf32, #tpu.memory_space<vmem>>, vector<1x1x256xf32>
    %393 = vector.shape_cast %392 : vector<1x1x256xf32> to vector<1x256xf32>
    %394 = vector.broadcast %393 : vector<1x256xf32> to vector<8x256xf32>
    %395 = arith.mulf %391, %394 : vector<8x256xf32>
    %c240_i32_324 = arith.constant 240 : i32
    %396 = tpu.dynamic_rotate %365 by %c240_i32_324 dim 1 : vector<8x256xf32>, i32 -> vector<8x256xf32>
    %c7_325 = arith.constant 7 : index
    %c0_326 = arith.constant 0 : index
    %c0_327 = arith.constant 0 : index
    %397 = vector.load %arg5[%c7_325, %c0_326, %c0_327] : memref<9x1x256xf32, #tpu.memory_space<vmem>>, vector<1x1x256xf32>
    %398 = vector.shape_cast %397 : vector<1x1x256xf32> to vector<1x256xf32>
    %399 = vector.broadcast %398 : vector<1x256xf32> to vector<8x256xf32>
    %400 = arith.mulf %396, %399 : vector<8x256xf32>
    %c239_i32_328 = arith.constant 239 : i32
    %401 = tpu.dynamic_rotate %365 by %c239_i32_328 dim 1 : vector<8x256xf32>, i32 -> vector<8x256xf32>
    %c8_329 = arith.constant 8 : index
    %c0_330 = arith.constant 0 : index
    %c0_331 = arith.constant 0 : index
    %402 = vector.load %arg5[%c8_329, %c0_330, %c0_331] : memref<9x1x256xf32, #tpu.memory_space<vmem>>, vector<1x1x256xf32>
    %403 = vector.shape_cast %402 : vector<1x1x256xf32> to vector<1x256xf32>
    %404 = vector.broadcast %403 : vector<1x256xf32> to vector<8x256xf32>
    %405 = arith.mulf %401, %404 : vector<8x256xf32>
    %406 = tpu.concatenate %370, %375, %380, %385, %365, %390, %395, %400, %405 in 0 : vector<8x256xf32>, vector<8x256xf32>, vector<8x256xf32>, vector<8x256xf32>, vector<8x256xf32>, vector<8x256xf32>, vector<8x256xf32>, vector<8x256xf32>, vector<8x256xf32> -> vector<72x256xf32>
    %407 = arith.truncf %406 : vector<72x256xf32> to vector<72x256xbf16>
    %c6_332 = arith.constant 6 : index
    %c0_333 = arith.constant 0 : index
    %c0_334 = arith.constant 0 : index
    %408 = vector.load %arg13[%c6_332, %c0_333, %c0_334] : memref<8x8x256xf32, #tpu.memory_space<vmem>>, vector<1x8x256xf32>
    %409 = vector.shape_cast %408 : vector<1x8x256xf32> to vector<8x256xf32>
    %cst_335 = arith.constant dense<0.000000e+00> : vector<8x256xf32>
    %410 = tpu.matmul %6, %407, %cst_335 {dimension_numbers = #tpu.dot_dimension_numbers<[1], [0], [0], [1], [0, 0, 1, 1], [], []>} : vector<8x72xbf16>, vector<72x256xbf16>, vector<8x256xf32> -> vector<8x256xf32>
    %411 = arith.addf %409, %410 : vector<8x256xf32>
    %c6_336 = arith.constant 6 : index
    %c0_337 = arith.constant 0 : index
    %c0_338 = arith.constant 0 : index
    %412 = vector.load %arg13[%c6_336, %c0_337, %c0_338] : memref<8x8x256xf32, #tpu.memory_space<vmem>>, vector<1x8x256xf32>
    %413 = vector.shape_cast %412 : vector<1x8x256xf32> to vector<8x256xf32>
    %414 = vector.shape_cast %411 : vector<8x256xf32> to vector<1x8x256xf32>
    tpu.vector_store %arg13[%c6_336, %c0_337, %c0_338], %414 {strides = array<i32>} : memref<8x8x256xf32, #tpu.memory_space<vmem>>, vector<1x8x256xf32>,
    %c5_339 = arith.constant 5 : index
    %c0_340 = arith.constant 0 : index
    %c0_341 = arith.constant 0 : index
    %415 = vector.load %arg13[%c5_339, %c0_340, %c0_341] : memref<8x8x256xf32, #tpu.memory_space<vmem>>, vector<1x8x256xf32>
    %416 = vector.shape_cast %415 : vector<1x8x256xf32> to vector<8x256xf32>
    %cst_342 = arith.constant dense<0.000000e+00> : vector<8x256xf32>
    %417 = tpu.matmul %8, %407, %cst_342 {dimension_numbers = #tpu.dot_dimension_numbers<[1], [0], [0], [1], [0, 0, 1, 1], [], []>} : vector<8x72xbf16>, vector<72x256xbf16>, vector<8x256xf32> -> vector<8x256xf32>
    %418 = arith.addf %416, %417 : vector<8x256xf32>
    %c5_343 = arith.constant 5 : index
    %c0_344 = arith.constant 0 : index
    %c0_345 = arith.constant 0 : index
    %419 = vector.load %arg13[%c5_343, %c0_344, %c0_345] : memref<8x8x256xf32, #tpu.memory_space<vmem>>, vector<1x8x256xf32>
    %420 = vector.shape_cast %419 : vector<1x8x256xf32> to vector<8x256xf32>
    %421 = vector.shape_cast %418 : vector<8x256xf32> to vector<1x8x256xf32>
    tpu.vector_store %arg13[%c5_343, %c0_344, %c0_345], %421 {strides = array<i32>} : memref<8x8x256xf32, #tpu.memory_space<vmem>>, vector<1x8x256xf32>,
    %c4_346 = arith.constant 4 : index
    %c0_347 = arith.constant 0 : index
    %c0_348 = arith.constant 0 : index
    %422 = vector.load %arg13[%c4_346, %c0_347, %c0_348] : memref<8x8x256xf32, #tpu.memory_space<vmem>>, vector<1x8x256xf32>
    %423 = vector.shape_cast %422 : vector<1x8x256xf32> to vector<8x256xf32>
    %cst_349 = arith.constant dense<0.000000e+00> : vector<8x256xf32>
    %424 = tpu.matmul %10, %407, %cst_349 {dimension_numbers = #tpu.dot_dimension_numbers<[1], [0], [0], [1], [0, 0, 1, 1], [], []>} : vector<8x72xbf16>, vector<72x256xbf16>, vector<8x256xf32> -> vector<8x256xf32>
    %425 = arith.addf %423, %424 : vector<8x256xf32>
    %c4_350 = arith.constant 4 : index
    %c0_351 = arith.constant 0 : index
    %c0_352 = arith.constant 0 : index
    %426 = vector.load %arg13[%c4_350, %c0_351, %c0_352] : memref<8x8x256xf32, #tpu.memory_space<vmem>>, vector<1x8x256xf32>
    %427 = vector.shape_cast %426 : vector<1x8x256xf32> to vector<8x256xf32>
    %428 = vector.shape_cast %425 : vector<8x256xf32> to vector<1x8x256xf32>
    tpu.vector_store %arg13[%c4_350, %c0_351, %c0_352], %428 {strides = array<i32>} : memref<8x8x256xf32, #tpu.memory_space<vmem>>, vector<1x8x256xf32>,
    %c0_353 = arith.constant 0 : index
    %c6_354 = arith.constant 6 : index
    %c0_355 = arith.constant 0 : index
    %c0_356 = arith.constant 0 : index
    %429 = vector.load %arg2[%c0_353, %c6_354, %c0_355, %c0_356] : memref<1x8x4x256xf32, #tpu.memory_space<vmem>>, vector<1x1x4x256xf32>
    %430 = vector.shape_cast %429 : vector<1x1x4x256xf32> to vector<4x256xf32>
    %cst_357 = arith.constant dense<0.000000e+00> : vector<8x256xf32>
    %431 = tpu.matmul %0, %430, %cst_357 {dimension_numbers = #tpu.dot_dimension_numbers<[1], [0], [0], [1], [0, 0, 1, 1], [], []>} : vector<8x4xf32>, vector<4x256xf32>, vector<8x256xf32> -> vector<8x256xf32>
    %432 = vector.broadcast %2 : vector<8x1xf32> to vector<8x256xf32>
    %433 = arith.addf %431, %432 : vector<8x256xf32>
    %cst_358 = arith.constant 0.000000e+00 : f32
    %434 = vector.broadcast %cst_358 : f32 to vector<8x256xf32>
    %435 = arith.maximumf %433, %434 : vector<8x256xf32>
    %c17_i32_359 = arith.constant 17 : i32
    %436 = tpu.dynamic_rotate %435 by %c17_i32_359 dim 1 : vector<8x256xf32>, i32 -> vector<8x256xf32>
    %c0_360 = arith.constant 0 : index
    %c0_361 = arith.constant 0 : index
    %c0_362 = arith.constant 0 : index
    %437 = vector.load %arg5[%c0_360, %c0_361, %c0_362] : memref<9x1x256xf32, #tpu.memory_space<vmem>>, vector<1x1x256xf32>
    %438 = vector.shape_cast %437 : vector<1x1x256xf32> to vector<1x256xf32>
    %439 = vector.broadcast %438 : vector<1x256xf32> to vector<8x256xf32>
    %440 = arith.mulf %436, %439 : vector<8x256xf32>
    %c16_i32_363 = arith.constant 16 : i32
    %441 = tpu.dynamic_rotate %435 by %c16_i32_363 dim 1 : vector<8x256xf32>, i32 -> vector<8x256xf32>
    %c1_364 = arith.constant 1 : index
    %c0_365 = arith.constant 0 : index
    %c0_366 = arith.constant 0 : index
    %442 = vector.load %arg5[%c1_364, %c0_365, %c0_366] : memref<9x1x256xf32, #tpu.memory_space<vmem>>, vector<1x1x256xf32>
    %443 = vector.shape_cast %442 : vector<1x1x256xf32> to vector<1x256xf32>
    %444 = vector.broadcast %443 : vector<1x256xf32> to vector<8x256xf32>
    %445 = arith.mulf %441, %444 : vector<8x256xf32>
    %c15_i32_367 = arith.constant 15 : i32
    %446 = tpu.dynamic_rotate %435 by %c15_i32_367 dim 1 : vector<8x256xf32>, i32 -> vector<8x256xf32>
    %c2_368 = arith.constant 2 : index
    %c0_369 = arith.constant 0 : index
    %c0_370 = arith.constant 0 : index
    %447 = vector.load %arg5[%c2_368, %c0_369, %c0_370] : memref<9x1x256xf32, #tpu.memory_space<vmem>>, vector<1x1x256xf32>
    %448 = vector.shape_cast %447 : vector<1x1x256xf32> to vector<1x256xf32>
    %449 = vector.broadcast %448 : vector<1x256xf32> to vector<8x256xf32>
    %450 = arith.mulf %446, %449 : vector<8x256xf32>
    %c1_i32_371 = arith.constant 1 : i32
    %451 = tpu.dynamic_rotate %435 by %c1_i32_371 dim 1 : vector<8x256xf32>, i32 -> vector<8x256xf32>
    %c3_372 = arith.constant 3 : index
    %c0_373 = arith.constant 0 : index
    %c0_374 = arith.constant 0 : index
    %452 = vector.load %arg5[%c3_372, %c0_373, %c0_374] : memref<9x1x256xf32, #tpu.memory_space<vmem>>, vector<1x1x256xf32>
    %453 = vector.shape_cast %452 : vector<1x1x256xf32> to vector<1x256xf32>
    %454 = vector.broadcast %453 : vector<1x256xf32> to vector<8x256xf32>
    %455 = arith.mulf %451, %454 : vector<8x256xf32>
    %c255_i32_375 = arith.constant 255 : i32
    %456 = tpu.dynamic_rotate %435 by %c255_i32_375 dim 1 : vector<8x256xf32>, i32 -> vector<8x256xf32>
    %c5_376 = arith.constant 5 : index
    %c0_377 = arith.constant 0 : index
    %c0_378 = arith.constant 0 : index
    %457 = vector.load %arg5[%c5_376, %c0_377, %c0_378] : memref<9x1x256xf32, #tpu.memory_space<vmem>>, vector<1x1x256xf32>
    %458 = vector.shape_cast %457 : vector<1x1x256xf32> to vector<1x256xf32>
    %459 = vector.broadcast %458 : vector<1x256xf32> to vector<8x256xf32>
    %460 = arith.mulf %456, %459 : vector<8x256xf32>
    %c241_i32_379 = arith.constant 241 : i32
    %461 = tpu.dynamic_rotate %435 by %c241_i32_379 dim 1 : vector<8x256xf32>, i32 -> vector<8x256xf32>
    %c6_380 = arith.constant 6 : index
    %c0_381 = arith.constant 0 : index
    %c0_382 = arith.constant 0 : index
    %462 = vector.load %arg5[%c6_380, %c0_381, %c0_382] : memref<9x1x256xf32, #tpu.memory_space<vmem>>, vector<1x1x256xf32>
    %463 = vector.shape_cast %462 : vector<1x1x256xf32> to vector<1x256xf32>
    %464 = vector.broadcast %463 : vector<1x256xf32> to vector<8x256xf32>
    %465 = arith.mulf %461, %464 : vector<8x256xf32>
    %c240_i32_383 = arith.constant 240 : i32
    %466 = tpu.dynamic_rotate %435 by %c240_i32_383 dim 1 : vector<8x256xf32>, i32 -> vector<8x256xf32>
    %c7_384 = arith.constant 7 : index
    %c0_385 = arith.constant 0 : index
    %c0_386 = arith.constant 0 : index
    %467 = vector.load %arg5[%c7_384, %c0_385, %c0_386] : memref<9x1x256xf32, #tpu.memory_space<vmem>>, vector<1x1x256xf32>
    %468 = vector.shape_cast %467 : vector<1x1x256xf32> to vector<1x256xf32>
    %469 = vector.broadcast %468 : vector<1x256xf32> to vector<8x256xf32>
    %470 = arith.mulf %466, %469 : vector<8x256xf32>
    %c239_i32_387 = arith.constant 239 : i32
    %471 = tpu.dynamic_rotate %435 by %c239_i32_387 dim 1 : vector<8x256xf32>, i32 -> vector<8x256xf32>
    %c8_388 = arith.constant 8 : index
    %c0_389 = arith.constant 0 : index
    %c0_390 = arith.constant 0 : index
    %472 = vector.load %arg5[%c8_388, %c0_389, %c0_390] : memref<9x1x256xf32, #tpu.memory_space<vmem>>, vector<1x1x256xf32>
    %473 = vector.shape_cast %472 : vector<1x1x256xf32> to vector<1x256xf32>
    %474 = vector.broadcast %473 : vector<1x256xf32> to vector<8x256xf32>
    %475 = arith.mulf %471, %474 : vector<8x256xf32>
    %476 = tpu.concatenate %440, %445, %450, %455, %435, %460, %465, %470, %475 in 0 : vector<8x256xf32>, vector<8x256xf32>, vector<8x256xf32>, vector<8x256xf32>, vector<8x256xf32>, vector<8x256xf32>, vector<8x256xf32>, vector<8x256xf32>, vector<8x256xf32> -> vector<72x256xf32>
    %477 = arith.truncf %476 : vector<72x256xf32> to vector<72x256xbf16>
    %c7_391 = arith.constant 7 : index
    %c0_392 = arith.constant 0 : index
    %c0_393 = arith.constant 0 : index
    %478 = vector.load %arg13[%c7_391, %c0_392, %c0_393] : memref<8x8x256xf32, #tpu.memory_space<vmem>>, vector<1x8x256xf32>
    %479 = vector.shape_cast %478 : vector<1x8x256xf32> to vector<8x256xf32>
    %cst_394 = arith.constant dense<0.000000e+00> : vector<8x256xf32>
    %480 = tpu.matmul %6, %477, %cst_394 {dimension_numbers = #tpu.dot_dimension_numbers<[1], [0], [0], [1], [0, 0, 1, 1], [], []>} : vector<8x72xbf16>, vector<72x256xbf16>, vector<8x256xf32> -> vector<8x256xf32>
    %481 = arith.addf %479, %480 : vector<8x256xf32>
    %c7_395 = arith.constant 7 : index
    %c0_396 = arith.constant 0 : index
    %c0_397 = arith.constant 0 : index
    %482 = vector.load %arg13[%c7_395, %c0_396, %c0_397] : memref<8x8x256xf32, #tpu.memory_space<vmem>>, vector<1x8x256xf32>
    %483 = vector.shape_cast %482 : vector<1x8x256xf32> to vector<8x256xf32>
    %484 = vector.shape_cast %481 : vector<8x256xf32> to vector<1x8x256xf32>
    tpu.vector_store %arg13[%c7_395, %c0_396, %c0_397], %484 {strides = array<i32>} : memref<8x8x256xf32, #tpu.memory_space<vmem>>, vector<1x8x256xf32>,
    %c6_398 = arith.constant 6 : index
    %c0_399 = arith.constant 0 : index
    %c0_400 = arith.constant 0 : index
    %485 = vector.load %arg13[%c6_398, %c0_399, %c0_400] : memref<8x8x256xf32, #tpu.memory_space<vmem>>, vector<1x8x256xf32>
    %486 = vector.shape_cast %485 : vector<1x8x256xf32> to vector<8x256xf32>
    %cst_401 = arith.constant dense<0.000000e+00> : vector<8x256xf32>
    %487 = tpu.matmul %8, %477, %cst_401 {dimension_numbers = #tpu.dot_dimension_numbers<[1], [0], [0], [1], [0, 0, 1, 1], [], []>} : vector<8x72xbf16>, vector<72x256xbf16>, vector<8x256xf32> -> vector<8x256xf32>
    %488 = arith.addf %486, %487 : vector<8x256xf32>
    %c6_402 = arith.constant 6 : index
    %c0_403 = arith.constant 0 : index
    %c0_404 = arith.constant 0 : index
    %489 = vector.load %arg13[%c6_402, %c0_403, %c0_404] : memref<8x8x256xf32, #tpu.memory_space<vmem>>, vector<1x8x256xf32>
    %490 = vector.shape_cast %489 : vector<1x8x256xf32> to vector<8x256xf32>
    %491 = vector.shape_cast %488 : vector<8x256xf32> to vector<1x8x256xf32>
    tpu.vector_store %arg13[%c6_402, %c0_403, %c0_404], %491 {strides = array<i32>} : memref<8x8x256xf32, #tpu.memory_space<vmem>>, vector<1x8x256xf32>,
    %c5_405 = arith.constant 5 : index
    %c0_406 = arith.constant 0 : index
    %c0_407 = arith.constant 0 : index
    %492 = vector.load %arg13[%c5_405, %c0_406, %c0_407] : memref<8x8x256xf32, #tpu.memory_space<vmem>>, vector<1x8x256xf32>
    %493 = vector.shape_cast %492 : vector<1x8x256xf32> to vector<8x256xf32>
    %cst_408 = arith.constant dense<0.000000e+00> : vector<8x256xf32>
    %494 = tpu.matmul %10, %477, %cst_408 {dimension_numbers = #tpu.dot_dimension_numbers<[1], [0], [0], [1], [0, 0, 1, 1], [], []>} : vector<8x72xbf16>, vector<72x256xbf16>, vector<8x256xf32> -> vector<8x256xf32>
    %495 = arith.addf %493, %494 : vector<8x256xf32>
    %c5_409 = arith.constant 5 : index
    %c0_410 = arith.constant 0 : index
    %c0_411 = arith.constant 0 : index
    %496 = vector.load %arg13[%c5_409, %c0_410, %c0_411] : memref<8x8x256xf32, #tpu.memory_space<vmem>>, vector<1x8x256xf32>
    %497 = vector.shape_cast %496 : vector<1x8x256xf32> to vector<8x256xf32>
    %498 = vector.shape_cast %495 : vector<8x256xf32> to vector<1x8x256xf32>
    tpu.vector_store %arg13[%c5_409, %c0_410, %c0_411], %498 {strides = array<i32>} : memref<8x8x256xf32, #tpu.memory_space<vmem>>, vector<1x8x256xf32>,
    %c0_412 = arith.constant 0 : index
    %c7_413 = arith.constant 7 : index
    %c0_414 = arith.constant 0 : index
    %c0_415 = arith.constant 0 : index
    %499 = vector.load %arg2[%c0_412, %c7_413, %c0_414, %c0_415] : memref<1x8x4x256xf32, #tpu.memory_space<vmem>>, vector<1x1x4x256xf32>
    %500 = vector.shape_cast %499 : vector<1x1x4x256xf32> to vector<4x256xf32>
    %cst_416 = arith.constant dense<0.000000e+00> : vector<8x256xf32>
    %501 = tpu.matmul %0, %500, %cst_416 {dimension_numbers = #tpu.dot_dimension_numbers<[1], [0], [0], [1], [0, 0, 1, 1], [], []>} : vector<8x4xf32>, vector<4x256xf32>, vector<8x256xf32> -> vector<8x256xf32>
    %502 = vector.broadcast %2 : vector<8x1xf32> to vector<8x256xf32>
    %503 = arith.addf %501, %502 : vector<8x256xf32>
    %cst_417 = arith.constant 0.000000e+00 : f32
    %504 = vector.broadcast %cst_417 : f32 to vector<8x256xf32>
    %505 = arith.maximumf %503, %504 : vector<8x256xf32>
    %c17_i32_418 = arith.constant 17 : i32
    %506 = tpu.dynamic_rotate %505 by %c17_i32_418 dim 1 : vector<8x256xf32>, i32 -> vector<8x256xf32>
    %c0_419 = arith.constant 0 : index
    %c0_420 = arith.constant 0 : index
    %c0_421 = arith.constant 0 : index
    %507 = vector.load %arg5[%c0_419, %c0_420, %c0_421] : memref<9x1x256xf32, #tpu.memory_space<vmem>>, vector<1x1x256xf32>
    %508 = vector.shape_cast %507 : vector<1x1x256xf32> to vector<1x256xf32>
    %509 = vector.broadcast %508 : vector<1x256xf32> to vector<8x256xf32>
    %510 = arith.mulf %506, %509 : vector<8x256xf32>
    %c16_i32_422 = arith.constant 16 : i32
    %511 = tpu.dynamic_rotate %505 by %c16_i32_422 dim 1 : vector<8x256xf32>, i32 -> vector<8x256xf32>
    %c1_423 = arith.constant 1 : index
    %c0_424 = arith.constant 0 : index
    %c0_425 = arith.constant 0 : index
    %512 = vector.load %arg5[%c1_423, %c0_424, %c0_425] : memref<9x1x256xf32, #tpu.memory_space<vmem>>, vector<1x1x256xf32>
    %513 = vector.shape_cast %512 : vector<1x1x256xf32> to vector<1x256xf32>
    %514 = vector.broadcast %513 : vector<1x256xf32> to vector<8x256xf32>
    %515 = arith.mulf %511, %514 : vector<8x256xf32>
    %c15_i32_426 = arith.constant 15 : i32
    %516 = tpu.dynamic_rotate %505 by %c15_i32_426 dim 1 : vector<8x256xf32>, i32 -> vector<8x256xf32>
    %c2_427 = arith.constant 2 : index
    %c0_428 = arith.constant 0 : index
    %c0_429 = arith.constant 0 : index
    %517 = vector.load %arg5[%c2_427, %c0_428, %c0_429] : memref<9x1x256xf32, #tpu.memory_space<vmem>>, vector<1x1x256xf32>
    %518 = vector.shape_cast %517 : vector<1x1x256xf32> to vector<1x256xf32>
    %519 = vector.broadcast %518 : vector<1x256xf32> to vector<8x256xf32>
    %520 = arith.mulf %516, %519 : vector<8x256xf32>
    %c1_i32_430 = arith.constant 1 : i32
    %521 = tpu.dynamic_rotate %505 by %c1_i32_430 dim 1 : vector<8x256xf32>, i32 -> vector<8x256xf32>
    %c3_431 = arith.constant 3 : index
    %c0_432 = arith.constant 0 : index
    %c0_433 = arith.constant 0 : index
    %522 = vector.load %arg5[%c3_431, %c0_432, %c0_433] : memref<9x1x256xf32, #tpu.memory_space<vmem>>, vector<1x1x256xf32>
    %523 = vector.shape_cast %522 : vector<1x1x256xf32> to vector<1x256xf32>
    %524 = vector.broadcast %523 : vector<1x256xf32> to vector<8x256xf32>
    %525 = arith.mulf %521, %524 : vector<8x256xf32>
    %c255_i32_434 = arith.constant 255 : i32
    %526 = tpu.dynamic_rotate %505 by %c255_i32_434 dim 1 : vector<8x256xf32>, i32 -> vector<8x256xf32>
    %c5_435 = arith.constant 5 : index
    %c0_436 = arith.constant 0 : index
    %c0_437 = arith.constant 0 : index
    %527 = vector.load %arg5[%c5_435, %c0_436, %c0_437] : memref<9x1x256xf32, #tpu.memory_space<vmem>>, vector<1x1x256xf32>
    %528 = vector.shape_cast %527 : vector<1x1x256xf32> to vector<1x256xf32>
    %529 = vector.broadcast %528 : vector<1x256xf32> to vector<8x256xf32>
    %530 = arith.mulf %526, %529 : vector<8x256xf32>
    %c241_i32_438 = arith.constant 241 : i32
    %531 = tpu.dynamic_rotate %505 by %c241_i32_438 dim 1 : vector<8x256xf32>, i32 -> vector<8x256xf32>
    %c6_439 = arith.constant 6 : index
    %c0_440 = arith.constant 0 : index
    %c0_441 = arith.constant 0 : index
    %532 = vector.load %arg5[%c6_439, %c0_440, %c0_441] : memref<9x1x256xf32, #tpu.memory_space<vmem>>, vector<1x1x256xf32>
    %533 = vector.shape_cast %532 : vector<1x1x256xf32> to vector<1x256xf32>
    %534 = vector.broadcast %533 : vector<1x256xf32> to vector<8x256xf32>
    %535 = arith.mulf %531, %534 : vector<8x256xf32>
    %c240_i32_442 = arith.constant 240 : i32
    %536 = tpu.dynamic_rotate %505 by %c240_i32_442 dim 1 : vector<8x256xf32>, i32 -> vector<8x256xf32>
    %c7_443 = arith.constant 7 : index
    %c0_444 = arith.constant 0 : index
    %c0_445 = arith.constant 0 : index
    %537 = vector.load %arg5[%c7_443, %c0_444, %c0_445] : memref<9x1x256xf32, #tpu.memory_space<vmem>>, vector<1x1x256xf32>
    %538 = vector.shape_cast %537 : vector<1x1x256xf32> to vector<1x256xf32>
    %539 = vector.broadcast %538 : vector<1x256xf32> to vector<8x256xf32>
    %540 = arith.mulf %536, %539 : vector<8x256xf32>
    %c239_i32_446 = arith.constant 239 : i32
    %541 = tpu.dynamic_rotate %505 by %c239_i32_446 dim 1 : vector<8x256xf32>, i32 -> vector<8x256xf32>
    %c8_447 = arith.constant 8 : index
    %c0_448 = arith.constant 0 : index
    %c0_449 = arith.constant 0 : index
    %542 = vector.load %arg5[%c8_447, %c0_448, %c0_449] : memref<9x1x256xf32, #tpu.memory_space<vmem>>, vector<1x1x256xf32>
    %543 = vector.shape_cast %542 : vector<1x1x256xf32> to vector<1x256xf32>
    %544 = vector.broadcast %543 : vector<1x256xf32> to vector<8x256xf32>
    %545 = arith.mulf %541, %544 : vector<8x256xf32>
    %546 = tpu.concatenate %510, %515, %520, %525, %505, %530, %535, %540, %545 in 0 : vector<8x256xf32>, vector<8x256xf32>, vector<8x256xf32>, vector<8x256xf32>, vector<8x256xf32>, vector<8x256xf32>, vector<8x256xf32>, vector<8x256xf32>, vector<8x256xf32> -> vector<72x256xf32>
    %547 = arith.truncf %546 : vector<72x256xf32> to vector<72x256xbf16>
    %c7_450 = arith.constant 7 : index
    %c0_451 = arith.constant 0 : index
    %c0_452 = arith.constant 0 : index
    %548 = vector.load %arg13[%c7_450, %c0_451, %c0_452] : memref<8x8x256xf32, #tpu.memory_space<vmem>>, vector<1x8x256xf32>
    %549 = vector.shape_cast %548 : vector<1x8x256xf32> to vector<8x256xf32>
    %cst_453 = arith.constant dense<0.000000e+00> : vector<8x256xf32>
    %550 = tpu.matmul %8, %547, %cst_453 {dimension_numbers = #tpu.dot_dimension_numbers<[1], [0], [0], [1], [0, 0, 1, 1], [], []>} : vector<8x72xbf16>, vector<72x256xbf16>, vector<8x256xf32> -> vector<8x256xf32>
    %551 = arith.addf %549, %550 : vector<8x256xf32>
    %c7_454 = arith.constant 7 : index
    %c0_455 = arith.constant 0 : index
    %c0_456 = arith.constant 0 : index
    %552 = vector.load %arg13[%c7_454, %c0_455, %c0_456] : memref<8x8x256xf32, #tpu.memory_space<vmem>>, vector<1x8x256xf32>
    %553 = vector.shape_cast %552 : vector<1x8x256xf32> to vector<8x256xf32>
    %554 = vector.shape_cast %551 : vector<8x256xf32> to vector<1x8x256xf32>
    tpu.vector_store %arg13[%c7_454, %c0_455, %c0_456], %554 {strides = array<i32>} : memref<8x8x256xf32, #tpu.memory_space<vmem>>, vector<1x8x256xf32>,
    %c6_457 = arith.constant 6 : index
    %c0_458 = arith.constant 0 : index
    %c0_459 = arith.constant 0 : index
    %555 = vector.load %arg13[%c6_457, %c0_458, %c0_459] : memref<8x8x256xf32, #tpu.memory_space<vmem>>, vector<1x8x256xf32>
    %556 = vector.shape_cast %555 : vector<1x8x256xf32> to vector<8x256xf32>
    %cst_460 = arith.constant dense<0.000000e+00> : vector<8x256xf32>
    %557 = tpu.matmul %10, %547, %cst_460 {dimension_numbers = #tpu.dot_dimension_numbers<[1], [0], [0], [1], [0, 0, 1, 1], [], []>} : vector<8x72xbf16>, vector<72x256xbf16>, vector<8x256xf32> -> vector<8x256xf32>
    %558 = arith.addf %556, %557 : vector<8x256xf32>
    %c6_461 = arith.constant 6 : index
    %c0_462 = arith.constant 0 : index
    %c0_463 = arith.constant 0 : index
    %559 = vector.load %arg13[%c6_461, %c0_462, %c0_463] : memref<8x8x256xf32, #tpu.memory_space<vmem>>, vector<1x8x256xf32>
    %560 = vector.shape_cast %559 : vector<1x8x256xf32> to vector<8x256xf32>
    %561 = vector.shape_cast %558 : vector<8x256xf32> to vector<1x8x256xf32>
    tpu.vector_store %arg13[%c6_461, %c0_462, %c0_463], %561 {strides = array<i32>} : memref<8x8x256xf32, #tpu.memory_space<vmem>>, vector<1x8x256xf32>,
    %c0_i32_464 = arith.constant 0 : i32
    %562 = arith.cmpi slt, %arg1, %c0_i32_464 : i32
    %563 = arith.extui %562 : i1 to i32
    %c0_i32_465 = arith.constant 0 : i32
    %564 = arith.cmpi ne, %563, %c0_i32_465 : i32
    scf.if %564 {
      %c0_578 = arith.constant 0 : index
      %c0_579 = arith.constant 0 : index
      %c0_580 = arith.constant 0 : index
      %c0_581 = arith.constant 0 : index
      %701 = vector.load %arg4[%c0_578, %c0_579, %c0_580, %c0_581] : memref<1x1x4x256xf32, #tpu.memory_space<vmem>>, vector<1x1x4x256xf32>
      %702 = vector.shape_cast %701 : vector<1x1x4x256xf32> to vector<4x256xf32>
      %cst_582 = arith.constant dense<0.000000e+00> : vector<8x256xf32>
      %703 = tpu.matmul %0, %702, %cst_582 {dimension_numbers = #tpu.dot_dimension_numbers<[1], [0], [0], [1], [0, 0, 1, 1], [], []>} : vector<8x4xf32>, vector<4x256xf32>, vector<8x256xf32> -> vector<8x256xf32>
      %704 = vector.broadcast %2 : vector<8x1xf32> to vector<8x256xf32>
      %705 = arith.addf %703, %704 : vector<8x256xf32>
      %cst_583 = arith.constant 0.000000e+00 : f32
      %706 = vector.broadcast %cst_583 : f32 to vector<8x256xf32>
      %707 = arith.maximumf %705, %706 : vector<8x256xf32>
      %c17_i32_584 = arith.constant 17 : i32
      %708 = tpu.dynamic_rotate %707 by %c17_i32_584 dim 1 : vector<8x256xf32>, i32 -> vector<8x256xf32>
      %c0_585 = arith.constant 0 : index
      %c0_586 = arith.constant 0 : index
      %c0_587 = arith.constant 0 : index
      %709 = vector.load %arg5[%c0_585, %c0_586, %c0_587] : memref<9x1x256xf32, #tpu.memory_space<vmem>>, vector<1x1x256xf32>
      %710 = vector.shape_cast %709 : vector<1x1x256xf32> to vector<1x256xf32>
      %711 = vector.broadcast %710 : vector<1x256xf32> to vector<8x256xf32>
      %712 = arith.mulf %708, %711 : vector<8x256xf32>
      %c16_i32_588 = arith.constant 16 : i32
      %713 = tpu.dynamic_rotate %707 by %c16_i32_588 dim 1 : vector<8x256xf32>, i32 -> vector<8x256xf32>
      %c1_589 = arith.constant 1 : index
      %c0_590 = arith.constant 0 : index
      %c0_591 = arith.constant 0 : index
      %714 = vector.load %arg5[%c1_589, %c0_590, %c0_591] : memref<9x1x256xf32, #tpu.memory_space<vmem>>, vector<1x1x256xf32>
      %715 = vector.shape_cast %714 : vector<1x1x256xf32> to vector<1x256xf32>
      %716 = vector.broadcast %715 : vector<1x256xf32> to vector<8x256xf32>
      %717 = arith.mulf %713, %716 : vector<8x256xf32>
      %c15_i32_592 = arith.constant 15 : i32
      %718 = tpu.dynamic_rotate %707 by %c15_i32_592 dim 1 : vector<8x256xf32>, i32 -> vector<8x256xf32>
      %c2_593 = arith.constant 2 : index
      %c0_594 = arith.constant 0 : index
      %c0_595 = arith.constant 0 : index
      %719 = vector.load %arg5[%c2_593, %c0_594, %c0_595] : memref<9x1x256xf32, #tpu.memory_space<vmem>>, vector<1x1x256xf32>
      %720 = vector.shape_cast %719 : vector<1x1x256xf32> to vector<1x256xf32>
      %721 = vector.broadcast %720 : vector<1x256xf32> to vector<8x256xf32>
      %722 = arith.mulf %718, %721 : vector<8x256xf32>
      %c1_i32_596 = arith.constant 1 : i32
      %723 = tpu.dynamic_rotate %707 by %c1_i32_596 dim 1 : vector<8x256xf32>, i32 -> vector<8x256xf32>
      %c3_597 = arith.constant 3 : index
      %c0_598 = arith.constant 0 : index
      %c0_599 = arith.constant 0 : index
      %724 = vector.load %arg5[%c3_597, %c0_598, %c0_599] : memref<9x1x256xf32, #tpu.memory_space<vmem>>, vector<1x1x256xf32>
      %725 = vector.shape_cast %724 : vector<1x1x256xf32> to vector<1x256xf32>
      %726 = vector.broadcast %725 : vector<1x256xf32> to vector<8x256xf32>
      %727 = arith.mulf %723, %726 : vector<8x256xf32>
      %c255_i32_600 = arith.constant 255 : i32
      %728 = tpu.dynamic_rotate %707 by %c255_i32_600 dim 1 : vector<8x256xf32>, i32 -> vector<8x256xf32>
      %c5_601 = arith.constant 5 : index
      %c0_602 = arith.constant 0 : index
      %c0_603 = arith.constant 0 : index
      %729 = vector.load %arg5[%c5_601, %c0_602, %c0_603] : memref<9x1x256xf32, #tpu.memory_space<vmem>>, vector<1x1x256xf32>
      %730 = vector.shape_cast %729 : vector<1x1x256xf32> to vector<1x256xf32>
      %731 = vector.broadcast %730 : vector<1x256xf32> to vector<8x256xf32>
      %732 = arith.mulf %728, %731 : vector<8x256xf32>
      %c241_i32_604 = arith.constant 241 : i32
      %733 = tpu.dynamic_rotate %707 by %c241_i32_604 dim 1 : vector<8x256xf32>, i32 -> vector<8x256xf32>
      %c6_605 = arith.constant 6 : index
      %c0_606 = arith.constant 0 : index
      %c0_607 = arith.constant 0 : index
      %734 = vector.load %arg5[%c6_605, %c0_606, %c0_607] : memref<9x1x256xf32, #tpu.memory_space<vmem>>, vector<1x1x256xf32>
      %735 = vector.shape_cast %734 : vector<1x1x256xf32> to vector<1x256xf32>
      %736 = vector.broadcast %735 : vector<1x256xf32> to vector<8x256xf32>
      %737 = arith.mulf %733, %736 : vector<8x256xf32>
      %c240_i32_608 = arith.constant 240 : i32
      %738 = tpu.dynamic_rotate %707 by %c240_i32_608 dim 1 : vector<8x256xf32>, i32 -> vector<8x256xf32>
      %c7_609 = arith.constant 7 : index
      %c0_610 = arith.constant 0 : index
      %c0_611 = arith.constant 0 : index
      %739 = vector.load %arg5[%c7_609, %c0_610, %c0_611] : memref<9x1x256xf32, #tpu.memory_space<vmem>>, vector<1x1x256xf32>
      %740 = vector.shape_cast %739 : vector<1x1x256xf32> to vector<1x256xf32>
      %741 = vector.broadcast %740 : vector<1x256xf32> to vector<8x256xf32>
      %742 = arith.mulf %738, %741 : vector<8x256xf32>
      %c239_i32_612 = arith.constant 239 : i32
      %743 = tpu.dynamic_rotate %707 by %c239_i32_612 dim 1 : vector<8x256xf32>, i32 -> vector<8x256xf32>
      %c8_613 = arith.constant 8 : index
      %c0_614 = arith.constant 0 : index
      %c0_615 = arith.constant 0 : index
      %744 = vector.load %arg5[%c8_613, %c0_614, %c0_615] : memref<9x1x256xf32, #tpu.memory_space<vmem>>, vector<1x1x256xf32>
      %745 = vector.shape_cast %744 : vector<1x1x256xf32> to vector<1x256xf32>
      %746 = vector.broadcast %745 : vector<1x256xf32> to vector<8x256xf32>
      %747 = arith.mulf %743, %746 : vector<8x256xf32>
      %748 = tpu.concatenate %712, %717, %722, %727, %707, %732, %737, %742, %747 in 0 : vector<8x256xf32>, vector<8x256xf32>, vector<8x256xf32>, vector<8x256xf32>, vector<8x256xf32>, vector<8x256xf32>, vector<8x256xf32>, vector<8x256xf32>, vector<8x256xf32> -> vector<72x256xf32>
      %749 = arith.truncf %748 : vector<72x256xf32> to vector<72x256xbf16>
      %c7_616 = arith.constant 7 : index
      %c0_617 = arith.constant 0 : index
      %c0_618 = arith.constant 0 : index
      %750 = vector.load %arg13[%c7_616, %c0_617, %c0_618] : memref<8x8x256xf32, #tpu.memory_space<vmem>>, vector<1x8x256xf32>
      %751 = vector.shape_cast %750 : vector<1x8x256xf32> to vector<8x256xf32>
      %cst_619 = arith.constant dense<0.000000e+00> : vector<8x256xf32>
      %752 = tpu.matmul %10, %749, %cst_619 {dimension_numbers = #tpu.dot_dimension_numbers<[1], [0], [0], [1], [0, 0, 1, 1], [], []>} : vector<8x72xbf16>, vector<72x256xbf16>, vector<8x256xf32> -> vector<8x256xf32>
      %753 = arith.addf %751, %752 : vector<8x256xf32>
      %c7_620 = arith.constant 7 : index
      %c0_621 = arith.constant 0 : index
      %c0_622 = arith.constant 0 : index
      %754 = vector.load %arg13[%c7_620, %c0_621, %c0_622] : memref<8x8x256xf32, #tpu.memory_space<vmem>>, vector<1x8x256xf32>
      %755 = vector.shape_cast %754 : vector<1x8x256xf32> to vector<8x256xf32>
      %756 = vector.shape_cast %753 : vector<8x256xf32> to vector<1x8x256xf32>
      tpu.vector_store %arg13[%c7_620, %c0_621, %c0_622], %756 {strides = array<i32>} : memref<8x8x256xf32, #tpu.memory_space<vmem>>, vector<1x8x256xf32>,
    } else {
    }
    %c0_466 = arith.constant 0 : index
    %c0_467 = arith.constant 0 : index
    %c0_468 = arith.constant 0 : index
    %565 = vector.load %arg13[%c0_466, %c0_467, %c0_468] : memref<8x8x256xf32, #tpu.memory_space<vmem>>, vector<1x8x256xf32>
    %566 = vector.shape_cast %565 : vector<1x8x256xf32> to vector<8x256xf32>
    %567 = vector.broadcast %3 : vector<8x1xf32> to vector<8x256xf32>
    %568 = arith.addf %566, %567 : vector<8x256xf32>
    %cst_469 = arith.constant 0.000000e+00 : f32
    %569 = vector.broadcast %cst_469 : f32 to vector<8x256xf32>
    %570 = arith.maximumf %568, %569 : vector<8x256xf32>
    %cst_470 = arith.constant dense<0.000000e+00> : vector<4x256xf32>
    %571 = tpu.matmul %1, %570, %cst_470 {dimension_numbers = #tpu.dot_dimension_numbers<[1], [0], [0], [1], [0, 0, 1, 1], [], []>} : vector<4x8xf32>, vector<8x256xf32>, vector<4x256xf32> -> vector<4x256xf32>
    %572 = vector.broadcast %4 : vector<4x1xf32> to vector<4x256xf32>
    %573 = arith.addf %571, %572 : vector<4x256xf32>
    %c0_471 = arith.constant 0 : index
    %c0_472 = arith.constant 0 : index
    %c0_473 = arith.constant 0 : index
    %c0_474 = arith.constant 0 : index
    %574 = vector.load %arg2[%c0_471, %c0_472, %c0_473, %c0_474] : memref<1x8x4x256xf32, #tpu.memory_space<vmem>>, vector<1x1x4x256xf32>
    %575 = vector.shape_cast %574 : vector<1x1x4x256xf32> to vector<4x256xf32>
    %576 = arith.addf %573, %575 : vector<4x256xf32>
    %cst_475 = arith.constant 0.000000e+00 : f32
    %577 = vector.broadcast %cst_475 : f32 to vector<4x256xf32>
    %578 = arith.maximumf %576, %577 : vector<4x256xf32>
    %c0_476 = arith.constant 0 : index
    %c0_477 = arith.constant 0 : index
    %c0_478 = arith.constant 0 : index
    %c0_479 = arith.constant 0 : index
    %579 = vector.load %arg12[%c0_476, %c0_477, %c0_478, %c0_479] : memref<1x8x4x256xf32, #tpu.memory_space<vmem>>, vector<1x1x4x256xf32>
    %580 = vector.shape_cast %579 : vector<1x1x4x256xf32> to vector<4x256xf32>
    %581 = vector.shape_cast %578 : vector<4x256xf32> to vector<1x1x4x256xf32>
    tpu.vector_store %arg12[%c0_476, %c0_477, %c0_478, %c0_479], %581 {strides = array<i32>} : memref<1x8x4x256xf32, #tpu.memory_space<vmem>>, vector<1x1x4x256xf32>,
    %c1_480 = arith.constant 1 : index
    %c0_481 = arith.constant 0 : index
    %c0_482 = arith.constant 0 : index
    %582 = vector.load %arg13[%c1_480, %c0_481, %c0_482] : memref<8x8x256xf32, #tpu.memory_space<vmem>>, vector<1x8x256xf32>
    %583 = vector.shape_cast %582 : vector<1x8x256xf32> to vector<8x256xf32>
    %584 = vector.broadcast %3 : vector<8x1xf32> to vector<8x256xf32>
    %585 = arith.addf %583, %584 : vector<8x256xf32>
    %cst_483 = arith.constant 0.000000e+00 : f32
    %586 = vector.broadcast %cst_483 : f32 to vector<8x256xf32>
    %587 = arith.maximumf %585, %586 : vector<8x256xf32>
    %cst_484 = arith.constant dense<0.000000e+00> : vector<4x256xf32>
    %588 = tpu.matmul %1, %587, %cst_484 {dimension_numbers = #tpu.dot_dimension_numbers<[1], [0], [0], [1], [0, 0, 1, 1], [], []>} : vector<4x8xf32>, vector<8x256xf32>, vector<4x256xf32> -> vector<4x256xf32>
    %589 = vector.broadcast %4 : vector<4x1xf32> to vector<4x256xf32>
    %590 = arith.addf %588, %589 : vector<4x256xf32>
    %c0_485 = arith.constant 0 : index
    %c1_486 = arith.constant 1 : index
    %c0_487 = arith.constant 0 : index
    %c0_488 = arith.constant 0 : index
    %591 = vector.load %arg2[%c0_485, %c1_486, %c0_487, %c0_488] : memref<1x8x4x256xf32, #tpu.memory_space<vmem>>, vector<1x1x4x256xf32>
    %592 = vector.shape_cast %591 : vector<1x1x4x256xf32> to vector<4x256xf32>
    %593 = arith.addf %590, %592 : vector<4x256xf32>
    %cst_489 = arith.constant 0.000000e+00 : f32
    %594 = vector.broadcast %cst_489 : f32 to vector<4x256xf32>
    %595 = arith.maximumf %593, %594 : vector<4x256xf32>
    %c0_490 = arith.constant 0 : index
    %c1_491 = arith.constant 1 : index
    %c0_492 = arith.constant 0 : index
    %c0_493 = arith.constant 0 : index
    %596 = vector.load %arg12[%c0_490, %c1_491, %c0_492, %c0_493] : memref<1x8x4x256xf32, #tpu.memory_space<vmem>>, vector<1x1x4x256xf32>
    %597 = vector.shape_cast %596 : vector<1x1x4x256xf32> to vector<4x256xf32>
    %598 = vector.shape_cast %595 : vector<4x256xf32> to vector<1x1x4x256xf32>
    tpu.vector_store %arg12[%c0_490, %c1_491, %c0_492, %c0_493], %598 {strides = array<i32>} : memref<1x8x4x256xf32, #tpu.memory_space<vmem>>, vector<1x1x4x256xf32>,
    %c2_494 = arith.constant 2 : index
    %c0_495 = arith.constant 0 : index
    %c0_496 = arith.constant 0 : index
    %599 = vector.load %arg13[%c2_494, %c0_495, %c0_496] : memref<8x8x256xf32, #tpu.memory_space<vmem>>, vector<1x8x256xf32>
    %600 = vector.shape_cast %599 : vector<1x8x256xf32> to vector<8x256xf32>
    %601 = vector.broadcast %3 : vector<8x1xf32> to vector<8x256xf32>
    %602 = arith.addf %600, %601 : vector<8x256xf32>
    %cst_497 = arith.constant 0.000000e+00 : f32
    %603 = vector.broadcast %cst_497 : f32 to vector<8x256xf32>
    %604 = arith.maximumf %602, %603 : vector<8x256xf32>
    %cst_498 = arith.constant dense<0.000000e+00> : vector<4x256xf32>
    %605 = tpu.matmul %1, %604, %cst_498 {dimension_numbers = #tpu.dot_dimension_numbers<[1], [0], [0], [1], [0, 0, 1, 1], [], []>} : vector<4x8xf32>, vector<8x256xf32>, vector<4x256xf32> -> vector<4x256xf32>
    %606 = vector.broadcast %4 : vector<4x1xf32> to vector<4x256xf32>
    %607 = arith.addf %605, %606 : vector<4x256xf32>
    %c0_499 = arith.constant 0 : index
    %c2_500 = arith.constant 2 : index
    %c0_501 = arith.constant 0 : index
    %c0_502 = arith.constant 0 : index
    %608 = vector.load %arg2[%c0_499, %c2_500, %c0_501, %c0_502] : memref<1x8x4x256xf32, #tpu.memory_space<vmem>>, vector<1x1x4x256xf32>
    %609 = vector.shape_cast %608 : vector<1x1x4x256xf32> to vector<4x256xf32>
    %610 = arith.addf %607, %609 : vector<4x256xf32>
    %cst_503 = arith.constant 0.000000e+00 : f32
    %611 = vector.broadcast %cst_503 : f32 to vector<4x256xf32>
    %612 = arith.maximumf %610, %611 : vector<4x256xf32>
    %c0_504 = arith.constant 0 : index
    %c2_505 = arith.constant 2 : index
    %c0_506 = arith.constant 0 : index
    %c0_507 = arith.constant 0 : index
    %613 = vector.load %arg12[%c0_504, %c2_505, %c0_506, %c0_507] : memref<1x8x4x256xf32, #tpu.memory_space<vmem>>, vector<1x1x4x256xf32>
    %614 = vector.shape_cast %613 : vector<1x1x4x256xf32> to vector<4x256xf32>
    %615 = vector.shape_cast %612 : vector<4x256xf32> to vector<1x1x4x256xf32>
    tpu.vector_store %arg12[%c0_504, %c2_505, %c0_506, %c0_507], %615 {strides = array<i32>} : memref<1x8x4x256xf32, #tpu.memory_space<vmem>>, vector<1x1x4x256xf32>,
    %c3_508 = arith.constant 3 : index
    %c0_509 = arith.constant 0 : index
    %c0_510 = arith.constant 0 : index
    %616 = vector.load %arg13[%c3_508, %c0_509, %c0_510] : memref<8x8x256xf32, #tpu.memory_space<vmem>>, vector<1x8x256xf32>
    %617 = vector.shape_cast %616 : vector<1x8x256xf32> to vector<8x256xf32>
    %618 = vector.broadcast %3 : vector<8x1xf32> to vector<8x256xf32>
    %619 = arith.addf %617, %618 : vector<8x256xf32>
    %cst_511 = arith.constant 0.000000e+00 : f32
    %620 = vector.broadcast %cst_511 : f32 to vector<8x256xf32>
    %621 = arith.maximumf %619, %620 : vector<8x256xf32>
    %cst_512 = arith.constant dense<0.000000e+00> : vector<4x256xf32>
    %622 = tpu.matmul %1, %621, %cst_512 {dimension_numbers = #tpu.dot_dimension_numbers<[1], [0], [0], [1], [0, 0, 1, 1], [], []>} : vector<4x8xf32>, vector<8x256xf32>, vector<4x256xf32> -> vector<4x256xf32>
    %623 = vector.broadcast %4 : vector<4x1xf32> to vector<4x256xf32>
    %624 = arith.addf %622, %623 : vector<4x256xf32>
    %c0_513 = arith.constant 0 : index
    %c3_514 = arith.constant 3 : index
    %c0_515 = arith.constant 0 : index
    %c0_516 = arith.constant 0 : index
    %625 = vector.load %arg2[%c0_513, %c3_514, %c0_515, %c0_516] : memref<1x8x4x256xf32, #tpu.memory_space<vmem>>, vector<1x1x4x256xf32>
    %626 = vector.shape_cast %625 : vector<1x1x4x256xf32> to vector<4x256xf32>
    %627 = arith.addf %624, %626 : vector<4x256xf32>
    %cst_517 = arith.constant 0.000000e+00 : f32
    %628 = vector.broadcast %cst_517 : f32 to vector<4x256xf32>
    %629 = arith.maximumf %627, %628 : vector<4x256xf32>
    %c0_518 = arith.constant 0 : index
    %c3_519 = arith.constant 3 : index
    %c0_520 = arith.constant 0 : index
    %c0_521 = arith.constant 0 : index
    %630 = vector.load %arg12[%c0_518, %c3_519, %c0_520, %c0_521] : memref<1x8x4x256xf32, #tpu.memory_space<vmem>>, vector<1x1x4x256xf32>
    %631 = vector.shape_cast %630 : vector<1x1x4x256xf32> to vector<4x256xf32>
    %632 = vector.shape_cast %629 : vector<4x256xf32> to vector<1x1x4x256xf32>
    tpu.vector_store %arg12[%c0_518, %c3_519, %c0_520, %c0_521], %632 {strides = array<i32>} : memref<1x8x4x256xf32, #tpu.memory_space<vmem>>, vector<1x1x4x256xf32>,
    %c4_522 = arith.constant 4 : index
    %c0_523 = arith.constant 0 : index
    %c0_524 = arith.constant 0 : index
    %633 = vector.load %arg13[%c4_522, %c0_523, %c0_524] : memref<8x8x256xf32, #tpu.memory_space<vmem>>, vector<1x8x256xf32>
    %634 = vector.shape_cast %633 : vector<1x8x256xf32> to vector<8x256xf32>
    %635 = vector.broadcast %3 : vector<8x1xf32> to vector<8x256xf32>
    %636 = arith.addf %634, %635 : vector<8x256xf32>
    %cst_525 = arith.constant 0.000000e+00 : f32
    %637 = vector.broadcast %cst_525 : f32 to vector<8x256xf32>
    %638 = arith.maximumf %636, %637 : vector<8x256xf32>
    %cst_526 = arith.constant dense<0.000000e+00> : vector<4x256xf32>
    %639 = tpu.matmul %1, %638, %cst_526 {dimension_numbers = #tpu.dot_dimension_numbers<[1], [0], [0], [1], [0, 0, 1, 1], [], []>} : vector<4x8xf32>, vector<8x256xf32>, vector<4x256xf32> -> vector<4x256xf32>
    %640 = vector.broadcast %4 : vector<4x1xf32> to vector<4x256xf32>
    %641 = arith.addf %639, %640 : vector<4x256xf32>
    %c0_527 = arith.constant 0 : index
    %c4_528 = arith.constant 4 : index
    %c0_529 = arith.constant 0 : index
    %c0_530 = arith.constant 0 : index
    %642 = vector.load %arg2[%c0_527, %c4_528, %c0_529, %c0_530] : memref<1x8x4x256xf32, #tpu.memory_space<vmem>>, vector<1x1x4x256xf32>
    %643 = vector.shape_cast %642 : vector<1x1x4x256xf32> to vector<4x256xf32>
    %644 = arith.addf %641, %643 : vector<4x256xf32>
    %cst_531 = arith.constant 0.000000e+00 : f32
    %645 = vector.broadcast %cst_531 : f32 to vector<4x256xf32>
    %646 = arith.maximumf %644, %645 : vector<4x256xf32>
    %c0_532 = arith.constant 0 : index
    %c4_533 = arith.constant 4 : index
    %c0_534 = arith.constant 0 : index
    %c0_535 = arith.constant 0 : index
    %647 = vector.load %arg12[%c0_532, %c4_533, %c0_534, %c0_535] : memref<1x8x4x256xf32, #tpu.memory_space<vmem>>, vector<1x1x4x256xf32>
    %648 = vector.shape_cast %647 : vector<1x1x4x256xf32> to vector<4x256xf32>
    %649 = vector.shape_cast %646 : vector<4x256xf32> to vector<1x1x4x256xf32>
    tpu.vector_store %arg12[%c0_532, %c4_533, %c0_534, %c0_535], %649 {strides = array<i32>} : memref<1x8x4x256xf32, #tpu.memory_space<vmem>>, vector<1x1x4x256xf32>,
    %c5_536 = arith.constant 5 : index
    %c0_537 = arith.constant 0 : index
    %c0_538 = arith.constant 0 : index
    %650 = vector.load %arg13[%c5_536, %c0_537, %c0_538] : memref<8x8x256xf32, #tpu.memory_space<vmem>>, vector<1x8x256xf32>
    %651 = vector.shape_cast %650 : vector<1x8x256xf32> to vector<8x256xf32>
    %652 = vector.broadcast %3 : vector<8x1xf32> to vector<8x256xf32>
    %653 = arith.addf %651, %652 : vector<8x256xf32>
    %cst_539 = arith.constant 0.000000e+00 : f32
    %654 = vector.broadcast %cst_539 : f32 to vector<8x256xf32>
    %655 = arith.maximumf %653, %654 : vector<8x256xf32>
    %cst_540 = arith.constant dense<0.000000e+00> : vector<4x256xf32>
    %656 = tpu.matmul %1, %655, %cst_540 {dimension_numbers = #tpu.dot_dimension_numbers<[1], [0], [0], [1], [0, 0, 1, 1], [], []>} : vector<4x8xf32>, vector<8x256xf32>, vector<4x256xf32> -> vector<4x256xf32>
    %657 = vector.broadcast %4 : vector<4x1xf32> to vector<4x256xf32>
    %658 = arith.addf %656, %657 : vector<4x256xf32>
    %c0_541 = arith.constant 0 : index
    %c5_542 = arith.constant 5 : index
    %c0_543 = arith.constant 0 : index
    %c0_544 = arith.constant 0 : index
    %659 = vector.load %arg2[%c0_541, %c5_542, %c0_543, %c0_544] : memref<1x8x4x256xf32, #tpu.memory_space<vmem>>, vector<1x1x4x256xf32>
    %660 = vector.shape_cast %659 : vector<1x1x4x256xf32> to vector<4x256xf32>
    %661 = arith.addf %658, %660 : vector<4x256xf32>
    %cst_545 = arith.constant 0.000000e+00 : f32
    %662 = vector.broadcast %cst_545 : f32 to vector<4x256xf32>
    %663 = arith.maximumf %661, %662 : vector<4x256xf32>
    %c0_546 = arith.constant 0 : index
    %c5_547 = arith.constant 5 : index
    %c0_548 = arith.constant 0 : index
    %c0_549 = arith.constant 0 : index
    %664 = vector.load %arg12[%c0_546, %c5_547, %c0_548, %c0_549] : memref<1x8x4x256xf32, #tpu.memory_space<vmem>>, vector<1x1x4x256xf32>
    %665 = vector.shape_cast %664 : vector<1x1x4x256xf32> to vector<4x256xf32>
    %666 = vector.shape_cast %663 : vector<4x256xf32> to vector<1x1x4x256xf32>
    tpu.vector_store %arg12[%c0_546, %c5_547, %c0_548, %c0_549], %666 {strides = array<i32>} : memref<1x8x4x256xf32, #tpu.memory_space<vmem>>, vector<1x1x4x256xf32>,
    %c6_550 = arith.constant 6 : index
    %c0_551 = arith.constant 0 : index
    %c0_552 = arith.constant 0 : index
    %667 = vector.load %arg13[%c6_550, %c0_551, %c0_552] : memref<8x8x256xf32, #tpu.memory_space<vmem>>, vector<1x8x256xf32>
    %668 = vector.shape_cast %667 : vector<1x8x256xf32> to vector<8x256xf32>
    %669 = vector.broadcast %3 : vector<8x1xf32> to vector<8x256xf32>
    %670 = arith.addf %668, %669 : vector<8x256xf32>
    %cst_553 = arith.constant 0.000000e+00 : f32
    %671 = vector.broadcast %cst_553 : f32 to vector<8x256xf32>
    %672 = arith.maximumf %670, %671 : vector<8x256xf32>
    %cst_554 = arith.constant dense<0.000000e+00> : vector<4x256xf32>
    %673 = tpu.matmul %1, %672, %cst_554 {dimension_numbers = #tpu.dot_dimension_numbers<[1], [0], [0], [1], [0, 0, 1, 1], [], []>} : vector<4x8xf32>, vector<8x256xf32>, vector<4x256xf32> -> vector<4x256xf32>
    %674 = vector.broadcast %4 : vector<4x1xf32> to vector<4x256xf32>
    %675 = arith.addf %673, %674 : vector<4x256xf32>
    %c0_555 = arith.constant 0 : index
    %c6_556 = arith.constant 6 : index
    %c0_557 = arith.constant 0 : index
    %c0_558 = arith.constant 0 : index
    %676 = vector.load %arg2[%c0_555, %c6_556, %c0_557, %c0_558] : memref<1x8x4x256xf32, #tpu.memory_space<vmem>>, vector<1x1x4x256xf32>
    %677 = vector.shape_cast %676 : vector<1x1x4x256xf32> to vector<4x256xf32>
    %678 = arith.addf %675, %677 : vector<4x256xf32>
    %cst_559 = arith.constant 0.000000e+00 : f32
    %679 = vector.broadcast %cst_559 : f32 to vector<4x256xf32>
    %680 = arith.maximumf %678, %679 : vector<4x256xf32>
    %c0_560 = arith.constant 0 : index
    %c6_561 = arith.constant 6 : index
    %c0_562 = arith.constant 0 : index
    %c0_563 = arith.constant 0 : index
    %681 = vector.load %arg12[%c0_560, %c6_561, %c0_562, %c0_563] : memref<1x8x4x256xf32, #tpu.memory_space<vmem>>, vector<1x1x4x256xf32>
    %682 = vector.shape_cast %681 : vector<1x1x4x256xf32> to vector<4x256xf32>
    %683 = vector.shape_cast %680 : vector<4x256xf32> to vector<1x1x4x256xf32>
    tpu.vector_store %arg12[%c0_560, %c6_561, %c0_562, %c0_563], %683 {strides = array<i32>} : memref<1x8x4x256xf32, #tpu.memory_space<vmem>>, vector<1x1x4x256xf32>,
    %c7_564 = arith.constant 7 : index
    %c0_565 = arith.constant 0 : index
    %c0_566 = arith.constant 0 : index
    %684 = vector.load %arg13[%c7_564, %c0_565, %c0_566] : memref<8x8x256xf32, #tpu.memory_space<vmem>>, vector<1x8x256xf32>
    %685 = vector.shape_cast %684 : vector<1x8x256xf32> to vector<8x256xf32>
    %686 = vector.broadcast %3 : vector<8x1xf32> to vector<8x256xf32>
    %687 = arith.addf %685, %686 : vector<8x256xf32>
    %cst_567 = arith.constant 0.000000e+00 : f32
    %688 = vector.broadcast %cst_567 : f32 to vector<8x256xf32>
    %689 = arith.maximumf %687, %688 : vector<8x256xf32>
    %cst_568 = arith.constant dense<0.000000e+00> : vector<4x256xf32>
    %690 = tpu.matmul %1, %689, %cst_568 {dimension_numbers = #tpu.dot_dimension_numbers<[1], [0], [0], [1], [0, 0, 1, 1], [], []>} : vector<4x8xf32>, vector<8x256xf32>, vector<4x256xf32> -> vector<4x256xf32>
    %691 = vector.broadcast %4 : vector<4x1xf32> to vector<4x256xf32>
    %692 = arith.addf %690, %691 : vector<4x256xf32>
    %c0_569 = arith.constant 0 : index
    %c7_570 = arith.constant 7 : index
    %c0_571 = arith.constant 0 : index
    %c0_572 = arith.constant 0 : index
    %693 = vector.load %arg2[%c0_569, %c7_570, %c0_571, %c0_572] : memref<1x8x4x256xf32, #tpu.memory_space<vmem>>, vector<1x1x4x256xf32>
    %694 = vector.shape_cast %693 : vector<1x1x4x256xf32> to vector<4x256xf32>
    %695 = arith.addf %692, %694 : vector<4x256xf32>
    %cst_573 = arith.constant 0.000000e+00 : f32
    %696 = vector.broadcast %cst_573 : f32 to vector<4x256xf32>
    %697 = arith.maximumf %695, %696 : vector<4x256xf32>
    %c0_574 = arith.constant 0 : index
    %c7_575 = arith.constant 7 : index
    %c0_576 = arith.constant 0 : index
    %c0_577 = arith.constant 0 : index
    %698 = vector.load %arg12[%c0_574, %c7_575, %c0_576, %c0_577] : memref<1x8x4x256xf32, #tpu.memory_space<vmem>>, vector<1x1x4x256xf32>
    %699 = vector.shape_cast %698 : vector<1x1x4x256xf32> to vector<4x256xf32>
    %700 = vector.shape_cast %697 : vector<4x256xf32> to vector<1x1x4x256xf32>
    tpu.vector_store %arg12[%c0_574, %c7_575, %c0_576, %c0_577], %700 {strides = array<i32>} : memref<1x8x4x256xf32, #tpu.memory_space<vmem>>, vector<1x1x4x256xf32>,
    return
  }
  func.func @transform_0(%arg0: i32, %arg1: i32) -> (i32, i32, i32, i32) {
    %c0_i32 = arith.constant 0 : i32
    %c0_i32_0 = arith.constant 0 : i32
    %c0_i32_1 = arith.constant 0 : i32
    return %arg0, %arg1, %c0_i32, %c0_i32_0 : i32, i32, i32, i32
  }
  func.func @transform_1(%arg0: i32, %arg1: i32) -> (i32, i32, i32, i32) {
    %c8_i32 = arith.constant 8 : i32
    %0 = arith.muli %arg1, %c8_i32 : i32
    %c1_i32 = arith.constant 1 : i32
    %1 = arith.subi %0, %c1_i32 : i32
    %c0_i32 = arith.constant 0 : i32
    %2 = arith.maxsi %1, %c0_i32 : i32
    %c0_i32_0 = arith.constant 0 : i32
    %c0_i32_1 = arith.constant 0 : i32
    %c0_i32_2 = arith.constant 0 : i32
    return %arg0, %2, %c0_i32_0, %c0_i32_1 : i32, i32, i32, i32
  }
  func.func @transform_2(%arg0: i32, %arg1: i32) -> (i32, i32, i32, i32) {
    %c8_i32 = arith.constant 8 : i32
    %0 = arith.muli %arg1, %c8_i32 : i32
    %c8_i32_0 = arith.constant 8 : i32
    %1 = arith.addi %0, %c8_i32_0 : i32
    %c7_i32 = arith.constant 7 : i32
    %2 = arith.minsi %1, %c7_i32 : i32
    %c0_i32 = arith.constant 0 : i32
    %c0_i32_1 = arith.constant 0 : i32
    %c0_i32_2 = arith.constant 0 : i32
    return %arg0, %2, %c0_i32, %c0_i32_1 : i32, i32, i32, i32
  }
  func.func @transform_3(%arg0: i32, %arg1: i32) -> (i32, i32, i32) {
    %c0_i32 = arith.constant 0 : i32
    %c0_i32_0 = arith.constant 0 : i32
    %c0_i32_1 = arith.constant 0 : i32
    %c0_i32_2 = arith.constant 0 : i32
    return %c0_i32, %c0_i32_0, %c0_i32_1 : i32, i32, i32
  }
  func.func @transform_4(%arg0: i32, %arg1: i32) -> (i32, i32) {
    %c0_i32 = arith.constant 0 : i32
    %c0_i32_0 = arith.constant 0 : i32
    %c0_i32_1 = arith.constant 0 : i32
    return %c0_i32, %c0_i32_0 : i32, i32
  }
  func.func @transform_5(%arg0: i32, %arg1: i32) -> (i32, i32, i32) {
    %c0_i32 = arith.constant 0 : i32
    %c0_i32_0 = arith.constant 0 : i32
    %c0_i32_1 = arith.constant 0 : i32
    %c0_i32_2 = arith.constant 0 : i32
    return %c0_i32, %c0_i32_0, %c0_i32_1 : i32, i32, i32
  }
  func.func @transform_6(%arg0: i32, %arg1: i32) -> (i32, i32) {
    %c0_i32 = arith.constant 0 : i32
    %c0_i32_0 = arith.constant 0 : i32
    %c0_i32_1 = arith.constant 0 : i32
    return %c0_i32, %c0_i32_0 : i32, i32
  }
  func.func @transform_7(%arg0: i32, %arg1: i32) -> (i32, i32) {
    %c0_i32 = arith.constant 0 : i32
    %c0_i32_0 = arith.constant 0 : i32
    %c0_i32_1 = arith.constant 0 : i32
    return %c0_i32, %c0_i32_0 : i32, i32
  }
  func.func @transform_8(%arg0: i32, %arg1: i32) -> (i32, i32) {
    %c0_i32 = arith.constant 0 : i32
    %c0_i32_0 = arith.constant 0 : i32
    %c0_i32_1 = arith.constant 0 : i32
    return %c0_i32, %c0_i32_0 : i32, i32
  }
  func.func @transform_9(%arg0: i32, %arg1: i32) -> (i32, i32) {
    %c0_i32 = arith.constant 0 : i32
    %c0_i32_0 = arith.constant 0 : i32
    %c0_i32_1 = arith.constant 0 : i32
    return %c0_i32, %c0_i32_0 : i32, i32
  }
  func.func @transform_10(%arg0: i32, %arg1: i32) -> (i32, i32, i32, i32) {
    %c0_i32 = arith.constant 0 : i32
    %c0_i32_0 = arith.constant 0 : i32
    %c0_i32_1 = arith.constant 0 : i32
    return %arg0, %arg1, %c0_i32, %c0_i32_0 : i32, i32, i32, i32
  }
}

</mosaic_0001>

<llo_original>
// kernel: residual_layer3d.1
$region0: #{residual_layer3d.1}
  #allocation0 [shape = 'u32[]', space=smem, size = 0x4, offset = 0x4, fixed_abs, tag = 'smem constant byte address 0x4 - core index']
  #allocation1 [shape = 'u32[144,128]{1,0:T(1,128)}', space=vmem, size = 0x12000, scoped, tag = 'internal scratch']
  #allocation2 [shape = 'f32[8,8,256]{2,1,0:T(8,128)}', space=vmem, size = 0x10000, scoped, tag = 'scratch operand']
  %s0 = inlined_call_operand.vmem [shape: f32[2,8,4,256], index: 0, kind: input, shape index: {}, may-alias: {0,1,2}]
  %s1 = inlined_call_operand.vmem [shape: f32[2,8,4,256], index: 1, kind: input, shape index: {}, may-alias: {0,1,2}]
  %s2 = inlined_call_operand.vmem [shape: f32[2,8,4,256], index: 2, kind: input, shape index: {}, may-alias: {0,1,2}]
  %s3 = inlined_call_operand.vmem [shape: f32[9,1,256], index: 3, kind: input, shape index: {}]
  %s4 = inlined_call_operand.vmem [shape: f32[8,4], index: 4, kind: input, shape index: {}]
  %s5 = inlined_call_operand.vmem [shape: bf16[3,8,72], index: 5, kind: input, shape index: {}]
  %s6 = inlined_call_operand.vmem [shape: f32[4,8], index: 6, kind: input, shape index: {}]
  %s7 = inlined_call_operand.vmem [shape: f32[8,1], index: 7, kind: input, shape index: {}]
  %s8 = inlined_call_operand.vmem [shape: f32[8,1], index: 8, kind: input, shape index: {}]
  %s9 = inlined_call_operand.vmem [shape: f32[4,1], index: 9, kind: input, shape index: {}]
  %s10 = inlined_call_operand.vmem [shape: f32[2,8,4,256], index: 10, kind: output, shape index: {}]
  %s11 = sld [smem:[#allocation0]]
  $region81: #{residual_layer3d.1} parent=0
    _
  %s13 = ssub.s32 1, %s11
  %s14 = scalar_select 0, %s13, %s11
  loop: start=0, step=1, limit=4
  $region2: #{residual_layer3d.1} parent=0 // loop_pre_header
    _
  $region3: #{residual_layer3d.1} parent=0 // loop_header
    %s16 = sphi 0, %s20
    %p17 = scmp.ge.s32.totalorder %s16, 4
    %s23 = sphi 0, %s35
    %s24 = sphi 0, %s31
    %s25 = sphi 0, %s23
    %s26 = sphi 0, %s24
    %s27 = sphi 0, %s25
    %s28 = sphi 0, %s26
    %s40 = sphi 0, %s42
    %s43 = sphi 0, %s40
    %s44 = sphi 0, %s43
    %s60 = sphi 0, %s44
    %s76 = sphi 0, %s78
    %s79 = sphi 0, %s76
    %s80 = sphi 0, %s79
    %s96 = sphi 0, %s80
    %s112 = sphi 0, %s114
    %s115 = sphi 0, %s112
    %s116 = sphi 0, %s115
    %s132 = sphi 0, %s116
    %s136 = sphi 0, %s136
    %s138 = sphi 0, %s136
    %s139 = sphi 0, %s138
    %s153 = sphi 0, %s139
    %s157 = sphi 0, %s157
    %s159 = sphi 0, %s157
    %s160 = sphi 0, %s159
    %s174 = sphi 0, %s160
    %s178 = sphi 0, %s178
    %s180 = sphi 0, %s178
    %s181 = sphi 0, %s180
    %s195 = sphi 0, %s181
    %s199 = sphi 0, %s199
    %s201 = sphi 0, %s199
    %s202 = sphi 0, %s201
    %s216 = sphi 0, %s202
    %s220 = sphi 0, %s220
    %s222 = sphi 0, %s220
    %s223 = sphi 0, %s222
    %s237 = sphi 0, %s223
    %s241 = sphi 0, %s241
    %s243 = sphi 0, %s241
    %s244 = sphi 0, %s243
    %s258 = sphi 0, %s244
    %s262 = sphi 0, %s262
    %s264 = sphi 0, %s262
    %s265 = sphi 0, %s264
    %s279 = sphi 0, %s265
    %s287 = sphi 0, %s289
    %s290 = sphi 0, %s287
    %s291 = sphi 0, %s290
    %s307 = sphi 0, %s291
  $region4: #{residual_layer3d.1} parent=0 // loop_header_branch
    %19 = sbr.rel (%p17) target = $region8
  $region5: #{residual_layer3d.1} parent=0 // loop_body
    %s21 = ssub.s32 %s16, 1
    %s22 = ssub.s32 %s16, 2
    %s29 = sadd.s32 1, %s24
    %p30 = scmp.ge.s32.totalorder %s29, 1
    %s31 = scalar_select %p30, 0, %s29
    %s32 = sadd.s32 1, %s23
    %s33 = scalar_select %p30, %s32, %s23
    %p34 = scmp.ge.s32.totalorder %s33, 2
    %s35 = scalar_select %p34, 0, %s33
    %s36 = ssub.s32 %s23, %s35
    %s37 = ssub.s32 %s24, %s31
    %s38 = sor.u32 %s36, %s37
    %p39 = scmp.eq.s32.totalorder %s38, 0
    %s41 = sadd.s32 %s40, 1
    %s42 = scalar_select %p39, %s40, %s41
    %p45 = pneg %p39
    %p46 = scmp.eq.s32.totalorder %s16, 1
    %p47 = por %p45, %p46
    %p48 = scmp.ne.s32.totalorder %s40, %s43
    %p49 = scmp.eq.s32.totalorder %s16, 0
    %p50 = por %p48, %p49
    %p51 = scmp.ne.s32.totalorder %s40, %s43
    %p52 = scmp.eq.s32.totalorder %s21, 1
    %p53 = por %p51, %p52
    %p54 = scmp.ne.s32.totalorder %s43, %s44
    %p55 = scmp.eq.s32.totalorder %s21, 0
    %p56 = por %p54, %p55
    %p57 = scmp.ne.s32.totalorder %s43, %s44
    %p58 = scmp.eq.s32.totalorder %s22, 1
    %p59 = por %p57, %p58
    %p61 = scmp.ne.s32.totalorder %s44, %s60
    %p62 = scmp.eq.s32.totalorder %s22, 0
    %p63 = por %p61, %p62
    %s64 = smul.u32 %s24, 8
    %s65 = ssub.s32 %s64, 1
    %p66 = scmp.gt.s32.totalorder %s65, 0
    %s67 = scalar_select %p66, %s65, 0
    %s68 = smul.u32 %s31, 8
    %s69 = ssub.s32 %s68, 1
    %p70 = scmp.gt.s32.totalorder %s69, 0
    %s71 = scalar_select %p70, %s69, 0
    %s72 = ssub.s32 %s23, %s35
    %s73 = ssub.s32 %s67, %s71
    %s74 = sor.u32 %s72, %s73
    %p75 = scmp.eq.s32.totalorder %s74, 0
    %s77 = sadd.s32 %s76, 1
    %s78 = scalar_select %p75, %s76, %s77
    %p81 = pneg %p75
    %p82 = scmp.eq.s32.totalorder %s16, 1
    %p83 = por %p81, %p82
    %p84 = scmp.ne.s32.totalorder %s76, %s79
    %p85 = scmp.eq.s32.totalorder %s16, 0
    %p86 = por %p84, %p85
    %p87 = scmp.ne.s32.totalorder %s76, %s79
    %p88 = scmp.eq.s32.totalorder %s21, 1
    %p89 = por %p87, %p88
    %p90 = scmp.ne.s32.totalorder %s79, %s80
    %p91 = scmp.eq.s32.totalorder %s21, 0
    %p92 = por %p90, %p91
    %p93 = scmp.ne.s32.totalorder %s79, %s80
    %p94 = scmp.eq.s32.totalorder %s22, 1
    %p95 = por %p93, %p94
    %p97 = scmp.ne.s32.totalorder %s80, %s96
    %p98 = scmp.eq.s32.totalorder %s22, 0
    %p99 = por %p97, %p98
    %s100 = smul.u32 %s24, 8
    %s101 = sadd.s32 %s100, 8
    %p102 = scmp.lt.s32.totalorder %s101, 7
    %s103 = scalar_select %p102, %s101, 7
    %s104 = smul.u32 %s31, 8
    %s105 = sadd.s32 %s104, 8
    %p106 = scmp.lt.s32.totalorder %s105, 7
    %s107 = scalar_select %p106, %s105, 7
    %s108 = ssub.s32 %s23, %s35
    %s109 = ssub.s32 %s103, %s107
    %s110 = sor.u32 %s108, %s109
    %p111 = scmp.eq.s32.totalorder %s110, 0
    %s113 = sadd.s32 %s112, 1
    %s114 = scalar_select %p111, %s112, %s113
    %p117 = pneg %p111
    %p118 = scmp.eq.s32.totalorder %s16, 1
    %p119 = por %p117, %p118
    %p120 = scmp.ne.s32.totalorder %s112, %s115
    %p121 = scmp.eq.s32.totalorder %s16, 0
    %p122 = por %p120, %p121
    %p123 = scmp.ne.s32.totalorder %s112, %s115
    %p124 = scmp.eq.s32.totalorder %s21, 1
    %p125 = por %p123, %p124
    %p126 = scmp.ne.s32.totalorder %s115, %s116
    %p127 = scmp.eq.s32.totalorder %s21, 0
    %p128 = por %p126, %p127
    %p129 = scmp.ne.s32.totalorder %s115, %s116
    %p130 = scmp.eq.s32.totalorder %s22, 1
    %p131 = por %p129, %p130
    %p133 = scmp.ne.s32.totalorder %s116, %s132
    %p134 = scmp.eq.s32.totalorder %s22, 0
    %p135 = por %p133, %p134
    %s137 = sadd.s32 %s136, 1
    %p140 = scmp.eq.s32.totalorder %s16, 1
    %p141 = scmp.ne.s32.totalorder %s136, %s138
    %p142 = scmp.eq.s32.totalorder %s16, 0
    %p143 = por %p141, %p142
    %p144 = scmp.ne.s32.totalorder %s136, %s138
    %p145 = scmp.eq.s32.totalorder %s21, 1
    %p146 = por %p144, %p145
    %p147 = scmp.ne.s32.totalorder %s138, %s139
    %p148 = scmp.eq.s32.totalorder %s21, 0
    %p149 = por %p147, %p148
    %p150 = scmp.ne.s32.totalorder %s138, %s139
    %p151 = scmp.eq.s32.totalorder %s22, 1
    %p152 = por %p150, %p151
    %p154 = scmp.ne.s32.totalorder %s139, %s153
    %p155 = scmp.eq.s32.totalorder %s22, 0
    %p156 = por %p154, %p155
    %s158 = sadd.s32 %s157, 1
    %p161 = scmp.eq.s32.totalorder %s16, 1
    %p162 = scmp.ne.s32.totalorder %s157, %s159
    %p163 = scmp.eq.s32.totalorder %s16, 0
    %p164 = por %p162, %p163
    %p165 = scmp.ne.s32.totalorder %s157, %s159
    %p166 = scmp.eq.s32.totalorder %s21, 1
    %p167 = por %p165, %p166
    %p168 = scmp.ne.s32.totalorder %s159, %s160
    %p169 = scmp.eq.s32.totalorder %s21, 0
    %p170 = por %p168, %p169
    %p171 = scmp.ne.s32.totalorder %s159, %s160
    %p172 = scmp.eq.s32.totalorder %s22, 1
    %p173 = por %p171, %p172
    %p175 = scmp.ne.s32.totalorder %s160, %s174
    %p176 = scmp.eq.s32.totalorder %s22, 0
    %p177 = por %p175, %p176
    %s179 = sadd.s32 %s178, 1
    %p182 = scmp.eq.s32.totalorder %s16, 1
    %p183 = scmp.ne.s32.totalorder %s178, %s180
    %p184 = scmp.eq.s32.totalorder %s16, 0
    %p185 = por %p183, %p184
    %p186 = scmp.ne.s32.totalorder %s178, %s180
    %p187 = scmp.eq.s32.totalorder %s21, 1
    %p188 = por %p186, %p187
    %p189 = scmp.ne.s32.totalorder %s180, %s181
    %p190 = scmp.eq.s32.totalorder %s21, 0
    %p191 = por %p189, %p190
    %p192 = scmp.ne.s32.totalorder %s180, %s181
    %p193 = scmp.eq.s32.totalorder %s22, 1
    %p194 = por %p192, %p193
    %p196 = scmp.ne.s32.totalorder %s181, %s195
    %p197 = scmp.eq.s32.totalorder %s22, 0
    %p198 = por %p196, %p197
    %s200 = sadd.s32 %s199, 1
    %p203 = scmp.eq.s32.totalorder %s16, 1
    %p204 = scmp.ne.s32.totalorder %s199, %s201
    %p205 = scmp.eq.s32.totalorder %s16, 0
    %p206 = por %p204, %p205
    %p207 = scmp.ne.s32.totalorder %s199, %s201
    %p208 = scmp.eq.s32.totalorder %s21, 1
    %p209 = por %p207, %p208
    %p210 = scmp.ne.s32.totalorder %s201, %s202
    %p211 = scmp.eq.s32.totalorder %s21, 0
    %p212 = por %p210, %p211
    %p213 = scmp.ne.s32.totalorder %s201, %s202
    %p214 = scmp.eq.s32.totalorder %s22, 1
    %p215 = por %p213, %p214
    %p217 = scmp.ne.s32.totalorder %s202, %s216
    %p218 = scmp.eq.s32.totalorder %s22, 0
    %p219 = por %p217, %p218
    %s221 = sadd.s32 %s220, 1
    %p224 = scmp.eq.s32.totalorder %s16, 1
    %p225 = scmp.ne.s32.totalorder %s220, %s222
    %p226 = scmp.eq.s32.totalorder %s16, 0
    %p227 = por %p225, %p226
    %p228 = scmp.ne.s32.totalorder %s220, %s222
    %p229 = scmp.eq.s32.totalorder %s21, 1
    %p230 = por %p228, %p229
    %p231 = scmp.ne.s32.totalorder %s222, %s223
    %p232 = scmp.eq.s32.totalorder %s21, 0
    %p233 = por %p231, %p232
    %p234 = scmp.ne.s32.totalorder %s222, %s223
    %p235 = scmp.eq.s32.totalorder %s22, 1
    %p236 = por %p234, %p235
    %p238 = scmp.ne.s32.totalorder %s223, %s237
    %p239 = scmp.eq.s32.totalorder %s22, 0
    %p240 = por %p238, %p239
    %s242 = sadd.s32 %s241, 1
    %p245 = scmp.eq.s32.totalorder %s16, 1
    %p246 = scmp.ne.s32.totalorder %s241, %s243
    %p247 = scmp.eq.s32.totalorder %s16, 0
    %p248 = por %p246, %p247
    %p249 = scmp.ne.s32.totalorder %s241, %s243
    %p250 = scmp.eq.s32.totalorder %s21, 1
    %p251 = por %p249, %p250
    %p252 = scmp.ne.s32.totalorder %s243, %s244
    %p253 = scmp.eq.s32.totalorder %s21, 0
    %p254 = por %p252, %p253
    %p255 = scmp.ne.s32.totalorder %s243, %s244
    %p256 = scmp.eq.s32.totalorder %s22, 1
    %p257 = por %p255, %p256
    %p259 = scmp.ne.s32.totalorder %s244, %s258
    %p260 = scmp.eq.s32.totalorder %s22, 0
    %p261 = por %p259, %p260
    %s263 = sadd.s32 %s262, 1
    %p266 = scmp.eq.s32.totalorder %s16, 1
    %p267 = scmp.ne.s32.totalorder %s262, %s264
    %p268 = scmp.eq.s32.totalorder %s16, 0
    %p269 = por %p267, %p268
    %p270 = scmp.ne.s32.totalorder %s262, %s264
    %p271 = scmp.eq.s32.totalorder %s21, 1
    %p272 = por %p270, %p271
    %p273 = scmp.ne.s32.totalorder %s264, %s265
    %p274 = scmp.eq.s32.totalorder %s21, 0
    %p275 = por %p273, %p274
    %p276 = scmp.ne.s32.totalorder %s264, %s265
    %p277 = scmp.eq.s32.totalorder %s22, 1
    %p278 = por %p276, %p277
    %p280 = scmp.ne.s32.totalorder %s265, %s279
    %p281 = scmp.eq.s32.totalorder %s22, 0
    %p282 = por %p280, %p281
    %s283 = ssub.s32 %s23, %s35
    %s284 = ssub.s32 %s24, %s31
    %s285 = sor.u32 %s283, %s284
    %p286 = scmp.eq.s32.totalorder %s285, 0
    %s288 = sadd.s32 %s287, 1
    %s289 = scalar_select %p286, %s287, %s288
    %p292 = pneg %p286
    %p293 = scmp.eq.s32.totalorder %s16, 1
    %p294 = por %p292, %p293
    %p295 = scmp.ne.s32.totalorder %s287, %s290
    %p296 = scmp.eq.s32.totalorder %s16, 0
    %p297 = por %p295, %p296
    %p298 = scmp.ne.s32.totalorder %s287, %s290
    %p299 = scmp.eq.s32.totalorder %s21, 1
    %p300 = por %p298, %p299
    %p301 = scmp.ne.s32.totalorder %s290, %s291
    %p302 = scmp.eq.s32.totalorder %s21, 0
    %p303 = por %p301, %p302
    %p304 = scmp.ne.s32.totalorder %s290, %s291
    %p305 = scmp.eq.s32.totalorder %s22, 1
    %p306 = por %p304, %p305
    %p308 = scmp.ne.s32.totalorder %s291, %s307
    %p309 = scmp.eq.s32.totalorder %s22, 0
    %p310 = por %p308, %p309
    %p311 = scmp.le.s32.totalorder 1, %s16
    %p312 = scmp.lt.s32.totalorder %s16, 3
    %p313 = pnand %p311, %p312
    %p314 = pneg %p313
    // Predicated region
    $region9: #{residual_layer3d.1} parent=5 // pred_check
      _
    $region10: #{residual_layer3d.1} parent=5 // pred_check_branch
      %316 = sbr.rel (%p313) target = $region12
    $region11: #{residual_layer3d.1} parent=5 // pred_region
      %s317 = ssub.s32 %s16, 1
      // Predicated region
      $region13: #{residual_layer3d.1} parent=11 // pred_check
        %p318 = pneg %p149
      $region14: #{residual_layer3d.1} parent=11 // pred_check_branch
        %320 = sbr.rel (%p318) target = $region16
      $region15: #{residual_layer3d.1} parent=11 // pred_region
        _
      $region16: #{residual_layer3d.1} parent=11 // pred_fallthru
        _
      // Predicated region
      $region17: #{residual_layer3d.1} parent=11 // pred_check
        %p321 = pneg %p170
      $region18: #{residual_layer3d.1} parent=11 // pred_check_branch
        %323 = sbr.rel (%p321) target = $region20
      $region19: #{residual_layer3d.1} parent=11 // pred_region
        _
      $region20: #{residual_layer3d.1} parent=11 // pred_fallthru
        _
      // Predicated region
      $region21: #{residual_layer3d.1} parent=11 // pred_check
        %p324 = pneg %p191
      $region22: #{residual_layer3d.1} parent=11 // pred_check_branch
        %326 = sbr.rel (%p324) target = $region24
      $region23: #{residual_layer3d.1} parent=11 // pred_region
        _
      $region24: #{residual_layer3d.1} parent=11 // pred_fallthru
        _
      // Predicated region
      $region25: #{residual_layer3d.1} parent=11 // pred_check
        %p327 = pneg %p212
      $region26: #{residual_layer3d.1} parent=11 // pred_check_branch
        %329 = sbr.rel (%p327) target = $region28
      $region27: #{residual_layer3d.1} parent=11 // pred_region
        _
      $region28: #{residual_layer3d.1} parent=11 // pred_fallthru
        _
      // Predicated region
      $region29: #{residual_layer3d.1} parent=11 // pred_check
        %p330 = pneg %p233
      $region30: #{residual_layer3d.1} parent=11 // pred_check_branch
        %332 = sbr.rel (%p330) target = $region32
      $region31: #{residual_layer3d.1} parent=11 // pred_region
        _
      $region32: #{residual_layer3d.1} parent=11 // pred_fallthru
        _
      // Predicated region
      $region33: #{residual_layer3d.1} parent=11 // pred_check
        %p333 = pneg %p254
      $region34: #{residual_layer3d.1} parent=11 // pred_check_branch
        %335 = sbr.rel (%p333) target = $region36
      $region35: #{residual_layer3d.1} parent=11 // pred_region
        _
      $region36: #{residual_layer3d.1} parent=11 // pred_fallthru
        _
      // Predicated region
      $region37: #{residual_layer3d.1} parent=11 // pred_check
        %p336 = pneg %p275
      $region38: #{residual_layer3d.1} parent=11 // pred_check_branch
        %338 = sbr.rel (%p336) target = $region40
      $region39: #{residual_layer3d.1} parent=11 // pred_region
        _
      $region40: #{residual_layer3d.1} parent=11 // pred_fallthru
        _
    $region12: #{residual_layer3d.1} parent=5 // pred_fallthru
      _
    %p339 = scmp.lt.s32.totalorder %s16, 2
    // Predicated region
    $region41: #{residual_layer3d.1} parent=5 // pred_check
      %p340 = pneg %p339
    $region42: #{residual_layer3d.1} parent=5 // pred_check_branch
      %342 = sbr.rel (%p340) target = $region44
    $region43: #{residual_layer3d.1} parent=5 // pred_region
      // Predicated region
      $region45: #{residual_layer3d.1} parent=43 // pred_check
        %p343 = pneg %p50
      $region46: #{residual_layer3d.1} parent=43 // pred_check_branch
        %345 = sbr.rel (%p343) target = $region48
      $region47: #{residual_layer3d.1} parent=43 // pred_region
        %s346 = smul.u32 8, %s24
        %p347 = scmp.lt.s32.totalorder %s23, 1
        %s348 = scalar_select %p347, %s23, 1
        %p349 = scmp.lt.s32.totalorder %s346, 7
        %s350 = scalar_select %p349, %s346, 7
        %s351 = smul.addr %s350, 2
        %s352 = smul.addr %s348, 16
        %s353 = sadd.s32 %s351, %s352
        %s354 = smul.addr %s353, 4
        %s355 = scalar_lea.vmem %s0, %s354
        %s356 = smul.u32 8, %s24
      $region48: #{residual_layer3d.1} parent=43 // pred_fallthru
        _
      // Predicated region
      $region49: #{residual_layer3d.1} parent=43 // pred_check
        %p357 = pneg %p86
      $region50: #{residual_layer3d.1} parent=43 // pred_check_branch
        %359 = sbr.rel (%p357) target = $region52
      $region51: #{residual_layer3d.1} parent=43 // pred_region
        %s360 = smul.u32 %s24, 8
        %s361 = ssub.s32 %s360, 1
        %p362 = scmp.gt.s32.totalorder %s361, 0
        %s363 = scalar_select %p362, %s361, 0
        %p364 = scmp.lt.s32.totalorder %s23, 1
        %s365 = scalar_select %p364, %s23, 1
        %p366 = scmp.lt.s32.totalorder %s363, 7
        %s367 = scalar_select %p366, %s363, 7
        %s368 = smul.addr %s367, 2
        %s369 = smul.addr %s365, 16
        %s370 = sadd.s32 %s368, %s369
        %s371 = smul.addr %s370, 4
        %s372 = scalar_lea.vmem %s1, %s371
        %s373 = smul.u32 %s24, 8
        %s374 = ssub.s32 %s373, 1
        %p375 = scmp.gt.s32.totalorder %s374, 0
        %s376 = scalar_select %p375, %s374, 0
      $region52: #{residual_layer3d.1} parent=43 // pred_fallthru
        _
      // Predicated region
      $region53: #{residual_layer3d.1} parent=43 // pred_check
        %p377 = pneg %p122
      $region54: #{residual_layer3d.1} parent=43 // pred_check_branch
        %379 = sbr.rel (%p377) target = $region56
      $region55: #{residual_layer3d.1} parent=43 // pred_region
        %s380 = smul.u32 %s24, 8
        %s381 = sadd.s32 %s380, 8
        %p382 = scmp.lt.s32.totalorder %s381, 7
        %s383 = scalar_select %p382, %s381, 7
        %p384 = scmp.lt.s32.totalorder %s23, 1
        %s385 = scalar_select %p384, %s23, 1
        %p386 = scmp.lt.s32.totalorder %s383, 7
        %s387 = scalar_select %p386, %s383, 7
        %s388 = smul.addr %s387, 2
        %s389 = smul.addr %s385, 16
        %s390 = sadd.s32 %s388, %s389
        %s391 = smul.addr %s390, 4
        %s392 = scalar_lea.vmem %s2, %s391
        %s393 = smul.u32 %s24, 8
        %s394 = sadd.s32 %s393, 8
        %p395 = scmp.lt.s32.totalorder %s394, 7
        %s396 = scalar_select %p395, %s394, 7
      $region56: #{residual_layer3d.1} parent=43 // pred_fallthru
        _
    $region44: #{residual_layer3d.1} parent=5 // pred_fallthru
      _
    %p397 = scmp.le.s32.totalorder 1, %s16
    %p398 = scmp.lt.s32.totalorder %s16, 3
    %p399 = pnand %p397, %p398
    %p400 = pneg %p399
    // Predicated region
    $region57: #{residual_layer3d.1} parent=5 // pred_check
      _
    $region58: #{residual_layer3d.1} parent=5 // pred_check_branch
      %402 = sbr.rel (%p399) target = $region60
    $region59: #{residual_layer3d.1} parent=5 // pred_region
      %s403 = ssub.s32 %s16, 1
      %s404 = smul.u32 8, %s26
      %p405 = scmp.lt.s32.totalorder %s25, 1
      %s406 = scalar_select %p405, %s25, 1
      %p407 = scmp.lt.s32.totalorder %s404, 7
      %s408 = scalar_select %p407, %s404, 7
      %s409 = smul.addr %s408, 2
      %s410 = smul.addr %s406, 16
      %s411 = sadd.s32 %s409, %s410
      %s412 = smul.addr %s411, 4
      %s413 = scalar_lea.vmem %s0, %s412
      %p414 = pneg %p56
      %p415 = pneg %p53
      %s416 = smul.u32 %s26, 8
      %s417 = ssub.s32 %s416, 1
      %p418 = scmp.gt.s32.totalorder %s417, 0
      %s419 = scalar_select %p418, %s417, 0
      %p420 = scmp.lt.s32.totalorder %s25, 1
      %s421 = scalar_select %p420, %s25, 1
      %p422 = scmp.lt.s32.totalorder %s419, 7
      %s423 = scalar_select %p422, %s419, 7
      %s424 = smul.addr %s423, 2
      %s425 = smul.addr %s421, 16
      %s426 = sadd.s32 %s424, %s425
      %s427 = smul.addr %s426, 4
      %s428 = scalar_lea.vmem %s1, %s427
      %p429 = pneg %p92
      %p430 = pneg %p89
      %s431 = smul.u32 %s26, 8
      %s432 = sadd.s32 %s431, 8
      %p433 = scmp.lt.s32.totalorder %s432, 7
      %s434 = scalar_select %p433, %s432, 7
      %p435 = scmp.lt.s32.totalorder %s25, 1
      %s436 = scalar_select %p435, %s25, 1
      %p437 = scmp.lt.s32.totalorder %s434, 7
      %s438 = scalar_select %p437, %s434, 7
      %s439 = smul.addr %s438, 2
      %s440 = smul.addr %s436, 16
      %s441 = sadd.s32 %s439, %s440
      %s442 = smul.addr %s441, 4
      %s443 = scalar_lea.vmem %s2, %s442
      %p444 = pneg %p128
      %p445 = pneg %p125
      %p446 = pneg %p149
      %p447 = pneg %p146
      %p448 = pneg %p170
      %p449 = pneg %p167
      %p450 = pneg %p191
      %p451 = pneg %p188
      %p452 = pneg %p212
      %p453 = pneg %p209
      %p454 = pneg %p233
      %p455 = pneg %p230
      %p456 = pneg %p254
      %p457 = pneg %p251
      %p458 = pneg %p275
      %p459 = pneg %p272
      %p460 = pneg %p303
      %p461 = pneg %p300
      %s462 = smul.u32 8, %s26
      %p463 = scmp.lt.s32.totalorder %s25, 1
      %s464 = scalar_select %p463, %s25, 1
      %p465 = scmp.lt.s32.totalorder %s462, 7
      %s466 = scalar_select %p465, %s462, 7
      %s467 = smul.addr %s466, 2
      %s468 = smul.addr %s464, 16
      %s469 = sadd.s32 %s467, %s468
      %s470 = smul.addr %s469, 4
      %s471 = scalar_lea.vmem %s10, %s470
      %s472 = smul.u32 8, %s26
      %p473 = scmp.lt.s32.totalorder %s25, 1
      %s474 = scalar_select %p473, %s25, 1
      %p475 = scmp.lt.s32.totalorder %s472, 7
      %s476 = scalar_select %p475, %s472, 7
      %s477 = smul.addr %s476, 2
      %s478 = smul.addr %s474, 16
      %s479 = sadd.s32 %s477, %s478
      %s480 = smul.addr %s479, 4
      %s481 = scalar_lea.vmem %s0, %s480
      %s482 = smul.u32 8, %s26
      %s483 = smul.u32 %s26, 8
      %s484 = ssub.s32 %s483, 1
      %p485 = scmp.gt.s32.totalorder %s484, 0
      %s486 = scalar_select %p485, %s484, 0
      %p487 = scmp.lt.s32.totalorder %s25, 1
      %s488 = scalar_select %p487, %s25, 1
      %p489 = scmp.lt.s32.totalorder %s486, 7
      %s490 = scalar_select %p489, %s486, 7
      %s491 = smul.addr %s490, 2
      %s492 = smul.addr %s488, 16
      %s493 = sadd.s32 %s491, %s492
      %s494 = smul.addr %s493, 4
      %s495 = scalar_lea.vmem %s1, %s494
      %s496 = smul.u32 %s26, 8
      %s497 = ssub.s32 %s496, 1
      %p498 = scmp.gt.s32.totalorder %s497, 0
      %s499 = scalar_select %p498, %s497, 0
      %s500 = smul.u32 %s26, 8
      %s501 = sadd.s32 %s500, 8
      %p502 = scmp.lt.s32.totalorder %s501, 7
      %s503 = scalar_select %p502, %s501, 7
      %p504 = scmp.lt.s32.totalorder %s25, 1
      %s505 = scalar_select %p504, %s25, 1
      %p506 = scmp.lt.s32.totalorder %s503, 7
      %s507 = scalar_select %p506, %s503, 7
      %s508 = smul.addr %s507, 2
      %s509 = smul.addr %s505, 16
      %s510 = sadd.s32 %s508, %s509
      %s511 = smul.addr %s510, 4
      %s512 = scalar_lea.vmem %s2, %s511
      %s513 = smul.u32 %s26, 8
      %s514 = sadd.s32 %s513, 8
      %p515 = scmp.lt.s32.totalorder %s514, 7
      %s516 = scalar_select %p515, %s514, 7
      %s517 = smul.u32 8, %s26
      %p518 = scmp.lt.s32.totalorder %s25, 1
      %s519 = scalar_select %p518, %s25, 1
      %p520 = scmp.lt.s32.totalorder %s517, 7
      %s521 = scalar_select %p520, %s517, 7
      %s522 = smul.addr %s521, 2
      %s523 = smul.addr %s519, 16
      %s524 = sadd.s32 %s522, %s523
      %s525 = smul.addr %s524, 4
      %s526 = scalar_lea.vmem %s10, %s525
      %s527 = smul.u32 8, %s26
      %v529 = vld [vmem:[%s4] sm:$0xff]
      %v530 = vld [vmem:[%s6] sm:$0xf]
      %v531 = vld [vmem:[%s7] sm:$0xff]
      %v532 = vld [vmem:[%s8] sm:$0xff]
      %v533 = vld [vmem:[%s9] sm:$0xf]
      %v534 = vld [vmem:[%s5] sm:$0xf]
      %s535 = scalar_lea.vmem %s5, 4
      %v536 = vld [vmem:[%s535] sm:$0xf]
      %s537 = scalar_lea.vmem %s5, 8
      %v538 = vld [vmem:[%s537] sm:$0xf]
      %539 = vst [vmem:[#allocation2] sm:$0xff] 0.0
      %540 = vst [vmem:[#allocation2 + $0x8] sm:$0xff] 0.0
      %541 = vst [vmem:[#allocation2 + $0x10] sm:$0xff] 0.0
      %542 = vst [vmem:[#allocation2 + $0x18] sm:$0xff] 0.0
      %543 = vst [vmem:[#allocation2 + $0x20] sm:$0xff] 0.0
      %544 = vst [vmem:[#allocation2 + $0x28] sm:$0xff] 0.0
      %545 = vst [vmem:[#allocation2 + $0x30] sm:$0xff] 0.0
      %546 = vst [vmem:[#allocation2 + $0x38] sm:$0xff] 0.0
      %547 = vst [vmem:[#allocation2 + $0x40] sm:$0xff] 0.0
      %548 = vst [vmem:[#allocation2 + $0x48] sm:$0xff] 0.0
      %549 = vst [vmem:[#allocation2 + $0x50] sm:$0xff] 0.0
      %550 = vst [vmem:[#allocation2 + $0x58] sm:$0xff] 0.0
      %551 = vst [vmem:[#allocation2 + $0x60] sm:$0xff] 0.0
      %552 = vst [vmem:[#allocation2 + $0x68] sm:$0xff] 0.0
      %553 = vst [vmem:[#allocation2 + $0x70] sm:$0xff] 0.0
      %554 = vst [vmem:[#allocation2 + $0x78] sm:$0xff] 0.0
      %p555 = scmp.gt.s32.totalorder %s26, 0
      // Predicated region
      $region61: #{residual_layer3d.1} parent=59 // pred_check
        %p556 = pneg %p555
      $region62: #{residual_layer3d.1} parent=59 // pred_check_branch
        %558 = sbr.rel (%p556) target = $region64
      $region63: #{residual_layer3d.1} parent=59 // pred_region
        %v559 = vld [vmem:[%s495] sm:$0xff]
        %561 = vset.pattern.permute.xlu0 0
        %562 = vperm.xlu0 %561, %v531
        %v563 = vpop.permute.xlu0 %562
        %v566 = vcombine.high %v559, %v559
        %vm567 = vcmask 31744
        %v569 = vsel %vm567, %v529, 0
        %vm571 = vcmask 1043456
        %v572 = vsel %vm571, %v559, 0
        %v574 = vsel %vm571, %v566, 0
        %576 = vmatprep.subr.mxu0 %v574
        %577 = vmatpush1.msra.mxu0 %v572
        %578 = vmatprep.subr.mxu0 0.0
        %579 = vmatpush1.msra.mxu0 0.0
        %580 = vmatprep.subr.mxu0 0.0
        %581 = vmatpush1.msra.mxu0 0.0
        %582 = vmatprep.subr.mxu0 0.0
        %583 = vmatpush1.msra.mxu0 0.0
        %584 = vmatprep.subr.mxu0 0.0
        %585 = vmatpush1.msra.mxu0 0.0
        %586 = vmatprep.subr.mxu0 0.0
        %587 = vmatpush1.msra.mxu0 0.0
        %588 = vmatprep.subr.mxu0 0.0
        %589 = vmatpush1.msra.mxu0 0.0
        %590 = vmatprep.subr.mxu0 0.0
        %591 = vmatpush1.msra.mxu0 0.0
        %592 = vmatprep.subr.mxu0 0.0
        %593 = vmatpush1.msra.mxu0 0.0
        %594 = vmatprep.subr.mxu0 0.0
        %595 = vmatpush1.msra.mxu0 0.0
        %596 = vmatprep.subr.mxu0 0.0
        %597 = vmatpush1.msra.mxu0 0.0
        %598 = vmatprep.subr.mxu0 0.0
        %599 = vmatpush1.msra.mxu0 0.0
        %600 = vmatprep.subr.mxu0 0.0
        %601 = vmatpush1.msra.mxu0 0.0
        %602 = vmatprep.subr.mxu0 0.0
        %603 = vmatpush1.msra.mxu0 0.0
        %604 = vmatprep.subr.mxu0 0.0
        %605 = vmatpush1.msra.mxu0 0.0
        %606 = vmatprep.subr.mxu0 0.0
        %607 = vmatpush1.msra.mxu0 0.0
        %608 = vmatprep.subr.mxu0 0.0
        %609 = vmatpush1.msra.mxu0 0.0
        %610 = vmatprep.subr.mxu0 0.0
        %611 = vmatpush1.msra.mxu0 0.0
        %612 = vmatprep.subr.mxu0 0.0
        %613 = vmatpush1.msra.mxu0 0.0
        %614 = vmatprep.subr.mxu0 0.0
        %615 = vmatpush1.msra.mxu0 0.0
        %616 = vmatprep.subr.mxu0 0.0
        %617 = vmatpush1.msra.mxu0 0.0
        %618 = vmatprep.subr.mxu0 0.0
        %619 = vmatpush1.msra.mxu0 0.0
        %620 = vmatprep.subr.mxu0 0.0
        %621 = vmatpush1.msra.mxu0 0.0
        %622 = vmatprep.subr.mxu0 0.0
        %623 = vmatpush1.msra.mxu0 0.0
        %624 = vmatprep.subr.mxu0 0.0
        %625 = vmatpush1.msra.mxu0 0.0
        %626 = vmatprep.subr.mxu0 0.0
        %627 = vmatpush1.msra.mxu0 0.0
        %628 = vmatprep.subr.mxu0 0.0
        %629 = vmatpush1.msra.mxu0 0.0
        %630 = vmatprep.subr.mxu0 0.0
        %631 = vmatpush1.msra.mxu0 0.0
        %632 = vmatprep.subr.mxu0 0.0
        %633 = vmatpush1.msra.mxu0 0.0
        %634 = vmatprep.subr.mxu0 0.0
        %635 = vmatpush1.msra.mxu0 0.0
        %636 = vmatprep.subr.mxu0 0.0
        %637 = vmatpush1.msra.mxu0 0.0
        %638 = vmatprep.subr.mxu0 0.0
        %639 = vmatpush1.msra.mxu0 0.0
        %640 = vmatprep.mubr.f32.mxu0 0.0
        %641 = vmatmul.mubr.f32.gmra.mrb[0].mxu0 %v569
        %v642 = vpop.f32.mrb[0].mxu0
        %v643 = vadd.f32 %v563, %v642
        %v644 = vpop.f32.mrb[0].mxu0
        %v645 = vadd.f32 %v563, %v644
        %646 = vdwg.mxu0
        %v647 = vmax.f32 %v643, 0.0
        %v648 = vmax.f32 %v645, 0.0
        %649 = vrot.lane.b32.xlu0 %v647, 17
        %v650 = vpop.permute.xlu0 %649
        %651 = vrot.lane.b32.xlu0 %v648, 17
        %v652 = vpop.permute.xlu0 %651
        %v653 = vlaneseq
        %v654 = vand.u32 %v653, 127
        %vm655 = vcmp.lt.s32.totalorder %v654, 17
        %v656 = vsel %vm655, %v650, %v652
        %v657 = vsel %vm655, %v652, %v650
        %v658 = vld [vmem:[%s3] sm:$0x3]
        %v660 = vlaneseq
        %v661 = vshrl.u32 %v660, 7
        %v662 = vsub.s32 0, %v661
        %v663 = vrot.slane %v658, %v662
        %v664 = vlaneseq
        %v665 = vshrl.u32 %v664, 7
        %v666 = vsub.s32 1, %v665
        %v667 = vrot.slane %v658, %v666
        %v670 = vmul.f32 %v657, %v663
        %v671 = vmul.f32 %v656, %v667
        %672 = vrot.lane.b32.xlu0 %v647, 16
        %v673 = vpop.permute.xlu0 %672
        %674 = vrot.lane.b32.xlu0 %v648, 16
        %v675 = vpop.permute.xlu0 %674
        %vm676 = vcmp.lt.s32.totalorder %v654, 16
        %v677 = vsel %vm676, %v673, %v675
        %v678 = vsel %vm676, %v675, %v673
        %s679 = scalar_lea.vmem %s3, 2
        %v680 = vld [vmem:[%s679] sm:$0x3]
        %v682 = vlaneseq
        %v683 = vshrl.u32 %v682, 7
        %v684 = vsub.s32 0, %v683
        %v685 = vrot.slane %v680, %v684
        %v686 = vlaneseq
        %v687 = vshrl.u32 %v686, 7
        %v688 = vsub.s32 1, %v687
        %v689 = vrot.slane %v680, %v688
        %v692 = vmul.f32 %v678, %v685
        %v693 = vmul.f32 %v677, %v689
        %694 = vrot.lane.b32.xlu0 %v647, 15
        %v695 = vpop.permute.xlu0 %694
        %696 = vrot.lane.b32.xlu0 %v648, 15
        %v697 = vpop.permute.xlu0 %696
        %vm698 = vcmp.lt.s32.totalorder %v654, 15
        %v699 = vsel %vm698, %v695, %v697
        %v700 = vsel %vm698, %v697, %v695
        %s701 = scalar_lea.vmem %s3, 4
        %v702 = vld [vmem:[%s701] sm:$0x3]
        %v704 = vlaneseq
        %v705 = vshrl.u32 %v704, 7
        %v706 = vsub.s32 0, %v705
        %v707 = vrot.slane %v702, %v706
        %v708 = vlaneseq
        %v709 = vshrl.u32 %v708, 7
        %v710 = vsub.s32 1, %v709
        %v711 = vrot.slane %v702, %v710
        %v714 = vmul.f32 %v700, %v707
        %v715 = vmul.f32 %v699, %v711
        %716 = vrot.lane.b32.xlu0 %v647, 1
        %v717 = vpop.permute.xlu0 %716
        %718 = vrot.lane.b32.xlu0 %v648, 1
        %v719 = vpop.permute.xlu0 %718
        %vm720 = vcmp.lt.s32.totalorder %v654, 1
        %v721 = vsel %vm720, %v717, %v719
        %v722 = vsel %vm720, %v719, %v717
        %s723 = scalar_lea.vmem %s3, 6
        %v724 = vld [vmem:[%s723] sm:$0x3]
        %v726 = vlaneseq
        %v727 = vshrl.u32 %v726, 7
        %v728 = vsub.s32 0, %v727
        %v729 = vrot.slane %v724, %v728
        %v730 = vlaneseq
        %v731 = vshrl.u32 %v730, 7
        %v732 = vsub.s32 1, %v731
        %v733 = vrot.slane %v724, %v732
        %v736 = vmul.f32 %v722, %v729
        %v737 = vmul.f32 %v721, %v733
        %738 = vrot.lane.b32.xlu0 %v647, 127
        %v739 = vpop.permute.xlu0 %738
        %740 = vrot.lane.b32.xlu0 %v648, 127
        %v741 = vpop.permute.xlu0 %740
        %vm742 = vcmp.lt.s32.totalorder %v654, 127
        %v743 = vsel %vm742, %v739, %v741
        %v744 = vsel %vm742, %v741, %v739
        %s745 = scalar_lea.vmem %s3, 10
        %v746 = vld [vmem:[%s745] sm:$0x3]
        %v748 = vlaneseq
        %v749 = vshrl.u32 %v748, 7
        %v750 = vsub.s32 0, %v749
        %v751 = vrot.slane %v746, %v750
        %v752 = vlaneseq
        %v753 = vshrl.u32 %v752, 7
        %v754 = vsub.s32 1, %v753
        %v755 = vrot.slane %v746, %v754
        %v758 = vmul.f32 %v743, %v751
        %v759 = vmul.f32 %v744, %v755
        %760 = vrot.lane.b32.xlu0 %v647, 113
        %v761 = vpop.permute.xlu0 %760
        %762 = vrot.lane.b32.xlu0 %v648, 113
        %v763 = vpop.permute.xlu0 %762
        %vm764 = vcmp.lt.s32.totalorder %v654, 113
        %v765 = vsel %vm764, %v761, %v763
        %v766 = vsel %vm764, %v763, %v761
        %s767 = scalar_lea.vmem %s3, 12
        %v768 = vld [vmem:[%s767] sm:$0x3]
        %v770 = vlaneseq
        %v771 = vshrl.u32 %v770, 7
        %v772 = vsub.s32 0, %v771
        %v773 = vrot.slane %v768, %v772
        %v774 = vlaneseq
        %v775 = vshrl.u32 %v774, 7
        %v776 = vsub.s32 1, %v775
        %v777 = vrot.slane %v768, %v776
        %v780 = vmul.f32 %v765, %v773
        %v781 = vmul.f32 %v766, %v777
        %782 = vrot.lane.b32.xlu0 %v647, 112
        %v783 = vpop.permute.xlu0 %782
        %784 = vrot.lane.b32.xlu0 %v648, 112
        %v785 = vpop.permute.xlu0 %784
        %vm786 = vcmp.lt.s32.totalorder %v654, 112
        %v787 = vsel %vm786, %v783, %v785
        %v788 = vsel %vm786, %v785, %v783
        %s789 = scalar_lea.vmem %s3, 14
        %v790 = vld [vmem:[%s789] sm:$0x3]
        %v792 = vlaneseq
        %v793 = vshrl.u32 %v792, 7
        %v794 = vsub.s32 0, %v793
        %v795 = vrot.slane %v790, %v794
        %v796 = vlaneseq
        %v797 = vshrl.u32 %v796, 7
        %v798 = vsub.s32 1, %v797
        %v799 = vrot.slane %v790, %v798
        %v802 = vmul.f32 %v787, %v795
        %v803 = vmul.f32 %v788, %v799
        %804 = vrot.lane.b32.xlu0 %v647, 111
        %v805 = vpop.permute.xlu0 %804
        %806 = vrot.lane.b32.xlu0 %v648, 111
        %v807 = vpop.permute.xlu0 %806
        %vm808 = vcmp.lt.s32.totalorder %v654, 111
        %v809 = vsel %vm808, %v805, %v807
        %v810 = vsel %vm808, %v807, %v805
        %s811 = scalar_lea.vmem %s3, 16
        %v812 = vld [vmem:[%s811] sm:$0x3]
        %v814 = vlaneseq
        %v815 = vshrl.u32 %v814, 7
        %v816 = vsub.s32 0, %v815
        %v817 = vrot.slane %v812, %v816
        %v818 = vlaneseq
        %v819 = vshrl.u32 %v818, 7
        %v820 = vsub.s32 1, %v819
        %v821 = vrot.slane %v812, %v820
        %v824 = vmul.f32 %v809, %v817
        %v825 = vmul.f32 %v810, %v821
        %v826 = vpack.c.bf16 %v692, %v670
        %v827 = vpack.c.bf16 %v693, %v671
        %v828 = vpack.c.bf16 %v736, %v714
        %v829 = vpack.c.bf16 %v737, %v715
        %v830 = vpack.c.bf16 %v758, %v647
        %v831 = vpack.c.bf16 %v759, %v648
        %v832 = vpack.c.bf16 %v802, %v780
        %v833 = vpack.c.bf16 %v803, %v781
        %v834 = vpack.c.bf16 %v824, %v824
        %v835 = vpack.c.bf16 %v825, %v825
        %v836 = vld [vmem:[#allocation2] sm:$0xff]
        %v837 = vld [vmem:[#allocation2 + $0x8] sm:$0xff]
        %vm838 = vcmask 588800
        %v840 = vsel %vm838, %v534, 0
        %v843 = vsel %vm571, %v834, 0
        %v846 = vsel %vm571, %v835, 0
        %848 = vmatprep.subr.bf16.mxu0 %v827
        %849 = vmatpush1.bf16.msra.mxu0 %v826
        %850 = vmatprep.subr.bf16.mxu0 %v829
        %851 = vmatpush1.bf16.msra.mxu0 %v828
        %852 = vmatprep.subr.bf16.mxu0 %v831
        %853 = vmatpush1.bf16.msra.mxu0 %v830
        %854 = vmatprep.subr.bf16.mxu0 %v833
        %855 = vmatpush1.bf16.msra.mxu0 %v832
        %856 = vmatprep.subr.bf16.mxu0 %v846
        %857 = vmatpush1.bf16.msra.mxu0 %v843
        %858 = vmatprep.subr.bf16.mxu0 0
        %859 = vmatpush1.bf16.msra.mxu0 0
        %860 = vmatprep.subr.bf16.mxu0 0
        %861 = vmatpush1.bf16.msra.mxu0 0
        %862 = vmatprep.subr.bf16.mxu0 0
        %863 = vmatpush1.bf16.msra.mxu0 0
        %864 = vmatprep.subr.bf16.mxu0 0
        %865 = vmatpush1.bf16.msra.mxu0 0
        %866 = vmatprep.subr.bf16.mxu0 0
        %867 = vmatpush1.bf16.msra.mxu0 0
        %868 = vmatprep.subr.bf16.mxu0 0
        %869 = vmatpush1.bf16.msra.mxu0 0
        %870 = vmatprep.subr.bf16.mxu0 0
        %871 = vmatpush1.bf16.msra.mxu0 0
        %872 = vmatprep.subr.bf16.mxu0 0
        %873 = vmatpush1.bf16.msra.mxu0 0
        %874 = vmatprep.subr.bf16.mxu0 0
        %875 = vmatpush1.bf16.msra.mxu0 0
        %876 = vmatprep.subr.bf16.mxu0 0
        %877 = vmatpush1.bf16.msra.mxu0 0
        %878 = vmatprep.subr.bf16.mxu0 0
        %879 = vmatpush1.bf16.msra.mxu0 0
        %880 = vmatprep.mubr.bf16.mxu0 0
        %881 = vmatmul.mubr.bf16.gmra.mrb[0].mxu0 %v840
        %v882 = vpop.f32.mrb[0].mxu0
        %v883 = vadd.f32 0.0, %v882
        %v884 = vpop.f32.mrb[0].mxu0
        %v885 = vadd.f32 0.0, %v884
        %v886 = vpop.f32.mrb[0].mxu0
        %v887 = vpop.f32.mrb[0].mxu0
        %888 = vdwg.mxu0
        %v889 = vadd.f32 %v836, %v883
        %v890 = vadd.f32 %v837, %v885
        %891 = vst [vmem:[#allocation2] sm:$0xff] %v889
        %892 = vst [vmem:[#allocation2 + $0x8] sm:$0xff] %v890
      $region64: #{residual_layer3d.1} parent=59 // pred_fallthru
        _
      %v893 = vld [vmem:[%s481] sm:$0xff]
      %895 = vset.pattern.permute.xlu0 0
      %896 = vperm.xlu0 %895, %v531
      %v897 = vpop.permute.xlu0 %896
      %v900 = vcombine.high %v893, %v893
      %vm901 = vcmask 31744
      %v903 = vsel %vm901, %v529, 0
      %vm905 = vcmask 1043456
      %v906 = vsel %vm905, %v893, 0
      %v908 = vsel %vm905, %v900, 0
      %910 = vmatprep.subr.mxu0 %v908
      %911 = vmatpush1.msra.mxu0 %v906
      %912 = vmatprep.subr.mxu0 0.0
      %913 = vmatpush1.msra.mxu0 0.0
      %914 = vmatprep.subr.mxu0 0.0
      %915 = vmatpush1.msra.mxu0 0.0
      %916 = vmatprep.subr.mxu0 0.0
      %917 = vmatpush1.msra.mxu0 0.0
      %918 = vmatprep.subr.mxu0 0.0
      %919 = vmatpush1.msra.mxu0 0.0
      %920 = vmatprep.subr.mxu0 0.0
      %921 = vmatpush1.msra.mxu0 0.0
      %922 = vmatprep.subr.mxu0 0.0
      %923 = vmatpush1.msra.mxu0 0.0
      %924 = vmatprep.subr.mxu0 0.0
      %925 = vmatpush1.msra.mxu0 0.0
      %926 = vmatprep.subr.mxu0 0.0
      %927 = vmatpush1.msra.mxu0 0.0
      %928 = vmatprep.subr.mxu0 0.0
      %929 = vmatpush1.msra.mxu0 0.0
      %930 = vmatprep.subr.mxu0 0.0
      %931 = vmatpush1.msra.mxu0 0.0
      %932 = vmatprep.subr.mxu0 0.0
      %933 = vmatpush1.msra.mxu0 0.0
      %934 = vmatprep.subr.mxu0 0.0
      %935 = vmatpush1.msra.mxu0 0.0
      %936 = vmatprep.subr.mxu0 0.0
      %937 = vmatpush1.msra.mxu0 0.0
      %938 = vmatprep.subr.mxu0 0.0
      %939 = vmatpush1.msra.mxu0 0.0
      %940 = vmatprep.subr.mxu0 0.0
      %941 = vmatpush1.msra.mxu0 0.0
      %942 = vmatprep.subr.mxu0 0.0
      %943 = vmatpush1.msra.mxu0 0.0
      %944 = vmatprep.subr.mxu0 0.0
      %945 = vmatpush1.msra.mxu0 0.0
      %946 = vmatprep.subr.mxu0 0.0
      %947 = vmatpush1.msra.mxu0 0.0
      %948 = vmatprep.subr.mxu0 0.0
      %949 = vmatpush1.msra.mxu0 0.0
      %950 = vmatprep.subr.mxu0 0.0
      %951 = vmatpush1.msra.mxu0 0.0
      %952 = vmatprep.subr.mxu0 0.0
      %953 = vmatpush1.msra.mxu0 0.0
      %954 = vmatprep.subr.mxu0 0.0
      %955 = vmatpush1.msra.mxu0 0.0
      %956 = vmatprep.subr.mxu0 0.0
      %957 = vmatpush1.msra.mxu0 0.0
      %958 = vmatprep.subr.mxu0 0.0
      %959 = vmatpush1.msra.mxu0 0.0
      %960 = vmatprep.subr.mxu0 0.0
      %961 = vmatpush1.msra.mxu0 0.0
      %962 = vmatprep.subr.mxu0 0.0
      %963 = vmatpush1.msra.mxu0 0.0
      %964 = vmatprep.subr.mxu0 0.0
      %965 = vmatpush1.msra.mxu0 0.0
      %966 = vmatprep.subr.mxu0 0.0
      %967 = vmatpush1.msra.mxu0 0.0
      %968 = vmatprep.subr.mxu0 0.0
      %969 = vmatpush1.msra.mxu0 0.0
      %970 = vmatprep.subr.mxu0 0.0
      %971 = vmatpush1.msra.mxu0 0.0
      %972 = vmatprep.subr.mxu0 0.0
      %973 = vmatpush1.msra.mxu0 0.0
      %974 = vmatprep.mubr.f32.mxu0 0.0
      %975 = vmatmul.mubr.f32.gmra.mrb[0].mxu0 %v903
      %v976 = vpop.f32.mrb[0].mxu0
      %v977 = vadd.f32 %v897, %v976
      %v978 = vpop.f32.mrb[0].mxu0
      %v979 = vadd.f32 %v897, %v978
      %980 = vdwg.mxu0
      %v981 = vmax.f32 %v977, 0.0
      %v982 = vmax.f32 %v979, 0.0
      %983 = vrot.lane.b32.xlu0 %v981, 17
      %v984 = vpop.permute.xlu0 %983
      %985 = vrot.lane.b32.xlu0 %v982, 17
      %v986 = vpop.permute.xlu0 %985
      %v987 = vlaneseq
      %v988 = vand.u32 %v987, 127
      %vm989 = vcmp.lt.s32.totalorder %v988, 17
      %v990 = vsel %vm989, %v984, %v986
      %v991 = vsel %vm989, %v986, %v984
      %v992 = vld [vmem:[%s3] sm:$0x3]
      %v994 = vlaneseq
      %v995 = vshrl.u32 %v994, 7
      %v996 = vsub.s32 0, %v995
      %v997 = vrot.slane %v992, %v996
      %v998 = vlaneseq
      %v999 = vshrl.u32 %v998, 7
      %v1000 = vsub.s32 1, %v999
      %v1001 = vrot.slane %v992, %v1000
      %v1004 = vmul.f32 %v991, %v997
      %v1005 = vmul.f32 %v990, %v1001
      %1006 = vrot.lane.b32.xlu0 %v981, 16
      %v1007 = vpop.permute.xlu0 %1006
      %1008 = vrot.lane.b32.xlu0 %v982, 16
      %v1009 = vpop.permute.xlu0 %1008
      %vm1010 = vcmp.lt.s32.totalorder %v988, 16
      %v1011 = vsel %vm1010, %v1007, %v1009
      %v1012 = vsel %vm1010, %v1009, %v1007
      %s1013 = scalar_lea.vmem %s3, 2
      %v1014 = vld [vmem:[%s1013] sm:$0x3]
      %v1016 = vlaneseq
      %v1017 = vshrl.u32 %v1016, 7
      %v1018 = vsub.s32 0, %v1017
      %v1019 = vrot.slane %v1014, %v1018
      %v1020 = vlaneseq
      %v1021 = vshrl.u32 %v1020, 7
      %v1022 = vsub.s32 1, %v1021
      %v1023 = vrot.slane %v1014, %v1022
      %v1026 = vmul.f32 %v1012, %v1019
      %v1027 = vmul.f32 %v1011, %v1023
      %1028 = vrot.lane.b32.xlu0 %v981, 15
      %v1029 = vpop.permute.xlu0 %1028
      %1030 = vrot.lane.b32.xlu0 %v982, 15
      %v1031 = vpop.permute.xlu0 %1030
      %vm1032 = vcmp.lt.s32.totalorder %v988, 15
      %v1033 = vsel %vm1032, %v1029, %v1031
      %v1034 = vsel %vm1032, %v1031, %v1029
      %s1035 = scalar_lea.vmem %s3, 4
      %v1036 = vld [vmem:[%s1035] sm:$0x3]
      %v1038 = vlaneseq
      %v1039 = vshrl.u32 %v1038, 7
      %v1040 = vsub.s32 0, %v1039
      %v1041 = vrot.slane %v1036, %v1040
      %v1042 = vlaneseq
      %v1043 = vshrl.u32 %v1042, 7
      %v1044 = vsub.s32 1, %v1043
      %v1045 = vrot.slane %v1036, %v1044
      %v1048 = vmul.f32 %v1034, %v1041
      %v1049 = vmul.f32 %v1033, %v1045
      %1050 = vrot.lane.b32.xlu0 %v981, 1
      %v1051 = vpop.permute.xlu0 %1050
      %1052 = vrot.lane.b32.xlu0 %v982, 1
      %v1053 = vpop.permute.xlu0 %1052
      %vm1054 = vcmp.lt.s32.totalorder %v988, 1
      %v1055 = vsel %vm1054, %v1051, %v1053
      %v1056 = vsel %vm1054, %v1053, %v1051
      %s1057 = scalar_lea.vmem %s3, 6
      %v1058 = vld [vmem:[%s1057] sm:$0x3]
      %v1060 = vlaneseq
      %v1061 = vshrl.u32 %v1060, 7
      %v1062 = vsub.s32 0, %v1061
      %v1063 = vrot.slane %v1058, %v1062
      %v1064 = vlaneseq
      %v1065 = vshrl.u32 %v1064, 7
      %v1066 = vsub.s32 1, %v1065
      %v1067 = vrot.slane %v1058, %v1066
      %v1070 = vmul.f32 %v1056, %v1063
      %v1071 = vmul.f32 %v1055, %v1067
      %1072 = vrot.lane.b32.xlu0 %v981, 127
      %v1073 = vpop.permute.xlu0 %1072
      %1074 = vrot.lane.b32.xlu0 %v982, 127
      %v1075 = vpop.permute.xlu0 %1074
      %vm1076 = vcmp.lt.s32.totalorder %v988, 127
      %v1077 = vsel %vm1076, %v1073, %v1075
      %v1078 = vsel %vm1076, %v1075, %v1073
      %s1079 = scalar_lea.vmem %s3, 10
      %v1080 = vld [vmem:[%s1079] sm:$0x3]
      %v1082 = vlaneseq
      %v1083 = vshrl.u32 %v1082, 7
      %v1084 = vsub.s32 0, %v1083
      %v1085 = vrot.slane %v1080, %v1084
      %v1086 = vlaneseq
      %v1087 = vshrl.u32 %v1086, 7
      %v1088 = vsub.s32 1, %v1087
      %v1089 = vrot.slane %v1080, %v1088
      %v1092 = vmul.f32 %v1077, %v1085
      %v1093 = vmul.f32 %v1078, %v1089
      %1094 = vrot.lane.b32.xlu0 %v981, 113
      %v1095 = vpop.permute.xlu0 %1094
      %1096 = vrot.lane.b32.xlu0 %v982, 113
      %v1097 = vpop.permute.xlu0 %1096
      %vm1098 = vcmp.lt.s32.totalorder %v988, 113
      %v1099 = vsel %vm1098, %v1095, %v1097
      %v1100 = vsel %vm1098, %v1097, %v1095
      %s1101 = scalar_lea.vmem %s3, 12
      %v1102 = vld [vmem:[%s1101] sm:$0x3]
      %v1104 = vlaneseq
      %v1105 = vshrl.u32 %v1104, 7
      %v1106 = vsub.s32 0, %v1105
      %v1107 = vrot.slane %v1102, %v1106
      %v1108 = vlaneseq
      %v1109 = vshrl.u32 %v1108, 7
      %v1110 = vsub.s32 1, %v1109
      %v1111 = vrot.slane %v1102, %v1110
      %v1114 = vmul.f32 %v1099, %v1107
      %v1115 = vmul.f32 %v1100, %v1111
      %1116 = vrot.lane.b32.xlu0 %v981, 112
      %v1117 = vpop.permute.xlu0 %1116
      %1118 = vrot.lane.b32.xlu0 %v982, 112
      %v1119 = vpop.permute.xlu0 %1118
      %vm1120 = vcmp.lt.s32.totalorder %v988, 112
      %v1121 = vsel %vm1120, %v1117, %v1119
      %v1122 = vsel %vm1120, %v1119, %v1117
      %s1123 = scalar_lea.vmem %s3, 14
      %v1124 = vld [vmem:[%s1123] sm:$0x3]
      %v1126 = vlaneseq
      %v1127 = vshrl.u32 %v1126, 7
      %v1128 = vsub.s32 0, %v1127
      %v1129 = vrot.slane %v1124, %v1128
      %v1130 = vlaneseq
      %v1131 = vshrl.u32 %v1130, 7
      %v1132 = vsub.s32 1, %v1131
      %v1133 = vrot.slane %v1124, %v1132
      %v1136 = vmul.f32 %v1121, %v1129
      %v1137 = vmul.f32 %v1122, %v1133
      %1138 = vrot.lane.b32.xlu0 %v981, 111
      %v1139 = vpop.permute.xlu0 %1138
      %1140 = vrot.lane.b32.xlu0 %v982, 111
      %v1141 = vpop.permute.xlu0 %1140
      %vm1142 = vcmp.lt.s32.totalorder %v988, 111
      %v1143 = vsel %vm1142, %v1139, %v1141
      %v1144 = vsel %vm1142, %v1141, %v1139
      %s1145 = scalar_lea.vmem %s3, 16
      %v1146 = vld [vmem:[%s1145] sm:$0x3]
      %v1148 = vlaneseq
      %v1149 = vshrl.u32 %v1148, 7
      %v1150 = vsub.s32 0, %v1149
      %v1151 = vrot.slane %v1146, %v1150
      %v1152 = vlaneseq
      %v1153 = vshrl.u32 %v1152, 7
      %v1154 = vsub.s32 1, %v1153
      %v1155 = vrot.slane %v1146, %v1154
      %v1158 = vmul.f32 %v1143, %v1151
      %v1159 = vmul.f32 %v1144, %v1155
      %v1160 = vpack.c.bf16 %v1026, %v1004
      %v1161 = vpack.c.bf16 %v1027, %v1005
      %v1162 = vpack.c.bf16 %v1070, %v1048
      %v1163 = vpack.c.bf16 %v1071, %v1049
      %v1164 = vpack.c.bf16 %v1092, %v981
      %v1165 = vpack.c.bf16 %v1093, %v982
      %v1166 = vpack.c.bf16 %v1136, %v1114
      %v1167 = vpack.c.bf16 %v1137, %v1115
      %v1168 = vpack.c.bf16 %v1158, %v1158
      %v1169 = vpack.c.bf16 %v1159, %v1159
      %s1170 = scalar_lea.vmem [#allocation2], 16
      %v1171 = vld [vmem:[%s1170] sm:$0xff]
      %v1172 = vld [vmem:[%s1170 + $0x8] sm:$0xff]
      %vm1173 = vcmask 588800
      %v1175 = vsel %vm1173, %v534, 0
      %v1178 = vsel %vm905, %v1168, 0
      %v1181 = vsel %vm905, %v1169, 0
      %1183 = vmatprep.subr.bf16.mxu0 %v1161
      %1184 = vmatpush1.bf16.msra.mxu0 %v1160
      %1185 = vmatprep.subr.bf16.mxu0 %v1163
      %1186 = vmatpush1.bf16.msra.mxu0 %v1162
      %1187 = vmatprep.subr.bf16.mxu0 %v1165
      %1188 = vmatpush1.bf16.msra.mxu0 %v1164
      %1189 = vmatprep.subr.bf16.mxu0 %v1167
      %1190 = vmatpush1.bf16.msra.mxu0 %v1166
      %1191 = vmatprep.subr.bf16.mxu0 %v1181
      %1192 = vmatpush1.bf16.msra.mxu0 %v1178
      %1193 = vmatprep.subr.bf16.mxu0 0
      %1194 = vmatpush1.bf16.msra.mxu0 0
      %1195 = vmatprep.subr.bf16.mxu0 0
      %1196 = vmatpush1.bf16.msra.mxu0 0
      %1197 = vmatprep.subr.bf16.mxu0 0
      %1198 = vmatpush1.bf16.msra.mxu0 0
      %1199 = vmatprep.subr.bf16.mxu0 0
      %1200 = vmatpush1.bf16.msra.mxu0 0
      %1201 = vmatprep.subr.bf16.mxu0 0
      %1202 = vmatpush1.bf16.msra.mxu0 0
      %1203 = vmatprep.subr.bf16.mxu0 0
      %1204 = vmatpush1.bf16.msra.mxu0 0
      %1205 = vmatprep.subr.bf16.mxu0 0
      %1206 = vmatpush1.bf16.msra.mxu0 0
      %1207 = vmatprep.subr.bf16.mxu0 0
      %1208 = vmatpush1.bf16.msra.mxu0 0
      %1209 = vmatprep.subr.bf16.mxu0 0
      %1210 = vmatpush1.bf16.msra.mxu0 0
      %1211 = vmatprep.subr.bf16.mxu0 0
      %1212 = vmatpush1.bf16.msra.mxu0 0
      %1213 = vmatprep.subr.bf16.mxu0 0
      %1214 = vmatpush1.bf16.msra.mxu0 0
      %1215 = vmatprep.mubr.bf16.mxu0 0
      %1216 = vmatmul.mubr.bf16.gmra.mrb[0].mxu0 %v1175
      %v1217 = vpop.f32.mrb[0].mxu0
      %v1218 = vadd.f32 0.0, %v1217
      %v1219 = vpop.f32.mrb[0].mxu0
      %v1220 = vadd.f32 0.0, %v1219
      %v1221 = vpop.f32.mrb[0].mxu0
      %v1222 = vpop.f32.mrb[0].mxu0
      %1223 = vdwg.mxu0
      %v1224 = vadd.f32 %v1171, %v1218
      %v1225 = vadd.f32 %v1172, %v1220
      %1226 = vst [vmem:[%s1170] sm:$0xff] %v1224
      %1227 = vst [vmem:[%s1170 + $0x8] sm:$0xff] %v1225
      %v1228 = vld [vmem:[#allocation2] sm:$0xff]
      %v1229 = vld [vmem:[#allocation2 + $0x8] sm:$0xff]
      %v1231 = vsel %vm1173, %v536, 0
      %1233 = vmatprep.subr.bf16.mxu0 %v1161
      %1234 = vmatpush1.bf16.msra.mxu0 %v1160
      %1235 = vmatprep.subr.bf16.mxu0 %v1163
      %1236 = vmatpush1.bf16.msra.mxu0 %v1162
      %1237 = vmatprep.subr.bf16.mxu0 %v1165
      %1238 = vmatpush1.bf16.msra.mxu0 %v1164
      %1239 = vmatprep.subr.bf16.mxu0 %v1167
      %1240 = vmatpush1.bf16.msra.mxu0 %v1166
      %1241 = vmatprep.subr.bf16.mxu0 %v1181
      %1242 = vmatpush1.bf16.msra.mxu0 %v1178
      %1243 = vmatprep.subr.bf16.mxu0 0
      %1244 = vmatpush1.bf16.msra.mxu0 0
      %1245 = vmatprep.subr.bf16.mxu0 0
      %1246 = vmatpush1.bf16.msra.mxu0 0
      %1247 = vmatprep.subr.bf16.mxu0 0
      %1248 = vmatpush1.bf16.msra.mxu0 0
      %1249 = vmatprep.subr.bf16.mxu0 0
      %1250 = vmatpush1.bf16.msra.mxu0 0
      %1251 = vmatprep.subr.bf16.mxu0 0
      %1252 = vmatpush1.bf16.msra.mxu0 0
      %1253 = vmatprep.subr.bf16.mxu0 0
      %1254 = vmatpush1.bf16.msra.mxu0 0
      %1255 = vmatprep.subr.bf16.mxu0 0
      %1256 = vmatpush1.bf16.msra.mxu0 0
      %1257 = vmatprep.subr.bf16.mxu0 0
      %1258 = vmatpush1.bf16.msra.mxu0 0
      %1259 = vmatprep.subr.bf16.mxu0 0
      %1260 = vmatpush1.bf16.msra.mxu0 0
      %1261 = vmatprep.subr.bf16.mxu0 0
      %1262 = vmatpush1.bf16.msra.mxu0 0
      %1263 = vmatprep.subr.bf16.mxu0 0
      %1264 = vmatpush1.bf16.msra.mxu0 0
      %1265 = vmatprep.mubr.bf16.mxu0 0
      %1266 = vmatmul.mubr.bf16.gmra.mrb[0].mxu0 %v1231
      %v1267 = vpop.f32.mrb[0].mxu0
      %v1268 = vadd.f32 0.0, %v1267
      %v1269 = vpop.f32.mrb[0].mxu0
      %v1270 = vadd.f32 0.0, %v1269
      %v1271 = vpop.f32.mrb[0].mxu0
      %v1272 = vpop.f32.mrb[0].mxu0
      %1273 = vdwg.mxu0
      %v1274 = vadd.f32 %v1228, %v1268
      %v1275 = vadd.f32 %v1229, %v1270
      %1276 = vst [vmem:[#allocation2] sm:$0xff] %v1274
      %1277 = vst [vmem:[#allocation2 + $0x8] sm:$0xff] %v1275
      %s1278 = scalar_lea.vmem %s481, 8
      %v1279 = vld [vmem:[%s1278] sm:$0xff]
      %v1281 = vcombine.high %v1279, %v1279
      %v1282 = vsel %vm905, %v1279, 0
      %v1284 = vsel %vm905, %v1281, 0
      %1286 = vmatprep.subr.mxu0 %v1284
      %1287 = vmatpush1.msra.mxu0 %v1282
      %1288 = vmatprep.subr.mxu0 0.0
      %1289 = vmatpush1.msra.mxu0 0.0
      %1290 = vmatprep.subr.mxu0 0.0
      %1291 = vmatpush1.msra.mxu0 0.0
      %1292 = vmatprep.subr.mxu0 0.0
      %1293 = vmatpush1.msra.mxu0 0.0
      %1294 = vmatprep.subr.mxu0 0.0
      %1295 = vmatpush1.msra.mxu0 0.0
      %1296 = vmatprep.subr.mxu0 0.0
      %1297 = vmatpush1.msra.mxu0 0.0
      %1298 = vmatprep.subr.mxu0 0.0
      %1299 = vmatpush1.msra.mxu0 0.0
      %1300 = vmatprep.subr.mxu0 0.0
      %1301 = vmatpush1.msra.mxu0 0.0
      %1302 = vmatprep.subr.mxu0 0.0
      %1303 = vmatpush1.msra.mxu0 0.0
      %1304 = vmatprep.subr.mxu0 0.0
      %1305 = vmatpush1.msra.mxu0 0.0
      %1306 = vmatprep.subr.mxu0 0.0
      %1307 = vmatpush1.msra.mxu0 0.0
      %1308 = vmatprep.subr.mxu0 0.0
      %1309 = vmatpush1.msra.mxu0 0.0
      %1310 = vmatprep.subr.mxu0 0.0
      %1311 = vmatpush1.msra.mxu0 0.0
      %1312 = vmatprep.subr.mxu0 0.0
      %1313 = vmatpush1.msra.mxu0 0.0
      %1314 = vmatprep.subr.mxu0 0.0
      %1315 = vmatpush1.msra.mxu0 0.0
      %1316 = vmatprep.subr.mxu0 0.0
      %1317 = vmatpush1.msra.mxu0 0.0
      %1318 = vmatprep.subr.mxu0 0.0
      %1319 = vmatpush1.msra.mxu0 0.0
      %1320 = vmatprep.subr.mxu0 0.0
      %1321 = vmatpush1.msra.mxu0 0.0
      %1322 = vmatprep.subr.mxu0 0.0
      %1323 = vmatpush1.msra.mxu0 0.0
      %1324 = vmatprep.subr.mxu0 0.0
      %1325 = vmatpush1.msra.mxu0 0.0
      %1326 = vmatprep.subr.mxu0 0.0
      %1327 = vmatpush1.msra.mxu0 0.0
      %1328 = vmatprep.subr.mxu0 0.0
      %1329 = vmatpush1.msra.mxu0 0.0
      %1330 = vmatprep.subr.mxu0 0.0
      %1331 = vmatpush1.msra.mxu0 0.0
      %1332 = vmatprep.subr.mxu0 0.0
      %1333 = vmatpush1.msra.mxu0 0.0
      %1334 = vmatprep.subr.mxu0 0.0
      %1335 = vmatpush1.msra.mxu0 0.0
      %1336 = vmatprep.subr.mxu0 0.0
      %1337 = vmatpush1.msra.mxu0 0.0
      %1338 = vmatprep.subr.mxu0 0.0
      %1339 = vmatpush1.msra.mxu0 0.0
      %1340 = vmatprep.subr.mxu0 0.0
      %1341 = vmatpush1.msra.mxu0 0.0
      %1342 = vmatprep.subr.mxu0 0.0
      %1343 = vmatpush1.msra.mxu0 0.0
      %1344 = vmatprep.subr.mxu0 0.0
      %1345 = vmatpush1.msra.mxu0 0.0
      %1346 = vmatprep.subr.mxu0 0.0
      %1347 = vmatpush1.msra.mxu0 0.0
      %1348 = vmatprep.subr.mxu0 0.0
      %1349 = vmatpush1.msra.mxu0 0.0
      %1350 = vmatprep.mubr.f32.mxu0 0.0
      %1351 = vmatmul.mubr.f32.gmra.mrb[0].mxu0 %v903
      %v1352 = vpop.f32.mrb[0].mxu0
      %v1353 = vadd.f32 %v897, %v1352
      %v1354 = vpop.f32.mrb[0].mxu0
      %v1355 = vadd.f32 %v897, %v1354
      %1356 = vdwg.mxu0
      %v1357 = vmax.f32 %v1353, 0.0
      %v1358 = vmax.f32 %v1355, 0.0
      %1359 = vrot.lane.b32.xlu0 %v1357, 17
      %v1360 = vpop.permute.xlu0 %1359
      %1361 = vrot.lane.b32.xlu0 %v1358, 17
      %v1362 = vpop.permute.xlu0 %1361
      %v1363 = vsel %vm989, %v1360, %v1362
      %v1364 = vsel %vm989, %v1362, %v1360
      %v1365 = vld [vmem:[%s3] sm:$0x3]
      %v1367 = vlaneseq
      %v1368 = vshrl.u32 %v1367, 7
      %v1369 = vsub.s32 0, %v1368
      %v1370 = vrot.slane %v1365, %v1369
      %v1371 = vlaneseq
      %v1372 = vshrl.u32 %v1371, 7
      %v1373 = vsub.s32 1, %v1372
      %v1374 = vrot.slane %v1365, %v1373
      %v1377 = vmul.f32 %v1364, %v1370
      %v1378 = vmul.f32 %v1363, %v1374
      %1379 = vrot.lane.b32.xlu0 %v1357, 16
      %v1380 = vpop.permute.xlu0 %1379
      %1381 = vrot.lane.b32.xlu0 %v1358, 16
      %v1382 = vpop.permute.xlu0 %1381
      %v1383 = vsel %vm1010, %v1380, %v1382
      %v1384 = vsel %vm1010, %v1382, %v1380
      %v1385 = vld [vmem:[%s1013] sm:$0x3]
      %v1387 = vlaneseq
      %v1388 = vshrl.u32 %v1387, 7
      %v1389 = vsub.s32 0, %v1388
      %v1390 = vrot.slane %v1385, %v1389
      %v1391 = vlaneseq
      %v1392 = vshrl.u32 %v1391, 7
      %v1393 = vsub.s32 1, %v1392
      %v1394 = vrot.slane %v1385, %v1393
      %v1397 = vmul.f32 %v1384, %v1390
      %v1398 = vmul.f32 %v1383, %v1394
      %1399 = vrot.lane.b32.xlu0 %v1357, 15
      %v1400 = vpop.permute.xlu0 %1399
      %1401 = vrot.lane.b32.xlu0 %v1358, 15
      %v1402 = vpop.permute.xlu0 %1401
      %v1403 = vsel %vm1032, %v1400, %v1402
      %v1404 = vsel %vm1032, %v1402, %v1400
      %v1405 = vld [vmem:[%s1035] sm:$0x3]
      %v1407 = vlaneseq
      %v1408 = vshrl.u32 %v1407, 7
      %v1409 = vsub.s32 0, %v1408
      %v1410 = vrot.slane %v1405, %v1409
      %v1411 = vlaneseq
      %v1412 = vshrl.u32 %v1411, 7
      %v1413 = vsub.s32 1, %v1412
      %v1414 = vrot.slane %v1405, %v1413
      %v1417 = vmul.f32 %v1404, %v1410
      %v1418 = vmul.f32 %v1403, %v1414
      %1419 = vrot.lane.b32.xlu0 %v1357, 1
      %v1420 = vpop.permute.xlu0 %1419
      %1421 = vrot.lane.b32.xlu0 %v1358, 1
      %v1422 = vpop.permute.xlu0 %1421
      %v1423 = vsel %vm1054, %v1420, %v1422
      %v1424 = vsel %vm1054, %v1422, %v1420
      %v1425 = vld [vmem:[%s1057] sm:$0x3]
      %v1427 = vlaneseq
      %v1428 = vshrl.u32 %v1427, 7
      %v1429 = vsub.s32 0, %v1428
      %v1430 = vrot.slane %v1425, %v1429
      %v1431 = vlaneseq
      %v1432 = vshrl.u32 %v1431, 7
      %v1433 = vsub.s32 1, %v1432
      %v1434 = vrot.slane %v1425, %v1433
      %v1437 = vmul.f32 %v1424, %v1430
      %v1438 = vmul.f32 %v1423, %v1434
      %1439 = vrot.lane.b32.xlu0 %v1357, 127
      %v1440 = vpop.permute.xlu0 %1439
      %1441 = vrot.lane.b32.xlu0 %v1358, 127
      %v1442 = vpop.permute.xlu0 %1441
      %v1443 = vsel %vm1076, %v1440, %v1442
      %v1444 = vsel %vm1076, %v1442, %v1440
      %v1445 = vld [vmem:[%s1079] sm:$0x3]
      %v1447 = vlaneseq
      %v1448 = vshrl.u32 %v1447, 7
      %v1449 = vsub.s32 0, %v1448
      %v1450 = vrot.slane %v1445, %v1449
      %v1451 = vlaneseq
      %v1452 = vshrl.u32 %v1451, 7
      %v1453 = vsub.s32 1, %v1452
      %v1454 = vrot.slane %v1445, %v1453
      %v1457 = vmul.f32 %v1443, %v1450
      %v1458 = vmul.f32 %v1444, %v1454
      %1459 = vrot.lane.b32.xlu0 %v1357, 113
      %v1460 = vpop.permute.xlu0 %1459
      %1461 = vrot.lane.b32.xlu0 %v1358, 113
      %v1462 = vpop.permute.xlu0 %1461
      %v1463 = vsel %vm1098, %v1460, %v1462
      %v1464 = vsel %vm1098, %v1462, %v1460
      %v1465 = vld [vmem:[%s1101] sm:$0x3]
      %v1467 = vlaneseq
      %v1468 = vshrl.u32 %v1467, 7
      %v1469 = vsub.s32 0, %v1468
      %v1470 = vrot.slane %v1465, %v1469
      %v1471 = vlaneseq
      %v1472 = vshrl.u32 %v1471, 7
      %v1473 = vsub.s32 1, %v1472
      %v1474 = vrot.slane %v1465, %v1473
      %v1477 = vmul.f32 %v1463, %v1470
      %v1478 = vmul.f32 %v1464, %v1474
      %1479 = vrot.lane.b32.xlu0 %v1357, 112
      %v1480 = vpop.permute.xlu0 %1479
      %1481 = vrot.lane.b32.xlu0 %v1358, 112
      %v1482 = vpop.permute.xlu0 %1481
      %v1483 = vsel %vm1120, %v1480, %v1482
      %v1484 = vsel %vm1120, %v1482, %v1480
      %v1485 = vld [vmem:[%s1123] sm:$0x3]
      %v1487 = vlaneseq
      %v1488 = vshrl.u32 %v1487, 7
      %v1489 = vsub.s32 0, %v1488
      %v1490 = vrot.slane %v1485, %v1489
      %v1491 = vlaneseq
      %v1492 = vshrl.u32 %v1491, 7
      %v1493 = vsub.s32 1, %v1492
      %v1494 = vrot.slane %v1485, %v1493
      %v1497 = vmul.f32 %v1483, %v1490
      %v1498 = vmul.f32 %v1484, %v1494
      %1499 = vrot.lane.b32.xlu0 %v1357, 111
      %v1500 = vpop.permute.xlu0 %1499
      %1501 = vrot.lane.b32.xlu0 %v1358, 111
      %v1502 = vpop.permute.xlu0 %1501
      %v1503 = vsel %vm1142, %v1500, %v1502
      %v1504 = vsel %vm1142, %v1502, %v1500
      %v1505 = vld [vmem:[%s1145] sm:$0x3]
      %v1507 = vlaneseq
      %v1508 = vshrl.u32 %v1507, 7
      %v1509 = vsub.s32 0, %v1508
      %v1510 = vrot.slane %v1505, %v1509
      %v1511 = vlaneseq
      %v1512 = vshrl.u32 %v1511, 7
      %v1513 = vsub.s32 1, %v1512
      %v1514 = vrot.slane %v1505, %v1513
      %v1517 = vmul.f32 %v1503, %v1510
      %v1518 = vmul.f32 %v1504, %v1514
      %v1519 = vpack.c.bf16 %v1397, %v1377
      %v1520 = vpack.c.bf16 %v1398, %v1378
      %v1521 = vpack.c.bf16 %v1437, %v1417
      %v1522 = vpack.c.bf16 %v1438, %v1418
      %v1523 = vpack.c.bf16 %v1457, %v1357
      %v1524 = vpack.c.bf16 %v1458, %v1358
      %v1525 = vpack.c.bf16 %v1497, %v1477
      %v1526 = vpack.c.bf16 %v1498, %v1478
      %v1527 = vpack.c.bf16 %v1517, %v1517
      %v1528 = vpack.c.bf16 %v1518, %v1518
      %s1529 = scalar_lea.vmem [#allocation2], 32
      %v1530 = vld [vmem:[%s1529] sm:$0xff]
      %v1531 = vld [vmem:[%s1529 + $0x8] sm:$0xff]
      %v1533 = vsel %vm905, %v1527, 0
      %v1536 = vsel %vm905, %v1528, 0
      %1538 = vmatprep.subr.bf16.mxu0 %v1520
      %1539 = vmatpush1.bf16.msra.mxu0 %v1519
      %1540 = vmatprep.subr.bf16.mxu0 %v1522
      %1541 = vmatpush1.bf16.msra.mxu0 %v1521
      %1542 = vmatprep.subr.bf16.mxu0 %v1524
      %1543 = vmatpush1.bf16.msra.mxu0 %v1523
      %1544 = vmatprep.subr.bf16.mxu0 %v1526
      %1545 = vmatpush1.bf16.msra.mxu0 %v1525
      %1546 = vmatprep.subr.bf16.mxu0 %v1536
      %1547 = vmatpush1.bf16.msra.mxu0 %v1533
      %1548 = vmatprep.subr.bf16.mxu0 0
      %1549 = vmatpush1.bf16.msra.mxu0 0
      %1550 = vmatprep.subr.bf16.mxu0 0
      %1551 = vmatpush1.bf16.msra.mxu0 0
      %1552 = vmatprep.subr.bf16.mxu0 0
      %1553 = vmatpush1.bf16.msra.mxu0 0
      %1554 = vmatprep.subr.bf16.mxu0 0
      %1555 = vmatpush1.bf16.msra.mxu0 0
      %1556 = vmatprep.subr.bf16.mxu0 0
      %1557 = vmatpush1.bf16.msra.mxu0 0
      %1558 = vmatprep.subr.bf16.mxu0 0
      %1559 = vmatpush1.bf16.msra.mxu0 0
      %1560 = vmatprep.subr.bf16.mxu0 0
      %1561 = vmatpush1.bf16.msra.mxu0 0
      %1562 = vmatprep.subr.bf16.mxu0 0
      %1563 = vmatpush1.bf16.msra.mxu0 0
      %1564 = vmatprep.subr.bf16.mxu0 0
      %1565 = vmatpush1.bf16.msra.mxu0 0
      %1566 = vmatprep.subr.bf16.mxu0 0
      %1567 = vmatpush1.bf16.msra.mxu0 0
      %1568 = vmatprep.subr.bf16.mxu0 0
      %1569 = vmatpush1.bf16.msra.mxu0 0
      %1570 = vmatprep.mubr.bf16.mxu0 0
      %1571 = vmatmul.mubr.bf16.gmra.mrb[0].mxu0 %v1175
      %v1572 = vpop.f32.mrb[0].mxu0
      %v1573 = vadd.f32 0.0, %v1572
      %v1574 = vpop.f32.mrb[0].mxu0
      %v1575 = vadd.f32 0.0, %v1574
      %v1576 = vpop.f32.mrb[0].mxu0
      %v1577 = vpop.f32.mrb[0].mxu0
      %1578 = vdwg.mxu0
      %v1579 = vadd.f32 %v1530, %v1573
      %v1580 = vadd.f32 %v1531, %v1575
      %1581 = vst [vmem:[%s1529] sm:$0xff] %v1579
      %1582 = vst [vmem:[%s1529 + $0x8] sm:$0xff] %v1580
      %v1583 = vld [vmem:[%s1170] sm:$0xff]
      %v1584 = vld [vmem:[%s1170 + $0x8] sm:$0xff]
      %1585 = vmatprep.subr.bf16.mxu0 %v1520
      %1586 = vmatpush1.bf16.msra.mxu0 %v1519
      %1587 = vmatprep.subr.bf16.mxu0 %v1522
      %1588 = vmatpush1.bf16.msra.mxu0 %v1521
      %1589 = vmatprep.subr.bf16.mxu0 %v1524
      %1590 = vmatpush1.bf16.msra.mxu0 %v1523
      %1591 = vmatprep.subr.bf16.mxu0 %v1526
      %1592 = vmatpush1.bf16.msra.mxu0 %v1525
      %1593 = vmatprep.subr.bf16.mxu0 %v1536
      %1594 = vmatpush1.bf16.msra.mxu0 %v1533
      %1595 = vmatprep.subr.bf16.mxu0 0
      %1596 = vmatpush1.bf16.msra.mxu0 0
      %1597 = vmatprep.subr.bf16.mxu0 0
      %1598 = vmatpush1.bf16.msra.mxu0 0
      %1599 = vmatprep.subr.bf16.mxu0 0
      %1600 = vmatpush1.bf16.msra.mxu0 0
      %1601 = vmatprep.subr.bf16.mxu0 0
      %1602 = vmatpush1.bf16.msra.mxu0 0
      %1603 = vmatprep.subr.bf16.mxu0 0
      %1604 = vmatpush1.bf16.msra.mxu0 0
      %1605 = vmatprep.subr.bf16.mxu0 0
      %1606 = vmatpush1.bf16.msra.mxu0 0
      %1607 = vmatprep.subr.bf16.mxu0 0
      %1608 = vmatpush1.bf16.msra.mxu0 0
      %1609 = vmatprep.subr.bf16.mxu0 0
      %1610 = vmatpush1.bf16.msra.mxu0 0
      %1611 = vmatprep.subr.bf16.mxu0 0
      %1612 = vmatpush1.bf16.msra.mxu0 0
      %1613 = vmatprep.subr.bf16.mxu0 0
      %1614 = vmatpush1.bf16.msra.mxu0 0
      %1615 = vmatprep.subr.bf16.mxu0 0
      %1616 = vmatpush1.bf16.msra.mxu0 0
      %1617 = vmatprep.mubr.bf16.mxu0 0
      %1618 = vmatmul.mubr.bf16.gmra.mrb[0].mxu0 %v1231
      %v1619 = vpop.f32.mrb[0].mxu0
      %v1620 = vadd.f32 0.0, %v1619
      %v1621 = vpop.f32.mrb[0].mxu0
      %v1622 = vadd.f32 0.0, %v1621
      %v1623 = vpop.f32.mrb[0].mxu0
      %v1624 = vpop.f32.mrb[0].mxu0
      %1625 = vdwg.mxu0
      %v1626 = vadd.f32 %v1583, %v1620
      %v1627 = vadd.f32 %v1584, %v1622
      %1628 = vst [vmem:[%s1170] sm:$0xff] %v1626
      %1629 = vst [vmem:[%s1170 + $0x8] sm:$0xff] %v1627
      %v1630 = vld [vmem:[#allocation2] sm:$0xff]
      %v1631 = vld [vmem:[#allocation2 + $0x8] sm:$0xff]
      %v1633 = vsel %vm1173, %v538, 0
      %1635 = vmatprep.subr.bf16.mxu0 %v1520
      %1636 = vmatpush1.bf16.msra.mxu0 %v1519
      %1637 = vmatprep.subr.bf16.mxu0 %v1522
      %1638 = vmatpush1.bf16.msra.mxu0 %v1521
      %1639 = vmatprep.subr.bf16.mxu0 %v1524
      %1640 = vmatpush1.bf16.msra.mxu0 %v1523
      %1641 = vmatprep.subr.bf16.mxu0 %v1526
      %1642 = vmatpush1.bf16.msra.mxu0 %v1525
      %1643 = vmatprep.subr.bf16.mxu0 %v1536
      %1644 = vmatpush1.bf16.msra.mxu0 %v1533
      %1645 = vmatprep.subr.bf16.mxu0 0
      %1646 = vmatpush1.bf16.msra.mxu0 0
      %1647 = vmatprep.subr.bf16.mxu0 0
      %1648 = vmatpush1.bf16.msra.mxu0 0
      %1649 = vmatprep.subr.bf16.mxu0 0
      %1650 = vmatpush1.bf16.msra.mxu0 0
      %1651 = vmatprep.subr.bf16.mxu0 0
      %1652 = vmatpush1.bf16.msra.mxu0 0
      %1653 = vmatprep.subr.bf16.mxu0 0
      %1654 = vmatpush1.bf16.msra.mxu0 0
      %1655 = vmatprep.subr.bf16.mxu0 0
      %1656 = vmatpush1.bf16.msra.mxu0 0
      %1657 = vmatprep.subr.bf16.mxu0 0
      %1658 = vmatpush1.bf16.msra.mxu0 0
      %1659 = vmatprep.subr.bf16.mxu0 0
      %1660 = vmatpush1.bf16.msra.mxu0 0
      %1661 = vmatprep.subr.bf16.mxu0 0
      %1662 = vmatpush1.bf16.msra.mxu0 0
      %1663 = vmatprep.subr.bf16.mxu0 0
      %1664 = vmatpush1.bf16.msra.mxu0 0
      %1665 = vmatprep.subr.bf16.mxu0 0
      %1666 = vmatpush1.bf16.msra.mxu0 0
      %1667 = vmatprep.mubr.bf16.mxu0 0
      %1668 = vmatmul.mubr.bf16.gmra.mrb[0].mxu0 %v1633
      %v1669 = vpop.f32.mrb[0].mxu0
      %v1670 = vadd.f32 0.0, %v1669
      %v1671 = vpop.f32.mrb[0].mxu0
      %v1672 = vadd.f32 0.0, %v1671
      %v1673 = vpop.f32.mrb[0].mxu0
      %v1674 = vpop.f32.mrb[0].mxu0
      %1675 = vdwg.mxu0
      %v1676 = vadd.f32 %v1630, %v1670
      %v1677 = vadd.f32 %v1631, %v1672
      %1678 = vst [vmem:[#allocation2] sm:$0xff] %v1676
      %1679 = vst [vmem:[#allocation2 + $0x8] sm:$0xff] %v1677
      %s1680 = scalar_lea.vmem %s481, 16
      %v1681 = vld [vmem:[%s1680] sm:$0xff]
      %v1683 = vcombine.high %v1681, %v1681
      %v1684 = vsel %vm905, %v1681, 0
      %v1686 = vsel %vm905, %v1683, 0
      %1688 = vmatprep.subr.mxu0 %v1686
      %1689 = vmatpush1.msra.mxu0 %v1684
      %1690 = vmatprep.subr.mxu0 0.0
      %1691 = vmatpush1.msra.mxu0 0.0
      %1692 = vmatprep.subr.mxu0 0.0
      %1693 = vmatpush1.msra.mxu0 0.0
      %1694 = vmatprep.subr.mxu0 0.0
      %1695 = vmatpush1.msra.mxu0 0.0
      %1696 = vmatprep.subr.mxu0 0.0
      %1697 = vmatpush1.msra.mxu0 0.0
      %1698 = vmatprep.subr.mxu0 0.0
      %1699 = vmatpush1.msra.mxu0 0.0
      %1700 = vmatprep.subr.mxu0 0.0
      %1701 = vmatpush1.msra.mxu0 0.0
      %1702 = vmatprep.subr.mxu0 0.0
      %1703 = vmatpush1.msra.mxu0 0.0
      %1704 = vmatprep.subr.mxu0 0.0
      %1705 = vmatpush1.msra.mxu0 0.0
      %1706 = vmatprep.subr.mxu0 0.0
      %1707 = vmatpush1.msra.mxu0 0.0
      %1708 = vmatprep.subr.mxu0 0.0
      %1709 = vmatpush1.msra.mxu0 0.0
      %1710 = vmatprep.subr.mxu0 0.0
      %1711 = vmatpush1.msra.mxu0 0.0
      %1712 = vmatprep.subr.mxu0 0.0
      %1713 = vmatpush1.msra.mxu0 0.0
      %1714 = vmatprep.subr.mxu0 0.0
      %1715 = vmatpush1.msra.mxu0 0.0
      %1716 = vmatprep.subr.mxu0 0.0
      %1717 = vmatpush1.msra.mxu0 0.0
      %1718 = vmatprep.subr.mxu0 0.0
      %1719 = vmatpush1.msra.mxu0 0.0
      %1720 = vmatprep.subr.mxu0 0.0
      %1721 = vmatpush1.msra.mxu0 0.0
      %1722 = vmatprep.subr.mxu0 0.0
      %1723 = vmatpush1.msra.mxu0 0.0
      %1724 = vmatprep.subr.mxu0 0.0
      %1725 = vmatpush1.msra.mxu0 0.0
      %1726 = vmatprep.subr.mxu0 0.0
      %1727 = vmatpush1.msra.mxu0 0.0
      %1728 = vmatprep.subr.mxu0 0.0
      %1729 = vmatpush1.msra.mxu0 0.0
      %1730 = vmatprep.subr.mxu0 0.0
      %1731 = vmatpush1.msra.mxu0 0.0
      %1732 = vmatprep.subr.mxu0 0.0
      %1733 = vmatpush1.msra.mxu0 0.0
      %1734 = vmatprep.subr.mxu0 0.0
      %1735 = vmatpush1.msra.mxu0 0.0
      %1736 = vmatprep.subr.mxu0 0.0
      %1737 = vmatpush1.msra.mxu0 0.0
      %1738 = vmatprep.subr.mxu0 0.0
      %1739 = vmatpush1.msra.mxu0 0.0
      %1740 = vmatprep.subr.mxu0 0.0
      %1741 = vmatpush1.msra.mxu0 0.0
      %1742 = vmatprep.subr.mxu0 0.0
      %1743 = vmatpush1.msra.mxu0 0.0
      %1744 = vmatprep.subr.mxu0 0.0
      %1745 = vmatpush1.msra.mxu0 0.0
      %1746 = vmatprep.subr.mxu0 0.0
      %1747 = vmatpush1.msra.mxu0 0.0
      %1748 = vmatprep.subr.mxu0 0.0
      %1749 = vmatpush1.msra.mxu0 0.0
      %1750 = vmatprep.subr.mxu0 0.0
      %1751 = vmatpush1.msra.mxu0 0.0
      %1752 = vmatprep.mubr.f32.mxu0 0.0
      %1753 = vmatmul.mubr.f32.gmra.mrb[0].mxu0 %v903
      %v1754 = vpop.f32.mrb[0].mxu0
      %v1755 = vadd.f32 %v897, %v1754
      %v1756 = vpop.f32.mrb[0].mxu0
      %v1757 = vadd.f32 %v897, %v1756
      %1758 = vdwg.mxu0
      %v1759 = vmax.f32 %v1755, 0.0
      %v1760 = vmax.f32 %v1757, 0.0
      %1761 = vrot.lane.b32.xlu0 %v1759, 17
      %v1762 = vpop.permute.xlu0 %1761
      %1763 = vrot.lane.b32.xlu0 %v1760, 17
      %v1764 = vpop.permute.xlu0 %1763
      %v1765 = vsel %vm989, %v1762, %v1764
      %v1766 = vsel %vm989, %v1764, %v1762
      %v1767 = vld [vmem:[%s3] sm:$0x3]
      %v1769 = vlaneseq
      %v1770 = vshrl.u32 %v1769, 7
      %v1771 = vsub.s32 0, %v1770
      %v1772 = vrot.slane %v1767, %v1771
      %v1773 = vlaneseq
      %v1774 = vshrl.u32 %v1773, 7
      %v1775 = vsub.s32 1, %v1774
      %v1776 = vrot.slane %v1767, %v1775
      %v1779 = vmul.f32 %v1766, %v1772
      %v1780 = vmul.f32 %v1765, %v1776
      %1781 = vrot.lane.b32.xlu0 %v1759, 16
      %v1782 = vpop.permute.xlu0 %1781
      %1783 = vrot.lane.b32.xlu0 %v1760, 16
      %v1784 = vpop.permute.xlu0 %1783
      %v1785 = vsel %vm1010, %v1782, %v1784
      %v1786 = vsel %vm1010, %v1784, %v1782
      %v1787 = vld [vmem:[%s1013] sm:$0x3]
      %v1789 = vlaneseq
      %v1790 = vshrl.u32 %v1789, 7
      %v1791 = vsub.s32 0, %v1790
      %v1792 = vrot.slane %v1787, %v1791
      %v1793 = vlaneseq
      %v1794 = vshrl.u32 %v1793, 7
      %v1795 = vsub.s32 1, %v1794
      %v1796 = vrot.slane %v1787, %v1795
      %v1799 = vmul.f32 %v1786, %v1792
      %v1800 = vmul.f32 %v1785, %v1796
      %1801 = vrot.lane.b32.xlu0 %v1759, 15
      %v1802 = vpop.permute.xlu0 %1801
      %1803 = vrot.lane.b32.xlu0 %v1760, 15
      %v1804 = vpop.permute.xlu0 %1803
      %v1805 = vsel %vm1032, %v1802, %v1804
      %v1806 = vsel %vm1032, %v1804, %v1802
      %v1807 = vld [vmem:[%s1035] sm:$0x3]
      %v1809 = vlaneseq
      %v1810 = vshrl.u32 %v1809, 7
      %v1811 = vsub.s32 0, %v1810
      %v1812 = vrot.slane %v1807, %v1811
      %v1813 = vlaneseq
      %v1814 = vshrl.u32 %v1813, 7
      %v1815 = vsub.s32 1, %v1814
      %v1816 = vrot.slane %v1807, %v1815
      %v1819 = vmul.f32 %v1806, %v1812
      %v1820 = vmul.f32 %v1805, %v1816
      %1821 = vrot.lane.b32.xlu0 %v1759, 1
      %v1822 = vpop.permute.xlu0 %1821
      %1823 = vrot.lane.b32.xlu0 %v1760, 1
      %v1824 = vpop.permute.xlu0 %1823
      %v1825 = vsel %vm1054, %v1822, %v1824
      %v1826 = vsel %vm1054, %v1824, %v1822
      %v1827 = vld [vmem:[%s1057] sm:$0x3]
      %v1829 = vlaneseq
      %v1830 = vshrl.u32 %v1829, 7
      %v1831 = vsub.s32 0, %v1830
      %v1832 = vrot.slane %v1827, %v1831
      %v1833 = vlaneseq
      %v1834 = vshrl.u32 %v1833, 7
      %v1835 = vsub.s32 1, %v1834
      %v1836 = vrot.slane %v1827, %v1835
      %v1839 = vmul.f32 %v1826, %v1832
      %v1840 = vmul.f32 %v1825, %v1836
      %1841 = vrot.lane.b32.xlu0 %v1759, 127
      %v1842 = vpop.permute.xlu0 %1841
      %1843 = vrot.lane.b32.xlu0 %v1760, 127
      %v1844 = vpop.permute.xlu0 %1843
      %v1845 = vsel %vm1076, %v1842, %v1844
      %v1846 = vsel %vm1076, %v1844, %v1842
      %v1847 = vld [vmem:[%s1079] sm:$0x3]
      %v1849 = vlaneseq
      %v1850 = vshrl.u32 %v1849, 7
      %v1851 = vsub.s32 0, %v1850
      %v1852 = vrot.slane %v1847, %v1851
      %v1853 = vlaneseq
      %v1854 = vshrl.u32 %v1853, 7
      %v1855 = vsub.s32 1, %v1854
      %v1856 = vrot.slane %v1847, %v1855
      %v1859 = vmul.f32 %v1845, %v1852
      %v1860 = vmul.f32 %v1846, %v1856
      %1861 = vrot.lane.b32.xlu0 %v1759, 113
      %v1862 = vpop.permute.xlu0 %1861
      %1863 = vrot.lane.b32.xlu0 %v1760, 113
      %v1864 = vpop.permute.xlu0 %1863
      %v1865 = vsel %vm1098, %v1862, %v1864
      %v1866 = vsel %vm1098, %v1864, %v1862
      %v1867 = vld [vmem:[%s1101] sm:$0x3]
      %v1869 = vlaneseq
      %v1870 = vshrl.u32 %v1869, 7
      %v1871 = vsub.s32 0, %v1870
      %v1872 = vrot.slane %v1867, %v1871
      %v1873 = vlaneseq
      %v1874 = vshrl.u32 %v1873, 7
      %v1875 = vsub.s32 1, %v1874
      %v1876 = vrot.slane %v1867, %v1875
      %v1879 = vmul.f32 %v1865, %v1872
      %v1880 = vmul.f32 %v1866, %v1876
      %1881 = vrot.lane.b32.xlu0 %v1759, 112
      %v1882 = vpop.permute.xlu0 %1881
      %1883 = vrot.lane.b32.xlu0 %v1760, 112
      %v1884 = vpop.permute.xlu0 %1883
      %v1885 = vsel %vm1120, %v1882, %v1884
      %v1886 = vsel %vm1120, %v1884, %v1882
      %v1887 = vld [vmem:[%s1123] sm:$0x3]
      %v1889 = vlaneseq
      %v1890 = vshrl.u32 %v1889, 7
      %v1891 = vsub.s32 0, %v1890
      %v1892 = vrot.slane %v1887, %v1891
      %v1893 = vlaneseq
      %v1894 = vshrl.u32 %v1893, 7
      %v1895 = vsub.s32 1, %v1894
      %v1896 = vrot.slane %v1887, %v1895
      %v1899 = vmul.f32 %v1885, %v1892
      %v1900 = vmul.f32 %v1886, %v1896
      %1901 = vrot.lane.b32.xlu0 %v1759, 111
      %v1902 = vpop.permute.xlu0 %1901
      %1903 = vrot.lane.b32.xlu0 %v1760, 111
      %v1904 = vpop.permute.xlu0 %1903
      %v1905 = vsel %vm1142, %v1902, %v1904
      %v1906 = vsel %vm1142, %v1904, %v1902
      %v1907 = vld [vmem:[%s1145] sm:$0x3]
      %v1909 = vlaneseq
      %v1910 = vshrl.u32 %v1909, 7
      %v1911 = vsub.s32 0, %v1910
      %v1912 = vrot.slane %v1907, %v1911
      %v1913 = vlaneseq
      %v1914 = vshrl.u32 %v1913, 7
      %v1915 = vsub.s32 1, %v1914
      %v1916 = vrot.slane %v1907, %v1915
      %v1919 = vmul.f32 %v1905, %v1912
      %v1920 = vmul.f32 %v1906, %v1916
      %v1921 = vpack.c.bf16 %v1799, %v1779
      %v1922 = vpack.c.bf16 %v1800, %v1780
      %v1923 = vpack.c.bf16 %v1839, %v1819
      %v1924 = vpack.c.bf16 %v1840, %v1820
      %v1925 = vpack.c.bf16 %v1859, %v1759
      %v1926 = vpack.c.bf16 %v1860, %v1760
      %v1927 = vpack.c.bf16 %v1899, %v1879
      %v1928 = vpack.c.bf16 %v1900, %v1880
      %v1929 = vpack.c.bf16 %v1919, %v1919
      %v1930 = vpack.c.bf16 %v1920, %v1920
      %s1931 = scalar_lea.vmem [#allocation2], 48
      %v1932 = vld [vmem:[%s1931] sm:$0xff]
      %v1933 = vld [vmem:[%s1931 + $0x8] sm:$0xff]
      %v1935 = vsel %vm905, %v1929, 0
      %v1938 = vsel %vm905, %v1930, 0
      %1940 = vmatprep.subr.bf16.mxu0 %v1922
      %1941 = vmatpush1.bf16.msra.mxu0 %v1921
      %1942 = vmatprep.subr.bf16.mxu0 %v1924
      %1943 = vmatpush1.bf16.msra.mxu0 %v1923
      %1944 = vmatprep.subr.bf16.mxu0 %v1926
      %1945 = vmatpush1.bf16.msra.mxu0 %v1925
      %1946 = vmatprep.subr.bf16.mxu0 %v1928
      %1947 = vmatpush1.bf16.msra.mxu0 %v1927
      %1948 = vmatprep.subr.bf16.mxu0 %v1938
      %1949 = vmatpush1.bf16.msra.mxu0 %v1935
      %1950 = vmatprep.subr.bf16.mxu0 0
      %1951 = vmatpush1.bf16.msra.mxu0 0
      %1952 = vmatprep.subr.bf16.mxu0 0
      %1953 = vmatpush1.bf16.msra.mxu0 0
      %1954 = vmatprep.subr.bf16.mxu0 0
      %1955 = vmatpush1.bf16.msra.mxu0 0
      %1956 = vmatprep.subr.bf16.mxu0 0
      %1957 = vmatpush1.bf16.msra.mxu0 0
      %1958 = vmatprep.subr.bf16.mxu0 0
      %1959 = vmatpush1.bf16.msra.mxu0 0
      %1960 = vmatprep.subr.bf16.mxu0 0
      %1961 = vmatpush1.bf16.msra.mxu0 0
      %1962 = vmatprep.subr.bf16.mxu0 0
      %1963 = vmatpush1.bf16.msra.mxu0 0
      %1964 = vmatprep.subr.bf16.mxu0 0
      %1965 = vmatpush1.bf16.msra.mxu0 0
      %1966 = vmatprep.subr.bf16.mxu0 0
      %1967 = vmatpush1.bf16.msra.mxu0 0
      %1968 = vmatprep.subr.bf16.mxu0 0
      %1969 = vmatpush1.bf16.msra.mxu0 0
      %1970 = vmatprep.subr.bf16.mxu0 0
      %1971 = vmatpush1.bf16.msra.mxu0 0
      %1972 = vmatprep.mubr.bf16.mxu0 0
      %1973 = vmatmul.mubr.bf16.gmra.mrb[0].mxu0 %v1175
      %v1974 = vpop.f32.mrb[0].mxu0
      %v1975 = vadd.f32 0.0, %v1974
      %v1976 = vpop.f32.mrb[0].mxu0
      %v1977 = vadd.f32 0.0, %v1976
      %v1978 = vpop.f32.mrb[0].mxu0
      %v1979 = vpop.f32.mrb[0].mxu0
      %1980 = vdwg.mxu0
      %v1981 = vadd.f32 %v1932, %v1975
      %v1982 = vadd.f32 %v1933, %v1977
      %1983 = vst [vmem:[%s1931] sm:$0xff] %v1981
      %1984 = vst [vmem:[%s1931 + $0x8] sm:$0xff] %v1982
      %v1985 = vld [vmem:[%s1529] sm:$0xff]
      %v1986 = vld [vmem:[%s1529 + $0x8] sm:$0xff]
      %1987 = vmatprep.subr.bf16.mxu0 %v1922
      %1988 = vmatpush1.bf16.msra.mxu0 %v1921
      %1989 = vmatprep.subr.bf16.mxu0 %v1924
      %1990 = vmatpush1.bf16.msra.mxu0 %v1923
      %1991 = vmatprep.subr.bf16.mxu0 %v1926
      %1992 = vmatpush1.bf16.msra.mxu0 %v1925
      %1993 = vmatprep.subr.bf16.mxu0 %v1928
      %1994 = vmatpush1.bf16.msra.mxu0 %v1927
      %1995 = vmatprep.subr.bf16.mxu0 %v1938
      %1996 = vmatpush1.bf16.msra.mxu0 %v1935
      %1997 = vmatprep.subr.bf16.mxu0 0
      %1998 = vmatpush1.bf16.msra.mxu0 0
      %1999 = vmatprep.subr.bf16.mxu0 0
      %2000 = vmatpush1.bf16.msra.mxu0 0
      %2001 = vmatprep.subr.bf16.mxu0 0
      %2002 = vmatpush1.bf16.msra.mxu0 0
      %2003 = vmatprep.subr.bf16.mxu0 0
      %2004 = vmatpush1.bf16.msra.mxu0 0
      %2005 = vmatprep.subr.bf16.mxu0 0
      %2006 = vmatpush1.bf16.msra.mxu0 0
      %2007 = vmatprep.subr.bf16.mxu0 0
      %2008 = vmatpush1.bf16.msra.mxu0 0
      %2009 = vmatprep.subr.bf16.mxu0 0
      %2010 = vmatpush1.bf16.msra.mxu0 0
      %2011 = vmatprep.subr.bf16.mxu0 0
      %2012 = vmatpush1.bf16.msra.mxu0 0
      %2013 = vmatprep.subr.bf16.mxu0 0
      %2014 = vmatpush1.bf16.msra.mxu0 0
      %2015 = vmatprep.subr.bf16.mxu0 0
      %2016 = vmatpush1.bf16.msra.mxu0 0
      %2017 = vmatprep.subr.bf16.mxu0 0
      %2018 = vmatpush1.bf16.msra.mxu0 0
      %2019 = vmatprep.mubr.bf16.mxu0 0
      %2020 = vmatmul.mubr.bf16.gmra.mrb[0].mxu0 %v1231
      %v2021 = vpop.f32.mrb[0].mxu0
      %v2022 = vadd.f32 0.0, %v2021
      %v2023 = vpop.f32.mrb[0].mxu0
      %v2024 = vadd.f32 0.0, %v2023
      %v2025 = vpop.f32.mrb[0].mxu0
      %v2026 = vpop.f32.mrb[0].mxu0
      %2027 = vdwg.mxu0
      %v2028 = vadd.f32 %v1985, %v2022
      %v2029 = vadd.f32 %v1986, %v2024
      %2030 = vst [vmem:[%s1529] sm:$0xff] %v2028
      %2031 = vst [vmem:[%s1529 + $0x8] sm:$0xff] %v2029
      %v2032 = vld [vmem:[%s1170] sm:$0xff]
      %v2033 = vld [vmem:[%s1170 + $0x8] sm:$0xff]
      %2034 = vmatprep.subr.bf16.mxu0 %v1922
      %2035 = vmatpush1.bf16.msra.mxu0 %v1921
      %2036 = vmatprep.subr.bf16.mxu0 %v1924
      %2037 = vmatpush1.bf16.msra.mxu0 %v1923
      %2038 = vmatprep.subr.bf16.mxu0 %v1926
      %2039 = vmatpush1.bf16.msra.mxu0 %v1925
      %2040 = vmatprep.subr.bf16.mxu0 %v1928
      %2041 = vmatpush1.bf16.msra.mxu0 %v1927
      %2042 = vmatprep.subr.bf16.mxu0 %v1938
      %2043 = vmatpush1.bf16.msra.mxu0 %v1935
      %2044 = vmatprep.subr.bf16.mxu0 0
      %2045 = vmatpush1.bf16.msra.mxu0 0
      %2046 = vmatprep.subr.bf16.mxu0 0
      %2047 = vmatpush1.bf16.msra.mxu0 0
      %2048 = vmatprep.subr.bf16.mxu0 0
      %2049 = vmatpush1.bf16.msra.mxu0 0
      %2050 = vmatprep.subr.bf16.mxu0 0
      %2051 = vmatpush1.bf16.msra.mxu0 0
      %2052 = vmatprep.subr.bf16.mxu0 0
      %2053 = vmatpush1.bf16.msra.mxu0 0
      %2054 = vmatprep.subr.bf16.mxu0 0
      %2055 = vmatpush1.bf16.msra.mxu0 0
      %2056 = vmatprep.subr.bf16.mxu0 0
      %2057 = vmatpush1.bf16.msra.mxu0 0
      %2058 = vmatprep.subr.bf16.mxu0 0
      %2059 = vmatpush1.bf16.msra.mxu0 0
      %2060 = vmatprep.subr.bf16.mxu0 0
      %2061 = vmatpush1.bf16.msra.mxu0 0
      %2062 = vmatprep.subr.bf16.mxu0 0
      %2063 = vmatpush1.bf16.msra.mxu0 0
      %2064 = vmatprep.subr.bf16.mxu0 0
      %2065 = vmatpush1.bf16.msra.mxu0 0
      %2066 = vmatprep.mubr.bf16.mxu0 0
      %2067 = vmatmul.mubr.bf16.gmra.mrb[0].mxu0 %v1633
      %v2068 = vpop.f32.mrb[0].mxu0
      %v2069 = vadd.f32 0.0, %v2068
      %v2070 = vpop.f32.mrb[0].mxu0
      %v2071 = vadd.f32 0.0, %v2070
      %v2072 = vpop.f32.mrb[0].mxu0
      %v2073 = vpop.f32.mrb[0].mxu0
      %2074 = vdwg.mxu0
      %v2075 = vadd.f32 %v2032, %v2069
      %v2076 = vadd.f32 %v2033, %v2071
      %2077 = vst [vmem:[%s1170] sm:$0xff] %v2075
      %2078 = vst [vmem:[%s1170 + $0x8] sm:$0xff] %v2076
      %s2079 = scalar_lea.vmem %s481, 24
      %v2080 = vld [vmem:[%s2079] sm:$0xff]
      %v2082 = vcombine.high %v2080, %v2080
      %v2083 = vsel %vm905, %v2080, 0
      %v2085 = vsel %vm905, %v2082, 0
      %2087 = vmatprep.subr.mxu0 %v2085
      %2088 = vmatpush1.msra.mxu0 %v2083
      %2089 = vmatprep.subr.mxu0 0.0
      %2090 = vmatpush1.msra.mxu0 0.0
      %2091 = vmatprep.subr.mxu0 0.0
      %2092 = vmatpush1.msra.mxu0 0.0
      %2093 = vmatprep.subr.mxu0 0.0
      %2094 = vmatpush1.msra.mxu0 0.0
      %2095 = vmatprep.subr.mxu0 0.0
      %2096 = vmatpush1.msra.mxu0 0.0
      %2097 = vmatprep.subr.mxu0 0.0
      %2098 = vmatpush1.msra.mxu0 0.0
      %2099 = vmatprep.subr.mxu0 0.0
      %2100 = vmatpush1.msra.mxu0 0.0
      %2101 = vmatprep.subr.mxu0 0.0
      %2102 = vmatpush1.msra.mxu0 0.0
      %2103 = vmatprep.subr.mxu0 0.0
      %2104 = vmatpush1.msra.mxu0 0.0
      %2105 = vmatprep.subr.mxu0 0.0
      %2106 = vmatpush1.msra.mxu0 0.0
      %2107 = vmatprep.subr.mxu0 0.0
      %2108 = vmatpush1.msra.mxu0 0.0
      %2109 = vmatprep.subr.mxu0 0.0
      %2110 = vmatpush1.msra.mxu0 0.0
      %2111 = vmatprep.subr.mxu0 0.0
      %2112 = vmatpush1.msra.mxu0 0.0
      %2113 = vmatprep.subr.mxu0 0.0
      %2114 = vmatpush1.msra.mxu0 0.0
      %2115 = vmatprep.subr.mxu0 0.0
      %2116 = vmatpush1.msra.mxu0 0.0
      %2117 = vmatprep.subr.mxu0 0.0
      %2118 = vmatpush1.msra.mxu0 0.0
      %2119 = vmatprep.subr.mxu0 0.0
      %2120 = vmatpush1.msra.mxu0 0.0
      %2121 = vmatprep.subr.mxu0 0.0
      %2122 = vmatpush1.msra.mxu0 0.0
      %2123 = vmatprep.subr.mxu0 0.0
      %2124 = vmatpush1.msra.mxu0 0.0
      %2125 = vmatprep.subr.mxu0 0.0
      %2126 = vmatpush1.msra.mxu0 0.0
      %2127 = vmatprep.subr.mxu0 0.0
      %2128 = vmatpush1.msra.mxu0 0.0
      %2129 = vmatprep.subr.mxu0 0.0
      %2130 = vmatpush1.msra.mxu0 0.0
      %2131 = vmatprep.subr.mxu0 0.0
      %2132 = vmatpush1.msra.mxu0 0.0
      %2133 = vmatprep.subr.mxu0 0.0
      %2134 = vmatpush1.msra.mxu0 0.0
      %2135 = vmatprep.subr.mxu0 0.0
      %2136 = vmatpush1.msra.mxu0 0.0
      %2137 = vmatprep.subr.mxu0 0.0
      %2138 = vmatpush1.msra.mxu0 0.0
      %2139 = vmatprep.subr.mxu0 0.0
      %2140 = vmatpush1.msra.mxu0 0.0
      %2141 = vmatprep.subr.mxu0 0.0
      %2142 = vmatpush1.msra.mxu0 0.0
      %2143 = vmatprep.subr.mxu0 0.0
      %2144 = vmatpush1.msra.mxu0 0.0
      %2145 = vmatprep.subr.mxu0 0.0
      %2146 = vmatpush1.msra.mxu0 0.0
      %2147 = vmatprep.subr.mxu0 0.0
      %2148 = vmatpush1.msra.mxu0 0.0
      %2149 = vmatprep.subr.mxu0 0.0
      %2150 = vmatpush1.msra.mxu0 0.0
      %2151 = vmatprep.mubr.f32.mxu0 0.0
      %2152 = vmatmul.mubr.f32.gmra.mrb[0].mxu0 %v903
      %v2153 = vpop.f32.mrb[0].mxu0
      %v2154 = vadd.f32 %v897, %v2153
      %v2155 = vpop.f32.mrb[0].mxu0
      %v2156 = vadd.f32 %v897, %v2155
      %2157 = vdwg.mxu0
      %v2158 = vmax.f32 %v2154, 0.0
      %v2159 = vmax.f32 %v2156, 0.0
      %2160 = vrot.lane.b32.xlu0 %v2158, 17
      %v2161 = vpop.permute.xlu0 %2160
      %2162 = vrot.lane.b32.xlu0 %v2159, 17
      %v2163 = vpop.permute.xlu0 %2162
      %v2164 = vsel %vm989, %v2161, %v2163
      %v2165 = vsel %vm989, %v2163, %v2161
      %v2166 = vld [vmem:[%s3] sm:$0x3]
      %v2168 = vlaneseq
      %v2169 = vshrl.u32 %v2168, 7
      %v2170 = vsub.s32 0, %v2169
      %v2171 = vrot.slane %v2166, %v2170
      %v2172 = vlaneseq
      %v2173 = vshrl.u32 %v2172, 7
      %v2174 = vsub.s32 1, %v2173
      %v2175 = vrot.slane %v2166, %v2174
      %v2178 = vmul.f32 %v2165, %v2171
      %v2179 = vmul.f32 %v2164, %v2175
      %2180 = vrot.lane.b32.xlu0 %v2158, 16
      %v2181 = vpop.permute.xlu0 %2180
      %2182 = vrot.lane.b32.xlu0 %v2159, 16
      %v2183 = vpop.permute.xlu0 %2182
      %v2184 = vsel %vm1010, %v2181, %v2183
      %v2185 = vsel %vm1010, %v2183, %v2181
      %v2186 = vld [vmem:[%s1013] sm:$0x3]
      %v2188 = vlaneseq
      %v2189 = vshrl.u32 %v2188, 7
      %v2190 = vsub.s32 0, %v2189
      %v2191 = vrot.slane %v2186, %v2190
      %v2192 = vlaneseq
      %v2193 = vshrl.u32 %v2192, 7
      %v2194 = vsub.s32 1, %v2193
      %v2195 = vrot.slane %v2186, %v2194
      %v2198 = vmul.f32 %v2185, %v2191
      %v2199 = vmul.f32 %v2184, %v2195
      %2200 = vrot.lane.b32.xlu0 %v2158, 15
      %v2201 = vpop.permute.xlu0 %2200
      %2202 = vrot.lane.b32.xlu0 %v2159, 15
      %v2203 = vpop.permute.xlu0 %2202
      %v2204 = vsel %vm1032, %v2201, %v2203
      %v2205 = vsel %vm1032, %v2203, %v2201
      %v2206 = vld [vmem:[%s1035] sm:$0x3]
      %v2208 = vlaneseq
      %v2209 = vshrl.u32 %v2208, 7
      %v2210 = vsub.s32 0, %v2209
      %v2211 = vrot.slane %v2206, %v2210
      %v2212 = vlaneseq
      %v2213 = vshrl.u32 %v2212, 7
      %v2214 = vsub.s32 1, %v2213
      %v2215 = vrot.slane %v2206, %v2214
      %v2218 = vmul.f32 %v2205, %v2211
      %v2219 = vmul.f32 %v2204, %v2215
      %2220 = vrot.lane.b32.xlu0 %v2158, 1
      %v2221 = vpop.permute.xlu0 %2220
      %2222 = vrot.lane.b32.xlu0 %v2159, 1
      %v2223 = vpop.permute.xlu0 %2222
      %v2224 = vsel %vm1054, %v2221, %v2223
      %v2225 = vsel %vm1054, %v2223, %v2221
      %v2226 = vld [vmem:[%s1057] sm:$0x3]
      %v2228 = vlaneseq
      %v2229 = vshrl.u32 %v2228, 7
      %v2230 = vsub.s32 0, %v2229
      %v2231 = vrot.slane %v2226, %v2230
      %v2232 = vlaneseq
      %v2233 = vshrl.u32 %v2232, 7
      %v2234 = vsub.s32 1, %v2233
      %v2235 = vrot.slane %v2226, %v2234
      %v2238 = vmul.f32 %v2225, %v2231
      %v2239 = vmul.f32 %v2224, %v2235
      %2240 = vrot.lane.b32.xlu0 %v2158, 127
      %v2241 = vpop.permute.xlu0 %2240
      %2242 = vrot.lane.b32.xlu0 %v2159, 127
      %v2243 = vpop.permute.xlu0 %2242
      %v2244 = vsel %vm1076, %v2241, %v2243
      %v2245 = vsel %vm1076, %v2243, %v2241
      %v2246 = vld [vmem:[%s1079] sm:$0x3]
      %v2248 = vlaneseq
      %v2249 = vshrl.u32 %v2248, 7
      %v2250 = vsub.s32 0, %v2249
      %v2251 = vrot.slane %v2246, %v2250
      %v2252 = vlaneseq
      %v2253 = vshrl.u32 %v2252, 7
      %v2254 = vsub.s32 1, %v2253
      %v2255 = vrot.slane %v2246, %v2254
      %v2258 = vmul.f32 %v2244, %v2251
      %v2259 = vmul.f32 %v2245, %v2255
      %2260 = vrot.lane.b32.xlu0 %v2158, 113
      %v2261 = vpop.permute.xlu0 %2260
      %2262 = vrot.lane.b32.xlu0 %v2159, 113
      %v2263 = vpop.permute.xlu0 %2262
      %v2264 = vsel %vm1098, %v2261, %v2263
      %v2265 = vsel %vm1098, %v2263, %v2261
      %v2266 = vld [vmem:[%s1101] sm:$0x3]
      %v2268 = vlaneseq
      %v2269 = vshrl.u32 %v2268, 7
      %v2270 = vsub.s32 0, %v2269
      %v2271 = vrot.slane %v2266, %v2270
      %v2272 = vlaneseq
      %v2273 = vshrl.u32 %v2272, 7
      %v2274 = vsub.s32 1, %v2273
      %v2275 = vrot.slane %v2266, %v2274
      %v2278 = vmul.f32 %v2264, %v2271
      %v2279 = vmul.f32 %v2265, %v2275
      %2280 = vrot.lane.b32.xlu0 %v2158, 112
      %v2281 = vpop.permute.xlu0 %2280
      %2282 = vrot.lane.b32.xlu0 %v2159, 112
      %v2283 = vpop.permute.xlu0 %2282
      %v2284 = vsel %vm1120, %v2281, %v2283
      %v2285 = vsel %vm1120, %v2283, %v2281
      %v2286 = vld [vmem:[%s1123] sm:$0x3]
      %v2288 = vlaneseq
      %v2289 = vshrl.u32 %v2288, 7
      %v2290 = vsub.s32 0, %v2289
      %v2291 = vrot.slane %v2286, %v2290
      %v2292 = vlaneseq
      %v2293 = vshrl.u32 %v2292, 7
      %v2294 = vsub.s32 1, %v2293
      %v2295 = vrot.slane %v2286, %v2294
      %v2298 = vmul.f32 %v2284, %v2291
      %v2299 = vmul.f32 %v2285, %v2295
      %2300 = vrot.lane.b32.xlu0 %v2158, 111
      %v2301 = vpop.permute.xlu0 %2300
      %2302 = vrot.lane.b32.xlu0 %v2159, 111
      %v2303 = vpop.permute.xlu0 %2302
      %v2304 = vsel %vm1142, %v2301, %v2303
      %v2305 = vsel %vm1142, %v2303, %v2301
      %v2306 = vld [vmem:[%s1145] sm:$0x3]
      %v2308 = vlaneseq
      %v2309 = vshrl.u32 %v2308, 7
      %v2310 = vsub.s32 0, %v2309
      %v2311 = vrot.slane %v2306, %v2310
      %v2312 = vlaneseq
      %v2313 = vshrl.u32 %v2312, 7
      %v2314 = vsub.s32 1, %v2313
      %v2315 = vrot.slane %v2306, %v2314
      %v2318 = vmul.f32 %v2304, %v2311
      %v2319 = vmul.f32 %v2305, %v2315
      %v2320 = vpack.c.bf16 %v2198, %v2178
      %v2321 = vpack.c.bf16 %v2199, %v2179
      %v2322 = vpack.c.bf16 %v2238, %v2218
      %v2323 = vpack.c.bf16 %v2239, %v2219
      %v2324 = vpack.c.bf16 %v2258, %v2158
      %v2325 = vpack.c.bf16 %v2259, %v2159
      %v2326 = vpack.c.bf16 %v2298, %v2278
      %v2327 = vpack.c.bf16 %v2299, %v2279
      %v2328 = vpack.c.bf16 %v2318, %v2318
      %v2329 = vpack.c.bf16 %v2319, %v2319
      %s2330 = scalar_lea.vmem [#allocation2], 64
      %v2331 = vld [vmem:[%s2330] sm:$0xff]
      %v2332 = vld [vmem:[%s2330 + $0x8] sm:$0xff]
      %v2334 = vsel %vm905, %v2328, 0
      %v2337 = vsel %vm905, %v2329, 0
      %2339 = vmatprep.subr.bf16.mxu0 %v2321
      %2340 = vmatpush1.bf16.msra.mxu0 %v2320
      %2341 = vmatprep.subr.bf16.mxu0 %v2323
      %2342 = vmatpush1.bf16.msra.mxu0 %v2322
      %2343 = vmatprep.subr.bf16.mxu0 %v2325
      %2344 = vmatpush1.bf16.msra.mxu0 %v2324
      %2345 = vmatprep.subr.bf16.mxu0 %v2327
      %2346 = vmatpush1.bf16.msra.mxu0 %v2326
      %2347 = vmatprep.subr.bf16.mxu0 %v2337
      %2348 = vmatpush1.bf16.msra.mxu0 %v2334
      %2349 = vmatprep.subr.bf16.mxu0 0
      %2350 = vmatpush1.bf16.msra.mxu0 0
      %2351 = vmatprep.subr.bf16.mxu0 0
      %2352 = vmatpush1.bf16.msra.mxu0 0
      %2353 = vmatprep.subr.bf16.mxu0 0
      %2354 = vmatpush1.bf16.msra.mxu0 0
      %2355 = vmatprep.subr.bf16.mxu0 0
      %2356 = vmatpush1.bf16.msra.mxu0 0
      %2357 = vmatprep.subr.bf16.mxu0 0
      %2358 = vmatpush1.bf16.msra.mxu0 0
      %2359 = vmatprep.subr.bf16.mxu0 0
      %2360 = vmatpush1.bf16.msra.mxu0 0
      %2361 = vmatprep.subr.bf16.mxu0 0
      %2362 = vmatpush1.bf16.msra.mxu0 0
      %2363 = vmatprep.subr.bf16.mxu0 0
      %2364 = vmatpush1.bf16.msra.mxu0 0
      %2365 = vmatprep.subr.bf16.mxu0 0
      %2366 = vmatpush1.bf16.msra.mxu0 0
      %2367 = vmatprep.subr.bf16.mxu0 0
      %2368 = vmatpush1.bf16.msra.mxu0 0
      %2369 = vmatprep.subr.bf16.mxu0 0
      %2370 = vmatpush1.bf16.msra.mxu0 0
      %2371 = vmatprep.mubr.bf16.mxu0 0
      %2372 = vmatmul.mubr.bf16.gmra.mrb[0].mxu0 %v1175
      %v2373 = vpop.f32.mrb[0].mxu0
      %v2374 = vadd.f32 0.0, %v2373
      %v2375 = vpop.f32.mrb[0].mxu0
      %v2376 = vadd.f32 0.0, %v2375
      %v2377 = vpop.f32.mrb[0].mxu0
      %v2378 = vpop.f32.mrb[0].mxu0
      %2379 = vdwg.mxu0
      %v2380 = vadd.f32 %v2331, %v2374
      %v2381 = vadd.f32 %v2332, %v2376
      %2382 = vst [vmem:[%s2330] sm:$0xff] %v2380
      %2383 = vst [vmem:[%s2330 + $0x8] sm:$0xff] %v2381
      %v2384 = vld [vmem:[%s1931] sm:$0xff]
      %v2385 = vld [vmem:[%s1931 + $0x8] sm:$0xff]
      %2386 = vmatprep.subr.bf16.mxu0 %v2321
      %2387 = vmatpush1.bf16.msra.mxu0 %v2320
      %2388 = vmatprep.subr.bf16.mxu0 %v2323
      %2389 = vmatpush1.bf16.msra.mxu0 %v2322
      %2390 = vmatprep.subr.bf16.mxu0 %v2325
      %2391 = vmatpush1.bf16.msra.mxu0 %v2324
      %2392 = vmatprep.subr.bf16.mxu0 %v2327
      %2393 = vmatpush1.bf16.msra.mxu0 %v2326
      %2394 = vmatprep.subr.bf16.mxu0 %v2337
      %2395 = vmatpush1.bf16.msra.mxu0 %v2334
      %2396 = vmatprep.subr.bf16.mxu0 0
      %2397 = vmatpush1.bf16.msra.mxu0 0
      %2398 = vmatprep.subr.bf16.mxu0 0
      %2399 = vmatpush1.bf16.msra.mxu0 0
      %2400 = vmatprep.subr.bf16.mxu0 0
      %2401 = vmatpush1.bf16.msra.mxu0 0
      %2402 = vmatprep.subr.bf16.mxu0 0
      %2403 = vmatpush1.bf16.msra.mxu0 0
      %2404 = vmatprep.subr.bf16.mxu0 0
      %2405 = vmatpush1.bf16.msra.mxu0 0
      %2406 = vmatprep.subr.bf16.mxu0 0
      %2407 = vmatpush1.bf16.msra.mxu0 0
      %2408 = vmatprep.subr.bf16.mxu0 0
      %2409 = vmatpush1.bf16.msra.mxu0 0
      %2410 = vmatprep.subr.bf16.mxu0 0
      %2411 = vmatpush1.bf16.msra.mxu0 0
      %2412 = vmatprep.subr.bf16.mxu0 0
      %2413 = vmatpush1.bf16.msra.mxu0 0
      %2414 = vmatprep.subr.bf16.mxu0 0
      %2415 = vmatpush1.bf16.msra.mxu0 0
      %2416 = vmatprep.subr.bf16.mxu0 0
      %2417 = vmatpush1.bf16.msra.mxu0 0
      %2418 = vmatprep.mubr.bf16.mxu0 0
      %2419 = vmatmul.mubr.bf16.gmra.mrb[0].mxu0 %v1231
      %v2420 = vpop.f32.mrb[0].mxu0
      %v2421 = vadd.f32 0.0, %v2420
      %v2422 = vpop.f32.mrb[0].mxu0
      %v2423 = vadd.f32 0.0, %v2422
      %v2424 = vpop.f32.mrb[0].mxu0
      %v2425 = vpop.f32.mrb[0].mxu0
      %2426 = vdwg.mxu0
      %v2427 = vadd.f32 %v2384, %v2421
      %v2428 = vadd.f32 %v2385, %v2423
      %2429 = vst [vmem:[%s1931] sm:$0xff] %v2427
      %2430 = vst [vmem:[%s1931 + $0x8] sm:$0xff] %v2428
      %v2431 = vld [vmem:[%s1529] sm:$0xff]
      %v2432 = vld [vmem:[%s1529 + $0x8] sm:$0xff]
      %2433 = vmatprep.subr.bf16.mxu0 %v2321
      %2434 = vmatpush1.bf16.msra.mxu0 %v2320
      %2435 = vmatprep.subr.bf16.mxu0 %v2323
      %2436 = vmatpush1.bf16.msra.mxu0 %v2322
      %2437 = vmatprep.subr.bf16.mxu0 %v2325
      %2438 = vmatpush1.bf16.msra.mxu0 %v2324
      %2439 = vmatprep.subr.bf16.mxu0 %v2327
      %2440 = vmatpush1.bf16.msra.mxu0 %v2326
      %2441 = vmatprep.subr.bf16.mxu0 %v2337
      %2442 = vmatpush1.bf16.msra.mxu0 %v2334
      %2443 = vmatprep.subr.bf16.mxu0 0
      %2444 = vmatpush1.bf16.msra.mxu0 0
      %2445 = vmatprep.subr.bf16.mxu0 0
      %2446 = vmatpush1.bf16.msra.mxu0 0
      %2447 = vmatprep.subr.bf16.mxu0 0
      %2448 = vmatpush1.bf16.msra.mxu0 0
      %2449 = vmatprep.subr.bf16.mxu0 0
      %2450 = vmatpush1.bf16.msra.mxu0 0
      %2451 = vmatprep.subr.bf16.mxu0 0
      %2452 = vmatpush1.bf16.msra.mxu0 0
      %2453 = vmatprep.subr.bf16.mxu0 0
      %2454 = vmatpush1.bf16.msra.mxu0 0
      %2455 = vmatprep.subr.bf16.mxu0 0
      %2456 = vmatpush1.bf16.msra.mxu0 0
      %2457 = vmatprep.subr.bf16.mxu0 0
      %2458 = vmatpush1.bf16.msra.mxu0 0
      %2459 = vmatprep.subr.bf16.mxu0 0
      %2460 = vmatpush1.bf16.msra.mxu0 0
      %2461 = vmatprep.subr.bf16.mxu0 0
      %2462 = vmatpush1.bf16.msra.mxu0 0
      %2463 = vmatprep.subr.bf16.mxu0 0
      %2464 = vmatpush1.bf16.msra.mxu0 0
      %2465 = vmatprep.mubr.bf16.mxu0 0
      %2466 = vmatmul.mubr.bf16.gmra.mrb[0].mxu0 %v1633
      %v2467 = vpop.f32.mrb[0].mxu0
      %v2468 = vadd.f32 0.0, %v2467
      %v2469 = vpop.f32.mrb[0].mxu0
      %v2470 = vadd.f32 0.0, %v2469
      %v2471 = vpop.f32.mrb[0].mxu0
      %v2472 = vpop.f32.mrb[0].mxu0
      %2473 = vdwg.mxu0
      %v2474 = vadd.f32 %v2431, %v2468
      %v2475 = vadd.f32 %v2432, %v2470
      %2476 = vst [vmem:[%s1529] sm:$0xff] %v2474
      %2477 = vst [vmem:[%s1529 + $0x8] sm:$0xff] %v2475
      %s2478 = scalar_lea.vmem %s481, 32
      %v2479 = vld [vmem:[%s2478] sm:$0xff]
      %v2481 = vcombine.high %v2479, %v2479
      %v2482 = vsel %vm905, %v2479, 0
      %v2484 = vsel %vm905, %v2481, 0
      %2486 = vmatprep.subr.mxu0 %v2484
      %2487 = vmatpush1.msra.mxu0 %v2482
      %2488 = vmatprep.subr.mxu0 0.0
      %2489 = vmatpush1.msra.mxu0 0.0
      %2490 = vmatprep.subr.mxu0 0.0
      %2491 = vmatpush1.msra.mxu0 0.0
      %2492 = vmatprep.subr.mxu0 0.0
      %2493 = vmatpush1.msra.mxu0 0.0
      %2494 = vmatprep.subr.mxu0 0.0
      %2495 = vmatpush1.msra.mxu0 0.0
      %2496 = vmatprep.subr.mxu0 0.0
      %2497 = vmatpush1.msra.mxu0 0.0
      %2498 = vmatprep.subr.mxu0 0.0
      %2499 = vmatpush1.msra.mxu0 0.0
      %2500 = vmatprep.subr.mxu0 0.0
      %2501 = vmatpush1.msra.mxu0 0.0
      %2502 = vmatprep.subr.mxu0 0.0
      %2503 = vmatpush1.msra.mxu0 0.0
      %2504 = vmatprep.subr.mxu0 0.0
      %2505 = vmatpush1.msra.mxu0 0.0
      %2506 = vmatprep.subr.mxu0 0.0
      %2507 = vmatpush1.msra.mxu0 0.0
      %2508 = vmatprep.subr.mxu0 0.0
      %2509 = vmatpush1.msra.mxu0 0.0
      %2510 = vmatprep.subr.mxu0 0.0
      %2511 = vmatpush1.msra.mxu0 0.0
      %2512 = vmatprep.subr.mxu0 0.0
      %2513 = vmatpush1.msra.mxu0 0.0
      %2514 = vmatprep.subr.mxu0 0.0
      %2515 = vmatpush1.msra.mxu0 0.0
      %2516 = vmatprep.subr.mxu0 0.0
      %2517 = vmatpush1.msra.mxu0 0.0
      %2518 = vmatprep.subr.mxu0 0.0
      %2519 = vmatpush1.msra.mxu0 0.0
      %2520 = vmatprep.subr.mxu0 0.0
      %2521 = vmatpush1.msra.mxu0 0.0
      %2522 = vmatprep.subr.mxu0 0.0
      %2523 = vmatpush1.msra.mxu0 0.0
      %2524 = vmatprep.subr.mxu0 0.0
      %2525 = vmatpush1.msra.mxu0 0.0
      %2526 = vmatprep.subr.mxu0 0.0
      %2527 = vmatpush1.msra.mxu0 0.0
      %2528 = vmatprep.subr.mxu0 0.0
      %2529 = vmatpush1.msra.mxu0 0.0
      %2530 = vmatprep.subr.mxu0 0.0
      %2531 = vmatpush1.msra.mxu0 0.0
      %2532 = vmatprep.subr.mxu0 0.0
      %2533 = vmatpush1.msra.mxu0 0.0
      %2534 = vmatprep.subr.mxu0 0.0
      %2535 = vmatpush1.msra.mxu0 0.0
      %2536 = vmatprep.subr.mxu0 0.0
      %2537 = vmatpush1.msra.mxu0 0.0
      %2538 = vmatprep.subr.mxu0 0.0
      %2539 = vmatpush1.msra.mxu0 0.0
      %2540 = vmatprep.subr.mxu0 0.0
      %2541 = vmatpush1.msra.mxu0 0.0
      %2542 = vmatprep.subr.mxu0 0.0
      %2543 = vmatpush1.msra.mxu0 0.0
      %2544 = vmatprep.subr.mxu0 0.0
      %2545 = vmatpush1.msra.mxu0 0.0
      %2546 = vmatprep.subr.mxu0 0.0
      %2547 = vmatpush1.msra.mxu0 0.0
      %2548 = vmatprep.subr.mxu0 0.0
      %2549 = vmatpush1.msra.mxu0 0.0
      %2550 = vmatprep.mubr.f32.mxu0 0.0
      %2551 = vmatmul.mubr.f32.gmra.mrb[0].mxu0 %v903
      %v2552 = vpop.f32.mrb[0].mxu0
      %v2553 = vadd.f32 %v897, %v2552
      %v2554 = vpop.f32.mrb[0].mxu0
      %v2555 = vadd.f32 %v897, %v2554
      %2556 = vdwg.mxu0
      %v2557 = vmax.f32 %v2553, 0.0
      %v2558 = vmax.f32 %v2555, 0.0
      %2559 = vrot.lane.b32.xlu0 %v2557, 17
      %v2560 = vpop.permute.xlu0 %2559
      %2561 = vrot.lane.b32.xlu0 %v2558, 17
      %v2562 = vpop.permute.xlu0 %2561
      %v2563 = vsel %vm989, %v2560, %v2562
      %v2564 = vsel %vm989, %v2562, %v2560
      %v2565 = vld [vmem:[%s3] sm:$0x3]
      %v2567 = vlaneseq
      %v2568 = vshrl.u32 %v2567, 7
      %v2569 = vsub.s32 0, %v2568
      %v2570 = vrot.slane %v2565, %v2569
      %v2571 = vlaneseq
      %v2572 = vshrl.u32 %v2571, 7
      %v2573 = vsub.s32 1, %v2572
      %v2574 = vrot.slane %v2565, %v2573
      %v2577 = vmul.f32 %v2564, %v2570
      %v2578 = vmul.f32 %v2563, %v2574
      %2579 = vrot.lane.b32.xlu0 %v2557, 16
      %v2580 = vpop.permute.xlu0 %2579
      %2581 = vrot.lane.b32.xlu0 %v2558, 16
      %v2582 = vpop.permute.xlu0 %2581
      %v2583 = vsel %vm1010, %v2580, %v2582
      %v2584 = vsel %vm1010, %v2582, %v2580
      %v2585 = vld [vmem:[%s1013] sm:$0x3]
      %v2587 = vlaneseq
      %v2588 = vshrl.u32 %v2587, 7
      %v2589 = vsub.s32 0, %v2588
      %v2590 = vrot.slane %v2585, %v2589
      %v2591 = vlaneseq
      %v2592 = vshrl.u32 %v2591, 7
      %v2593 = vsub.s32 1, %v2592
      %v2594 = vrot.slane %v2585, %v2593
      %v2597 = vmul.f32 %v2584, %v2590
      %v2598 = vmul.f32 %v2583, %v2594
      %2599 = vrot.lane.b32.xlu0 %v2557, 15
      %v2600 = vpop.permute.xlu0 %2599
      %2601 = vrot.lane.b32.xlu0 %v2558, 15
      %v2602 = vpop.permute.xlu0 %2601
      %v2603 = vsel %vm1032, %v2600, %v2602
      %v2604 = vsel %vm1032, %v2602, %v2600
      %v2605 = vld [vmem:[%s1035] sm:$0x3]
      %v2607 = vlaneseq
      %v2608 = vshrl.u32 %v2607, 7
      %v2609 = vsub.s32 0, %v2608
      %v2610 = vrot.slane %v2605, %v2609
      %v2611 = vlaneseq
      %v2612 = vshrl.u32 %v2611, 7
      %v2613 = vsub.s32 1, %v2612
      %v2614 = vrot.slane %v2605, %v2613
      %v2617 = vmul.f32 %v2604, %v2610
      %v2618 = vmul.f32 %v2603, %v2614
      %2619 = vrot.lane.b32.xlu0 %v2557, 1
      %v2620 = vpop.permute.xlu0 %2619
      %2621 = vrot.lane.b32.xlu0 %v2558, 1
      %v2622 = vpop.permute.xlu0 %2621
      %v2623 = vsel %vm1054, %v2620, %v2622
      %v2624 = vsel %vm1054, %v2622, %v2620
      %v2625 = vld [vmem:[%s1057] sm:$0x3]
      %v2627 = vlaneseq
      %v2628 = vshrl.u32 %v2627, 7
      %v2629 = vsub.s32 0, %v2628
      %v2630 = vrot.slane %v2625, %v2629
      %v2631 = vlaneseq
      %v2632 = vshrl.u32 %v2631, 7
      %v2633 = vsub.s32 1, %v2632
      %v2634 = vrot.slane %v2625, %v2633
      %v2637 = vmul.f32 %v2624, %v2630
      %v2638 = vmul.f32 %v2623, %v2634
      %2639 = vrot.lane.b32.xlu0 %v2557, 127
      %v2640 = vpop.permute.xlu0 %2639
      %2641 = vrot.lane.b32.xlu0 %v2558, 127
      %v2642 = vpop.permute.xlu0 %2641
      %v2643 = vsel %vm1076, %v2640, %v2642
      %v2644 = vsel %vm1076, %v2642, %v2640
      %v2645 = vld [vmem:[%s1079] sm:$0x3]
      %v2647 = vlaneseq
      %v2648 = vshrl.u32 %v2647, 7
      %v2649 = vsub.s32 0, %v2648
      %v2650 = vrot.slane %v2645, %v2649
      %v2651 = vlaneseq
      %v2652 = vshrl.u32 %v2651, 7
      %v2653 = vsub.s32 1, %v2652
      %v2654 = vrot.slane %v2645, %v2653
      %v2657 = vmul.f32 %v2643, %v2650
      %v2658 = vmul.f32 %v2644, %v2654
      %2659 = vrot.lane.b32.xlu0 %v2557, 113
      %v2660 = vpop.permute.xlu0 %2659
      %2661 = vrot.lane.b32.xlu0 %v2558, 113
      %v2662 = vpop.permute.xlu0 %2661
      %v2663 = vsel %vm1098, %v2660, %v2662
      %v2664 = vsel %vm1098, %v2662, %v2660
      %v2665 = vld [vmem:[%s1101] sm:$0x3]
      %v2667 = vlaneseq
      %v2668 = vshrl.u32 %v2667, 7
      %v2669 = vsub.s32 0, %v2668
      %v2670 = vrot.slane %v2665, %v2669
      %v2671 = vlaneseq
      %v2672 = vshrl.u32 %v2671, 7
      %v2673 = vsub.s32 1, %v2672
      %v2674 = vrot.slane %v2665, %v2673
      %v2677 = vmul.f32 %v2663, %v2670
      %v2678 = vmul.f32 %v2664, %v2674
      %2679 = vrot.lane.b32.xlu0 %v2557, 112
      %v2680 = vpop.permute.xlu0 %2679
      %2681 = vrot.lane.b32.xlu0 %v2558, 112
      %v2682 = vpop.permute.xlu0 %2681
      %v2683 = vsel %vm1120, %v2680, %v2682
      %v2684 = vsel %vm1120, %v2682, %v2680
      %v2685 = vld [vmem:[%s1123] sm:$0x3]
      %v2687 = vlaneseq
      %v2688 = vshrl.u32 %v2687, 7
      %v2689 = vsub.s32 0, %v2688
      %v2690 = vrot.slane %v2685, %v2689
      %v2691 = vlaneseq
      %v2692 = vshrl.u32 %v2691, 7
      %v2693 = vsub.s32 1, %v2692
      %v2694 = vrot.slane %v2685, %v2693
      %v2697 = vmul.f32 %v2683, %v2690
      %v2698 = vmul.f32 %v2684, %v2694
      %2699 = vrot.lane.b32.xlu0 %v2557, 111
      %v2700 = vpop.permute.xlu0 %2699
      %2701 = vrot.lane.b32.xlu0 %v2558, 111
      %v2702 = vpop.permute.xlu0 %2701
      %v2703 = vsel %vm1142, %v2700, %v2702
      %v2704 = vsel %vm1142, %v2702, %v2700
      %v2705 = vld [vmem:[%s1145] sm:$0x3]
      %v2707 = vlaneseq
      %v2708 = vshrl.u32 %v2707, 7
      %v2709 = vsub.s32 0, %v2708
      %v2710 = vrot.slane %v2705, %v2709
      %v2711 = vlaneseq
      %v2712 = vshrl.u32 %v2711, 7
      %v2713 = vsub.s32 1, %v2712
      %v2714 = vrot.slane %v2705, %v2713
      %v2717 = vmul.f32 %v2703, %v2710
      %v2718 = vmul.f32 %v2704, %v2714
      %v2719 = vpack.c.bf16 %v2597, %v2577
      %v2720 = vpack.c.bf16 %v2598, %v2578
      %v2721 = vpack.c.bf16 %v2637, %v2617
      %v2722 = vpack.c.bf16 %v2638, %v2618
      %v2723 = vpack.c.bf16 %v2657, %v2557
      %v2724 = vpack.c.bf16 %v2658, %v2558
      %v2725 = vpack.c.bf16 %v2697, %v2677
      %v2726 = vpack.c.bf16 %v2698, %v2678
      %v2727 = vpack.c.bf16 %v2717, %v2717
      %v2728 = vpack.c.bf16 %v2718, %v2718
      %s2729 = scalar_lea.vmem [#allocation2], 80
      %v2730 = vld [vmem:[%s2729] sm:$0xff]
      %v2731 = vld [vmem:[%s2729 + $0x8] sm:$0xff]
      %v2733 = vsel %vm905, %v2727, 0
      %v2736 = vsel %vm905, %v2728, 0
      %2738 = vmatprep.subr.bf16.mxu0 %v2720
      %2739 = vmatpush1.bf16.msra.mxu0 %v2719
      %2740 = vmatprep.subr.bf16.mxu0 %v2722
      %2741 = vmatpush1.bf16.msra.mxu0 %v2721
      %2742 = vmatprep.subr.bf16.mxu0 %v2724
      %2743 = vmatpush1.bf16.msra.mxu0 %v2723
      %2744 = vmatprep.subr.bf16.mxu0 %v2726
      %2745 = vmatpush1.bf16.msra.mxu0 %v2725
      %2746 = vmatprep.subr.bf16.mxu0 %v2736
      %2747 = vmatpush1.bf16.msra.mxu0 %v2733
      %2748 = vmatprep.subr.bf16.mxu0 0
      %2749 = vmatpush1.bf16.msra.mxu0 0
      %2750 = vmatprep.subr.bf16.mxu0 0
      %2751 = vmatpush1.bf16.msra.mxu0 0
      %2752 = vmatprep.subr.bf16.mxu0 0
      %2753 = vmatpush1.bf16.msra.mxu0 0
      %2754 = vmatprep.subr.bf16.mxu0 0
      %2755 = vmatpush1.bf16.msra.mxu0 0
      %2756 = vmatprep.subr.bf16.mxu0 0
      %2757 = vmatpush1.bf16.msra.mxu0 0
      %2758 = vmatprep.subr.bf16.mxu0 0
      %2759 = vmatpush1.bf16.msra.mxu0 0
      %2760 = vmatprep.subr.bf16.mxu0 0
      %2761 = vmatpush1.bf16.msra.mxu0 0
      %2762 = vmatprep.subr.bf16.mxu0 0
      %2763 = vmatpush1.bf16.msra.mxu0 0
      %2764 = vmatprep.subr.bf16.mxu0 0
      %2765 = vmatpush1.bf16.msra.mxu0 0
      %2766 = vmatprep.subr.bf16.mxu0 0
      %2767 = vmatpush1.bf16.msra.mxu0 0
      %2768 = vmatprep.subr.bf16.mxu0 0
      %2769 = vmatpush1.bf16.msra.mxu0 0
      %2770 = vmatprep.mubr.bf16.mxu0 0
      %2771 = vmatmul.mubr.bf16.gmra.mrb[0].mxu0 %v1175
      %v2772 = vpop.f32.mrb[0].mxu0
      %v2773 = vadd.f32 0.0, %v2772
      %v2774 = vpop.f32.mrb[0].mxu0
      %v2775 = vadd.f32 0.0, %v2774
      %v2776 = vpop.f32.mrb[0].mxu0
      %v2777 = vpop.f32.mrb[0].mxu0
      %2778 = vdwg.mxu0
      %v2779 = vadd.f32 %v2730, %v2773
      %v2780 = vadd.f32 %v2731, %v2775
      %2781 = vst [vmem:[%s2729] sm:$0xff] %v2779
      %2782 = vst [vmem:[%s2729 + $0x8] sm:$0xff] %v2780
      %v2783 = vld [vmem:[%s2330] sm:$0xff]
      %v2784 = vld [vmem:[%s2330 + $0x8] sm:$0xff]
      %2785 = vmatprep.subr.bf16.mxu0 %v2720
      %2786 = vmatpush1.bf16.msra.mxu0 %v2719
      %2787 = vmatprep.subr.bf16.mxu0 %v2722
      %2788 = vmatpush1.bf16.msra.mxu0 %v2721
      %2789 = vmatprep.subr.bf16.mxu0 %v2724
      %2790 = vmatpush1.bf16.msra.mxu0 %v2723
      %2791 = vmatprep.subr.bf16.mxu0 %v2726
      %2792 = vmatpush1.bf16.msra.mxu0 %v2725
      %2793 = vmatprep.subr.bf16.mxu0 %v2736
      %2794 = vmatpush1.bf16.msra.mxu0 %v2733
      %2795 = vmatprep.subr.bf16.mxu0 0
      %2796 = vmatpush1.bf16.msra.mxu0 0
      %2797 = vmatprep.subr.bf16.mxu0 0
      %2798 = vmatpush1.bf16.msra.mxu0 0
      %2799 = vmatprep.subr.bf16.mxu0 0
      %2800 = vmatpush1.bf16.msra.mxu0 0
      %2801 = vmatprep.subr.bf16.mxu0 0
      %2802 = vmatpush1.bf16.msra.mxu0 0
      %2803 = vmatprep.subr.bf16.mxu0 0
      %2804 = vmatpush1.bf16.msra.mxu0 0
      %2805 = vmatprep.subr.bf16.mxu0 0
      %2806 = vmatpush1.bf16.msra.mxu0 0
      %2807 = vmatprep.subr.bf16.mxu0 0
      %2808 = vmatpush1.bf16.msra.mxu0 0
      %2809 = vmatprep.subr.bf16.mxu0 0
      %2810 = vmatpush1.bf16.msra.mxu0 0
      %2811 = vmatprep.subr.bf16.mxu0 0
      %2812 = vmatpush1.bf16.msra.mxu0 0
      %2813 = vmatprep.subr.bf16.mxu0 0
      %2814 = vmatpush1.bf16.msra.mxu0 0
      %2815 = vmatprep.subr.bf16.mxu0 0
      %2816 = vmatpush1.bf16.msra.mxu0 0
      %2817 = vmatprep.mubr.bf16.mxu0 0
      %2818 = vmatmul.mubr.bf16.gmra.mrb[0].mxu0 %v1231
      %v2819 = vpop.f32.mrb[0].mxu0
      %v2820 = vadd.f32 0.0, %v2819
      %v2821 = vpop.f32.mrb[0].mxu0
      %v2822 = vadd.f32 0.0, %v2821
      %v2823 = vpop.f32.mrb[0].mxu0
      %v2824 = vpop.f32.mrb[0].mxu0
      %2825 = vdwg.mxu0
      %v2826 = vadd.f32 %v2783, %v2820
      %v2827 = vadd.f32 %v2784, %v2822
      %2828 = vst [vmem:[%s2330] sm:$0xff] %v2826
      %2829 = vst [vmem:[%s2330 + $0x8] sm:$0xff] %v2827
      %v2830 = vld [vmem:[%s1931] sm:$0xff]
      %v2831 = vld [vmem:[%s1931 + $0x8] sm:$0xff]
      %2832 = vmatprep.subr.bf16.mxu0 %v2720
      %2833 = vmatpush1.bf16.msra.mxu0 %v2719
      %2834 = vmatprep.subr.bf16.mxu0 %v2722
      %2835 = vmatpush1.bf16.msra.mxu0 %v2721
      %2836 = vmatprep.subr.bf16.mxu0 %v2724
      %2837 = vmatpush1.bf16.msra.mxu0 %v2723
      %2838 = vmatprep.subr.bf16.mxu0 %v2726
      %2839 = vmatpush1.bf16.msra.mxu0 %v2725
      %2840 = vmatprep.subr.bf16.mxu0 %v2736
      %2841 = vmatpush1.bf16.msra.mxu0 %v2733
      %2842 = vmatprep.subr.bf16.mxu0 0
      %2843 = vmatpush1.bf16.msra.mxu0 0
      %2844 = vmatprep.subr.bf16.mxu0 0
      %2845 = vmatpush1.bf16.msra.mxu0 0
      %2846 = vmatprep.subr.bf16.mxu0 0
      %2847 = vmatpush1.bf16.msra.mxu0 0
      %2848 = vmatprep.subr.bf16.mxu0 0
      %2849 = vmatpush1.bf16.msra.mxu0 0
      %2850 = vmatprep.subr.bf16.mxu0 0
      %2851 = vmatpush1.bf16.msra.mxu0 0
      %2852 = vmatprep.subr.bf16.mxu0 0
      %2853 = vmatpush1.bf16.msra.mxu0 0
      %2854 = vmatprep.subr.bf16.mxu0 0
      %2855 = vmatpush1.bf16.msra.mxu0 0
      %2856 = vmatprep.subr.bf16.mxu0 0
      %2857 = vmatpush1.bf16.msra.mxu0 0
      %2858 = vmatprep.subr.bf16.mxu0 0
      %2859 = vmatpush1.bf16.msra.mxu0 0
      %2860 = vmatprep.subr.bf16.mxu0 0
      %2861 = vmatpush1.bf16.msra.mxu0 0
      %2862 = vmatprep.subr.bf16.mxu0 0
      %2863 = vmatpush1.bf16.msra.mxu0 0
      %2864 = vmatprep.mubr.bf16.mxu0 0
      %2865 = vmatmul.mubr.bf16.gmra.mrb[0].mxu0 %v1633
      %v2866 = vpop.f32.mrb[0].mxu0
      %v2867 = vadd.f32 0.0, %v2866
      %v2868 = vpop.f32.mrb[0].mxu0
      %v2869 = vadd.f32 0.0, %v2868
      %v2870 = vpop.f32.mrb[0].mxu0
      %v2871 = vpop.f32.mrb[0].mxu0
      %2872 = vdwg.mxu0
      %v2873 = vadd.f32 %v2830, %v2867
      %v2874 = vadd.f32 %v2831, %v2869
      %2875 = vst [vmem:[%s1931] sm:$0xff] %v2873
      %2876 = vst [vmem:[%s1931 + $0x8] sm:$0xff] %v2874
      %s2877 = scalar_lea.vmem %s481, 40
      %v2878 = vld [vmem:[%s2877] sm:$0xff]
      %v2880 = vcombine.high %v2878, %v2878
      %v2881 = vsel %vm905, %v2878, 0
      %v2883 = vsel %vm905, %v2880, 0
      %2885 = vmatprep.subr.mxu0 %v2883
      %2886 = vmatpush1.msra.mxu0 %v2881
      %2887 = vmatprep.subr.mxu0 0.0
      %2888 = vmatpush1.msra.mxu0 0.0
      %2889 = vmatprep.subr.mxu0 0.0
      %2890 = vmatpush1.msra.mxu0 0.0
      %2891 = vmatprep.subr.mxu0 0.0
      %2892 = vmatpush1.msra.mxu0 0.0
      %2893 = vmatprep.subr.mxu0 0.0
      %2894 = vmatpush1.msra.mxu0 0.0
      %2895 = vmatprep.subr.mxu0 0.0
      %2896 = vmatpush1.msra.mxu0 0.0
      %2897 = vmatprep.subr.mxu0 0.0
      %2898 = vmatpush1.msra.mxu0 0.0
      %2899 = vmatprep.subr.mxu0 0.0
      %2900 = vmatpush1.msra.mxu0 0.0
      %2901 = vmatprep.subr.mxu0 0.0
      %2902 = vmatpush1.msra.mxu0 0.0
      %2903 = vmatprep.subr.mxu0 0.0
      %2904 = vmatpush1.msra.mxu0 0.0
      %2905 = vmatprep.subr.mxu0 0.0
      %2906 = vmatpush1.msra.mxu0 0.0
      %2907 = vmatprep.subr.mxu0 0.0
      %2908 = vmatpush1.msra.mxu0 0.0
      %2909 = vmatprep.subr.mxu0 0.0
      %2910 = vmatpush1.msra.mxu0 0.0
      %2911 = vmatprep.subr.mxu0 0.0
      %2912 = vmatpush1.msra.mxu0 0.0
      %2913 = vmatprep.subr.mxu0 0.0
      %2914 = vmatpush1.msra.mxu0 0.0
      %2915 = vmatprep.subr.mxu0 0.0
      %2916 = vmatpush1.msra.mxu0 0.0
      %2917 = vmatprep.subr.mxu0 0.0
      %2918 = vmatpush1.msra.mxu0 0.0
      %2919 = vmatprep.subr.mxu0 0.0
      %2920 = vmatpush1.msra.mxu0 0.0
      %2921 = vmatprep.subr.mxu0 0.0
      %2922 = vmatpush1.msra.mxu0 0.0
      %2923 = vmatprep.subr.mxu0 0.0
      %2924 = vmatpush1.msra.mxu0 0.0
      %2925 = vmatprep.subr.mxu0 0.0
      %2926 = vmatpush1.msra.mxu0 0.0
      %2927 = vmatprep.subr.mxu0 0.0
      %2928 = vmatpush1.msra.mxu0 0.0
      %2929 = vmatprep.subr.mxu0 0.0
      %2930 = vmatpush1.msra.mxu0 0.0
      %2931 = vmatprep.subr.mxu0 0.0
      %2932 = vmatpush1.msra.mxu0 0.0
      %2933 = vmatprep.subr.mxu0 0.0
      %2934 = vmatpush1.msra.mxu0 0.0
      %2935 = vmatprep.subr.mxu0 0.0
      %2936 = vmatpush1.msra.mxu0 0.0
      %2937 = vmatprep.subr.mxu0 0.0
      %2938 = vmatpush1.msra.mxu0 0.0
      %2939 = vmatprep.subr.mxu0 0.0
      %2940 = vmatpush1.msra.mxu0 0.0
      %2941 = vmatprep.subr.mxu0 0.0
      %2942 = vmatpush1.msra.mxu0 0.0
      %2943 = vmatprep.subr.mxu0 0.0
      %2944 = vmatpush1.msra.mxu0 0.0
      %2945 = vmatprep.subr.mxu0 0.0
      %2946 = vmatpush1.msra.mxu0 0.0
      %2947 = vmatprep.subr.mxu0 0.0
      %2948 = vmatpush1.msra.mxu0 0.0
      %2949 = vmatprep.mubr.f32.mxu0 0.0
      %2950 = vmatmul.mubr.f32.gmra.mrb[0].mxu0 %v903
      %v2951 = vpop.f32.mrb[0].mxu0
      %v2952 = vadd.f32 %v897, %v2951
      %v2953 = vpop.f32.mrb[0].mxu0
      %v2954 = vadd.f32 %v897, %v2953
      %2955 = vdwg.mxu0
      %v2956 = vmax.f32 %v2952, 0.0
      %v2957 = vmax.f32 %v2954, 0.0
      %2958 = vrot.lane.b32.xlu0 %v2956, 17
      %v2959 = vpop.permute.xlu0 %2958
      %2960 = vrot.lane.b32.xlu0 %v2957, 17
      %v2961 = vpop.permute.xlu0 %2960
      %v2962 = vsel %vm989, %v2959, %v2961
      %v2963 = vsel %vm989, %v2961, %v2959
      %v2964 = vld [vmem:[%s3] sm:$0x3]
      %v2966 = vlaneseq
      %v2967 = vshrl.u32 %v2966, 7
      %v2968 = vsub.s32 0, %v2967
      %v2969 = vrot.slane %v2964, %v2968
      %v2970 = vlaneseq
      %v2971 = vshrl.u32 %v2970, 7
      %v2972 = vsub.s32 1, %v2971
      %v2973 = vrot.slane %v2964, %v2972
      %v2976 = vmul.f32 %v2963, %v2969
      %v2977 = vmul.f32 %v2962, %v2973
      %2978 = vrot.lane.b32.xlu0 %v2956, 16
      %v2979 = vpop.permute.xlu0 %2978
      %2980 = vrot.lane.b32.xlu0 %v2957, 16
      %v2981 = vpop.permute.xlu0 %2980
      %v2982 = vsel %vm1010, %v2979, %v2981
      %v2983 = vsel %vm1010, %v2981, %v2979
      %v2984 = vld [vmem:[%s1013] sm:$0x3]
      %v2986 = vlaneseq
      %v2987 = vshrl.u32 %v2986, 7
      %v2988 = vsub.s32 0, %v2987
      %v2989 = vrot.slane %v2984, %v2988
      %v2990 = vlaneseq
      %v2991 = vshrl.u32 %v2990, 7
      %v2992 = vsub.s32 1, %v2991
      %v2993 = vrot.slane %v2984, %v2992
      %v2996 = vmul.f32 %v2983, %v2989
      %v2997 = vmul.f32 %v2982, %v2993
      %2998 = vrot.lane.b32.xlu0 %v2956, 15
      %v2999 = vpop.permute.xlu0 %2998
      %3000 = vrot.lane.b32.xlu0 %v2957, 15
      %v3001 = vpop.permute.xlu0 %3000
      %v3002 = vsel %vm1032, %v2999, %v3001
      %v3003 = vsel %vm1032, %v3001, %v2999
      %v3004 = vld [vmem:[%s1035] sm:$0x3]
      %v3006 = vlaneseq
      %v3007 = vshrl.u32 %v3006, 7
      %v3008 = vsub.s32 0, %v3007
      %v3009 = vrot.slane %v3004, %v3008
      %v3010 = vlaneseq
      %v3011 = vshrl.u32 %v3010, 7
      %v3012 = vsub.s32 1, %v3011
      %v3013 = vrot.slane %v3004, %v3012
      %v3016 = vmul.f32 %v3003, %v3009
      %v3017 = vmul.f32 %v3002, %v3013
      %3018 = vrot.lane.b32.xlu0 %v2956, 1
      %v3019 = vpop.permute.xlu0 %3018
      %3020 = vrot.lane.b32.xlu0 %v2957, 1
      %v3021 = vpop.permute.xlu0 %3020
      %v3022 = vsel %vm1054, %v3019, %v3021
      %v3023 = vsel %vm1054, %v3021, %v3019
      %v3024 = vld [vmem:[%s1057] sm:$0x3]
      %v3026 = vlaneseq
      %v3027 = vshrl.u32 %v3026, 7
      %v3028 = vsub.s32 0, %v3027
      %v3029 = vrot.slane %v3024, %v3028
      %v3030 = vlaneseq
      %v3031 = vshrl.u32 %v3030, 7
      %v3032 = vsub.s32 1, %v3031
      %v3033 = vrot.slane %v3024, %v3032
      %v3036 = vmul.f32 %v3023, %v3029
      %v3037 = vmul.f32 %v3022, %v3033
      %3038 = vrot.lane.b32.xlu0 %v2956, 127
      %v3039 = vpop.permute.xlu0 %3038
      %3040 = vrot.lane.b32.xlu0 %v2957, 127
      %v3041 = vpop.permute.xlu0 %3040
      %v3042 = vsel %vm1076, %v3039, %v3041
      %v3043 = vsel %vm1076, %v3041, %v3039
      %v3044 = vld [vmem:[%s1079] sm:$0x3]
      %v3046 = vlaneseq
      %v3047 = vshrl.u32 %v3046, 7
      %v3048 = vsub.s32 0, %v3047
      %v3049 = vrot.slane %v3044, %v3048
      %v3050 = vlaneseq
      %v3051 = vshrl.u32 %v3050, 7
      %v3052 = vsub.s32 1, %v3051
      %v3053 = vrot.slane %v3044, %v3052
      %v3056 = vmul.f32 %v3042, %v3049
      %v3057 = vmul.f32 %v3043, %v3053
      %3058 = vrot.lane.b32.xlu0 %v2956, 113
      %v3059 = vpop.permute.xlu0 %3058
      %3060 = vrot.lane.b32.xlu0 %v2957, 113
      %v3061 = vpop.permute.xlu0 %3060
      %v3062 = vsel %vm1098, %v3059, %v3061
      %v3063 = vsel %vm1098, %v3061, %v3059
      %v3064 = vld [vmem:[%s1101] sm:$0x3]
      %v3066 = vlaneseq
      %v3067 = vshrl.u32 %v3066, 7
      %v3068 = vsub.s32 0, %v3067
      %v3069 = vrot.slane %v3064, %v3068
      %v3070 = vlaneseq
      %v3071 = vshrl.u32 %v3070, 7
      %v3072 = vsub.s32 1, %v3071
      %v3073 = vrot.slane %v3064, %v3072
      %v3076 = vmul.f32 %v3062, %v3069
      %v3077 = vmul.f32 %v3063, %v3073
      %3078 = vrot.lane.b32.xlu0 %v2956, 112
      %v3079 = vpop.permute.xlu0 %3078
      %3080 = vrot.lane.b32.xlu0 %v2957, 112
      %v3081 = vpop.permute.xlu0 %3080
      %v3082 = vsel %vm1120, %v3079, %v3081
      %v3083 = vsel %vm1120, %v3081, %v3079
      %v3084 = vld [vmem:[%s1123] sm:$0x3]
      %v3086 = vlaneseq
      %v3087 = vshrl.u32 %v3086, 7
      %v3088 = vsub.s32 0, %v3087
      %v3089 = vrot.slane %v3084, %v3088
      %v3090 = vlaneseq
      %v3091 = vshrl.u32 %v3090, 7
      %v3092 = vsub.s32 1, %v3091
      %v3093 = vrot.slane %v3084, %v3092
      %v3096 = vmul.f32 %v3082, %v3089
      %v3097 = vmul.f32 %v3083, %v3093
      %3098 = vrot.lane.b32.xlu0 %v2956, 111
      %v3099 = vpop.permute.xlu0 %3098
      %3100 = vrot.lane.b32.xlu0 %v2957, 111
      %v3101 = vpop.permute.xlu0 %3100
      %v3102 = vsel %vm1142, %v3099, %v3101
      %v3103 = vsel %vm1142, %v3101, %v3099
      %v3104 = vld [vmem:[%s1145] sm:$0x3]
      %v3106 = vlaneseq
      %v3107 = vshrl.u32 %v3106, 7
      %v3108 = vsub.s32 0, %v3107
      %v3109 = vrot.slane %v3104, %v3108
      %v3110 = vlaneseq
      %v3111 = vshrl.u32 %v3110, 7
      %v3112 = vsub.s32 1, %v3111
      %v3113 = vrot.slane %v3104, %v3112
      %v3116 = vmul.f32 %v3102, %v3109
      %v3117 = vmul.f32 %v3103, %v3113
      %v3118 = vpack.c.bf16 %v2996, %v2976
      %v3119 = vpack.c.bf16 %v2997, %v2977
      %v3120 = vpack.c.bf16 %v3036, %v3016
      %v3121 = vpack.c.bf16 %v3037, %v3017
      %v3122 = vpack.c.bf16 %v3056, %v2956
      %v3123 = vpack.c.bf16 %v3057, %v2957
      %v3124 = vpack.c.bf16 %v3096, %v3076
      %v3125 = vpack.c.bf16 %v3097, %v3077
      %v3126 = vpack.c.bf16 %v3116, %v3116
      %v3127 = vpack.c.bf16 %v3117, %v3117
      %s3128 = scalar_lea.vmem [#allocation2], 96
      %v3129 = vld [vmem:[%s3128] sm:$0xff]
      %v3130 = vld [vmem:[%s3128 + $0x8] sm:$0xff]
      %v3132 = vsel %vm905, %v3126, 0
      %v3135 = vsel %vm905, %v3127, 0
      %3137 = vmatprep.subr.bf16.mxu0 %v3119
      %3138 = vmatpush1.bf16.msra.mxu0 %v3118
      %3139 = vmatprep.subr.bf16.mxu0 %v3121
      %3140 = vmatpush1.bf16.msra.mxu0 %v3120
      %3141 = vmatprep.subr.bf16.mxu0 %v3123
      %3142 = vmatpush1.bf16.msra.mxu0 %v3122
      %3143 = vmatprep.subr.bf16.mxu0 %v3125
      %3144 = vmatpush1.bf16.msra.mxu0 %v3124
      %3145 = vmatprep.subr.bf16.mxu0 %v3135
      %3146 = vmatpush1.bf16.msra.mxu0 %v3132
      %3147 = vmatprep.subr.bf16.mxu0 0
      %3148 = vmatpush1.bf16.msra.mxu0 0
      %3149 = vmatprep.subr.bf16.mxu0 0
      %3150 = vmatpush1.bf16.msra.mxu0 0
      %3151 = vmatprep.subr.bf16.mxu0 0
      %3152 = vmatpush1.bf16.msra.mxu0 0
      %3153 = vmatprep.subr.bf16.mxu0 0
      %3154 = vmatpush1.bf16.msra.mxu0 0
      %3155 = vmatprep.subr.bf16.mxu0 0
      %3156 = vmatpush1.bf16.msra.mxu0 0
      %3157 = vmatprep.subr.bf16.mxu0 0
      %3158 = vmatpush1.bf16.msra.mxu0 0
      %3159 = vmatprep.subr.bf16.mxu0 0
      %3160 = vmatpush1.bf16.msra.mxu0 0
      %3161 = vmatprep.subr.bf16.mxu0 0
      %3162 = vmatpush1.bf16.msra.mxu0 0
      %3163 = vmatprep.subr.bf16.mxu0 0
      %3164 = vmatpush1.bf16.msra.mxu0 0
      %3165 = vmatprep.subr.bf16.mxu0 0
      %3166 = vmatpush1.bf16.msra.mxu0 0
      %3167 = vmatprep.subr.bf16.mxu0 0
      %3168 = vmatpush1.bf16.msra.mxu0 0
      %3169 = vmatprep.mubr.bf16.mxu0 0
      %3170 = vmatmul.mubr.bf16.gmra.mrb[0].mxu0 %v1175
      %v3171 = vpop.f32.mrb[0].mxu0
      %v3172 = vadd.f32 0.0, %v3171
      %v3173 = vpop.f32.mrb[0].mxu0
      %v3174 = vadd.f32 0.0, %v3173
      %v3175 = vpop.f32.mrb[0].mxu0
      %v3176 = vpop.f32.mrb[0].mxu0
      %3177 = vdwg.mxu0
      %v3178 = vadd.f32 %v3129, %v3172
      %v3179 = vadd.f32 %v3130, %v3174
      %3180 = vst [vmem:[%s3128] sm:$0xff] %v3178
      %3181 = vst [vmem:[%s3128 + $0x8] sm:$0xff] %v3179
      %v3182 = vld [vmem:[%s2729] sm:$0xff]
      %v3183 = vld [vmem:[%s2729 + $0x8] sm:$0xff]
      %3184 = vmatprep.subr.bf16.mxu0 %v3119
      %3185 = vmatpush1.bf16.msra.mxu0 %v3118
      %3186 = vmatprep.subr.bf16.mxu0 %v3121
      %3187 = vmatpush1.bf16.msra.mxu0 %v3120
      %3188 = vmatprep.subr.bf16.mxu0 %v3123
      %3189 = vmatpush1.bf16.msra.mxu0 %v3122
      %3190 = vmatprep.subr.bf16.mxu0 %v3125
      %3191 = vmatpush1.bf16.msra.mxu0 %v3124
      %3192 = vmatprep.subr.bf16.mxu0 %v3135
      %3193 = vmatpush1.bf16.msra.mxu0 %v3132
      %3194 = vmatprep.subr.bf16.mxu0 0
      %3195 = vmatpush1.bf16.msra.mxu0 0
      %3196 = vmatprep.subr.bf16.mxu0 0
      %3197 = vmatpush1.bf16.msra.mxu0 0
      %3198 = vmatprep.subr.bf16.mxu0 0
      %3199 = vmatpush1.bf16.msra.mxu0 0
      %3200 = vmatprep.subr.bf16.mxu0 0
      %3201 = vmatpush1.bf16.msra.mxu0 0
      %3202 = vmatprep.subr.bf16.mxu0 0
      %3203 = vmatpush1.bf16.msra.mxu0 0
      %3204 = vmatprep.subr.bf16.mxu0 0
      %3205 = vmatpush1.bf16.msra.mxu0 0
      %3206 = vmatprep.subr.bf16.mxu0 0
      %3207 = vmatpush1.bf16.msra.mxu0 0
      %3208 = vmatprep.subr.bf16.mxu0 0
      %3209 = vmatpush1.bf16.msra.mxu0 0
      %3210 = vmatprep.subr.bf16.mxu0 0
      %3211 = vmatpush1.bf16.msra.mxu0 0
      %3212 = vmatprep.subr.bf16.mxu0 0
      %3213 = vmatpush1.bf16.msra.mxu0 0
      %3214 = vmatprep.subr.bf16.mxu0 0
      %3215 = vmatpush1.bf16.msra.mxu0 0
      %3216 = vmatprep.mubr.bf16.mxu0 0
      %3217 = vmatmul.mubr.bf16.gmra.mrb[0].mxu0 %v1231
      %v3218 = vpop.f32.mrb[0].mxu0
      %v3219 = vadd.f32 0.0, %v3218
      %v3220 = vpop.f32.mrb[0].mxu0
      %v3221 = vadd.f32 0.0, %v3220
      %v3222 = vpop.f32.mrb[0].mxu0
      %v3223 = vpop.f32.mrb[0].mxu0
      %3224 = vdwg.mxu0
      %v3225 = vadd.f32 %v3182, %v3219
      %v3226 = vadd.f32 %v3183, %v3221
      %3227 = vst [vmem:[%s2729] sm:$0xff] %v3225
      %3228 = vst [vmem:[%s2729 + $0x8] sm:$0xff] %v3226
      %v3229 = vld [vmem:[%s2330] sm:$0xff]
      %v3230 = vld [vmem:[%s2330 + $0x8] sm:$0xff]
      %3231 = vmatprep.subr.bf16.mxu0 %v3119
      %3232 = vmatpush1.bf16.msra.mxu0 %v3118
      %3233 = vmatprep.subr.bf16.mxu0 %v3121
      %3234 = vmatpush1.bf16.msra.mxu0 %v3120
      %3235 = vmatprep.subr.bf16.mxu0 %v3123
      %3236 = vmatpush1.bf16.msra.mxu0 %v3122
      %3237 = vmatprep.subr.bf16.mxu0 %v3125
      %3238 = vmatpush1.bf16.msra.mxu0 %v3124
      %3239 = vmatprep.subr.bf16.mxu0 %v3135
      %3240 = vmatpush1.bf16.msra.mxu0 %v3132
      %3241 = vmatprep.subr.bf16.mxu0 0
      %3242 = vmatpush1.bf16.msra.mxu0 0
      %3243 = vmatprep.subr.bf16.mxu0 0
      %3244 = vmatpush1.bf16.msra.mxu0 0
      %3245 = vmatprep.subr.bf16.mxu0 0
      %3246 = vmatpush1.bf16.msra.mxu0 0
      %3247 = vmatprep.subr.bf16.mxu0 0
      %3248 = vmatpush1.bf16.msra.mxu0 0
      %3249 = vmatprep.subr.bf16.mxu0 0
      %3250 = vmatpush1.bf16.msra.mxu0 0
      %3251 = vmatprep.subr.bf16.mxu0 0
      %3252 = vmatpush1.bf16.msra.mxu0 0
      %3253 = vmatprep.subr.bf16.mxu0 0
      %3254 = vmatpush1.bf16.msra.mxu0 0
      %3255 = vmatprep.subr.bf16.mxu0 0
      %3256 = vmatpush1.bf16.msra.mxu0 0
      %3257 = vmatprep.subr.bf16.mxu0 0
      %3258 = vmatpush1.bf16.msra.mxu0 0
      %3259 = vmatprep.subr.bf16.mxu0 0
      %3260 = vmatpush1.bf16.msra.mxu0 0
      %3261 = vmatprep.subr.bf16.mxu0 0
      %3262 = vmatpush1.bf16.msra.mxu0 0
      %3263 = vmatprep.mubr.bf16.mxu0 0
      %3264 = vmatmul.mubr.bf16.gmra.mrb[0].mxu0 %v1633
      %v3265 = vpop.f32.mrb[0].mxu0
      %v3266 = vadd.f32 0.0, %v3265
      %v3267 = vpop.f32.mrb[0].mxu0
      %v3268 = vadd.f32 0.0, %v3267
      %v3269 = vpop.f32.mrb[0].mxu0
      %v3270 = vpop.f32.mrb[0].mxu0
      %3271 = vdwg.mxu0
      %v3272 = vadd.f32 %v3229, %v3266
      %v3273 = vadd.f32 %v3230, %v3268
      %3274 = vst [vmem:[%s2330] sm:$0xff] %v3272
      %3275 = vst [vmem:[%s2330 + $0x8] sm:$0xff] %v3273
      %s3276 = scalar_lea.vmem %s481, 48
      %v3277 = vld [vmem:[%s3276] sm:$0xff]
      %v3279 = vcombine.high %v3277, %v3277
      %v3280 = vsel %vm905, %v3277, 0
      %v3282 = vsel %vm905, %v3279, 0
      %3284 = vmatprep.subr.mxu0 %v3282
      %3285 = vmatpush1.msra.mxu0 %v3280
      %3286 = vmatprep.subr.mxu0 0.0
      %3287 = vmatpush1.msra.mxu0 0.0
      %3288 = vmatprep.subr.mxu0 0.0
      %3289 = vmatpush1.msra.mxu0 0.0
      %3290 = vmatprep.subr.mxu0 0.0
      %3291 = vmatpush1.msra.mxu0 0.0
      %3292 = vmatprep.subr.mxu0 0.0
      %3293 = vmatpush1.msra.mxu0 0.0
      %3294 = vmatprep.subr.mxu0 0.0
      %3295 = vmatpush1.msra.mxu0 0.0
      %3296 = vmatprep.subr.mxu0 0.0
      %3297 = vmatpush1.msra.mxu0 0.0
      %3298 = vmatprep.subr.mxu0 0.0
      %3299 = vmatpush1.msra.mxu0 0.0
      %3300 = vmatprep.subr.mxu0 0.0
      %3301 = vmatpush1.msra.mxu0 0.0
      %3302 = vmatprep.subr.mxu0 0.0
      %3303 = vmatpush1.msra.mxu0 0.0
      %3304 = vmatprep.subr.mxu0 0.0
      %3305 = vmatpush1.msra.mxu0 0.0
      %3306 = vmatprep.subr.mxu0 0.0
      %3307 = vmatpush1.msra.mxu0 0.0
      %3308 = vmatprep.subr.mxu0 0.0
      %3309 = vmatpush1.msra.mxu0 0.0
      %3310 = vmatprep.subr.mxu0 0.0
      %3311 = vmatpush1.msra.mxu0 0.0
      %3312 = vmatprep.subr.mxu0 0.0
      %3313 = vmatpush1.msra.mxu0 0.0
      %3314 = vmatprep.subr.mxu0 0.0
      %3315 = vmatpush1.msra.mxu0 0.0
      %3316 = vmatprep.subr.mxu0 0.0
      %3317 = vmatpush1.msra.mxu0 0.0
      %3318 = vmatprep.subr.mxu0 0.0
      %3319 = vmatpush1.msra.mxu0 0.0
      %3320 = vmatprep.subr.mxu0 0.0
      %3321 = vmatpush1.msra.mxu0 0.0
      %3322 = vmatprep.subr.mxu0 0.0
      %3323 = vmatpush1.msra.mxu0 0.0
      %3324 = vmatprep.subr.mxu0 0.0
      %3325 = vmatpush1.msra.mxu0 0.0
      %3326 = vmatprep.subr.mxu0 0.0
      %3327 = vmatpush1.msra.mxu0 0.0
      %3328 = vmatprep.subr.mxu0 0.0
      %3329 = vmatpush1.msra.mxu0 0.0
      %3330 = vmatprep.subr.mxu0 0.0
      %3331 = vmatpush1.msra.mxu0 0.0
      %3332 = vmatprep.subr.mxu0 0.0
      %3333 = vmatpush1.msra.mxu0 0.0
      %3334 = vmatprep.subr.mxu0 0.0
      %3335 = vmatpush1.msra.mxu0 0.0
      %3336 = vmatprep.subr.mxu0 0.0
      %3337 = vmatpush1.msra.mxu0 0.0
      %3338 = vmatprep.subr.mxu0 0.0
      %3339 = vmatpush1.msra.mxu0 0.0
      %3340 = vmatprep.subr.mxu0 0.0
      %3341 = vmatpush1.msra.mxu0 0.0
      %3342 = vmatprep.subr.mxu0 0.0
      %3343 = vmatpush1.msra.mxu0 0.0
      %3344 = vmatprep.subr.mxu0 0.0
      %3345 = vmatpush1.msra.mxu0 0.0
      %3346 = vmatprep.subr.mxu0 0.0
      %3347 = vmatpush1.msra.mxu0 0.0
      %3348 = vmatprep.mubr.f32.mxu0 0.0
      %3349 = vmatmul.mubr.f32.gmra.mrb[0].mxu0 %v903
      %v3350 = vpop.f32.mrb[0].mxu0
      %v3351 = vadd.f32 %v897, %v3350
      %v3352 = vpop.f32.mrb[0].mxu0
      %v3353 = vadd.f32 %v897, %v3352
      %3354 = vdwg.mxu0
      %v3355 = vmax.f32 %v3351, 0.0
      %v3356 = vmax.f32 %v3353, 0.0
      %3357 = vrot.lane.b32.xlu0 %v3355, 17
      %v3358 = vpop.permute.xlu0 %3357
      %3359 = vrot.lane.b32.xlu0 %v3356, 17
      %v3360 = vpop.permute.xlu0 %3359
      %v3361 = vsel %vm989, %v3358, %v3360
      %v3362 = vsel %vm989, %v3360, %v3358
      %v3363 = vld [vmem:[%s3] sm:$0x3]
      %v3365 = vlaneseq
      %v3366 = vshrl.u32 %v3365, 7
      %v3367 = vsub.s32 0, %v3366
      %v3368 = vrot.slane %v3363, %v3367
      %v3369 = vlaneseq
      %v3370 = vshrl.u32 %v3369, 7
      %v3371 = vsub.s32 1, %v3370
      %v3372 = vrot.slane %v3363, %v3371
      %v3375 = vmul.f32 %v3362, %v3368
      %v3376 = vmul.f32 %v3361, %v3372
      %3377 = vrot.lane.b32.xlu0 %v3355, 16
      %v3378 = vpop.permute.xlu0 %3377
      %3379 = vrot.lane.b32.xlu0 %v3356, 16
      %v3380 = vpop.permute.xlu0 %3379
      %v3381 = vsel %vm1010, %v3378, %v3380
      %v3382 = vsel %vm1010, %v3380, %v3378
      %v3383 = vld [vmem:[%s1013] sm:$0x3]
      %v3385 = vlaneseq
      %v3386 = vshrl.u32 %v3385, 7
      %v3387 = vsub.s32 0, %v3386
      %v3388 = vrot.slane %v3383, %v3387
      %v3389 = vlaneseq
      %v3390 = vshrl.u32 %v3389, 7
      %v3391 = vsub.s32 1, %v3390
      %v3392 = vrot.slane %v3383, %v3391
      %v3395 = vmul.f32 %v3382, %v3388
      %v3396 = vmul.f32 %v3381, %v3392
      %3397 = vrot.lane.b32.xlu0 %v3355, 15
      %v3398 = vpop.permute.xlu0 %3397
      %3399 = vrot.lane.b32.xlu0 %v3356, 15
      %v3400 = vpop.permute.xlu0 %3399
      %v3401 = vsel %vm1032, %v3398, %v3400
      %v3402 = vsel %vm1032, %v3400, %v3398
      %v3403 = vld [vmem:[%s1035] sm:$0x3]
      %v3405 = vlaneseq
      %v3406 = vshrl.u32 %v3405, 7
      %v3407 = vsub.s32 0, %v3406
      %v3408 = vrot.slane %v3403, %v3407
      %v3409 = vlaneseq
      %v3410 = vshrl.u32 %v3409, 7
      %v3411 = vsub.s32 1, %v3410
      %v3412 = vrot.slane %v3403, %v3411
      %v3415 = vmul.f32 %v3402, %v3408
      %v3416 = vmul.f32 %v3401, %v3412
      %3417 = vrot.lane.b32.xlu0 %v3355, 1
      %v3418 = vpop.permute.xlu0 %3417
      %3419 = vrot.lane.b32.xlu0 %v3356, 1
      %v3420 = vpop.permute.xlu0 %3419
      %v3421 = vsel %vm1054, %v3418, %v3420
      %v3422 = vsel %vm1054, %v3420, %v3418
      %v3423 = vld [vmem:[%s1057] sm:$0x3]
      %v3425 = vlaneseq
      %v3426 = vshrl.u32 %v3425, 7
      %v3427 = vsub.s32 0, %v3426
      %v3428 = vrot.slane %v3423, %v3427
      %v3429 = vlaneseq
      %v3430 = vshrl.u32 %v3429, 7
      %v3431 = vsub.s32 1, %v3430
      %v3432 = vrot.slane %v3423, %v3431
      %v3435 = vmul.f32 %v3422, %v3428
      %v3436 = vmul.f32 %v3421, %v3432
      %3437 = vrot.lane.b32.xlu0 %v3355, 127
      %v3438 = vpop.permute.xlu0 %3437
      %3439 = vrot.lane.b32.xlu0 %v3356, 127
      %v3440 = vpop.permute.xlu0 %3439
      %v3441 = vsel %vm1076, %v3438, %v3440
      %v3442 = vsel %vm1076, %v3440, %v3438
      %v3443 = vld [vmem:[%s1079] sm:$0x3]
      %v3445 = vlaneseq
      %v3446 = vshrl.u32 %v3445, 7
      %v3447 = vsub.s32 0, %v3446
      %v3448 = vrot.slane %v3443, %v3447
      %v3449 = vlaneseq
      %v3450 = vshrl.u32 %v3449, 7
      %v3451 = vsub.s32 1, %v3450
      %v3452 = vrot.slane %v3443, %v3451
      %v3455 = vmul.f32 %v3441, %v3448
      %v3456 = vmul.f32 %v3442, %v3452
      %3457 = vrot.lane.b32.xlu0 %v3355, 113
      %v3458 = vpop.permute.xlu0 %3457
      %3459 = vrot.lane.b32.xlu0 %v3356, 113
      %v3460 = vpop.permute.xlu0 %3459
      %v3461 = vsel %vm1098, %v3458, %v3460
      %v3462 = vsel %vm1098, %v3460, %v3458
      %v3463 = vld [vmem:[%s1101] sm:$0x3]
      %v3465 = vlaneseq
      %v3466 = vshrl.u32 %v3465, 7
      %v3467 = vsub.s32 0, %v3466
      %v3468 = vrot.slane %v3463, %v3467
      %v3469 = vlaneseq
      %v3470 = vshrl.u32 %v3469, 7
      %v3471 = vsub.s32 1, %v3470
      %v3472 = vrot.slane %v3463, %v3471
      %v3475 = vmul.f32 %v3461, %v3468
      %v3476 = vmul.f32 %v3462, %v3472
      %3477 = vrot.lane.b32.xlu0 %v3355, 112
      %v3478 = vpop.permute.xlu0 %3477
      %3479 = vrot.lane.b32.xlu0 %v3356, 112
      %v3480 = vpop.permute.xlu0 %3479
      %v3481 = vsel %vm1120, %v3478, %v3480
      %v3482 = vsel %vm1120, %v3480, %v3478
      %v3483 = vld [vmem:[%s1123] sm:$0x3]
      %v3485 = vlaneseq
      %v3486 = vshrl.u32 %v3485, 7
      %v3487 = vsub.s32 0, %v3486
      %v3488 = vrot.slane %v3483, %v3487
      %v3489 = vlaneseq
      %v3490 = vshrl.u32 %v3489, 7
      %v3491 = vsub.s32 1, %v3490
      %v3492 = vrot.slane %v3483, %v3491
      %v3495 = vmul.f32 %v3481, %v3488
      %v3496 = vmul.f32 %v3482, %v3492
      %3497 = vrot.lane.b32.xlu0 %v3355, 111
      %v3498 = vpop.permute.xlu0 %3497
      %3499 = vrot.lane.b32.xlu0 %v3356, 111
      %v3500 = vpop.permute.xlu0 %3499
      %v3501 = vsel %vm1142, %v3498, %v3500
      %v3502 = vsel %vm1142, %v3500, %v3498
      %v3503 = vld [vmem:[%s1145] sm:$0x3]
      %v3505 = vlaneseq
      %v3506 = vshrl.u32 %v3505, 7
      %v3507 = vsub.s32 0, %v3506
      %v3508 = vrot.slane %v3503, %v3507
      %v3509 = vlaneseq
      %v3510 = vshrl.u32 %v3509, 7
      %v3511 = vsub.s32 1, %v3510
      %v3512 = vrot.slane %v3503, %v3511
      %v3515 = vmul.f32 %v3501, %v3508
      %v3516 = vmul.f32 %v3502, %v3512
      %v3517 = vpack.c.bf16 %v3395, %v3375
      %v3518 = vpack.c.bf16 %v3396, %v3376
      %v3519 = vpack.c.bf16 %v3435, %v3415
      %v3520 = vpack.c.bf16 %v3436, %v3416
      %v3521 = vpack.c.bf16 %v3455, %v3355
      %v3522 = vpack.c.bf16 %v3456, %v3356
      %v3523 = vpack.c.bf16 %v3495, %v3475
      %v3524 = vpack.c.bf16 %v3496, %v3476
      %v3525 = vpack.c.bf16 %v3515, %v3515
      %v3526 = vpack.c.bf16 %v3516, %v3516
      %s3527 = scalar_lea.vmem [#allocation2], 112
      %v3528 = vld [vmem:[%s3527] sm:$0xff]
      %v3529 = vld [vmem:[%s3527 + $0x8] sm:$0xff]
      %v3531 = vsel %vm905, %v3525, 0
      %v3534 = vsel %vm905, %v3526, 0
      %3536 = vmatprep.subr.bf16.mxu0 %v3518
      %3537 = vmatpush1.bf16.msra.mxu0 %v3517
      %3538 = vmatprep.subr.bf16.mxu0 %v3520
      %3539 = vmatpush1.bf16.msra.mxu0 %v3519
      %3540 = vmatprep.subr.bf16.mxu0 %v3522
      %3541 = vmatpush1.bf16.msra.mxu0 %v3521
      %3542 = vmatprep.subr.bf16.mxu0 %v3524
      %3543 = vmatpush1.bf16.msra.mxu0 %v3523
      %3544 = vmatprep.subr.bf16.mxu0 %v3534
      %3545 = vmatpush1.bf16.msra.mxu0 %v3531
      %3546 = vmatprep.subr.bf16.mxu0 0
      %3547 = vmatpush1.bf16.msra.mxu0 0
      %3548 = vmatprep.subr.bf16.mxu0 0
      %3549 = vmatpush1.bf16.msra.mxu0 0
      %3550 = vmatprep.subr.bf16.mxu0 0
      %3551 = vmatpush1.bf16.msra.mxu0 0
      %3552 = vmatprep.subr.bf16.mxu0 0
      %3553 = vmatpush1.bf16.msra.mxu0 0
      %3554 = vmatprep.subr.bf16.mxu0 0
      %3555 = vmatpush1.bf16.msra.mxu0 0
      %3556 = vmatprep.subr.bf16.mxu0 0
      %3557 = vmatpush1.bf16.msra.mxu0 0
      %3558 = vmatprep.subr.bf16.mxu0 0
      %3559 = vmatpush1.bf16.msra.mxu0 0
      %3560 = vmatprep.subr.bf16.mxu0 0
      %3561 = vmatpush1.bf16.msra.mxu0 0
      %3562 = vmatprep.subr.bf16.mxu0 0
      %3563 = vmatpush1.bf16.msra.mxu0 0
      %3564 = vmatprep.subr.bf16.mxu0 0
      %3565 = vmatpush1.bf16.msra.mxu0 0
      %3566 = vmatprep.subr.bf16.mxu0 0
      %3567 = vmatpush1.bf16.msra.mxu0 0
      %3568 = vmatprep.mubr.bf16.mxu0 0
      %3569 = vmatmul.mubr.bf16.gmra.mrb[0].mxu0 %v1175
      %v3570 = vpop.f32.mrb[0].mxu0
      %v3571 = vadd.f32 0.0, %v3570
      %v3572 = vpop.f32.mrb[0].mxu0
      %v3573 = vadd.f32 0.0, %v3572
      %v3574 = vpop.f32.mrb[0].mxu0
      %v3575 = vpop.f32.mrb[0].mxu0
      %3576 = vdwg.mxu0
      %v3577 = vadd.f32 %v3528, %v3571
      %v3578 = vadd.f32 %v3529, %v3573
      %3579 = vst [vmem:[%s3527] sm:$0xff] %v3577
      %3580 = vst [vmem:[%s3527 + $0x8] sm:$0xff] %v3578
      %v3581 = vld [vmem:[%s3128] sm:$0xff]
      %v3582 = vld [vmem:[%s3128 + $0x8] sm:$0xff]
      %3583 = vmatprep.subr.bf16.mxu0 %v3518
      %3584 = vmatpush1.bf16.msra.mxu0 %v3517
      %3585 = vmatprep.subr.bf16.mxu0 %v3520
      %3586 = vmatpush1.bf16.msra.mxu0 %v3519
      %3587 = vmatprep.subr.bf16.mxu0 %v3522
      %3588 = vmatpush1.bf16.msra.mxu0 %v3521
      %3589 = vmatprep.subr.bf16.mxu0 %v3524
      %3590 = vmatpush1.bf16.msra.mxu0 %v3523
      %3591 = vmatprep.subr.bf16.mxu0 %v3534
      %3592 = vmatpush1.bf16.msra.mxu0 %v3531
      %3593 = vmatprep.subr.bf16.mxu0 0
      %3594 = vmatpush1.bf16.msra.mxu0 0
      %3595 = vmatprep.subr.bf16.mxu0 0
      %3596 = vmatpush1.bf16.msra.mxu0 0
      %3597 = vmatprep.subr.bf16.mxu0 0
      %3598 = vmatpush1.bf16.msra.mxu0 0
      %3599 = vmatprep.subr.bf16.mxu0 0
      %3600 = vmatpush1.bf16.msra.mxu0 0
      %3601 = vmatprep.subr.bf16.mxu0 0
      %3602 = vmatpush1.bf16.msra.mxu0 0
      %3603 = vmatprep.subr.bf16.mxu0 0
      %3604 = vmatpush1.bf16.msra.mxu0 0
      %3605 = vmatprep.subr.bf16.mxu0 0
      %3606 = vmatpush1.bf16.msra.mxu0 0
      %3607 = vmatprep.subr.bf16.mxu0 0
      %3608 = vmatpush1.bf16.msra.mxu0 0
      %3609 = vmatprep.subr.bf16.mxu0 0
      %3610 = vmatpush1.bf16.msra.mxu0 0
      %3611 = vmatprep.subr.bf16.mxu0 0
      %3612 = vmatpush1.bf16.msra.mxu0 0
      %3613 = vmatprep.subr.bf16.mxu0 0
      %3614 = vmatpush1.bf16.msra.mxu0 0
      %3615 = vmatprep.mubr.bf16.mxu0 0
      %3616 = vmatmul.mubr.bf16.gmra.mrb[0].mxu0 %v1231
      %v3617 = vpop.f32.mrb[0].mxu0
      %v3618 = vadd.f32 0.0, %v3617
      %v3619 = vpop.f32.mrb[0].mxu0
      %v3620 = vadd.f32 0.0, %v3619
      %v3621 = vpop.f32.mrb[0].mxu0
      %v3622 = vpop.f32.mrb[0].mxu0
      %3623 = vdwg.mxu0
      %v3624 = vadd.f32 %v3581, %v3618
      %v3625 = vadd.f32 %v3582, %v3620
      %3626 = vst [vmem:[%s3128] sm:$0xff] %v3624
      %3627 = vst [vmem:[%s3128 + $0x8] sm:$0xff] %v3625
      %v3628 = vld [vmem:[%s2729] sm:$0xff]
      %v3629 = vld [vmem:[%s2729 + $0x8] sm:$0xff]
      %3630 = vmatprep.subr.bf16.mxu0 %v3518
      %3631 = vmatpush1.bf16.msra.mxu0 %v3517
      %3632 = vmatprep.subr.bf16.mxu0 %v3520
      %3633 = vmatpush1.bf16.msra.mxu0 %v3519
      %3634 = vmatprep.subr.bf16.mxu0 %v3522
      %3635 = vmatpush1.bf16.msra.mxu0 %v3521
      %3636 = vmatprep.subr.bf16.mxu0 %v3524
      %3637 = vmatpush1.bf16.msra.mxu0 %v3523
      %3638 = vmatprep.subr.bf16.mxu0 %v3534
      %3639 = vmatpush1.bf16.msra.mxu0 %v3531
      %3640 = vmatprep.subr.bf16.mxu0 0
      %3641 = vmatpush1.bf16.msra.mxu0 0
      %3642 = vmatprep.subr.bf16.mxu0 0
      %3643 = vmatpush1.bf16.msra.mxu0 0
      %3644 = vmatprep.subr.bf16.mxu0 0
      %3645 = vmatpush1.bf16.msra.mxu0 0
      %3646 = vmatprep.subr.bf16.mxu0 0
      %3647 = vmatpush1.bf16.msra.mxu0 0
      %3648 = vmatprep.subr.bf16.mxu0 0
      %3649 = vmatpush1.bf16.msra.mxu0 0
      %3650 = vmatprep.subr.bf16.mxu0 0
      %3651 = vmatpush1.bf16.msra.mxu0 0
      %3652 = vmatprep.subr.bf16.mxu0 0
      %3653 = vmatpush1.bf16.msra.mxu0 0
      %3654 = vmatprep.subr.bf16.mxu0 0
      %3655 = vmatpush1.bf16.msra.mxu0 0
      %3656 = vmatprep.subr.bf16.mxu0 0
      %3657 = vmatpush1.bf16.msra.mxu0 0
      %3658 = vmatprep.subr.bf16.mxu0 0
      %3659 = vmatpush1.bf16.msra.mxu0 0
      %3660 = vmatprep.subr.bf16.mxu0 0
      %3661 = vmatpush1.bf16.msra.mxu0 0
      %3662 = vmatprep.mubr.bf16.mxu0 0
      %3663 = vmatmul.mubr.bf16.gmra.mrb[0].mxu0 %v1633
      %v3664 = vpop.f32.mrb[0].mxu0
      %v3665 = vadd.f32 0.0, %v3664
      %v3666 = vpop.f32.mrb[0].mxu0
      %v3667 = vadd.f32 0.0, %v3666
      %v3668 = vpop.f32.mrb[0].mxu0
      %v3669 = vpop.f32.mrb[0].mxu0
      %3670 = vdwg.mxu0
      %v3671 = vadd.f32 %v3628, %v3665
      %v3672 = vadd.f32 %v3629, %v3667
      %3673 = vst [vmem:[%s2729] sm:$0xff] %v3671
      %3674 = vst [vmem:[%s2729 + $0x8] sm:$0xff] %v3672
      %s3675 = scalar_lea.vmem %s481, 56
      %v3676 = vld [vmem:[%s3675] sm:$0xff]
      %v3678 = vcombine.high %v3676, %v3676
      %v3679 = vsel %vm905, %v3676, 0
      %v3681 = vsel %vm905, %v3678, 0
      %3683 = vmatprep.subr.mxu0 %v3681
      %3684 = vmatpush1.msra.mxu0 %v3679
      %3685 = vmatprep.subr.mxu0 0.0
      %3686 = vmatpush1.msra.mxu0 0.0
      %3687 = vmatprep.subr.mxu0 0.0
      %3688 = vmatpush1.msra.mxu0 0.0
      %3689 = vmatprep.subr.mxu0 0.0
      %3690 = vmatpush1.msra.mxu0 0.0
      %3691 = vmatprep.subr.mxu0 0.0
      %3692 = vmatpush1.msra.mxu0 0.0
      %3693 = vmatprep.subr.mxu0 0.0
      %3694 = vmatpush1.msra.mxu0 0.0
      %3695 = vmatprep.subr.mxu0 0.0
      %3696 = vmatpush1.msra.mxu0 0.0
      %3697 = vmatprep.subr.mxu0 0.0
      %3698 = vmatpush1.msra.mxu0 0.0
      %3699 = vmatprep.subr.mxu0 0.0
      %3700 = vmatpush1.msra.mxu0 0.0
      %3701 = vmatprep.subr.mxu0 0.0
      %3702 = vmatpush1.msra.mxu0 0.0
      %3703 = vmatprep.subr.mxu0 0.0
      %3704 = vmatpush1.msra.mxu0 0.0
      %3705 = vmatprep.subr.mxu0 0.0
      %3706 = vmatpush1.msra.mxu0 0.0
      %3707 = vmatprep.subr.mxu0 0.0
      %3708 = vmatpush1.msra.mxu0 0.0
      %3709 = vmatprep.subr.mxu0 0.0
      %3710 = vmatpush1.msra.mxu0 0.0
      %3711 = vmatprep.subr.mxu0 0.0
      %3712 = vmatpush1.msra.mxu0 0.0
      %3713 = vmatprep.subr.mxu0 0.0
      %3714 = vmatpush1.msra.mxu0 0.0
      %3715 = vmatprep.subr.mxu0 0.0
      %3716 = vmatpush1.msra.mxu0 0.0
      %3717 = vmatprep.subr.mxu0 0.0
      %3718 = vmatpush1.msra.mxu0 0.0
      %3719 = vmatprep.subr.mxu0 0.0
      %3720 = vmatpush1.msra.mxu0 0.0
      %3721 = vmatprep.subr.mxu0 0.0
      %3722 = vmatpush1.msra.mxu0 0.0
      %3723 = vmatprep.subr.mxu0 0.0
      %3724 = vmatpush1.msra.mxu0 0.0
      %3725 = vmatprep.subr.mxu0 0.0
      %3726 = vmatpush1.msra.mxu0 0.0
      %3727 = vmatprep.subr.mxu0 0.0
      %3728 = vmatpush1.msra.mxu0 0.0
      %3729 = vmatprep.subr.mxu0 0.0
      %3730 = vmatpush1.msra.mxu0 0.0
      %3731 = vmatprep.subr.mxu0 0.0
      %3732 = vmatpush1.msra.mxu0 0.0
      %3733 = vmatprep.subr.mxu0 0.0
      %3734 = vmatpush1.msra.mxu0 0.0
      %3735 = vmatprep.subr.mxu0 0.0
      %3736 = vmatpush1.msra.mxu0 0.0
      %3737 = vmatprep.subr.mxu0 0.0
      %3738 = vmatpush1.msra.mxu0 0.0
      %3739 = vmatprep.subr.mxu0 0.0
      %3740 = vmatpush1.msra.mxu0 0.0
      %3741 = vmatprep.subr.mxu0 0.0
      %3742 = vmatpush1.msra.mxu0 0.0
      %3743 = vmatprep.subr.mxu0 0.0
      %3744 = vmatpush1.msra.mxu0 0.0
      %3745 = vmatprep.subr.mxu0 0.0
      %3746 = vmatpush1.msra.mxu0 0.0
      %3747 = vmatprep.mubr.f32.mxu0 0.0
      %3748 = vmatmul.mubr.f32.gmra.mrb[0].mxu0 %v903
      %v3749 = vpop.f32.mrb[0].mxu0
      %v3750 = vadd.f32 %v897, %v3749
      %v3751 = vpop.f32.mrb[0].mxu0
      %v3752 = vadd.f32 %v897, %v3751
      %3753 = vdwg.mxu0
      %v3754 = vmax.f32 %v3750, 0.0
      %v3755 = vmax.f32 %v3752, 0.0
      %3756 = vrot.lane.b32.xlu0 %v3754, 17
      %v3757 = vpop.permute.xlu0 %3756
      %3758 = vrot.lane.b32.xlu0 %v3755, 17
      %v3759 = vpop.permute.xlu0 %3758
      %v3760 = vsel %vm989, %v3757, %v3759
      %v3761 = vsel %vm989, %v3759, %v3757
      %v3762 = vld [vmem:[%s3] sm:$0x3]
      %v3764 = vlaneseq
      %v3765 = vshrl.u32 %v3764, 7
      %v3766 = vsub.s32 0, %v3765
      %v3767 = vrot.slane %v3762, %v3766
      %v3768 = vlaneseq
      %v3769 = vshrl.u32 %v3768, 7
      %v3770 = vsub.s32 1, %v3769
      %v3771 = vrot.slane %v3762, %v3770
      %v3774 = vmul.f32 %v3761, %v3767
      %v3775 = vmul.f32 %v3760, %v3771
      %3776 = vrot.lane.b32.xlu0 %v3754, 16
      %v3777 = vpop.permute.xlu0 %3776
      %3778 = vrot.lane.b32.xlu0 %v3755, 16
      %v3779 = vpop.permute.xlu0 %3778
      %v3780 = vsel %vm1010, %v3777, %v3779
      %v3781 = vsel %vm1010, %v3779, %v3777
      %v3782 = vld [vmem:[%s1013] sm:$0x3]
      %v3784 = vlaneseq
      %v3785 = vshrl.u32 %v3784, 7
      %v3786 = vsub.s32 0, %v3785
      %v3787 = vrot.slane %v3782, %v3786
      %v3788 = vlaneseq
      %v3789 = vshrl.u32 %v3788, 7
      %v3790 = vsub.s32 1, %v3789
      %v3791 = vrot.slane %v3782, %v3790
      %v3794 = vmul.f32 %v3781, %v3787
      %v3795 = vmul.f32 %v3780, %v3791
      %3796 = vrot.lane.b32.xlu0 %v3754, 15
      %v3797 = vpop.permute.xlu0 %3796
      %3798 = vrot.lane.b32.xlu0 %v3755, 15
      %v3799 = vpop.permute.xlu0 %3798
      %v3800 = vsel %vm1032, %v3797, %v3799
      %v3801 = vsel %vm1032, %v3799, %v3797
      %v3802 = vld [vmem:[%s1035] sm:$0x3]
      %v3804 = vlaneseq
      %v3805 = vshrl.u32 %v3804, 7
      %v3806 = vsub.s32 0, %v3805
      %v3807 = vrot.slane %v3802, %v3806
      %v3808 = vlaneseq
      %v3809 = vshrl.u32 %v3808, 7
      %v3810 = vsub.s32 1, %v3809
      %v3811 = vrot.slane %v3802, %v3810
      %v3814 = vmul.f32 %v3801, %v3807
      %v3815 = vmul.f32 %v3800, %v3811
      %3816 = vrot.lane.b32.xlu0 %v3754, 1
      %v3817 = vpop.permute.xlu0 %3816
      %3818 = vrot.lane.b32.xlu0 %v3755, 1
      %v3819 = vpop.permute.xlu0 %3818
      %v3820 = vsel %vm1054, %v3817, %v3819
      %v3821 = vsel %vm1054, %v3819, %v3817
      %v3822 = vld [vmem:[%s1057] sm:$0x3]
      %v3824 = vlaneseq
      %v3825 = vshrl.u32 %v3824, 7
      %v3826 = vsub.s32 0, %v3825
      %v3827 = vrot.slane %v3822, %v3826
      %v3828 = vlaneseq
      %v3829 = vshrl.u32 %v3828, 7
      %v3830 = vsub.s32 1, %v3829
      %v3831 = vrot.slane %v3822, %v3830
      %v3834 = vmul.f32 %v3821, %v3827
      %v3835 = vmul.f32 %v3820, %v3831
      %3836 = vrot.lane.b32.xlu0 %v3754, 127
      %v3837 = vpop.permute.xlu0 %3836
      %3838 = vrot.lane.b32.xlu0 %v3755, 127
      %v3839 = vpop.permute.xlu0 %3838
      %v3840 = vsel %vm1076, %v3837, %v3839
      %v3841 = vsel %vm1076, %v3839, %v3837
      %v3842 = vld [vmem:[%s1079] sm:$0x3]
      %v3844 = vlaneseq
      %v3845 = vshrl.u32 %v3844, 7
      %v3846 = vsub.s32 0, %v3845
      %v3847 = vrot.slane %v3842, %v3846
      %v3848 = vlaneseq
      %v3849 = vshrl.u32 %v3848, 7
      %v3850 = vsub.s32 1, %v3849
      %v3851 = vrot.slane %v3842, %v3850
      %v3854 = vmul.f32 %v3840, %v3847
      %v3855 = vmul.f32 %v3841, %v3851
      %3856 = vrot.lane.b32.xlu0 %v3754, 113
      %v3857 = vpop.permute.xlu0 %3856
      %3858 = vrot.lane.b32.xlu0 %v3755, 113
      %v3859 = vpop.permute.xlu0 %3858
      %v3860 = vsel %vm1098, %v3857, %v3859
      %v3861 = vsel %vm1098, %v3859, %v3857
      %v3862 = vld [vmem:[%s1101] sm:$0x3]
      %v3864 = vlaneseq
      %v3865 = vshrl.u32 %v3864, 7
      %v3866 = vsub.s32 0, %v3865
      %v3867 = vrot.slane %v3862, %v3866
      %v3868 = vlaneseq
      %v3869 = vshrl.u32 %v3868, 7
      %v3870 = vsub.s32 1, %v3869
      %v3871 = vrot.slane %v3862, %v3870
      %v3874 = vmul.f32 %v3860, %v3867
      %v3875 = vmul.f32 %v3861, %v3871
      %3876 = vrot.lane.b32.xlu0 %v3754, 112
      %v3877 = vpop.permute.xlu0 %3876
      %3878 = vrot.lane.b32.xlu0 %v3755, 112
      %v3879 = vpop.permute.xlu0 %3878
      %v3880 = vsel %vm1120, %v3877, %v3879
      %v3881 = vsel %vm1120, %v3879, %v3877
      %v3882 = vld [vmem:[%s1123] sm:$0x3]
      %v3884 = vlaneseq
      %v3885 = vshrl.u32 %v3884, 7
      %v3886 = vsub.s32 0, %v3885
      %v3887 = vrot.slane %v3882, %v3886
      %v3888 = vlaneseq
      %v3889 = vshrl.u32 %v3888, 7
      %v3890 = vsub.s32 1, %v3889
      %v3891 = vrot.slane %v3882, %v3890
      %v3894 = vmul.f32 %v3880, %v3887
      %v3895 = vmul.f32 %v3881, %v3891
      %3896 = vrot.lane.b32.xlu0 %v3754, 111
      %v3897 = vpop.permute.xlu0 %3896
      %3898 = vrot.lane.b32.xlu0 %v3755, 111
      %v3899 = vpop.permute.xlu0 %3898
      %v3900 = vsel %vm1142, %v3897, %v3899
      %v3901 = vsel %vm1142, %v3899, %v3897
      %v3902 = vld [vmem:[%s1145] sm:$0x3]
      %v3904 = vlaneseq
      %v3905 = vshrl.u32 %v3904, 7
      %v3906 = vsub.s32 0, %v3905
      %v3907 = vrot.slane %v3902, %v3906
      %v3908 = vlaneseq
      %v3909 = vshrl.u32 %v3908, 7
      %v3910 = vsub.s32 1, %v3909
      %v3911 = vrot.slane %v3902, %v3910
      %v3914 = vmul.f32 %v3900, %v3907
      %v3915 = vmul.f32 %v3901, %v3911
      %v3916 = vpack.c.bf16 %v3794, %v3774
      %v3917 = vpack.c.bf16 %v3795, %v3775
      %v3918 = vpack.c.bf16 %v3834, %v3814
      %v3919 = vpack.c.bf16 %v3835, %v3815
      %v3920 = vpack.c.bf16 %v3854, %v3754
      %v3921 = vpack.c.bf16 %v3855, %v3755
      %v3922 = vpack.c.bf16 %v3894, %v3874
      %v3923 = vpack.c.bf16 %v3895, %v3875
      %v3924 = vpack.c.bf16 %v3914, %v3914
      %v3925 = vpack.c.bf16 %v3915, %v3915
      %v3926 = vld [vmem:[%s3527] sm:$0xff]
      %v3927 = vld [vmem:[%s3527 + $0x8] sm:$0xff]
      %v3929 = vsel %vm905, %v3924, 0
      %v3932 = vsel %vm905, %v3925, 0
      %3934 = vmatprep.subr.bf16.mxu0 %v3917
      %3935 = vmatpush1.bf16.msra.mxu0 %v3916
      %3936 = vmatprep.subr.bf16.mxu0 %v3919
      %3937 = vmatpush1.bf16.msra.mxu0 %v3918
      %3938 = vmatprep.subr.bf16.mxu0 %v3921
      %3939 = vmatpush1.bf16.msra.mxu0 %v3920
      %3940 = vmatprep.subr.bf16.mxu0 %v3923
      %3941 = vmatpush1.bf16.msra.mxu0 %v3922
      %3942 = vmatprep.subr.bf16.mxu0 %v3932
      %3943 = vmatpush1.bf16.msra.mxu0 %v3929
      %3944 = vmatprep.subr.bf16.mxu0 0
      %3945 = vmatpush1.bf16.msra.mxu0 0
      %3946 = vmatprep.subr.bf16.mxu0 0
      %3947 = vmatpush1.bf16.msra.mxu0 0
      %3948 = vmatprep.subr.bf16.mxu0 0
      %3949 = vmatpush1.bf16.msra.mxu0 0
      %3950 = vmatprep.subr.bf16.mxu0 0
      %3951 = vmatpush1.bf16.msra.mxu0 0
      %3952 = vmatprep.subr.bf16.mxu0 0
      %3953 = vmatpush1.bf16.msra.mxu0 0
      %3954 = vmatprep.subr.bf16.mxu0 0
      %3955 = vmatpush1.bf16.msra.mxu0 0
      %3956 = vmatprep.subr.bf16.mxu0 0
      %3957 = vmatpush1.bf16.msra.mxu0 0
      %3958 = vmatprep.subr.bf16.mxu0 0
      %3959 = vmatpush1.bf16.msra.mxu0 0
      %3960 = vmatprep.subr.bf16.mxu0 0
      %3961 = vmatpush1.bf16.msra.mxu0 0
      %3962 = vmatprep.subr.bf16.mxu0 0
      %3963 = vmatpush1.bf16.msra.mxu0 0
      %3964 = vmatprep.subr.bf16.mxu0 0
      %3965 = vmatpush1.bf16.msra.mxu0 0
      %3966 = vmatprep.mubr.bf16.mxu0 0
      %3967 = vmatmul.mubr.bf16.gmra.mrb[0].mxu0 %v1231
      %v3968 = vpop.f32.mrb[0].mxu0
      %v3969 = vadd.f32 0.0, %v3968
      %v3970 = vpop.f32.mrb[0].mxu0
      %v3971 = vadd.f32 0.0, %v3970
      %v3972 = vpop.f32.mrb[0].mxu0
      %v3973 = vpop.f32.mrb[0].mxu0
      %3974 = vdwg.mxu0
      %v3975 = vadd.f32 %v3926, %v3969
      %v3976 = vadd.f32 %v3927, %v3971
      %3977 = vst [vmem:[%s3527] sm:$0xff] %v3975
      %3978 = vst [vmem:[%s3527 + $0x8] sm:$0xff] %v3976
      %v3979 = vld [vmem:[%s3128] sm:$0xff]
      %v3980 = vld [vmem:[%s3128 + $0x8] sm:$0xff]
      %3981 = vmatprep.subr.bf16.mxu0 %v3917
      %3982 = vmatpush1.bf16.msra.mxu0 %v3916
      %3983 = vmatprep.subr.bf16.mxu0 %v3919
      %3984 = vmatpush1.bf16.msra.mxu0 %v3918
      %3985 = vmatprep.subr.bf16.mxu0 %v3921
      %3986 = vmatpush1.bf16.msra.mxu0 %v3920
      %3987 = vmatprep.subr.bf16.mxu0 %v3923
      %3988 = vmatpush1.bf16.msra.mxu0 %v3922
      %3989 = vmatprep.subr.bf16.mxu0 %v3932
      %3990 = vmatpush1.bf16.msra.mxu0 %v3929
      %3991 = vmatprep.subr.bf16.mxu0 0
      %3992 = vmatpush1.bf16.msra.mxu0 0
      %3993 = vmatprep.subr.bf16.mxu0 0
      %3994 = vmatpush1.bf16.msra.mxu0 0
      %3995 = vmatprep.subr.bf16.mxu0 0
      %3996 = vmatpush1.bf16.msra.mxu0 0
      %3997 = vmatprep.subr.bf16.mxu0 0
      %3998 = vmatpush1.bf16.msra.mxu0 0
      %3999 = vmatprep.subr.bf16.mxu0 0
      %4000 = vmatpush1.bf16.msra.mxu0 0
      %4001 = vmatprep.subr.bf16.mxu0 0
      %4002 = vmatpush1.bf16.msra.mxu0 0
      %4003 = vmatprep.subr.bf16.mxu0 0
      %4004 = vmatpush1.bf16.msra.mxu0 0
      %4005 = vmatprep.subr.bf16.mxu0 0
      %4006 = vmatpush1.bf16.msra.mxu0 0
      %4007 = vmatprep.subr.bf16.mxu0 0
      %4008 = vmatpush1.bf16.msra.mxu0 0
      %4009 = vmatprep.subr.bf16.mxu0 0
      %4010 = vmatpush1.bf16.msra.mxu0 0
      %4011 = vmatprep.subr.bf16.mxu0 0
      %4012 = vmatpush1.bf16.msra.mxu0 0
      %4013 = vmatprep.mubr.bf16.mxu0 0
      %4014 = vmatmul.mubr.bf16.gmra.mrb[0].mxu0 %v1633
      %v4015 = vpop.f32.mrb[0].mxu0
      %v4016 = vadd.f32 0.0, %v4015
      %v4017 = vpop.f32.mrb[0].mxu0
      %v4018 = vadd.f32 0.0, %v4017
      %v4019 = vpop.f32.mrb[0].mxu0
      %v4020 = vpop.f32.mrb[0].mxu0
      %4021 = vdwg.mxu0
      %v4022 = vadd.f32 %v3979, %v4016
      %v4023 = vadd.f32 %v3980, %v4018
      %4024 = vst [vmem:[%s3128] sm:$0xff] %v4022
      %4025 = vst [vmem:[%s3128 + $0x8] sm:$0xff] %v4023
      %p4026 = scmp.lt.s32.totalorder %s26, 0
      // Predicated region
      $region65: #{residual_layer3d.1} parent=59 // pred_check
        %p4027 = pneg %p4026
      $region66: #{residual_layer3d.1} parent=59 // pred_check_branch
        %4029 = sbr.rel (%p4027) target = $region68
      $region67: #{residual_layer3d.1} parent=59 // pred_region
        %v4030 = vld [vmem:[%s512] sm:$0xff]
        %v4032 = vcombine.high %v4030, %v4030
        %v4033 = vsel %vm905, %v4030, 0
        %v4035 = vsel %vm905, %v4032, 0
        %4037 = vmatprep.subr.mxu0 %v4035
        %4038 = vmatpush1.msra.mxu0 %v4033
        %4039 = vmatprep.subr.mxu0 0.0
        %4040 = vmatpush1.msra.mxu0 0.0
        %4041 = vmatprep.subr.mxu0 0.0
        %4042 = vmatpush1.msra.mxu0 0.0
        %4043 = vmatprep.subr.mxu0 0.0
        %4044 = vmatpush1.msra.mxu0 0.0
        %4045 = vmatprep.subr.mxu0 0.0
        %4046 = vmatpush1.msra.mxu0 0.0
        %4047 = vmatprep.subr.mxu0 0.0
        %4048 = vmatpush1.msra.mxu0 0.0
        %4049 = vmatprep.subr.mxu0 0.0
        %4050 = vmatpush1.msra.mxu0 0.0
        %4051 = vmatprep.subr.mxu0 0.0
        %4052 = vmatpush1.msra.mxu0 0.0
        %4053 = vmatprep.subr.mxu0 0.0
        %4054 = vmatpush1.msra.mxu0 0.0
        %4055 = vmatprep.subr.mxu0 0.0
        %4056 = vmatpush1.msra.mxu0 0.0
        %4057 = vmatprep.subr.mxu0 0.0
        %4058 = vmatpush1.msra.mxu0 0.0
        %4059 = vmatprep.subr.mxu0 0.0
        %4060 = vmatpush1.msra.mxu0 0.0
        %4061 = vmatprep.subr.mxu0 0.0
        %4062 = vmatpush1.msra.mxu0 0.0
        %4063 = vmatprep.subr.mxu0 0.0
        %4064 = vmatpush1.msra.mxu0 0.0
        %4065 = vmatprep.subr.mxu0 0.0
        %4066 = vmatpush1.msra.mxu0 0.0
        %4067 = vmatprep.subr.mxu0 0.0
        %4068 = vmatpush1.msra.mxu0 0.0
        %4069 = vmatprep.subr.mxu0 0.0
        %4070 = vmatpush1.msra.mxu0 0.0
        %4071 = vmatprep.subr.mxu0 0.0
        %4072 = vmatpush1.msra.mxu0 0.0
        %4073 = vmatprep.subr.mxu0 0.0
        %4074 = vmatpush1.msra.mxu0 0.0
        %4075 = vmatprep.subr.mxu0 0.0
        %4076 = vmatpush1.msra.mxu0 0.0
        %4077 = vmatprep.subr.mxu0 0.0
        %4078 = vmatpush1.msra.mxu0 0.0
        %4079 = vmatprep.subr.mxu0 0.0
        %4080 = vmatpush1.msra.mxu0 0.0
        %4081 = vmatprep.subr.mxu0 0.0
        %4082 = vmatpush1.msra.mxu0 0.0
        %4083 = vmatprep.subr.mxu0 0.0
        %4084 = vmatpush1.msra.mxu0 0.0
        %4085 = vmatprep.subr.mxu0 0.0
        %4086 = vmatpush1.msra.mxu0 0.0
        %4087 = vmatprep.subr.mxu0 0.0
        %4088 = vmatpush1.msra.mxu0 0.0
        %4089 = vmatprep.subr.mxu0 0.0
        %4090 = vmatpush1.msra.mxu0 0.0
        %4091 = vmatprep.subr.mxu0 0.0
        %4092 = vmatpush1.msra.mxu0 0.0
        %4093 = vmatprep.subr.mxu0 0.0
        %4094 = vmatpush1.msra.mxu0 0.0
        %4095 = vmatprep.subr.mxu0 0.0
        %4096 = vmatpush1.msra.mxu0 0.0
        %4097 = vmatprep.subr.mxu0 0.0
        %4098 = vmatpush1.msra.mxu0 0.0
        %4099 = vmatprep.subr.mxu0 0.0
        %4100 = vmatpush1.msra.mxu0 0.0
        %4101 = vmatprep.mubr.f32.mxu0 0.0
        %4102 = vmatmul.mubr.f32.gmra.mrb[0].mxu0 %v903
        %v4103 = vpop.f32.mrb[0].mxu0
        %v4104 = vadd.f32 %v897, %v4103
        %v4105 = vpop.f32.mrb[0].mxu0
        %v4106 = vadd.f32 %v897, %v4105
        %4107 = vdwg.mxu0
        %v4108 = vmax.f32 %v4104, 0.0
        %v4109 = vmax.f32 %v4106, 0.0
        %4110 = vrot.lane.b32.xlu0 %v4108, 17
        %v4111 = vpop.permute.xlu0 %4110
        %4112 = vrot.lane.b32.xlu0 %v4109, 17
        %v4113 = vpop.permute.xlu0 %4112
        %v4114 = vsel %vm989, %v4111, %v4113
        %v4115 = vsel %vm989, %v4113, %v4111
        %v4116 = vld [vmem:[%s3] sm:$0x3]
        %v4118 = vlaneseq
        %v4119 = vshrl.u32 %v4118, 7
        %v4120 = vsub.s32 0, %v4119
        %v4121 = vrot.slane %v4116, %v4120
        %v4122 = vlaneseq
        %v4123 = vshrl.u32 %v4122, 7
        %v4124 = vsub.s32 1, %v4123
        %v4125 = vrot.slane %v4116, %v4124
        %v4128 = vmul.f32 %v4115, %v4121
        %v4129 = vmul.f32 %v4114, %v4125
        %4130 = vrot.lane.b32.xlu0 %v4108, 16
        %v4131 = vpop.permute.xlu0 %4130
        %4132 = vrot.lane.b32.xlu0 %v4109, 16
        %v4133 = vpop.permute.xlu0 %4132
        %v4134 = vsel %vm1010, %v4131, %v4133
        %v4135 = vsel %vm1010, %v4133, %v4131
        %v4136 = vld [vmem:[%s1013] sm:$0x3]
        %v4138 = vlaneseq
        %v4139 = vshrl.u32 %v4138, 7
        %v4140 = vsub.s32 0, %v4139
        %v4141 = vrot.slane %v4136, %v4140
        %v4142 = vlaneseq
        %v4143 = vshrl.u32 %v4142, 7
        %v4144 = vsub.s32 1, %v4143
        %v4145 = vrot.slane %v4136, %v4144
        %v4148 = vmul.f32 %v4135, %v4141
        %v4149 = vmul.f32 %v4134, %v4145
        %4150 = vrot.lane.b32.xlu0 %v4108, 15
        %v4151 = vpop.permute.xlu0 %4150
        %4152 = vrot.lane.b32.xlu0 %v4109, 15
        %v4153 = vpop.permute.xlu0 %4152
        %v4154 = vsel %vm1032, %v4151, %v4153
        %v4155 = vsel %vm1032, %v4153, %v4151
        %v4156 = vld [vmem:[%s1035] sm:$0x3]
        %v4158 = vlaneseq
        %v4159 = vshrl.u32 %v4158, 7
        %v4160 = vsub.s32 0, %v4159
        %v4161 = vrot.slane %v4156, %v4160
        %v4162 = vlaneseq
        %v4163 = vshrl.u32 %v4162, 7
        %v4164 = vsub.s32 1, %v4163
        %v4165 = vrot.slane %v4156, %v4164
        %v4168 = vmul.f32 %v4155, %v4161
        %v4169 = vmul.f32 %v4154, %v4165
        %4170 = vrot.lane.b32.xlu0 %v4108, 1
        %v4171 = vpop.permute.xlu0 %4170
        %4172 = vrot.lane.b32.xlu0 %v4109, 1
        %v4173 = vpop.permute.xlu0 %4172
        %v4174 = vsel %vm1054, %v4171, %v4173
        %v4175 = vsel %vm1054, %v4173, %v4171
        %v4176 = vld [vmem:[%s1057] sm:$0x3]
        %v4178 = vlaneseq
        %v4179 = vshrl.u32 %v4178, 7
        %v4180 = vsub.s32 0, %v4179
        %v4181 = vrot.slane %v4176, %v4180
        %v4182 = vlaneseq
        %v4183 = vshrl.u32 %v4182, 7
        %v4184 = vsub.s32 1, %v4183
        %v4185 = vrot.slane %v4176, %v4184
        %v4188 = vmul.f32 %v4175, %v4181
        %v4189 = vmul.f32 %v4174, %v4185
        %4190 = vrot.lane.b32.xlu0 %v4108, 127
        %v4191 = vpop.permute.xlu0 %4190
        %4192 = vrot.lane.b32.xlu0 %v4109, 127
        %v4193 = vpop.permute.xlu0 %4192
        %v4194 = vsel %vm1076, %v4191, %v4193
        %v4195 = vsel %vm1076, %v4193, %v4191
        %v4196 = vld [vmem:[%s1079] sm:$0x3]
        %v4198 = vlaneseq
        %v4199 = vshrl.u32 %v4198, 7
        %v4200 = vsub.s32 0, %v4199
        %v4201 = vrot.slane %v4196, %v4200
        %v4202 = vlaneseq
        %v4203 = vshrl.u32 %v4202, 7
        %v4204 = vsub.s32 1, %v4203
        %v4205 = vrot.slane %v4196, %v4204
        %v4208 = vmul.f32 %v4194, %v4201
        %v4209 = vmul.f32 %v4195, %v4205
        %4210 = vrot.lane.b32.xlu0 %v4108, 113
        %v4211 = vpop.permute.xlu0 %4210
        %4212 = vrot.lane.b32.xlu0 %v4109, 113
        %v4213 = vpop.permute.xlu0 %4212
        %v4214 = vsel %vm1098, %v4211, %v4213
        %v4215 = vsel %vm1098, %v4213, %v4211
        %v4216 = vld [vmem:[%s1101] sm:$0x3]
        %v4218 = vlaneseq
        %v4219 = vshrl.u32 %v4218, 7
        %v4220 = vsub.s32 0, %v4219
        %v4221 = vrot.slane %v4216, %v4220
        %v4222 = vlaneseq
        %v4223 = vshrl.u32 %v4222, 7
        %v4224 = vsub.s32 1, %v4223
        %v4225 = vrot.slane %v4216, %v4224
        %v4228 = vmul.f32 %v4214, %v4221
        %v4229 = vmul.f32 %v4215, %v4225
        %4230 = vrot.lane.b32.xlu0 %v4108, 112
        %v4231 = vpop.permute.xlu0 %4230
        %4232 = vrot.lane.b32.xlu0 %v4109, 112
        %v4233 = vpop.permute.xlu0 %4232
        %v4234 = vsel %vm1120, %v4231, %v4233
        %v4235 = vsel %vm1120, %v4233, %v4231
        %v4236 = vld [vmem:[%s1123] sm:$0x3]
        %v4238 = vlaneseq
        %v4239 = vshrl.u32 %v4238, 7
        %v4240 = vsub.s32 0, %v4239
        %v4241 = vrot.slane %v4236, %v4240
        %v4242 = vlaneseq
        %v4243 = vshrl.u32 %v4242, 7
        %v4244 = vsub.s32 1, %v4243
        %v4245 = vrot.slane %v4236, %v4244
        %v4248 = vmul.f32 %v4234, %v4241
        %v4249 = vmul.f32 %v4235, %v4245
        %4250 = vrot.lane.b32.xlu0 %v4108, 111
        %v4251 = vpop.permute.xlu0 %4250
        %4252 = vrot.lane.b32.xlu0 %v4109, 111
        %v4253 = vpop.permute.xlu0 %4252
        %v4254 = vsel %vm1142, %v4251, %v4253
        %v4255 = vsel %vm1142, %v4253, %v4251
        %v4256 = vld [vmem:[%s1145] sm:$0x3]
        %v4258 = vlaneseq
        %v4259 = vshrl.u32 %v4258, 7
        %v4260 = vsub.s32 0, %v4259
        %v4261 = vrot.slane %v4256, %v4260
        %v4262 = vlaneseq
        %v4263 = vshrl.u32 %v4262, 7
        %v4264 = vsub.s32 1, %v4263
        %v4265 = vrot.slane %v4256, %v4264
        %v4268 = vmul.f32 %v4254, %v4261
        %v4269 = vmul.f32 %v4255, %v4265
        %v4270 = vpack.c.bf16 %v4148, %v4128
        %v4271 = vpack.c.bf16 %v4149, %v4129
        %v4272 = vpack.c.bf16 %v4188, %v4168
        %v4273 = vpack.c.bf16 %v4189, %v4169
        %v4274 = vpack.c.bf16 %v4208, %v4108
        %v4275 = vpack.c.bf16 %v4209, %v4109
        %v4276 = vpack.c.bf16 %v4248, %v4228
        %v4277 = vpack.c.bf16 %v4249, %v4229
        %v4278 = vpack.c.bf16 %v4268, %v4268
        %v4279 = vpack.c.bf16 %v4269, %v4269
        %v4280 = vld [vmem:[%s3527] sm:$0xff]
        %v4281 = vld [vmem:[%s3527 + $0x8] sm:$0xff]
        %v4283 = vsel %vm905, %v4278, 0
        %v4286 = vsel %vm905, %v4279, 0
        %4288 = vmatprep.subr.bf16.mxu0 %v4271
        %4289 = vmatpush1.bf16.msra.mxu0 %v4270
        %4290 = vmatprep.subr.bf16.mxu0 %v4273
        %4291 = vmatpush1.bf16.msra.mxu0 %v4272
        %4292 = vmatprep.subr.bf16.mxu0 %v4275
        %4293 = vmatpush1.bf16.msra.mxu0 %v4274
        %4294 = vmatprep.subr.bf16.mxu0 %v4277
        %4295 = vmatpush1.bf16.msra.mxu0 %v4276
        %4296 = vmatprep.subr.bf16.mxu0 %v4286
        %4297 = vmatpush1.bf16.msra.mxu0 %v4283
        %4298 = vmatprep.subr.bf16.mxu0 0
        %4299 = vmatpush1.bf16.msra.mxu0 0
        %4300 = vmatprep.subr.bf16.mxu0 0
        %4301 = vmatpush1.bf16.msra.mxu0 0
        %4302 = vmatprep.subr.bf16.mxu0 0
        %4303 = vmatpush1.bf16.msra.mxu0 0
        %4304 = vmatprep.subr.bf16.mxu0 0
        %4305 = vmatpush1.bf16.msra.mxu0 0
        %4306 = vmatprep.subr.bf16.mxu0 0
        %4307 = vmatpush1.bf16.msra.mxu0 0
        %4308 = vmatprep.subr.bf16.mxu0 0
        %4309 = vmatpush1.bf16.msra.mxu0 0
        %4310 = vmatprep.subr.bf16.mxu0 0
        %4311 = vmatpush1.bf16.msra.mxu0 0
        %4312 = vmatprep.subr.bf16.mxu0 0
        %4313 = vmatpush1.bf16.msra.mxu0 0
        %4314 = vmatprep.subr.bf16.mxu0 0
        %4315 = vmatpush1.bf16.msra.mxu0 0
        %4316 = vmatprep.subr.bf16.mxu0 0
        %4317 = vmatpush1.bf16.msra.mxu0 0
        %4318 = vmatprep.subr.bf16.mxu0 0
        %4319 = vmatpush1.bf16.msra.mxu0 0
        %4320 = vmatprep.mubr.bf16.mxu0 0
        %4321 = vmatmul.mubr.bf16.gmra.mrb[0].mxu0 %v1633
        %v4322 = vpop.f32.mrb[0].mxu0
        %v4323 = vadd.f32 0.0, %v4322
        %v4324 = vpop.f32.mrb[0].mxu0
        %v4325 = vadd.f32 0.0, %v4324
        %v4326 = vpop.f32.mrb[0].mxu0
        %v4327 = vpop.f32.mrb[0].mxu0
        %4328 = vdwg.mxu0
        %v4329 = vadd.f32 %v4280, %v4323
        %v4330 = vadd.f32 %v4281, %v4325
        %4331 = vst [vmem:[%s3527] sm:$0xff] %v4329
        %4332 = vst [vmem:[%s3527 + $0x8] sm:$0xff] %v4330
      $region68: #{residual_layer3d.1} parent=59 // pred_fallthru
        _
      %v4333 = vld [vmem:[#allocation2] sm:$0xff]
      %v4334 = vld [vmem:[#allocation2 + $0x8] sm:$0xff]
      %4336 = vset.pattern.permute.xlu0 0
      %4337 = vperm.xlu0 %4336, %v532
      %v4338 = vpop.permute.xlu0 %4337
      %v4340 = vadd.f32 %v4333, %v4338
      %v4341 = vadd.f32 %v4334, %v4338
      %v4342 = vmax.f32 %v4340, 0.0
      %v4343 = vmax.f32 %v4341, 0.0
      %4345 = vset.pattern.permute.xlu0 0
      %4346 = vperm.xlu0 %4345, %v533
      %v4347 = vpop.permute.xlu0 %4346
      %vm4349 = vcmask 64512
      %v4351 = vsel %vm4349, %v530, 0
      %4353 = vmatprep.subr.mxu0 %v4343
      %4354 = vmatpush1.msra.mxu0 %v4342
      %4355 = vmatprep.subr.mxu0 0.0
      %4356 = vmatpush1.msra.mxu0 0.0
      %4357 = vmatprep.subr.mxu0 0.0
      %4358 = vmatpush1.msra.mxu0 0.0
      %4359 = vmatprep.subr.mxu0 0.0
      %4360 = vmatpush1.msra.mxu0 0.0
      %4361 = vmatprep.subr.mxu0 0.0
      %4362 = vmatpush1.msra.mxu0 0.0
      %4363 = vmatprep.subr.mxu0 0.0
      %4364 = vmatpush1.msra.mxu0 0.0
      %4365 = vmatprep.subr.mxu0 0.0
      %4366 = vmatpush1.msra.mxu0 0.0
      %4367 = vmatprep.subr.mxu0 0.0
      %4368 = vmatpush1.msra.mxu0 0.0
      %4369 = vmatprep.subr.mxu0 0.0
      %4370 = vmatpush1.msra.mxu0 0.0
      %4371 = vmatprep.subr.mxu0 0.0
      %4372 = vmatpush1.msra.mxu0 0.0
      %4373 = vmatprep.subr.mxu0 0.0
      %4374 = vmatpush1.msra.mxu0 0.0
      %4375 = vmatprep.subr.mxu0 0.0
      %4376 = vmatpush1.msra.mxu0 0.0
      %4377 = vmatprep.subr.mxu0 0.0
      %4378 = vmatpush1.msra.mxu0 0.0
      %4379 = vmatprep.subr.mxu0 0.0
      %4380 = vmatpush1.msra.mxu0 0.0
      %4381 = vmatprep.subr.mxu0 0.0
      %4382 = vmatpush1.msra.mxu0 0.0
      %4383 = vmatprep.subr.mxu0 0.0
      %4384 = vmatpush1.msra.mxu0 0.0
      %4385 = vmatprep.subr.mxu0 0.0
      %4386 = vmatpush1.msra.mxu0 0.0
      %4387 = vmatprep.subr.mxu0 0.0
      %4388 = vmatpush1.msra.mxu0 0.0
      %4389 = vmatprep.subr.mxu0 0.0
      %4390 = vmatpush1.msra.mxu0 0.0
      %4391 = vmatprep.subr.mxu0 0.0
      %4392 = vmatpush1.msra.mxu0 0.0
      %4393 = vmatprep.subr.mxu0 0.0
      %4394 = vmatpush1.msra.mxu0 0.0
      %4395 = vmatprep.subr.mxu0 0.0
      %4396 = vmatpush1.msra.mxu0 0.0
      %4397 = vmatprep.subr.mxu0 0.0
      %4398 = vmatpush1.msra.mxu0 0.0
      %4399 = vmatprep.subr.mxu0 0.0
      %4400 = vmatpush1.msra.mxu0 0.0
      %4401 = vmatprep.subr.mxu0 0.0
      %4402 = vmatpush1.msra.mxu0 0.0
      %4403 = vmatprep.subr.mxu0 0.0
      %4404 = vmatpush1.msra.mxu0 0.0
      %4405 = vmatprep.subr.mxu0 0.0
      %4406 = vmatpush1.msra.mxu0 0.0
      %4407 = vmatprep.subr.mxu0 0.0
      %4408 = vmatpush1.msra.mxu0 0.0
      %4409 = vmatprep.subr.mxu0 0.0
      %4410 = vmatpush1.msra.mxu0 0.0
      %4411 = vmatprep.subr.mxu0 0.0
      %4412 = vmatpush1.msra.mxu0 0.0
      %4413 = vmatprep.subr.mxu0 0.0
      %4414 = vmatpush1.msra.mxu0 0.0
      %4415 = vmatprep.subr.mxu0 0.0
      %4416 = vmatpush1.msra.mxu0 0.0
      %4417 = vmatprep.mubr.f32.mxu0 0.0
      %4418 = vmatmul.mubr.f32.gmra.mrb[0].mxu0 %v4351
      %v4419 = vpop.f32.mrb[0].mxu0
      %v4420 = vadd.f32 %v4347, %v4419
      %v4421 = vpop.f32.mrb[0].mxu0
      %v4422 = vadd.f32 %v4347, %v4421
      %4423 = vdwg.mxu0
      %v4424 = vld [vmem:[%s481] sm:$0xff]
      %v4426 = vcombine.high %v4424, %v4424
      %v4428 = vadd.f32 %v4420, %v4424
      %v4429 = vadd.f32 %v4422, %v4426
      %v4430 = vmax.f32 %v4428, 0.0
      %v4431 = vmax.f32 %v4429, 0.0
      %v4434 = vcombine.low %v4430, %v4431
      %4436 = vst [vmem:[%s526] sm:$0xff] %v4434
      %v4437 = vld [vmem:[%s1170] sm:$0xff]
      %v4438 = vld [vmem:[%s1170 + $0x8] sm:$0xff]
      %v4439 = vadd.f32 %v4437, %v4338
      %v4440 = vadd.f32 %v4438, %v4338
      %v4441 = vmax.f32 %v4439, 0.0
      %v4442 = vmax.f32 %v4440, 0.0
      %4443 = vmatprep.subr.mxu0 %v4442
      %4444 = vmatpush1.msra.mxu0 %v4441
      %4445 = vmatprep.subr.mxu0 0.0
      %4446 = vmatpush1.msra.mxu0 0.0
      %4447 = vmatprep.subr.mxu0 0.0
      %4448 = vmatpush1.msra.mxu0 0.0
      %4449 = vmatprep.subr.mxu0 0.0
      %4450 = vmatpush1.msra.mxu0 0.0
      %4451 = vmatprep.subr.mxu0 0.0
      %4452 = vmatpush1.msra.mxu0 0.0
      %4453 = vmatprep.subr.mxu0 0.0
      %4454 = vmatpush1.msra.mxu0 0.0
      %4455 = vmatprep.subr.mxu0 0.0
      %4456 = vmatpush1.msra.mxu0 0.0
      %4457 = vmatprep.subr.mxu0 0.0
      %4458 = vmatpush1.msra.mxu0 0.0
      %4459 = vmatprep.subr.mxu0 0.0
      %4460 = vmatpush1.msra.mxu0 0.0
      %4461 = vmatprep.subr.mxu0 0.0
      %4462 = vmatpush1.msra.mxu0 0.0
      %4463 = vmatprep.subr.mxu0 0.0
      %4464 = vmatpush1.msra.mxu0 0.0
      %4465 = vmatprep.subr.mxu0 0.0
      %4466 = vmatpush1.msra.mxu0 0.0
      %4467 = vmatprep.subr.mxu0 0.0
      %4468 = vmatpush1.msra.mxu0 0.0
      %4469 = vmatprep.subr.mxu0 0.0
      %4470 = vmatpush1.msra.mxu0 0.0
      %4471 = vmatprep.subr.mxu0 0.0
      %4472 = vmatpush1.msra.mxu0 0.0
      %4473 = vmatprep.subr.mxu0 0.0
      %4474 = vmatpush1.msra.mxu0 0.0
      %4475 = vmatprep.subr.mxu0 0.0
      %4476 = vmatpush1.msra.mxu0 0.0
      %4477 = vmatprep.subr.mxu0 0.0
      %4478 = vmatpush1.msra.mxu0 0.0
      %4479 = vmatprep.subr.mxu0 0.0
      %4480 = vmatpush1.msra.mxu0 0.0
      %4481 = vmatprep.subr.mxu0 0.0
      %4482 = vmatpush1.msra.mxu0 0.0
      %4483 = vmatprep.subr.mxu0 0.0
      %4484 = vmatpush1.msra.mxu0 0.0
      %4485 = vmatprep.subr.mxu0 0.0
      %4486 = vmatpush1.msra.mxu0 0.0
      %4487 = vmatprep.subr.mxu0 0.0
      %4488 = vmatpush1.msra.mxu0 0.0
      %4489 = vmatprep.subr.mxu0 0.0
      %4490 = vmatpush1.msra.mxu0 0.0
      %4491 = vmatprep.subr.mxu0 0.0
      %4492 = vmatpush1.msra.mxu0 0.0
      %4493 = vmatprep.subr.mxu0 0.0
      %4494 = vmatpush1.msra.mxu0 0.0
      %4495 = vmatprep.subr.mxu0 0.0
      %4496 = vmatpush1.msra.mxu0 0.0
      %4497 = vmatprep.subr.mxu0 0.0
      %4498 = vmatpush1.msra.mxu0 0.0
      %4499 = vmatprep.subr.mxu0 0.0
      %4500 = vmatpush1.msra.mxu0 0.0
      %4501 = vmatprep.subr.mxu0 0.0
      %4502 = vmatpush1.msra.mxu0 0.0
      %4503 = vmatprep.subr.mxu0 0.0
      %4504 = vmatpush1.msra.mxu0 0.0
      %4505 = vmatprep.subr.mxu0 0.0
      %4506 = vmatpush1.msra.mxu0 0.0
      %4507 = vmatprep.mubr.f32.mxu0 0.0
      %4508 = vmatmul.mubr.f32.gmra.mrb[0].mxu0 %v4351
      %v4509 = vpop.f32.mrb[0].mxu0
      %v4510 = vadd.f32 %v4347, %v4509
      %v4511 = vpop.f32.mrb[0].mxu0
      %v4512 = vadd.f32 %v4347, %v4511
      %4513 = vdwg.mxu0
      %v4514 = vld [vmem:[%s1278] sm:$0xff]
      %v4516 = vcombine.high %v4514, %v4514
      %v4518 = vadd.f32 %v4510, %v4514
      %v4519 = vadd.f32 %v4512, %v4516
      %v4520 = vmax.f32 %v4518, 0.0
      %v4521 = vmax.f32 %v4519, 0.0
      %v4524 = vcombine.low %v4520, %v4521
      %s4526 = scalar_lea.vmem %s526, 8
      %4527 = vst [vmem:[%s4526] sm:$0xff] %v4524
      %v4528 = vld [vmem:[%s1529] sm:$0xff]
      %v4529 = vld [vmem:[%s1529 + $0x8] sm:$0xff]
      %v4530 = vadd.f32 %v4528, %v4338
      %v4531 = vadd.f32 %v4529, %v4338
      %v4532 = vmax.f32 %v4530, 0.0
      %v4533 = vmax.f32 %v4531, 0.0
      %4534 = vmatprep.subr.mxu0 %v4533
      %4535 = vmatpush1.msra.mxu0 %v4532
      %4536 = vmatprep.subr.mxu0 0.0
      %4537 = vmatpush1.msra.mxu0 0.0
      %4538 = vmatprep.subr.mxu0 0.0
      %4539 = vmatpush1.msra.mxu0 0.0
      %4540 = vmatprep.subr.mxu0 0.0
      %4541 = vmatpush1.msra.mxu0 0.0
      %4542 = vmatprep.subr.mxu0 0.0
      %4543 = vmatpush1.msra.mxu0 0.0
      %4544 = vmatprep.subr.mxu0 0.0
      %4545 = vmatpush1.msra.mxu0 0.0
      %4546 = vmatprep.subr.mxu0 0.0
      %4547 = vmatpush1.msra.mxu0 0.0
      %4548 = vmatprep.subr.mxu0 0.0
      %4549 = vmatpush1.msra.mxu0 0.0
      %4550 = vmatprep.subr.mxu0 0.0
      %4551 = vmatpush1.msra.mxu0 0.0
      %4552 = vmatprep.subr.mxu0 0.0
      %4553 = vmatpush1.msra.mxu0 0.0
      %4554 = vmatprep.subr.mxu0 0.0
      %4555 = vmatpush1.msra.mxu0 0.0
      %4556 = vmatprep.subr.mxu0 0.0
      %4557 = vmatpush1.msra.mxu0 0.0
      %4558 = vmatprep.subr.mxu0 0.0
      %4559 = vmatpush1.msra.mxu0 0.0
      %4560 = vmatprep.subr.mxu0 0.0
      %4561 = vmatpush1.msra.mxu0 0.0
      %4562 = vmatprep.subr.mxu0 0.0
      %4563 = vmatpush1.msra.mxu0 0.0
      %4564 = vmatprep.subr.mxu0 0.0
      %4565 = vmatpush1.msra.mxu0 0.0
      %4566 = vmatprep.subr.mxu0 0.0
      %4567 = vmatpush1.msra.mxu0 0.0
      %4568 = vmatprep.subr.mxu0 0.0
      %4569 = vmatpush1.msra.mxu0 0.0
      %4570 = vmatprep.subr.mxu0 0.0
      %4571 = vmatpush1.msra.mxu0 0.0
      %4572 = vmatprep.subr.mxu0 0.0
      %4573 = vmatpush1.msra.mxu0 0.0
      %4574 = vmatprep.subr.mxu0 0.0
      %4575 = vmatpush1.msra.mxu0 0.0
      %4576 = vmatprep.subr.mxu0 0.0
      %4577 = vmatpush1.msra.mxu0 0.0
      %4578 = vmatprep.subr.mxu0 0.0
      %4579 = vmatpush1.msra.mxu0 0.0
      %4580 = vmatprep.subr.mxu0 0.0
      %4581 = vmatpush1.msra.mxu0 0.0
      %4582 = vmatprep.subr.mxu0 0.0
      %4583 = vmatpush1.msra.mxu0 0.0
      %4584 = vmatprep.subr.mxu0 0.0
      %4585 = vmatpush1.msra.mxu0 0.0
      %4586 = vmatprep.subr.mxu0 0.0
      %4587 = vmatpush1.msra.mxu0 0.0
      %4588 = vmatprep.subr.mxu0 0.0
      %4589 = vmatpush1.msra.mxu0 0.0
      %4590 = vmatprep.subr.mxu0 0.0
      %4591 = vmatpush1.msra.mxu0 0.0
      %4592 = vmatprep.subr.mxu0 0.0
      %4593 = vmatpush1.msra.mxu0 0.0
      %4594 = vmatprep.subr.mxu0 0.0
      %4595 = vmatpush1.msra.mxu0 0.0
      %4596 = vmatprep.subr.mxu0 0.0
      %4597 = vmatpush1.msra.mxu0 0.0
      %4598 = vmatprep.mubr.f32.mxu0 0.0
      %4599 = vmatmul.mubr.f32.gmra.mrb[0].mxu0 %v4351
      %v4600 = vpop.f32.mrb[0].mxu0
      %v4601 = vadd.f32 %v4347, %v4600
      %v4602 = vpop.f32.mrb[0].mxu0
      %v4603 = vadd.f32 %v4347, %v4602
      %4604 = vdwg.mxu0
      %v4605 = vld [vmem:[%s1680] sm:$0xff]
      %v4607 = vcombine.high %v4605, %v4605
      %v4609 = vadd.f32 %v4601, %v4605
      %v4610 = vadd.f32 %v4603, %v4607
      %v4611 = vmax.f32 %v4609, 0.0
      %v4612 = vmax.f32 %v4610, 0.0
      %v4615 = vcombine.low %v4611, %v4612
      %s4617 = scalar_lea.vmem %s526, 16
      %4618 = vst [vmem:[%s4617] sm:$0xff] %v4615
      %v4619 = vld [vmem:[%s1931] sm:$0xff]
      %v4620 = vld [vmem:[%s1931 + $0x8] sm:$0xff]
      %v4621 = vadd.f32 %v4619, %v4338
      %v4622 = vadd.f32 %v4620, %v4338
      %v4623 = vmax.f32 %v4621, 0.0
      %v4624 = vmax.f32 %v4622, 0.0
      %4625 = vmatprep.subr.mxu0 %v4624
      %4626 = vmatpush1.msra.mxu0 %v4623
      %4627 = vmatprep.subr.mxu0 0.0
      %4628 = vmatpush1.msra.mxu0 0.0
      %4629 = vmatprep.subr.mxu0 0.0
      %4630 = vmatpush1.msra.mxu0 0.0
      %4631 = vmatprep.subr.mxu0 0.0
      %4632 = vmatpush1.msra.mxu0 0.0
      %4633 = vmatprep.subr.mxu0 0.0
      %4634 = vmatpush1.msra.mxu0 0.0
      %4635 = vmatprep.subr.mxu0 0.0
      %4636 = vmatpush1.msra.mxu0 0.0
      %4637 = vmatprep.subr.mxu0 0.0
      %4638 = vmatpush1.msra.mxu0 0.0
      %4639 = vmatprep.subr.mxu0 0.0
      %4640 = vmatpush1.msra.mxu0 0.0
      %4641 = vmatprep.subr.mxu0 0.0
      %4642 = vmatpush1.msra.mxu0 0.0
      %4643 = vmatprep.subr.mxu0 0.0
      %4644 = vmatpush1.msra.mxu0 0.0
      %4645 = vmatprep.subr.mxu0 0.0
      %4646 = vmatpush1.msra.mxu0 0.0
      %4647 = vmatprep.subr.mxu0 0.0
      %4648 = vmatpush1.msra.mxu0 0.0
      %4649 = vmatprep.subr.mxu0 0.0
      %4650 = vmatpush1.msra.mxu0 0.0
      %4651 = vmatprep.subr.mxu0 0.0
      %4652 = vmatpush1.msra.mxu0 0.0
      %4653 = vmatprep.subr.mxu0 0.0
      %4654 = vmatpush1.msra.mxu0 0.0
      %4655 = vmatprep.subr.mxu0 0.0
      %4656 = vmatpush1.msra.mxu0 0.0
      %4657 = vmatprep.subr.mxu0 0.0
      %4658 = vmatpush1.msra.mxu0 0.0
      %4659 = vmatprep.subr.mxu0 0.0
      %4660 = vmatpush1.msra.mxu0 0.0
      %4661 = vmatprep.subr.mxu0 0.0
      %4662 = vmatpush1.msra.mxu0 0.0
      %4663 = vmatprep.subr.mxu0 0.0
      %4664 = vmatpush1.msra.mxu0 0.0
      %4665 = vmatprep.subr.mxu0 0.0
      %4666 = vmatpush1.msra.mxu0 0.0
      %4667 = vmatprep.subr.mxu0 0.0
      %4668 = vmatpush1.msra.mxu0 0.0
      %4669 = vmatprep.subr.mxu0 0.0
      %4670 = vmatpush1.msra.mxu0 0.0
      %4671 = vmatprep.subr.mxu0 0.0
      %4672 = vmatpush1.msra.mxu0 0.0
      %4673 = vmatprep.subr.mxu0 0.0
      %4674 = vmatpush1.msra.mxu0 0.0
      %4675 = vmatprep.subr.mxu0 0.0
      %4676 = vmatpush1.msra.mxu0 0.0
      %4677 = vmatprep.subr.mxu0 0.0
      %4678 = vmatpush1.msra.mxu0 0.0
      %4679 = vmatprep.subr.mxu0 0.0
      %4680 = vmatpush1.msra.mxu0 0.0
      %4681 = vmatprep.subr.mxu0 0.0
      %4682 = vmatpush1.msra.mxu0 0.0
      %4683 = vmatprep.subr.mxu0 0.0
      %4684 = vmatpush1.msra.mxu0 0.0
      %4685 = vmatprep.subr.mxu0 0.0
      %4686 = vmatpush1.msra.mxu0 0.0
      %4687 = vmatprep.subr.mxu0 0.0
      %4688 = vmatpush1.msra.mxu0 0.0
      %4689 = vmatprep.mubr.f32.mxu0 0.0
      %4690 = vmatmul.mubr.f32.gmra.mrb[0].mxu0 %v4351
      %v4691 = vpop.f32.mrb[0].mxu0
      %v4692 = vadd.f32 %v4347, %v4691
      %v4693 = vpop.f32.mrb[0].mxu0
      %v4694 = vadd.f32 %v4347, %v4693
      %4695 = vdwg.mxu0
      %v4696 = vld [vmem:[%s2079] sm:$0xff]
      %v4698 = vcombine.high %v4696, %v4696
      %v4700 = vadd.f32 %v4692, %v4696
      %v4701 = vadd.f32 %v4694, %v4698
      %v4702 = vmax.f32 %v4700, 0.0
      %v4703 = vmax.f32 %v4701, 0.0
      %v4706 = vcombine.low %v4702, %v4703
      %s4708 = scalar_lea.vmem %s526, 24
      %4709 = vst [vmem:[%s4708] sm:$0xff] %v4706
      %v4710 = vld [vmem:[%s2330] sm:$0xff]
      %v4711 = vld [vmem:[%s2330 + $0x8] sm:$0xff]
      %v4712 = vadd.f32 %v4710, %v4338
      %v4713 = vadd.f32 %v4711, %v4338
      %v4714 = vmax.f32 %v4712, 0.0
      %v4715 = vmax.f32 %v4713, 0.0
      %4716 = vmatprep.subr.mxu0 %v4715
      %4717 = vmatpush1.msra.mxu0 %v4714
      %4718 = vmatprep.subr.mxu0 0.0
      %4719 = vmatpush1.msra.mxu0 0.0
      %4720 = vmatprep.subr.mxu0 0.0
      %4721 = vmatpush1.msra.mxu0 0.0
      %4722 = vmatprep.subr.mxu0 0.0
      %4723 = vmatpush1.msra.mxu0 0.0
      %4724 = vmatprep.subr.mxu0 0.0
      %4725 = vmatpush1.msra.mxu0 0.0
      %4726 = vmatprep.subr.mxu0 0.0
      %4727 = vmatpush1.msra.mxu0 0.0
      %4728 = vmatprep.subr.mxu0 0.0
      %4729 = vmatpush1.msra.mxu0 0.0
      %4730 = vmatprep.subr.mxu0 0.0
      %4731 = vmatpush1.msra.mxu0 0.0
      %4732 = vmatprep.subr.mxu0 0.0
      %4733 = vmatpush1.msra.mxu0 0.0
      %4734 = vmatprep.subr.mxu0 0.0
      %4735 = vmatpush1.msra.mxu0 0.0
      %4736 = vmatprep.subr.mxu0 0.0
      %4737 = vmatpush1.msra.mxu0 0.0
      %4738 = vmatprep.subr.mxu0 0.0
      %4739 = vmatpush1.msra.mxu0 0.0
      %4740 = vmatprep.subr.mxu0 0.0
      %4741 = vmatpush1.msra.mxu0 0.0
      %4742 = vmatprep.subr.mxu0 0.0
      %4743 = vmatpush1.msra.mxu0 0.0
      %4744 = vmatprep.subr.mxu0 0.0
      %4745 = vmatpush1.msra.mxu0 0.0
      %4746 = vmatprep.subr.mxu0 0.0
      %4747 = vmatpush1.msra.mxu0 0.0
      %4748 = vmatprep.subr.mxu0 0.0
      %4749 = vmatpush1.msra.mxu0 0.0
      %4750 = vmatprep.subr.mxu0 0.0
      %4751 = vmatpush1.msra.mxu0 0.0
      %4752 = vmatprep.subr.mxu0 0.0
      %4753 = vmatpush1.msra.mxu0 0.0
      %4754 = vmatprep.subr.mxu0 0.0
      %4755 = vmatpush1.msra.mxu0 0.0
      %4756 = vmatprep.subr.mxu0 0.0
      %4757 = vmatpush1.msra.mxu0 0.0
      %4758 = vmatprep.subr.mxu0 0.0
      %4759 = vmatpush1.msra.mxu0 0.0
      %4760 = vmatprep.subr.mxu0 0.0
      %4761 = vmatpush1.msra.mxu0 0.0
      %4762 = vmatprep.subr.mxu0 0.0
      %4763 = vmatpush1.msra.mxu0 0.0
      %4764 = vmatprep.subr.mxu0 0.0
      %4765 = vmatpush1.msra.mxu0 0.0
      %4766 = vmatprep.subr.mxu0 0.0
      %4767 = vmatpush1.msra.mxu0 0.0
      %4768 = vmatprep.subr.mxu0 0.0
      %4769 = vmatpush1.msra.mxu0 0.0
      %4770 = vmatprep.subr.mxu0 0.0
      %4771 = vmatpush1.msra.mxu0 0.0
      %4772 = vmatprep.subr.mxu0 0.0
      %4773 = vmatpush1.msra.mxu0 0.0
      %4774 = vmatprep.subr.mxu0 0.0
      %4775 = vmatpush1.msra.mxu0 0.0
      %4776 = vmatprep.subr.mxu0 0.0
      %4777 = vmatpush1.msra.mxu0 0.0
      %4778 = vmatprep.subr.mxu0 0.0
      %4779 = vmatpush1.msra.mxu0 0.0
      %4780 = vmatprep.mubr.f32.mxu0 0.0
      %4781 = vmatmul.mubr.f32.gmra.mrb[0].mxu0 %v4351
      %v4782 = vpop.f32.mrb[0].mxu0
      %v4783 = vadd.f32 %v4347, %v4782
      %v4784 = vpop.f32.mrb[0].mxu0
      %v4785 = vadd.f32 %v4347, %v4784
      %4786 = vdwg.mxu0
      %v4787 = vld [vmem:[%s2478] sm:$0xff]
      %v4789 = vcombine.high %v4787, %v4787
      %v4791 = vadd.f32 %v4783, %v4787
      %v4792 = vadd.f32 %v4785, %v4789
      %v4793 = vmax.f32 %v4791, 0.0
      %v4794 = vmax.f32 %v4792, 0.0
      %v4797 = vcombine.low %v4793, %v4794
      %s4799 = scalar_lea.vmem %s526, 32
      %4800 = vst [vmem:[%s4799] sm:$0xff] %v4797
      %v4801 = vld [vmem:[%s2729] sm:$0xff]
      %v4802 = vld [vmem:[%s2729 + $0x8] sm:$0xff]
      %v4803 = vadd.f32 %v4801, %v4338
      %v4804 = vadd.f32 %v4802, %v4338
      %v4805 = vmax.f32 %v4803, 0.0
      %v4806 = vmax.f32 %v4804, 0.0
      %4807 = vmatprep.subr.mxu0 %v4806
      %4808 = vmatpush1.msra.mxu0 %v4805
      %4809 = vmatprep.subr.mxu0 0.0
      %4810 = vmatpush1.msra.mxu0 0.0
      %4811 = vmatprep.subr.mxu0 0.0
      %4812 = vmatpush1.msra.mxu0 0.0
      %4813 = vmatprep.subr.mxu0 0.0
      %4814 = vmatpush1.msra.mxu0 0.0
      %4815 = vmatprep.subr.mxu0 0.0
      %4816 = vmatpush1.msra.mxu0 0.0
      %4817 = vmatprep.subr.mxu0 0.0
      %4818 = vmatpush1.msra.mxu0 0.0
      %4819 = vmatprep.subr.mxu0 0.0
      %4820 = vmatpush1.msra.mxu0 0.0
      %4821 = vmatprep.subr.mxu0 0.0
      %4822 = vmatpush1.msra.mxu0 0.0
      %4823 = vmatprep.subr.mxu0 0.0
      %4824 = vmatpush1.msra.mxu0 0.0
      %4825 = vmatprep.subr.mxu0 0.0
      %4826 = vmatpush1.msra.mxu0 0.0
      %4827 = vmatprep.subr.mxu0 0.0
      %4828 = vmatpush1.msra.mxu0 0.0
      %4829 = vmatprep.subr.mxu0 0.0
      %4830 = vmatpush1.msra.mxu0 0.0
      %4831 = vmatprep.subr.mxu0 0.0
      %4832 = vmatpush1.msra.mxu0 0.0
      %4833 = vmatprep.subr.mxu0 0.0
      %4834 = vmatpush1.msra.mxu0 0.0
      %4835 = vmatprep.subr.mxu0 0.0
      %4836 = vmatpush1.msra.mxu0 0.0
      %4837 = vmatprep.subr.mxu0 0.0
      %4838 = vmatpush1.msra.mxu0 0.0
      %4839 = vmatprep.subr.mxu0 0.0
      %4840 = vmatpush1.msra.mxu0 0.0
      %4841 = vmatprep.subr.mxu0 0.0
      %4842 = vmatpush1.msra.mxu0 0.0
      %4843 = vmatprep.subr.mxu0 0.0
      %4844 = vmatpush1.msra.mxu0 0.0
      %4845 = vmatprep.subr.mxu0 0.0
      %4846 = vmatpush1.msra.mxu0 0.0
      %4847 = vmatprep.subr.mxu0 0.0
      %4848 = vmatpush1.msra.mxu0 0.0
      %4849 = vmatprep.subr.mxu0 0.0
      %4850 = vmatpush1.msra.mxu0 0.0
      %4851 = vmatprep.subr.mxu0 0.0
      %4852 = vmatpush1.msra.mxu0 0.0
      %4853 = vmatprep.subr.mxu0 0.0
      %4854 = vmatpush1.msra.mxu0 0.0
      %4855 = vmatprep.subr.mxu0 0.0
      %4856 = vmatpush1.msra.mxu0 0.0
      %4857 = vmatprep.subr.mxu0 0.0
      %4858 = vmatpush1.msra.mxu0 0.0
      %4859 = vmatprep.subr.mxu0 0.0
      %4860 = vmatpush1.msra.mxu0 0.0
      %4861 = vmatprep.subr.mxu0 0.0
      %4862 = vmatpush1.msra.mxu0 0.0
      %4863 = vmatprep.subr.mxu0 0.0
      %4864 = vmatpush1.msra.mxu0 0.0
      %4865 = vmatprep.subr.mxu0 0.0
      %4866 = vmatpush1.msra.mxu0 0.0
      %4867 = vmatprep.subr.mxu0 0.0
      %4868 = vmatpush1.msra.mxu0 0.0
      %4869 = vmatprep.subr.mxu0 0.0
      %4870 = vmatpush1.msra.mxu0 0.0
      %4871 = vmatprep.mubr.f32.mxu0 0.0
      %4872 = vmatmul.mubr.f32.gmra.mrb[0].mxu0 %v4351
      %v4873 = vpop.f32.mrb[0].mxu0
      %v4874 = vadd.f32 %v4347, %v4873
      %v4875 = vpop.f32.mrb[0].mxu0
      %v4876 = vadd.f32 %v4347, %v4875
      %4877 = vdwg.mxu0
      %v4878 = vld [vmem:[%s2877] sm:$0xff]
      %v4880 = vcombine.high %v4878, %v4878
      %v4882 = vadd.f32 %v4874, %v4878
      %v4883 = vadd.f32 %v4876, %v4880
      %v4884 = vmax.f32 %v4882, 0.0
      %v4885 = vmax.f32 %v4883, 0.0
      %v4888 = vcombine.low %v4884, %v4885
      %s4890 = scalar_lea.vmem %s526, 40
      %4891 = vst [vmem:[%s4890] sm:$0xff] %v4888
      %v4892 = vld [vmem:[%s3128] sm:$0xff]
      %v4893 = vld [vmem:[%s3128 + $0x8] sm:$0xff]
      %v4894 = vadd.f32 %v4892, %v4338
      %v4895 = vadd.f32 %v4893, %v4338
      %v4896 = vmax.f32 %v4894, 0.0
      %v4897 = vmax.f32 %v4895, 0.0
      %4898 = vmatprep.subr.mxu0 %v4897
      %4899 = vmatpush1.msra.mxu0 %v4896
      %4900 = vmatprep.subr.mxu0 0.0
      %4901 = vmatpush1.msra.mxu0 0.0
      %4902 = vmatprep.subr.mxu0 0.0
      %4903 = vmatpush1.msra.mxu0 0.0
      %4904 = vmatprep.subr.mxu0 0.0
      %4905 = vmatpush1.msra.mxu0 0.0
      %4906 = vmatprep.subr.mxu0 0.0
      %4907 = vmatpush1.msra.mxu0 0.0
      %4908 = vmatprep.subr.mxu0 0.0
      %4909 = vmatpush1.msra.mxu0 0.0
      %4910 = vmatprep.subr.mxu0 0.0
      %4911 = vmatpush1.msra.mxu0 0.0
      %4912 = vmatprep.subr.mxu0 0.0
      %4913 = vmatpush1.msra.mxu0 0.0
      %4914 = vmatprep.subr.mxu0 0.0
      %4915 = vmatpush1.msra.mxu0 0.0
      %4916 = vmatprep.subr.mxu0 0.0
      %4917 = vmatpush1.msra.mxu0 0.0
      %4918 = vmatprep.subr.mxu0 0.0
      %4919 = vmatpush1.msra.mxu0 0.0
      %4920 = vmatprep.subr.mxu0 0.0
      %4921 = vmatpush1.msra.mxu0 0.0
      %4922 = vmatprep.subr.mxu0 0.0
      %4923 = vmatpush1.msra.mxu0 0.0
      %4924 = vmatprep.subr.mxu0 0.0
      %4925 = vmatpush1.msra.mxu0 0.0
      %4926 = vmatprep.subr.mxu0 0.0
      %4927 = vmatpush1.msra.mxu0 0.0
      %4928 = vmatprep.subr.mxu0 0.0
      %4929 = vmatpush1.msra.mxu0 0.0
      %4930 = vmatprep.subr.mxu0 0.0
      %4931 = vmatpush1.msra.mxu0 0.0
      %4932 = vmatprep.subr.mxu0 0.0
      %4933 = vmatpush1.msra.mxu0 0.0
      %4934 = vmatprep.subr.mxu0 0.0
      %4935 = vmatpush1.msra.mxu0 0.0
      %4936 = vmatprep.subr.mxu0 0.0
      %4937 = vmatpush1.msra.mxu0 0.0
      %4938 = vmatprep.subr.mxu0 0.0
      %4939 = vmatpush1.msra.mxu0 0.0
      %4940 = vmatprep.subr.mxu0 0.0
      %4941 = vmatpush1.msra.mxu0 0.0
      %4942 = vmatprep.subr.mxu0 0.0
      %4943 = vmatpush1.msra.mxu0 0.0
      %4944 = vmatprep.subr.mxu0 0.0
      %4945 = vmatpush1.msra.mxu0 0.0
      %4946 = vmatprep.subr.mxu0 0.0
      %4947 = vmatpush1.msra.mxu0 0.0
      %4948 = vmatprep.subr.mxu0 0.0
      %4949 = vmatpush1.msra.mxu0 0.0
      %4950 = vmatprep.subr.mxu0 0.0
      %4951 = vmatpush1.msra.mxu0 0.0
      %4952 = vmatprep.subr.mxu0 0.0
      %4953 = vmatpush1.msra.mxu0 0.0
      %4954 = vmatprep.subr.mxu0 0.0
      %4955 = vmatpush1.msra.mxu0 0.0
      %4956 = vmatprep.subr.mxu0 0.0
      %4957 = vmatpush1.msra.mxu0 0.0
      %4958 = vmatprep.subr.mxu0 0.0
      %4959 = vmatpush1.msra.mxu0 0.0
      %4960 = vmatprep.subr.mxu0 0.0
      %4961 = vmatpush1.msra.mxu0 0.0
      %4962 = vmatprep.mubr.f32.mxu0 0.0
      %4963 = vmatmul.mubr.f32.gmra.mrb[0].mxu0 %v4351
      %v4964 = vpop.f32.mrb[0].mxu0
      %v4965 = vadd.f32 %v4347, %v4964
      %v4966 = vpop.f32.mrb[0].mxu0
      %v4967 = vadd.f32 %v4347, %v4966
      %4968 = vdwg.mxu0
      %v4969 = vld [vmem:[%s3276] sm:$0xff]
      %v4971 = vcombine.high %v4969, %v4969
      %v4973 = vadd.f32 %v4965, %v4969
      %v4974 = vadd.f32 %v4967, %v4971
      %v4975 = vmax.f32 %v4973, 0.0
      %v4976 = vmax.f32 %v4974, 0.0
      %v4979 = vcombine.low %v4975, %v4976
      %s4981 = scalar_lea.vmem %s526, 48
      %4982 = vst [vmem:[%s4981] sm:$0xff] %v4979
      %v4983 = vld [vmem:[%s3527] sm:$0xff]
      %v4984 = vld [vmem:[%s3527 + $0x8] sm:$0xff]
      %v4985 = vadd.f32 %v4983, %v4338
      %v4986 = vadd.f32 %v4984, %v4338
      %v4987 = vmax.f32 %v4985, 0.0
      %v4988 = vmax.f32 %v4986, 0.0
      %4989 = vmatprep.subr.mxu0 %v4988
      %4990 = vmatpush1.msra.mxu0 %v4987
      %4991 = vmatprep.subr.mxu0 0.0
      %4992 = vmatpush1.msra.mxu0 0.0
      %4993 = vmatprep.subr.mxu0 0.0
      %4994 = vmatpush1.msra.mxu0 0.0
      %4995 = vmatprep.subr.mxu0 0.0
      %4996 = vmatpush1.msra.mxu0 0.0
      %4997 = vmatprep.subr.mxu0 0.0
      %4998 = vmatpush1.msra.mxu0 0.0
      %4999 = vmatprep.subr.mxu0 0.0
      %5000 = vmatpush1.msra.mxu0 0.0
      %5001 = vmatprep.subr.mxu0 0.0
      %5002 = vmatpush1.msra.mxu0 0.0
      %5003 = vmatprep.subr.mxu0 0.0
      %5004 = vmatpush1.msra.mxu0 0.0
      %5005 = vmatprep.subr.mxu0 0.0
      %5006 = vmatpush1.msra.mxu0 0.0
      %5007 = vmatprep.subr.mxu0 0.0
      %5008 = vmatpush1.msra.mxu0 0.0
      %5009 = vmatprep.subr.mxu0 0.0
      %5010 = vmatpush1.msra.mxu0 0.0
      %5011 = vmatprep.subr.mxu0 0.0
      %5012 = vmatpush1.msra.mxu0 0.0
      %5013 = vmatprep.subr.mxu0 0.0
      %5014 = vmatpush1.msra.mxu0 0.0
      %5015 = vmatprep.subr.mxu0 0.0
      %5016 = vmatpush1.msra.mxu0 0.0
      %5017 = vmatprep.subr.mxu0 0.0
      %5018 = vmatpush1.msra.mxu0 0.0
      %5019 = vmatprep.subr.mxu0 0.0
      %5020 = vmatpush1.msra.mxu0 0.0
      %5021 = vmatprep.subr.mxu0 0.0
      %5022 = vmatpush1.msra.mxu0 0.0
      %5023 = vmatprep.subr.mxu0 0.0
      %5024 = vmatpush1.msra.mxu0 0.0
      %5025 = vmatprep.subr.mxu0 0.0
      %5026 = vmatpush1.msra.mxu0 0.0
      %5027 = vmatprep.subr.mxu0 0.0
      %5028 = vmatpush1.msra.mxu0 0.0
      %5029 = vmatprep.subr.mxu0 0.0
      %5030 = vmatpush1.msra.mxu0 0.0
      %5031 = vmatprep.subr.mxu0 0.0
      %5032 = vmatpush1.msra.mxu0 0.0
      %5033 = vmatprep.subr.mxu0 0.0
      %5034 = vmatpush1.msra.mxu0 0.0
      %5035 = vmatprep.subr.mxu0 0.0
      %5036 = vmatpush1.msra.mxu0 0.0
      %5037 = vmatprep.subr.mxu0 0.0
      %5038 = vmatpush1.msra.mxu0 0.0
      %5039 = vmatprep.subr.mxu0 0.0
      %5040 = vmatpush1.msra.mxu0 0.0
      %5041 = vmatprep.subr.mxu0 0.0
      %5042 = vmatpush1.msra.mxu0 0.0
      %5043 = vmatprep.subr.mxu0 0.0
      %5044 = vmatpush1.msra.mxu0 0.0
      %5045 = vmatprep.subr.mxu0 0.0
      %5046 = vmatpush1.msra.mxu0 0.0
      %5047 = vmatprep.subr.mxu0 0.0
      %5048 = vmatpush1.msra.mxu0 0.0
      %5049 = vmatprep.subr.mxu0 0.0
      %5050 = vmatpush1.msra.mxu0 0.0
      %5051 = vmatprep.subr.mxu0 0.0
      %5052 = vmatpush1.msra.mxu0 0.0
      %5053 = vmatprep.mubr.f32.mxu0 0.0
      %5054 = vmatmul.mubr.f32.gmra.mrb[0].mxu0 %v4351
      %v5055 = vpop.f32.mrb[0].mxu0
      %v5056 = vadd.f32 %v4347, %v5055
      %v5057 = vpop.f32.mrb[0].mxu0
      %v5058 = vadd.f32 %v4347, %v5057
      %5059 = vdwg.mxu0
      %v5060 = vld [vmem:[%s3675] sm:$0xff]
      %v5062 = vcombine.high %v5060, %v5060
      %v5064 = vadd.f32 %v5056, %v5060
      %v5065 = vadd.f32 %v5058, %v5062
      %v5066 = vmax.f32 %v5064, 0.0
      %v5067 = vmax.f32 %v5065, 0.0
      %v5070 = vcombine.low %v5066, %v5067
      %s5072 = scalar_lea.vmem %s526, 56
      %5073 = vst [vmem:[%s5072] sm:$0xff] %v5070
      %s5074 = smul.u32 8, %s26
      %p5075 = scmp.lt.s32.totalorder %s25, 1
      %s5076 = scalar_select %p5075, %s25, 1
      %p5077 = scmp.lt.s32.totalorder %s5074, 7
      %s5078 = scalar_select %p5077, %s5074, 7
      %s5079 = smul.addr %s5078, 2
      %s5080 = smul.addr %s5076, 16
      %s5081 = sadd.s32 %s5079, %s5080
      %s5082 = smul.addr %s5081, 4
      %s5083 = scalar_lea.vmem %s10, %s5082
      // Predicated region
      $region69: #{residual_layer3d.1} parent=59 // pred_check
        %p5084 = pneg %p300
      $region70: #{residual_layer3d.1} parent=59 // pred_check_branch
        %5086 = sbr.rel (%p5084) target = $region72
      $region71: #{residual_layer3d.1} parent=59 // pred_region
        %s5087 = smul.u32 8, %s26
      $region72: #{residual_layer3d.1} parent=59 // pred_fallthru
        _
    $region60: #{residual_layer3d.1} parent=5 // pred_fallthru
      _
    %p5088 = scmp.le.s32.totalorder 2, %s16
    // Predicated region
    $region73: #{residual_layer3d.1} parent=5 // pred_check
      %p5089 = pneg %p5088
    $region74: #{residual_layer3d.1} parent=5 // pred_check_branch
      %5091 = sbr.rel (%p5089) target = $region76
    $region75: #{residual_layer3d.1} parent=5 // pred_region
      %s5092 = ssub.s32 %s16, 2
      // Predicated region
      $region77: #{residual_layer3d.1} parent=75 // pred_check
        %p5093 = pneg %p306
      $region78: #{residual_layer3d.1} parent=75 // pred_check_branch
        %5095 = sbr.rel (%p5093) target = $region80
      $region79: #{residual_layer3d.1} parent=75 // pred_region
        %s5096 = smul.u32 8, %s28
        %p5097 = scmp.lt.s32.totalorder %s27, 1
        %s5098 = scalar_select %p5097, %s27, 1
        %p5099 = scmp.lt.s32.totalorder %s5096, 7
        %s5100 = scalar_select %p5099, %s5096, 7
        %s5101 = smul.addr %s5100, 2
        %s5102 = smul.addr %s5098, 16
        %s5103 = sadd.s32 %s5101, %s5102
        %s5104 = smul.addr %s5103, 4
        %s5105 = scalar_lea.vmem %s10, %s5104
      $region80: #{residual_layer3d.1} parent=75 // pred_fallthru
        _
    $region76: #{residual_layer3d.1} parent=5 // pred_fallthru
      _
  $region6: #{residual_layer3d.1} parent=0 // loop_footer
    %s20 = sadd.s32 1, %s16
  $region7: #{residual_layer3d.1} parent=0 // loop_footer_branch
    %15 = sbr.rel target = $region3
  $region8: #{residual_layer3d.1} parent=0 // loop_exit
    _

</llo_original>
